<compile_context>
chip_gen: v7x
topology: tpu7x:2x2x1
jax: 0.10.0
libtpu: 0.0.40
codegen_flags: <defaults>
</compile_context>

<pallas_src>
import math

import jax
import jax.numpy as jnp
from jax import lax
from jax.experimental import pallas as pl
from jax.experimental.pallas import tpu as pltpu

C1, C2 = 32, 64              # conv channel widths from the PyTorch module
K = 7                        # conv kernel size (padding = 3)
BLUR_K, BLUR_SIGMA = 5, 0.5  # torchvision GaussianBlur(kernel_size=5, sigma=0.5)


# ---------------------------------------------------------------------------
# Host-side (one-time) parameter preparation.
# ---------------------------------------------------------------------------
def _gaussian_1d(kernel_size=BLUR_K, sigma=BLUR_SIGMA):
    half = (kernel_size - 1) * 0.5
    pdf = [math.exp(-0.5 * ((-half + i) / sigma) ** 2) for i in range(kernel_size)]
    s = sum(pdf)
    return [p / s for p in pdf]


def _blur_operator(N):
    """(N, N) matrix G such that G @ x applies the 1-D Gaussian blur with
    reflect padding along the leading axis (so blur2d(x) = G @ x @ G.T)."""
    g = _gaussian_1d()
    pad = BLUR_K // 2

    def reflect(p):
        if p < 0:
            return -p
        if p >= N:
            return 2 * N - 2 - p
        return p

    rows = [[0.0] * N for _ in range(N)]
    for h in range(N):
        for i in range(BLUR_K):
            rows[h][reflect(h + i - pad)] += g[i]
    return jnp.array(rows, jnp.float32)


def _banded_conv_weights(w, w_in):
    """Fold the column taps + column zero-padding of a KxK 'same' conv into a
    banded matrix per row tap.

    w: (K, K, Cin, Cout) indexed [dy, dx, ci, co].
    Returns (K, w_in*Cin, w_in*Cout); output columns are permuted to
    "pool-phase major" order  col = k*(w_in//4)*Cout + j*Cout + co  with the
    true output position w = 4*j + k, so MaxPool1d(4) becomes a max over 4
    contiguous, 128-aligned lane blocks.
    """
    Kk, _, Cin, Cout = w.shape
    P = Kk // 2
    dx = jnp.arange(w_in)[:, None] - jnp.arange(w_in)[None, :] + P   # (w_in, w_out)
    valid = (dx >= 0) & (dx < Kk)
    sel = jnp.where(valid, dx, 0)
    B = w[:, sel]                                         # (K, w_in, w_out, Cin, Cout)
    B = jnp.where(valid[None, :, :, None, None], B, 0.0)
    B = B.transpose(0, 1, 3, 2, 4)                        # (K, w_in, Cin, w_out, Cout)
    jb = w_in // 4
    B = B.reshape(Kk, w_in, Cin, jb, 4, Cout).transpose(0, 1, 2, 4, 3, 5)
    return B.reshape(Kk, w_in * Cin, w_in * Cout)


def prepare_params(params, N):
    W2, W3 = N // 4, N // 16
    w1 = params["w1"][:, :, None, :]                      # (7, 7, 1, C1)
    return {
        "G":   _blur_operator(N),
        "w1b": _banded_conv_weights(w1, N),                       # (7, N, N*C1)
        "b1r": jnp.tile(params["b1"].reshape(1, C1), (1, N)),     # (1, N*C1)
        "w2b": _banded_conv_weights(params["w2"], W2),            # (7, W2*C1, W2*C2)
        "b2r": jnp.tile(params["b2"].reshape(1, C2), (1, W2)),    # (1, W2*C2)
        # mean(conv1x1(x)) == mean(x) @ W3 + b3  ->  fold the spatial mean.
        "w3s": jnp.concatenate([params["w3"]] * W3, axis=0) / float(N * W3),
        "b3":  params["b3"].reshape(1, C2),
        "wl":  params["wl"],
        "bl":  params["bl"].reshape(1, 1),
    }


# ---------------------------------------------------------------------------
# The single fused kernel.
# ---------------------------------------------------------------------------
def _make_kernel(N):
    assert N % 16 == 0, "N must be divisible by 16 (two MaxPool(4) stages)"
    W2, W3 = N // 4, N // 16

    def kernel(x1_ref, x2_ref, g_ref, w1_ref, b1_ref, w2_ref, b2_ref,
               w3_ref, b3_ref, wl_ref, bl_ref, o_ref):
        # ---- complete_mat: symmetrize (original diagonal kept) + blur ------
        g = g_ref[...]
        gt = g.T
        ii = lax.broadcasted_iota(jnp.int32, (N, N), 0)
        jj = lax.broadcasted_iota(jnp.int32, (N, N), 1)

        def smooth(x):
            sym = jnp.where(ii == jj, x, x + x.T)   # tmp.fill_diagonal_(0); tmp.T + x
            t = jnp.dot(g, sym, preferred_element_type=jnp.float32)
            return jnp.dot(t, gt, preferred_element_type=jnp.float32)

        d = (smooth(x1_ref[...]) - smooth(x2_ref[...])) ** 2            # (N, N)

        # ---- 7x7 "same" conv as 7 row-tap banded matmuls -------------------
        h_idx = lax.broadcasted_iota(jnp.int32, (N, 1), 0)

        def conv7(x, w_ref):
            out_cols = w_ref.shape[-1]
            acc = jnp.zeros((N, out_cols), jnp.float32)
            for dy in range(K):
                oy = dy - K // 2
                if oy == 0:
                    a = x
                else:
                    a = pltpu.roll(x, shift=(-oy) % N, axis=0)           # a[h]=x[h+oy]
                    a = jnp.where((h_idx + oy >= 0) & (h_idx + oy < N), a, 0.0)
                acc = acc + jnp.dot(a, w_ref[dy],
                                    preferred_element_type=jnp.float32)
            return acc

        def pool4(x, block):
            # TODO(synk): nn.MaxPool1d(4) on a 4-D NCHW tensor is invalid in
            # PyTorch; implemented as pooling the last spatial dim with k=s=4.
            return jnp.maximum(
                jnp.maximum(x[:, 0:block], x[:, block:2 * block]),
                jnp.maximum(x[:, 2 * block:3 * block], x[:, 3 * block:4 * block]))

        # layer 1: Conv2d(1, 32, 7, p=3) + ReLU + MaxPool(4) along W
        a1 = jnp.maximum(conv7(d, w1_ref) + b1_ref[...], 0.0)           # (N, N*C1)
        p1 = pool4(a1, W2 * C1)                                         # (N, W2*C1)

        # layer 2: Conv2d(32, 64, 7, p=3) + ReLU + MaxPool(4) along W
        a2 = jnp.maximum(conv7(p1, w2_ref) + b2_ref[...], 0.0)          # (N, W2*C2)
        p2 = pool4(a2, W3 * C2)                                         # (N, W3*C2)

        # head: Conv2d(64, 64, 1) + mean over (H, W) + Linear(64, 1)
        colsum = jnp.sum(p2, axis=0, keepdims=True)                     # (1, W3*C2)
        feat = jnp.dot(colsum, w3_ref[...],
                       preferred_element_type=jnp.float32) + b3_ref[...]
        o_ref[...] = (jnp.dot(feat, wl_ref[...],
                              preferred_element_type=jnp.float32) + bl_ref[...])

    return kernel


def discriminator_forward(x1, x2, params):
    N = x1.shape[0]
    p = prepare_params(params, N)
    args = (x1, x2, p["G"], p["w1b"], p["b1r"], p["w2b"], p["b2r"],
            p["w3s"], p["b3"], p["wl"], p["bl"])
    return pl.pallas_call(
        _make_kernel(N),
        out_shape=jax.ShapeDtypeStruct((1, 1), jnp.float32),
        in_specs=[pl.BlockSpec(memory_space=pltpu.MemorySpace.VMEM) for _ in args],
        out_specs=pl.BlockSpec(memory_space=pltpu.MemorySpace.VMEM),
        compiler_params=pltpu.CompilerParams(vmem_limit_bytes=32 * 1024 * 1024),
    )(*args)


# ---------------------------------------------------------------------------
# Deterministic synthetic parameters (PyTorch-style uniform(-1/sqrt(fan), .)).
# ---------------------------------------------------------------------------
def init_params(key):
    ks = jax.random.split(key, 8)

    def u(k, shape, fan_in):
        bound = 1.0 / float(math.sqrt(fan_in))
        return jax.random.uniform(k, shape, jnp.float32, -bound, bound)

    return {
        "w1": u(ks[0], (K, K, C1), K * K * 1),        # [dy, dx, co]
        "b1": u(ks[1], (C1,), K * K * 1),
        "w2": u(ks[2], (K, K, C1, C2), K * K * C1),   # [dy, dx, ci, co]
        "b2": u(ks[3], (C2,), K * K * C1),
        "w3": u(ks[4], (C2, C2), C2),                 # [ci, co]
        "b3": u(ks[5], (C2,), C2),
        "wl": u(ks[6], (C2, 1), C2),
        "bl": u(ks[7], (1,), C2),
    }


# ---------------------------------------------------------------------------
# Pure-JAX reference (lax.conv, NCHW) used only for a correctness check.
# ---------------------------------------------------------------------------
def _complete_mat_ref(x):
    n = x.shape[0]
    sym = x + x.T - jnp.diag(jnp.diag(x))
    g = jnp.array(_gaussian_1d(), jnp.float32)
    k2 = jnp.outer(g, g)
    xp = jnp.pad(sym, BLUR_K // 2, mode="reflect")
    out = jnp.zeros_like(sym)
    for i in range(BLUR_K):
        for j in range(BLUR_K):
            out = out + k2[i, j] * xp[i:i + n, j:j + n]
    return out


def reference_forward(x1, x2, params):
    d = (_complete_mat_ref(x1) - _complete_mat_ref(x2)) ** 2
    x = d[None, None]                                     # (1, 1, N, N)

    def conv(x, w, b):
        kh, kw, _, cout = w.shape
        y = lax.conv_general_dilated(
            x, w.transpose(3, 2, 0, 1), (1, 1),
            [(kh // 2, kh // 2), (kw // 2, kw // 2)],
            dimension_numbers=("NCHW", "OIHW", "NCHW"),
            precision=lax.Precision.HIGHEST)
        return y + b.reshape(1, cout, 1, 1)

    def pool(x):
        b, c, h, w = x.shape
        return jnp.max(x.reshape(b, c, h, w // 4, 4), axis=-1)

    x = pool(jax.nn.relu(conv(x, params["w1"][:, :, None, :], params["b1"])))
    x = pool(jax.nn.relu(conv(x, params["w2"], params["b2"])))
    x = conv(x, params["w3"][None, None], params["b3"])
    feat = x.mean(axis=(-2, -1))                          # (1, C2)
    return (jnp.dot(feat, params["wl"], precision=lax.Precision.HIGHEST)
            + params["bl"].reshape(1, 1))


if __name__ == "__main__":
    N = 32                       # Hi-C contact matrices are (N, N); N % 16 == 0
    key = jax.random.PRNGKey(0)
    kx1, kx2, kp = jax.random.split(key, 3)
    x1 = jax.random.normal(kx1, (N, N), jnp.float32)
    x2 = jax.random.normal(kx2, (N, N), jnp.float32)
    params = init_params(kp)

    fwd = jax.jit(discriminator_forward)
    out = jax.block_until_ready(fwd(x1, x2, params))

    ref = jax.block_until_ready(reference_forward(x1, x2, params))
    err = float(jnp.max(jnp.abs(out - ref)))
    tol = 3e-2 * (1.0 + float(jnp.max(jnp.abs(ref))))
    assert out.shape == (1, 1), out.shape
    assert err < tol, f"kernel/reference mismatch: err={err}, out={out}, ref={ref}"
    print("KERNEL_OK")
</pallas_src>

<mosaic_0001>
module attributes {stable_mosaic.version = 11 : i64} {
  func.func @kernel(%arg0: memref<32x32xf32, #tpu.memory_space<vmem>>, %arg1: memref<32x32xf32, #tpu.memory_space<vmem>>, %arg2: memref<32x32xf32, #tpu.memory_space<vmem>>, %arg3: memref<7x32x1024xf32, #tpu.memory_space<vmem>>, %arg4: memref<1x1024xf32, #tpu.memory_space<vmem>>, %arg5: memref<7x256x512xf32, #tpu.memory_space<vmem>>, %arg6: memref<1x512xf32, #tpu.memory_space<vmem>>, %arg7: memref<128x64xf32, #tpu.memory_space<vmem>>, %arg8: memref<1x64xf32, #tpu.memory_space<vmem>>, %arg9: memref<64x1xf32, #tpu.memory_space<vmem>>, %arg10: memref<1x1xf32, #tpu.memory_space<vmem>>, %arg11: memref<1x1xf32, #tpu.memory_space<vmem>>) attributes {dimension_semantics = [], scalar_prefetch = 0 : i64, scratch_operands = 0 : i64, tpu.core_type = #tpu.core_type<tc>} {
    %c0 = arith.constant 0 : index
    %c0_0 = arith.constant 0 : index
    %0 = vector.load %arg2[%c0, %c0_0] : memref<32x32xf32, #tpu.memory_space<vmem>>, vector<32x32xf32>
    %1 = tpu.transpose %0, [1, 0] : vector<32x32xf32> -> vector<32x32xf32>
    %2 = tpu.iota {dimensions = array<i32: 0>} : vector<32x32xi32>
    %3 = tpu.iota {dimensions = array<i32: 1>} : vector<32x32xi32>
    %c0_1 = arith.constant 0 : index
    %c0_2 = arith.constant 0 : index
    %4 = vector.load %arg0[%c0_1, %c0_2] : memref<32x32xf32, #tpu.memory_space<vmem>>, vector<32x32xf32>
    %5 = arith.cmpi eq, %2, %3 : vector<32x32xi32>
    %6 = tpu.transpose %4, [1, 0] : vector<32x32xf32> -> vector<32x32xf32>
    %7 = arith.addf %4, %6 : vector<32x32xf32>
    %8 = arith.select %5, %4, %7 : vector<32x32xi1>, vector<32x32xf32>
    %cst = arith.constant dense<0.000000e+00> : vector<32x32xf32>
    %9 = tpu.matmul %0, %8, %cst {dimension_numbers = #tpu.dot_dimension_numbers<[1], [0], [0], [1], [0, 0, 1, 1], [], []>} : vector<32x32xf32>, vector<32x32xf32>, vector<32x32xf32> -> vector<32x32xf32>
    %cst_3 = arith.constant dense<0.000000e+00> : vector<32x32xf32>
    %10 = tpu.matmul %9, %1, %cst_3 {dimension_numbers = #tpu.dot_dimension_numbers<[1], [0], [0], [1], [0, 0, 1, 1], [], []>} : vector<32x32xf32>, vector<32x32xf32>, vector<32x32xf32> -> vector<32x32xf32>
    %c0_4 = arith.constant 0 : index
    %c0_5 = arith.constant 0 : index
    %11 = vector.load %arg1[%c0_4, %c0_5] : memref<32x32xf32, #tpu.memory_space<vmem>>, vector<32x32xf32>
    %12 = arith.cmpi eq, %2, %3 : vector<32x32xi32>
    %13 = tpu.transpose %11, [1, 0] : vector<32x32xf32> -> vector<32x32xf32>
    %14 = arith.addf %11, %13 : vector<32x32xf32>
    %15 = arith.select %12, %11, %14 : vector<32x32xi1>, vector<32x32xf32>
    %cst_6 = arith.constant dense<0.000000e+00> : vector<32x32xf32>
    %16 = tpu.matmul %0, %15, %cst_6 {dimension_numbers = #tpu.dot_dimension_numbers<[1], [0], [0], [1], [0, 0, 1, 1], [], []>} : vector<32x32xf32>, vector<32x32xf32>, vector<32x32xf32> -> vector<32x32xf32>
    %cst_7 = arith.constant dense<0.000000e+00> : vector<32x32xf32>
    %17 = tpu.matmul %16, %1, %cst_7 {dimension_numbers = #tpu.dot_dimension_numbers<[1], [0], [0], [1], [0, 0, 1, 1], [], []>} : vector<32x32xf32>, vector<32x32xf32>, vector<32x32xf32> -> vector<32x32xf32>
    %18 = arith.subf %10, %17 : vector<32x32xf32>
    %19 = arith.mulf %18, %18 : vector<32x32xf32>
    %20 = tpu.iota {dimensions = array<i32: 0>} : vector<32x1xi32>
    %cst_8 = arith.constant 0.000000e+00 : f32
    %21 = vector.broadcast %cst_8 : f32 to vector<32x1024xf32>
    %c3_i32 = arith.constant 3 : i32
    %22 = tpu.dynamic_rotate %19 by %c3_i32 dim 0 : vector<32x32xf32>, i32 -> vector<32x32xf32>
    %c-3_i32 = arith.constant -3 : i32
    %23 = vector.broadcast %c-3_i32 : i32 to vector<32x1xi32>
    %24 = arith.addi %20, %23 : vector<32x1xi32>
    %c0_i32 = arith.constant 0 : i32
    %25 = vector.broadcast %c0_i32 : i32 to vector<32x1xi32>
    %26 = arith.cmpi sge, %24, %25 : vector<32x1xi32>
    %c-3_i32_9 = arith.constant -3 : i32
    %27 = vector.broadcast %c-3_i32_9 : i32 to vector<32x1xi32>
    %28 = arith.addi %20, %27 : vector<32x1xi32>
    %c32_i32 = arith.constant 32 : i32
    %29 = vector.broadcast %c32_i32 : i32 to vector<32x1xi32>
    %30 = arith.cmpi slt, %28, %29 : vector<32x1xi32>
    %31 = arith.andi %26, %30 : vector<32x1xi1>
    %cst_10 = arith.constant 0.000000e+00 : f32
    %32 = vector.shape_cast %31 : vector<32x1xi1> to vector<32x1xi1>
    %33 = vector.broadcast %32 : vector<32x1xi1> to vector<32x32xi1>
    %34 = vector.broadcast %cst_10 : f32 to vector<32x32xf32>
    %35 = arith.select %33, %22, %34 : vector<32x32xi1>, vector<32x32xf32>
    %c0_11 = arith.constant 0 : index
    %c0_12 = arith.constant 0 : index
    %c0_13 = arith.constant 0 : index
    %36 = vector.load %arg3[%c0_11, %c0_12, %c0_13] : memref<7x32x1024xf32, #tpu.memory_space<vmem>>, vector<1x32x1024xf32>
    %37 = vector.shape_cast %36 : vector<1x32x1024xf32> to vector<32x1024xf32>
    %cst_14 = arith.constant dense<0.000000e+00> : vector<32x1024xf32>
    %38 = tpu.matmul %35, %37, %cst_14 {dimension_numbers = #tpu.dot_dimension_numbers<[1], [0], [0], [1], [0, 0, 1, 1], [], []>} : vector<32x32xf32>, vector<32x1024xf32>, vector<32x1024xf32> -> vector<32x1024xf32>
    %39 = arith.addf %21, %38 : vector<32x1024xf32>
    %c2_i32 = arith.constant 2 : i32
    %40 = tpu.dynamic_rotate %19 by %c2_i32 dim 0 : vector<32x32xf32>, i32 -> vector<32x32xf32>
    %c-2_i32 = arith.constant -2 : i32
    %41 = vector.broadcast %c-2_i32 : i32 to vector<32x1xi32>
    %42 = arith.addi %20, %41 : vector<32x1xi32>
    %c0_i32_15 = arith.constant 0 : i32
    %43 = vector.broadcast %c0_i32_15 : i32 to vector<32x1xi32>
    %44 = arith.cmpi sge, %42, %43 : vector<32x1xi32>
    %c-2_i32_16 = arith.constant -2 : i32
    %45 = vector.broadcast %c-2_i32_16 : i32 to vector<32x1xi32>
    %46 = arith.addi %20, %45 : vector<32x1xi32>
    %c32_i32_17 = arith.constant 32 : i32
    %47 = vector.broadcast %c32_i32_17 : i32 to vector<32x1xi32>
    %48 = arith.cmpi slt, %46, %47 : vector<32x1xi32>
    %49 = arith.andi %44, %48 : vector<32x1xi1>
    %cst_18 = arith.constant 0.000000e+00 : f32
    %50 = vector.shape_cast %49 : vector<32x1xi1> to vector<32x1xi1>
    %51 = vector.broadcast %50 : vector<32x1xi1> to vector<32x32xi1>
    %52 = vector.broadcast %cst_18 : f32 to vector<32x32xf32>
    %53 = arith.select %51, %40, %52 : vector<32x32xi1>, vector<32x32xf32>
    %c1 = arith.constant 1 : index
    %c0_19 = arith.constant 0 : index
    %c0_20 = arith.constant 0 : index
    %54 = vector.load %arg3[%c1, %c0_19, %c0_20] : memref<7x32x1024xf32, #tpu.memory_space<vmem>>, vector<1x32x1024xf32>
    %55 = vector.shape_cast %54 : vector<1x32x1024xf32> to vector<32x1024xf32>
    %cst_21 = arith.constant dense<0.000000e+00> : vector<32x1024xf32>
    %56 = tpu.matmul %53, %55, %cst_21 {dimension_numbers = #tpu.dot_dimension_numbers<[1], [0], [0], [1], [0, 0, 1, 1], [], []>} : vector<32x32xf32>, vector<32x1024xf32>, vector<32x1024xf32> -> vector<32x1024xf32>
    %57 = arith.addf %39, %56 : vector<32x1024xf32>
    %c1_i32 = arith.constant 1 : i32
    %58 = tpu.dynamic_rotate %19 by %c1_i32 dim 0 : vector<32x32xf32>, i32 -> vector<32x32xf32>
    %c-1_i32 = arith.constant -1 : i32
    %59 = vector.broadcast %c-1_i32 : i32 to vector<32x1xi32>
    %60 = arith.addi %20, %59 : vector<32x1xi32>
    %c0_i32_22 = arith.constant 0 : i32
    %61 = vector.broadcast %c0_i32_22 : i32 to vector<32x1xi32>
    %62 = arith.cmpi sge, %60, %61 : vector<32x1xi32>
    %c-1_i32_23 = arith.constant -1 : i32
    %63 = vector.broadcast %c-1_i32_23 : i32 to vector<32x1xi32>
    %64 = arith.addi %20, %63 : vector<32x1xi32>
    %c32_i32_24 = arith.constant 32 : i32
    %65 = vector.broadcast %c32_i32_24 : i32 to vector<32x1xi32>
    %66 = arith.cmpi slt, %64, %65 : vector<32x1xi32>
    %67 = arith.andi %62, %66 : vector<32x1xi1>
    %cst_25 = arith.constant 0.000000e+00 : f32
    %68 = vector.shape_cast %67 : vector<32x1xi1> to vector<32x1xi1>
    %69 = vector.broadcast %68 : vector<32x1xi1> to vector<32x32xi1>
    %70 = vector.broadcast %cst_25 : f32 to vector<32x32xf32>
    %71 = arith.select %69, %58, %70 : vector<32x32xi1>, vector<32x32xf32>
    %c2 = arith.constant 2 : index
    %c0_26 = arith.constant 0 : index
    %c0_27 = arith.constant 0 : index
    %72 = vector.load %arg3[%c2, %c0_26, %c0_27] : memref<7x32x1024xf32, #tpu.memory_space<vmem>>, vector<1x32x1024xf32>
    %73 = vector.shape_cast %72 : vector<1x32x1024xf32> to vector<32x1024xf32>
    %cst_28 = arith.constant dense<0.000000e+00> : vector<32x1024xf32>
    %74 = tpu.matmul %71, %73, %cst_28 {dimension_numbers = #tpu.dot_dimension_numbers<[1], [0], [0], [1], [0, 0, 1, 1], [], []>} : vector<32x32xf32>, vector<32x1024xf32>, vector<32x1024xf32> -> vector<32x1024xf32>
    %75 = arith.addf %57, %74 : vector<32x1024xf32>
    %c3 = arith.constant 3 : index
    %c0_29 = arith.constant 0 : index
    %c0_30 = arith.constant 0 : index
    %76 = vector.load %arg3[%c3, %c0_29, %c0_30] : memref<7x32x1024xf32, #tpu.memory_space<vmem>>, vector<1x32x1024xf32>
    %77 = vector.shape_cast %76 : vector<1x32x1024xf32> to vector<32x1024xf32>
    %cst_31 = arith.constant dense<0.000000e+00> : vector<32x1024xf32>
    %78 = tpu.matmul %19, %77, %cst_31 {dimension_numbers = #tpu.dot_dimension_numbers<[1], [0], [0], [1], [0, 0, 1, 1], [], []>} : vector<32x32xf32>, vector<32x1024xf32>, vector<32x1024xf32> -> vector<32x1024xf32>
    %79 = arith.addf %75, %78 : vector<32x1024xf32>
    %c31_i32 = arith.constant 31 : i32
    %80 = tpu.dynamic_rotate %19 by %c31_i32 dim 0 : vector<32x32xf32>, i32 -> vector<32x32xf32>
    %c1_i32_32 = arith.constant 1 : i32
    %81 = vector.broadcast %c1_i32_32 : i32 to vector<32x1xi32>
    %82 = arith.addi %20, %81 : vector<32x1xi32>
    %c0_i32_33 = arith.constant 0 : i32
    %83 = vector.broadcast %c0_i32_33 : i32 to vector<32x1xi32>
    %84 = arith.cmpi sge, %82, %83 : vector<32x1xi32>
    %c1_i32_34 = arith.constant 1 : i32
    %85 = vector.broadcast %c1_i32_34 : i32 to vector<32x1xi32>
    %86 = arith.addi %20, %85 : vector<32x1xi32>
    %c32_i32_35 = arith.constant 32 : i32
    %87 = vector.broadcast %c32_i32_35 : i32 to vector<32x1xi32>
    %88 = arith.cmpi slt, %86, %87 : vector<32x1xi32>
    %89 = arith.andi %84, %88 : vector<32x1xi1>
    %cst_36 = arith.constant 0.000000e+00 : f32
    %90 = vector.shape_cast %89 : vector<32x1xi1> to vector<32x1xi1>
    %91 = vector.broadcast %90 : vector<32x1xi1> to vector<32x32xi1>
    %92 = vector.broadcast %cst_36 : f32 to vector<32x32xf32>
    %93 = arith.select %91, %80, %92 : vector<32x32xi1>, vector<32x32xf32>
    %c4 = arith.constant 4 : index
    %c0_37 = arith.constant 0 : index
    %c0_38 = arith.constant 0 : index
    %94 = vector.load %arg3[%c4, %c0_37, %c0_38] : memref<7x32x1024xf32, #tpu.memory_space<vmem>>, vector<1x32x1024xf32>
    %95 = vector.shape_cast %94 : vector<1x32x1024xf32> to vector<32x1024xf32>
    %cst_39 = arith.constant dense<0.000000e+00> : vector<32x1024xf32>
    %96 = tpu.matmul %93, %95, %cst_39 {dimension_numbers = #tpu.dot_dimension_numbers<[1], [0], [0], [1], [0, 0, 1, 1], [], []>} : vector<32x32xf32>, vector<32x1024xf32>, vector<32x1024xf32> -> vector<32x1024xf32>
    %97 = arith.addf %79, %96 : vector<32x1024xf32>
    %c30_i32 = arith.constant 30 : i32
    %98 = tpu.dynamic_rotate %19 by %c30_i32 dim 0 : vector<32x32xf32>, i32 -> vector<32x32xf32>
    %c2_i32_40 = arith.constant 2 : i32
    %99 = vector.broadcast %c2_i32_40 : i32 to vector<32x1xi32>
    %100 = arith.addi %20, %99 : vector<32x1xi32>
    %c0_i32_41 = arith.constant 0 : i32
    %101 = vector.broadcast %c0_i32_41 : i32 to vector<32x1xi32>
    %102 = arith.cmpi sge, %100, %101 : vector<32x1xi32>
    %c2_i32_42 = arith.constant 2 : i32
    %103 = vector.broadcast %c2_i32_42 : i32 to vector<32x1xi32>
    %104 = arith.addi %20, %103 : vector<32x1xi32>
    %c32_i32_43 = arith.constant 32 : i32
    %105 = vector.broadcast %c32_i32_43 : i32 to vector<32x1xi32>
    %106 = arith.cmpi slt, %104, %105 : vector<32x1xi32>
    %107 = arith.andi %102, %106 : vector<32x1xi1>
    %cst_44 = arith.constant 0.000000e+00 : f32
    %108 = vector.shape_cast %107 : vector<32x1xi1> to vector<32x1xi1>
    %109 = vector.broadcast %108 : vector<32x1xi1> to vector<32x32xi1>
    %110 = vector.broadcast %cst_44 : f32 to vector<32x32xf32>
    %111 = arith.select %109, %98, %110 : vector<32x32xi1>, vector<32x32xf32>
    %c5 = arith.constant 5 : index
    %c0_45 = arith.constant 0 : index
    %c0_46 = arith.constant 0 : index
    %112 = vector.load %arg3[%c5, %c0_45, %c0_46] : memref<7x32x1024xf32, #tpu.memory_space<vmem>>, vector<1x32x1024xf32>
    %113 = vector.shape_cast %112 : vector<1x32x1024xf32> to vector<32x1024xf32>
    %cst_47 = arith.constant dense<0.000000e+00> : vector<32x1024xf32>
    %114 = tpu.matmul %111, %113, %cst_47 {dimension_numbers = #tpu.dot_dimension_numbers<[1], [0], [0], [1], [0, 0, 1, 1], [], []>} : vector<32x32xf32>, vector<32x1024xf32>, vector<32x1024xf32> -> vector<32x1024xf32>
    %115 = arith.addf %97, %114 : vector<32x1024xf32>
    %c29_i32 = arith.constant 29 : i32
    %116 = tpu.dynamic_rotate %19 by %c29_i32 dim 0 : vector<32x32xf32>, i32 -> vector<32x32xf32>
    %c3_i32_48 = arith.constant 3 : i32
    %117 = vector.broadcast %c3_i32_48 : i32 to vector<32x1xi32>
    %118 = arith.addi %20, %117 : vector<32x1xi32>
    %c0_i32_49 = arith.constant 0 : i32
    %119 = vector.broadcast %c0_i32_49 : i32 to vector<32x1xi32>
    %120 = arith.cmpi sge, %118, %119 : vector<32x1xi32>
    %c3_i32_50 = arith.constant 3 : i32
    %121 = vector.broadcast %c3_i32_50 : i32 to vector<32x1xi32>
    %122 = arith.addi %20, %121 : vector<32x1xi32>
    %c32_i32_51 = arith.constant 32 : i32
    %123 = vector.broadcast %c32_i32_51 : i32 to vector<32x1xi32>
    %124 = arith.cmpi slt, %122, %123 : vector<32x1xi32>
    %125 = arith.andi %120, %124 : vector<32x1xi1>
    %cst_52 = arith.constant 0.000000e+00 : f32
    %126 = vector.shape_cast %125 : vector<32x1xi1> to vector<32x1xi1>
    %127 = vector.broadcast %126 : vector<32x1xi1> to vector<32x32xi1>
    %128 = vector.broadcast %cst_52 : f32 to vector<32x32xf32>
    %129 = arith.select %127, %116, %128 : vector<32x32xi1>, vector<32x32xf32>
    %c6 = arith.constant 6 : index
    %c0_53 = arith.constant 0 : index
    %c0_54 = arith.constant 0 : index
    %130 = vector.load %arg3[%c6, %c0_53, %c0_54] : memref<7x32x1024xf32, #tpu.memory_space<vmem>>, vector<1x32x1024xf32>
    %131 = vector.shape_cast %130 : vector<1x32x1024xf32> to vector<32x1024xf32>
    %cst_55 = arith.constant dense<0.000000e+00> : vector<32x1024xf32>
    %132 = tpu.matmul %129, %131, %cst_55 {dimension_numbers = #tpu.dot_dimension_numbers<[1], [0], [0], [1], [0, 0, 1, 1], [], []>} : vector<32x32xf32>, vector<32x1024xf32>, vector<32x1024xf32> -> vector<32x1024xf32>
    %133 = arith.addf %115, %132 : vector<32x1024xf32>
    %c0_56 = arith.constant 0 : index
    %c0_57 = arith.constant 0 : index
    %134 = vector.load %arg4[%c0_56, %c0_57] : memref<1x1024xf32, #tpu.memory_space<vmem>>, vector<1x1024xf32>
    %135 = vector.broadcast %134 : vector<1x1024xf32> to vector<32x1024xf32>
    %136 = arith.addf %133, %135 : vector<32x1024xf32>
    %cst_58 = arith.constant 0.000000e+00 : f32
    %137 = vector.broadcast %cst_58 : f32 to vector<32x1024xf32>
    %138 = arith.maximumf %136, %137 : vector<32x1024xf32>
    %139 = vector.extract_strided_slice %138 {offsets = [0, 0], sizes = [32, 256], strides = [1, 1]} : vector<32x1024xf32> to vector<32x256xf32>
    %140 = vector.extract_strided_slice %138 {offsets = [0, 256], sizes = [32, 256], strides = [1, 1]} : vector<32x1024xf32> to vector<32x256xf32>
    %141 = arith.maximumf %139, %140 : vector<32x256xf32>
    %142 = vector.extract_strided_slice %138 {offsets = [0, 512], sizes = [32, 256], strides = [1, 1]} : vector<32x1024xf32> to vector<32x256xf32>
    %143 = vector.extract_strided_slice %138 {offsets = [0, 768], sizes = [32, 256], strides = [1, 1]} : vector<32x1024xf32> to vector<32x256xf32>
    %144 = arith.maximumf %142, %143 : vector<32x256xf32>
    %145 = arith.maximumf %141, %144 : vector<32x256xf32>
    %cst_59 = arith.constant 0.000000e+00 : f32
    %146 = vector.broadcast %cst_59 : f32 to vector<32x512xf32>
    %c3_i32_60 = arith.constant 3 : i32
    %147 = tpu.dynamic_rotate %145 by %c3_i32_60 dim 0 : vector<32x256xf32>, i32 -> vector<32x256xf32>
    %c-3_i32_61 = arith.constant -3 : i32
    %148 = vector.broadcast %c-3_i32_61 : i32 to vector<32x1xi32>
    %149 = arith.addi %20, %148 : vector<32x1xi32>
    %c0_i32_62 = arith.constant 0 : i32
    %150 = vector.broadcast %c0_i32_62 : i32 to vector<32x1xi32>
    %151 = arith.cmpi sge, %149, %150 : vector<32x1xi32>
    %c-3_i32_63 = arith.constant -3 : i32
    %152 = vector.broadcast %c-3_i32_63 : i32 to vector<32x1xi32>
    %153 = arith.addi %20, %152 : vector<32x1xi32>
    %c32_i32_64 = arith.constant 32 : i32
    %154 = vector.broadcast %c32_i32_64 : i32 to vector<32x1xi32>
    %155 = arith.cmpi slt, %153, %154 : vector<32x1xi32>
    %156 = arith.andi %151, %155 : vector<32x1xi1>
    %cst_65 = arith.constant 0.000000e+00 : f32
    %157 = vector.shape_cast %156 : vector<32x1xi1> to vector<32x1xi1>
    %158 = vector.broadcast %157 : vector<32x1xi1> to vector<32x256xi1>
    %159 = vector.broadcast %cst_65 : f32 to vector<32x256xf32>
    %160 = arith.select %158, %147, %159 : vector<32x256xi1>, vector<32x256xf32>
    %c0_66 = arith.constant 0 : index
    %c0_67 = arith.constant 0 : index
    %c0_68 = arith.constant 0 : index
    %161 = vector.load %arg5[%c0_66, %c0_67, %c0_68] : memref<7x256x512xf32, #tpu.memory_space<vmem>>, vector<1x256x512xf32>
    %162 = vector.shape_cast %161 : vector<1x256x512xf32> to vector<256x512xf32>
    %cst_69 = arith.constant dense<0.000000e+00> : vector<32x512xf32>
    %163 = tpu.matmul %160, %162, %cst_69 {dimension_numbers = #tpu.dot_dimension_numbers<[1], [0], [0], [1], [0, 0, 1, 1], [], []>} : vector<32x256xf32>, vector<256x512xf32>, vector<32x512xf32> -> vector<32x512xf32>
    %164 = arith.addf %146, %163 : vector<32x512xf32>
    %c2_i32_70 = arith.constant 2 : i32
    %165 = tpu.dynamic_rotate %145 by %c2_i32_70 dim 0 : vector<32x256xf32>, i32 -> vector<32x256xf32>
    %c-2_i32_71 = arith.constant -2 : i32
    %166 = vector.broadcast %c-2_i32_71 : i32 to vector<32x1xi32>
    %167 = arith.addi %20, %166 : vector<32x1xi32>
    %c0_i32_72 = arith.constant 0 : i32
    %168 = vector.broadcast %c0_i32_72 : i32 to vector<32x1xi32>
    %169 = arith.cmpi sge, %167, %168 : vector<32x1xi32>
    %c-2_i32_73 = arith.constant -2 : i32
    %170 = vector.broadcast %c-2_i32_73 : i32 to vector<32x1xi32>
    %171 = arith.addi %20, %170 : vector<32x1xi32>
    %c32_i32_74 = arith.constant 32 : i32
    %172 = vector.broadcast %c32_i32_74 : i32 to vector<32x1xi32>
    %173 = arith.cmpi slt, %171, %172 : vector<32x1xi32>
    %174 = arith.andi %169, %173 : vector<32x1xi1>
    %cst_75 = arith.constant 0.000000e+00 : f32
    %175 = vector.shape_cast %174 : vector<32x1xi1> to vector<32x1xi1>
    %176 = vector.broadcast %175 : vector<32x1xi1> to vector<32x256xi1>
    %177 = vector.broadcast %cst_75 : f32 to vector<32x256xf32>
    %178 = arith.select %176, %165, %177 : vector<32x256xi1>, vector<32x256xf32>
    %c1_76 = arith.constant 1 : index
    %c0_77 = arith.constant 0 : index
    %c0_78 = arith.constant 0 : index
    %179 = vector.load %arg5[%c1_76, %c0_77, %c0_78] : memref<7x256x512xf32, #tpu.memory_space<vmem>>, vector<1x256x512xf32>
    %180 = vector.shape_cast %179 : vector<1x256x512xf32> to vector<256x512xf32>
    %cst_79 = arith.constant dense<0.000000e+00> : vector<32x512xf32>
    %181 = tpu.matmul %178, %180, %cst_79 {dimension_numbers = #tpu.dot_dimension_numbers<[1], [0], [0], [1], [0, 0, 1, 1], [], []>} : vector<32x256xf32>, vector<256x512xf32>, vector<32x512xf32> -> vector<32x512xf32>
    %182 = arith.addf %164, %181 : vector<32x512xf32>
    %c1_i32_80 = arith.constant 1 : i32
    %183 = tpu.dynamic_rotate %145 by %c1_i32_80 dim 0 : vector<32x256xf32>, i32 -> vector<32x256xf32>
    %c-1_i32_81 = arith.constant -1 : i32
    %184 = vector.broadcast %c-1_i32_81 : i32 to vector<32x1xi32>
    %185 = arith.addi %20, %184 : vector<32x1xi32>
    %c0_i32_82 = arith.constant 0 : i32
    %186 = vector.broadcast %c0_i32_82 : i32 to vector<32x1xi32>
    %187 = arith.cmpi sge, %185, %186 : vector<32x1xi32>
    %c-1_i32_83 = arith.constant -1 : i32
    %188 = vector.broadcast %c-1_i32_83 : i32 to vector<32x1xi32>
    %189 = arith.addi %20, %188 : vector<32x1xi32>
    %c32_i32_84 = arith.constant 32 : i32
    %190 = vector.broadcast %c32_i32_84 : i32 to vector<32x1xi32>
    %191 = arith.cmpi slt, %189, %190 : vector<32x1xi32>
    %192 = arith.andi %187, %191 : vector<32x1xi1>
    %cst_85 = arith.constant 0.000000e+00 : f32
    %193 = vector.shape_cast %192 : vector<32x1xi1> to vector<32x1xi1>
    %194 = vector.broadcast %193 : vector<32x1xi1> to vector<32x256xi1>
    %195 = vector.broadcast %cst_85 : f32 to vector<32x256xf32>
    %196 = arith.select %194, %183, %195 : vector<32x256xi1>, vector<32x256xf32>
    %c2_86 = arith.constant 2 : index
    %c0_87 = arith.constant 0 : index
    %c0_88 = arith.constant 0 : index
    %197 = vector.load %arg5[%c2_86, %c0_87, %c0_88] : memref<7x256x512xf32, #tpu.memory_space<vmem>>, vector<1x256x512xf32>
    %198 = vector.shape_cast %197 : vector<1x256x512xf32> to vector<256x512xf32>
    %cst_89 = arith.constant dense<0.000000e+00> : vector<32x512xf32>
    %199 = tpu.matmul %196, %198, %cst_89 {dimension_numbers = #tpu.dot_dimension_numbers<[1], [0], [0], [1], [0, 0, 1, 1], [], []>} : vector<32x256xf32>, vector<256x512xf32>, vector<32x512xf32> -> vector<32x512xf32>
    %200 = arith.addf %182, %199 : vector<32x512xf32>
    %c3_90 = arith.constant 3 : index
    %c0_91 = arith.constant 0 : index
    %c0_92 = arith.constant 0 : index
    %201 = vector.load %arg5[%c3_90, %c0_91, %c0_92] : memref<7x256x512xf32, #tpu.memory_space<vmem>>, vector<1x256x512xf32>
    %202 = vector.shape_cast %201 : vector<1x256x512xf32> to vector<256x512xf32>
    %cst_93 = arith.constant dense<0.000000e+00> : vector<32x512xf32>
    %203 = tpu.matmul %145, %202, %cst_93 {dimension_numbers = #tpu.dot_dimension_numbers<[1], [0], [0], [1], [0, 0, 1, 1], [], []>} : vector<32x256xf32>, vector<256x512xf32>, vector<32x512xf32> -> vector<32x512xf32>
    %204 = arith.addf %200, %203 : vector<32x512xf32>
    %c31_i32_94 = arith.constant 31 : i32
    %205 = tpu.dynamic_rotate %145 by %c31_i32_94 dim 0 : vector<32x256xf32>, i32 -> vector<32x256xf32>
    %c1_i32_95 = arith.constant 1 : i32
    %206 = vector.broadcast %c1_i32_95 : i32 to vector<32x1xi32>
    %207 = arith.addi %20, %206 : vector<32x1xi32>
    %c0_i32_96 = arith.constant 0 : i32
    %208 = vector.broadcast %c0_i32_96 : i32 to vector<32x1xi32>
    %209 = arith.cmpi sge, %207, %208 : vector<32x1xi32>
    %c1_i32_97 = arith.constant 1 : i32
    %210 = vector.broadcast %c1_i32_97 : i32 to vector<32x1xi32>
    %211 = arith.addi %20, %210 : vector<32x1xi32>
    %c32_i32_98 = arith.constant 32 : i32
    %212 = vector.broadcast %c32_i32_98 : i32 to vector<32x1xi32>
    %213 = arith.cmpi slt, %211, %212 : vector<32x1xi32>
    %214 = arith.andi %209, %213 : vector<32x1xi1>
    %cst_99 = arith.constant 0.000000e+00 : f32
    %215 = vector.shape_cast %214 : vector<32x1xi1> to vector<32x1xi1>
    %216 = vector.broadcast %215 : vector<32x1xi1> to vector<32x256xi1>
    %217 = vector.broadcast %cst_99 : f32 to vector<32x256xf32>
    %218 = arith.select %216, %205, %217 : vector<32x256xi1>, vector<32x256xf32>
    %c4_100 = arith.constant 4 : index
    %c0_101 = arith.constant 0 : index
    %c0_102 = arith.constant 0 : index
    %219 = vector.load %arg5[%c4_100, %c0_101, %c0_102] : memref<7x256x512xf32, #tpu.memory_space<vmem>>, vector<1x256x512xf32>
    %220 = vector.shape_cast %219 : vector<1x256x512xf32> to vector<256x512xf32>
    %cst_103 = arith.constant dense<0.000000e+00> : vector<32x512xf32>
    %221 = tpu.matmul %218, %220, %cst_103 {dimension_numbers = #tpu.dot_dimension_numbers<[1], [0], [0], [1], [0, 0, 1, 1], [], []>} : vector<32x256xf32>, vector<256x512xf32>, vector<32x512xf32> -> vector<32x512xf32>
    %222 = arith.addf %204, %221 : vector<32x512xf32>
    %c30_i32_104 = arith.constant 30 : i32
    %223 = tpu.dynamic_rotate %145 by %c30_i32_104 dim 0 : vector<32x256xf32>, i32 -> vector<32x256xf32>
    %c2_i32_105 = arith.constant 2 : i32
    %224 = vector.broadcast %c2_i32_105 : i32 to vector<32x1xi32>
    %225 = arith.addi %20, %224 : vector<32x1xi32>
    %c0_i32_106 = arith.constant 0 : i32
    %226 = vector.broadcast %c0_i32_106 : i32 to vector<32x1xi32>
    %227 = arith.cmpi sge, %225, %226 : vector<32x1xi32>
    %c2_i32_107 = arith.constant 2 : i32
    %228 = vector.broadcast %c2_i32_107 : i32 to vector<32x1xi32>
    %229 = arith.addi %20, %228 : vector<32x1xi32>
    %c32_i32_108 = arith.constant 32 : i32
    %230 = vector.broadcast %c32_i32_108 : i32 to vector<32x1xi32>
    %231 = arith.cmpi slt, %229, %230 : vector<32x1xi32>
    %232 = arith.andi %227, %231 : vector<32x1xi1>
    %cst_109 = arith.constant 0.000000e+00 : f32
    %233 = vector.shape_cast %232 : vector<32x1xi1> to vector<32x1xi1>
    %234 = vector.broadcast %233 : vector<32x1xi1> to vector<32x256xi1>
    %235 = vector.broadcast %cst_109 : f32 to vector<32x256xf32>
    %236 = arith.select %234, %223, %235 : vector<32x256xi1>, vector<32x256xf32>
    %c5_110 = arith.constant 5 : index
    %c0_111 = arith.constant 0 : index
    %c0_112 = arith.constant 0 : index
    %237 = vector.load %arg5[%c5_110, %c0_111, %c0_112] : memref<7x256x512xf32, #tpu.memory_space<vmem>>, vector<1x256x512xf32>
    %238 = vector.shape_cast %237 : vector<1x256x512xf32> to vector<256x512xf32>
    %cst_113 = arith.constant dense<0.000000e+00> : vector<32x512xf32>
    %239 = tpu.matmul %236, %238, %cst_113 {dimension_numbers = #tpu.dot_dimension_numbers<[1], [0], [0], [1], [0, 0, 1, 1], [], []>} : vector<32x256xf32>, vector<256x512xf32>, vector<32x512xf32> -> vector<32x512xf32>
    %240 = arith.addf %222, %239 : vector<32x512xf32>
    %c29_i32_114 = arith.constant 29 : i32
    %241 = tpu.dynamic_rotate %145 by %c29_i32_114 dim 0 : vector<32x256xf32>, i32 -> vector<32x256xf32>
    %c3_i32_115 = arith.constant 3 : i32
    %242 = vector.broadcast %c3_i32_115 : i32 to vector<32x1xi32>
    %243 = arith.addi %20, %242 : vector<32x1xi32>
    %c0_i32_116 = arith.constant 0 : i32
    %244 = vector.broadcast %c0_i32_116 : i32 to vector<32x1xi32>
    %245 = arith.cmpi sge, %243, %244 : vector<32x1xi32>
    %c3_i32_117 = arith.constant 3 : i32
    %246 = vector.broadcast %c3_i32_117 : i32 to vector<32x1xi32>
    %247 = arith.addi %20, %246 : vector<32x1xi32>
    %c32_i32_118 = arith.constant 32 : i32
    %248 = vector.broadcast %c32_i32_118 : i32 to vector<32x1xi32>
    %249 = arith.cmpi slt, %247, %248 : vector<32x1xi32>
    %250 = arith.andi %245, %249 : vector<32x1xi1>
    %cst_119 = arith.constant 0.000000e+00 : f32
    %251 = vector.shape_cast %250 : vector<32x1xi1> to vector<32x1xi1>
    %252 = vector.broadcast %251 : vector<32x1xi1> to vector<32x256xi1>
    %253 = vector.broadcast %cst_119 : f32 to vector<32x256xf32>
    %254 = arith.select %252, %241, %253 : vector<32x256xi1>, vector<32x256xf32>
    %c6_120 = arith.constant 6 : index
    %c0_121 = arith.constant 0 : index
    %c0_122 = arith.constant 0 : index
    %255 = vector.load %arg5[%c6_120, %c0_121, %c0_122] : memref<7x256x512xf32, #tpu.memory_space<vmem>>, vector<1x256x512xf32>
    %256 = vector.shape_cast %255 : vector<1x256x512xf32> to vector<256x512xf32>
    %cst_123 = arith.constant dense<0.000000e+00> : vector<32x512xf32>
    %257 = tpu.matmul %254, %256, %cst_123 {dimension_numbers = #tpu.dot_dimension_numbers<[1], [0], [0], [1], [0, 0, 1, 1], [], []>} : vector<32x256xf32>, vector<256x512xf32>, vector<32x512xf32> -> vector<32x512xf32>
    %258 = arith.addf %240, %257 : vector<32x512xf32>
    %c0_124 = arith.constant 0 : index
    %c0_125 = arith.constant 0 : index
    %259 = vector.load %arg6[%c0_124, %c0_125] : memref<1x512xf32, #tpu.memory_space<vmem>>, vector<1x512xf32>
    %260 = vector.broadcast %259 : vector<1x512xf32> to vector<32x512xf32>
    %261 = arith.addf %258, %260 : vector<32x512xf32>
    %cst_126 = arith.constant 0.000000e+00 : f32
    %262 = vector.broadcast %cst_126 : f32 to vector<32x512xf32>
    %263 = arith.maximumf %261, %262 : vector<32x512xf32>
    %264 = vector.extract_strided_slice %263 {offsets = [0, 0], sizes = [32, 128], strides = [1, 1]} : vector<32x512xf32> to vector<32x128xf32>
    %265 = vector.extract_strided_slice %263 {offsets = [0, 128], sizes = [32, 128], strides = [1, 1]} : vector<32x512xf32> to vector<32x128xf32>
    %266 = arith.maximumf %264, %265 : vector<32x128xf32>
    %267 = vector.extract_strided_slice %263 {offsets = [0, 256], sizes = [32, 128], strides = [1, 1]} : vector<32x512xf32> to vector<32x128xf32>
    %268 = vector.extract_strided_slice %263 {offsets = [0, 384], sizes = [32, 128], strides = [1, 1]} : vector<32x512xf32> to vector<32x128xf32>
    %269 = arith.maximumf %267, %268 : vector<32x128xf32>
    %270 = arith.maximumf %266, %269 : vector<32x128xf32>
    %cst_127 = arith.constant dense<0.000000e+00> : vector<128xf32>
    %271 = vector.multi_reduction <add>, %270, %cst_127 [0] : vector<32x128xf32> to vector<128xf32>
    %272 = vector.shape_cast %271 : vector<128xf32> to vector<1x128xf32>
    %c0_128 = arith.constant 0 : index
    %c0_129 = arith.constant 0 : index
    %273 = vector.load %arg7[%c0_128, %c0_129] : memref<128x64xf32, #tpu.memory_space<vmem>>, vector<128x64xf32>
    %cst_130 = arith.constant dense<0.000000e+00> : vector<1x64xf32>
    %274 = tpu.matmul %272, %273, %cst_130 {dimension_numbers = #tpu.dot_dimension_numbers<[1], [0], [0], [1], [0, 0, 1, 1], [], []>} : vector<1x128xf32>, vector<128x64xf32>, vector<1x64xf32> -> vector<1x64xf32>
    %c0_131 = arith.constant 0 : index
    %c0_132 = arith.constant 0 : index
    %275 = vector.load %arg8[%c0_131, %c0_132] : memref<1x64xf32, #tpu.memory_space<vmem>>, vector<1x64xf32>
    %276 = arith.addf %274, %275 : vector<1x64xf32>
    %c0_133 = arith.constant 0 : index
    %c0_134 = arith.constant 0 : index
    %277 = vector.load %arg9[%c0_133, %c0_134] : memref<64x1xf32, #tpu.memory_space<vmem>>, vector<64x1xf32>
    %cst_135 = arith.constant dense<0.000000e+00> : vector<1x1xf32>
    %278 = tpu.matmul %276, %277, %cst_135 {dimension_numbers = #tpu.dot_dimension_numbers<[1], [0], [0], [1], [0, 0, 1, 1], [], []>} : vector<1x64xf32>, vector<64x1xf32>, vector<1x1xf32> -> vector<1x1xf32>
    %c0_136 = arith.constant 0 : index
    %c0_137 = arith.constant 0 : index
    %279 = vector.load %arg10[%c0_136, %c0_137] : memref<1x1xf32, #tpu.memory_space<vmem>>, vector<1x1xf32>
    %280 = arith.addf %278, %279 : vector<1x1xf32>
    %c0_138 = arith.constant 0 : index
    %c0_139 = arith.constant 0 : index
    %281 = vector.load %arg11[%c0_138, %c0_139] : memref<1x1xf32, #tpu.memory_space<vmem>>, vector<1x1xf32>
    tpu.vector_store %arg11[%c0_138, %c0_139], %280 {strides = array<i32>} : memref<1x1xf32, #tpu.memory_space<vmem>>, vector<1x1xf32>,
    return
  }
}

</mosaic_0001>

<llo_original>
// kernel: discriminator_forward.1
$region0: #{discriminator_forward.1}
  #allocation0 [shape = 'u32[]', space=smem, size = 0x4, offset = 0x4, fixed_abs, tag = 'smem constant byte address 0x4 - core index']
  #allocation1 [shape = 'u32[144,128]{1,0:T(1,128)}', space=vmem, size = 0x12000, scoped, tag = 'internal scratch']
  #allocation2 [shape = 'f32[1,1]{1,0:T(1,128)S(1)}', space=vmem, size = 0x200, scoped, tag = 'scoped memory for discriminator_forward.1']
  %s0 = inlined_call_operand.vmem [shape: f32[32,32], index: 0, kind: input, shape index: {}]
  %s1 = inlined_call_operand.vmem [shape: f32[32,32], index: 1, kind: input, shape index: {}]
  %s2 = inlined_call_operand.vmem [shape: f32[32,32], index: 2, kind: input, shape index: {}]
  %s3 = inlined_call_operand.vmem [shape: f32[7,32,1024], index: 3, kind: input, shape index: {}]
  %s4 = inlined_call_operand.vmem [shape: f32[1,1024], index: 4, kind: input, shape index: {}]
  %s5 = inlined_call_operand.vmem [shape: f32[7,256,512], index: 5, kind: input, shape index: {}]
  %s6 = inlined_call_operand.vmem [shape: f32[1,512], index: 6, kind: input, shape index: {}]
  %s7 = inlined_call_operand.vmem [shape: f32[128,64], index: 7, kind: input, shape index: {}]
  %s8 = inlined_call_operand.vmem [shape: f32[1,64], index: 8, kind: input, shape index: {}]
  %s9 = inlined_call_operand.vmem [shape: f32[64,1], index: 9, kind: input, shape index: {}]
  %s10 = inlined_call_operand.<no memory space> [shape: f32[1,1], index: 10, kind: input, shape index: {}]
  %s11 = inlined_call_operand.hbm [shape: f32[1,1], index: 11, kind: output, shape index: {}]
  %s12 = sld [smem:[#allocation0]]
  $region54: #{discriminator_forward.1} parent=0
    _
  %s14 = ssub.s32 1, %s12
  %s15 = scalar_select 0, %s14, %s12
  %v16 = vstv %s10
  %17 = vst [vmem:[#allocation2] sm:$0x1] %v16
  $region1: #{discriminator_forward.1} parent=0
    #allocation3 [shape = 'u8[512]{0}', space=vmem, size = 0x400, scoped, tag = 'output window, operand 0, single buffered']
    #allocation4 [shape = 's32[1]{0}', space=sflag, size = 0x4, scoped, tag = 'scoped memory for discriminator_forward.1']
    %18 = vsyncpa [#allocation4], 0
    // Predicated region
    $region2: #{discriminator_forward.1} parent=1 // pred_check
      _
    $region3: #{discriminator_forward.1} parent=1 // pred_check_branch
      %20 = sbr.rel (0) target = $region5
    $region4: #{discriminator_forward.1} parent=1 // pred_region
      _
    $region5: #{discriminator_forward.1} parent=1 // pred_fallthru
      _
    // Predicated region
    $region6: #{discriminator_forward.1} parent=1 // pred_check
      _
    $region7: #{discriminator_forward.1} parent=1 // pred_check_branch
      %22 = sbr.rel (0) target = $region9
    $region8: #{discriminator_forward.1} parent=1 // pred_region
      _
    $region9: #{discriminator_forward.1} parent=1 // pred_fallthru
      _
    // Predicated region
    $region10: #{discriminator_forward.1} parent=1 // pred_check
      _
    $region11: #{discriminator_forward.1} parent=1 // pred_check_branch
      %24 = sbr.rel (0) target = $region13
    $region12: #{discriminator_forward.1} parent=1 // pred_region
      _
    $region13: #{discriminator_forward.1} parent=1 // pred_fallthru
      _
    // Predicated region
    $region14: #{discriminator_forward.1} parent=1 // pred_check
      _
    $region15: #{discriminator_forward.1} parent=1 // pred_check_branch
      %26 = sbr.rel (0) target = $region17
    $region16: #{discriminator_forward.1} parent=1 // pred_region
      _
    $region17: #{discriminator_forward.1} parent=1 // pred_fallthru
      _
    // Predicated region
    $region18: #{discriminator_forward.1} parent=1 // pred_check
      _
    $region19: #{discriminator_forward.1} parent=1 // pred_check_branch
      %28 = sbr.rel (0) target = $region21
    $region20: #{discriminator_forward.1} parent=1 // pred_region
      _
    $region21: #{discriminator_forward.1} parent=1 // pred_fallthru
      _
    // Predicated region
    $region22: #{discriminator_forward.1} parent=1 // pred_check
      _
    $region23: #{discriminator_forward.1} parent=1 // pred_check_branch
      %30 = sbr.rel (0) target = $region25
    $region24: #{discriminator_forward.1} parent=1 // pred_region
      _
    $region25: #{discriminator_forward.1} parent=1 // pred_fallthru
      _
    // Predicated region
    $region26: #{discriminator_forward.1} parent=1 // pred_check
      _
    $region27: #{discriminator_forward.1} parent=1 // pred_check_branch
      %32 = sbr.rel (0) target = $region29
    $region28: #{discriminator_forward.1} parent=1 // pred_region
      _
    $region29: #{discriminator_forward.1} parent=1 // pred_fallthru
      _
    // Predicated region
    $region30: #{discriminator_forward.1} parent=1 // pred_check
      _
    $region31: #{discriminator_forward.1} parent=1 // pred_check_branch
      %34 = sbr.rel (0) target = $region33
    $region32: #{discriminator_forward.1} parent=1 // pred_region
      _
    $region33: #{discriminator_forward.1} parent=1 // pred_fallthru
      _
    // Predicated region
    $region34: #{discriminator_forward.1} parent=1 // pred_check
      _
    $region35: #{discriminator_forward.1} parent=1 // pred_check_branch
      %36 = sbr.rel (0) target = $region37
    $region36: #{discriminator_forward.1} parent=1 // pred_region
      _
    $region37: #{discriminator_forward.1} parent=1 // pred_fallthru
      _
    // Predicated region
    $region38: #{discriminator_forward.1} parent=1 // pred_check
      _
    $region39: #{discriminator_forward.1} parent=1 // pred_check_branch
      %38 = sbr.rel (0) target = $region41
    $region40: #{discriminator_forward.1} parent=1 // pred_region
      _
    $region41: #{discriminator_forward.1} parent=1 // pred_fallthru
      _
    // Predicated region
    $region42: #{discriminator_forward.1} parent=1 // pred_check
      _
    $region43: #{discriminator_forward.1} parent=1 // pred_check_branch
      %40 = sbr.rel (0) target = $region45
    $region44: #{discriminator_forward.1} parent=1 // pred_region
      _
    $region45: #{discriminator_forward.1} parent=1 // pred_fallthru
      _
    %v41 = vld [vmem:[%s2] sm:$0xff]
    %v42 = vld [vmem:[%s2 + $0x8] sm:$0xff]
    %v43 = vld [vmem:[%s2 + $0x10] sm:$0xff]
    %v44 = vld [vmem:[%s2 + $0x18] sm:$0xff]
    %v45 = vlaneseq
    %v46 = vshrl.u32 %v45, 7
    %v47 = vadd.s32 %v46, 8
    %v48 = vadd.s32 %v46, 16
    %v49 = vadd.s32 %v46, 24
    %v50 = vlaneseq
    %v51 = vand.u32 %v50, 127
    %v52 = vld [vmem:[%s0] sm:$0xff]
    %v53 = vld [vmem:[%s0 + $0x8] sm:$0xff]
    %v54 = vld [vmem:[%s0 + $0x10] sm:$0xff]
    %v55 = vld [vmem:[%s0 + $0x18] sm:$0xff]
    %vm56 = vcmp.eq.s32.totalorder %v46, %v51
    %vm57 = vcmp.eq.s32.totalorder %v47, %v51
    %vm58 = vcmp.eq.s32.totalorder %v48, %v51
    %vm59 = vcmp.eq.s32.totalorder %v49, %v51
    %60 = vxpose.xlu0.b32.start [1/16] %v52, 128
    %61 = vxpose.xlu0.b32.cont [2/16] %v53, 128
    %62 = vxpose.xlu0.b32.cont [3/16] %v54, 128
    %63 = vxpose.xlu0.b32.cont [4/16] %v55, 128
    %64 = vxpose.xlu0.b32.cont [5/16] 0.0, 128
    %65 = vxpose.xlu0.b32.cont [6/16] 0.0, 128
    %66 = vxpose.xlu0.b32.cont [7/16] 0.0, 128
    %67 = vxpose.xlu0.b32.cont [8/16] 0.0, 128
    %68 = vxpose.xlu0.b32.cont [9/16] 0.0, 128
    %69 = vxpose.xlu0.b32.cont [10/16] 0.0, 128
    %70 = vxpose.xlu0.b32.cont [11/16] 0.0, 128
    %71 = vxpose.xlu0.b32.cont [12/16] 0.0, 128
    %72 = vxpose.xlu0.b32.cont [13/16] 0.0, 128
    %73 = vxpose.xlu0.b32.cont [14/16] 0.0, 128
    %74 = vxpose.xlu0.b32.cont [15/16] 0.0, 128
    %75 = vxpose.xlu0.b32.end [16/16] 0.0, 128
    %v76 = vpop.trf.xlu0
    %v77 = vpop.trf.xlu0
    %v78 = vpop.trf.xlu0
    %v79 = vpop.trf.xlu0
    %v80 = vpop.trf.xlu0
    %v81 = vpop.trf.xlu0
    %v82 = vpop.trf.xlu0
    %v83 = vpop.trf.xlu0
    %v84 = vpop.trf.xlu0
    %v85 = vpop.trf.xlu0
    %v86 = vpop.trf.xlu0
    %v87 = vpop.trf.xlu0
    %v88 = vpop.trf.xlu0
    %v89 = vpop.trf.xlu0
    %v90 = vpop.trf.xlu0
    %v91 = vpop.trf.xlu0
    %v92 = vadd.f32 %v52, %v76
    %v93 = vadd.f32 %v53, %v77
    %v94 = vadd.f32 %v54, %v78
    %v95 = vadd.f32 %v55, %v79
    %v96 = vsel %vm56, %v52, %v92
    %v97 = vsel %vm57, %v53, %v93
    %v98 = vsel %vm58, %v54, %v94
    %v99 = vsel %vm59, %v55, %v95
    %vm100 = vcmask 261120
    %v102 = vsel %vm100, %v41, 0
    %v105 = vsel %vm100, %v42, 0
    %v108 = vsel %vm100, %v43, 0
    %v111 = vsel %vm100, %v44, 0
    %113 = vmatprep.subr.mxu0 0.0
    %114 = vmatpush1.msra.mxu0 %v96
    %115 = vmatprep.subr.mxu0 0.0
    %116 = vmatpush1.msra.mxu0 %v97
    %117 = vmatprep.subr.mxu0 0.0
    %118 = vmatpush1.msra.mxu0 %v98
    %119 = vmatprep.subr.mxu0 0.0
    %120 = vmatpush1.msra.mxu0 %v99
    %121 = vmatprep.subr.mxu0 0.0
    %122 = vmatpush1.msra.mxu0 0.0
    %123 = vmatprep.subr.mxu0 0.0
    %124 = vmatpush1.msra.mxu0 0.0
    %125 = vmatprep.subr.mxu0 0.0
    %126 = vmatpush1.msra.mxu0 0.0
    %127 = vmatprep.subr.mxu0 0.0
    %128 = vmatpush1.msra.mxu0 0.0
    %129 = vmatprep.subr.mxu0 0.0
    %130 = vmatpush1.msra.mxu0 0.0
    %131 = vmatprep.subr.mxu0 0.0
    %132 = vmatpush1.msra.mxu0 0.0
    %133 = vmatprep.subr.mxu0 0.0
    %134 = vmatpush1.msra.mxu0 0.0
    %135 = vmatprep.subr.mxu0 0.0
    %136 = vmatpush1.msra.mxu0 0.0
    %137 = vmatprep.subr.mxu0 0.0
    %138 = vmatpush1.msra.mxu0 0.0
    %139 = vmatprep.subr.mxu0 0.0
    %140 = vmatpush1.msra.mxu0 0.0
    %141 = vmatprep.subr.mxu0 0.0
    %142 = vmatpush1.msra.mxu0 0.0
    %143 = vmatprep.subr.mxu0 0.0
    %144 = vmatpush1.msra.mxu0 0.0
    %145 = vmatprep.subr.mxu0 0.0
    %146 = vmatpush1.msra.mxu0 0.0
    %147 = vmatprep.subr.mxu0 0.0
    %148 = vmatpush1.msra.mxu0 0.0
    %149 = vmatprep.subr.mxu0 0.0
    %150 = vmatpush1.msra.mxu0 0.0
    %151 = vmatprep.subr.mxu0 0.0
    %152 = vmatpush1.msra.mxu0 0.0
    %153 = vmatprep.subr.mxu0 0.0
    %154 = vmatpush1.msra.mxu0 0.0
    %155 = vmatprep.subr.mxu0 0.0
    %156 = vmatpush1.msra.mxu0 0.0
    %157 = vmatprep.subr.mxu0 0.0
    %158 = vmatpush1.msra.mxu0 0.0
    %159 = vmatprep.subr.mxu0 0.0
    %160 = vmatpush1.msra.mxu0 0.0
    %161 = vmatprep.subr.mxu0 0.0
    %162 = vmatpush1.msra.mxu0 0.0
    %163 = vmatprep.subr.mxu0 0.0
    %164 = vmatpush1.msra.mxu0 0.0
    %165 = vmatprep.subr.mxu0 0.0
    %166 = vmatpush1.msra.mxu0 0.0
    %167 = vmatprep.subr.mxu0 0.0
    %168 = vmatpush1.msra.mxu0 0.0
    %169 = vmatprep.subr.mxu0 0.0
    %170 = vmatpush1.msra.mxu0 0.0
    %171 = vmatprep.subr.mxu0 0.0
    %172 = vmatpush1.msra.mxu0 0.0
    %173 = vmatprep.subr.mxu0 0.0
    %174 = vmatpush1.msra.mxu0 0.0
    %175 = vmatprep.subr.mxu0 0.0
    %176 = vmatpush1.msra.mxu0 0.0
    %177 = vmatprep.mubr.f32.mxu0 0.0
    %178 = vmatmul.mubr.f32.gmra.mrb[0].mxu0 %v102
    %v179 = vpop.f32.mrb[0].mxu0
    %v180 = vadd.f32 0.0, %v179
    %v181 = vpop.f32.mrb[0].mxu0
    %182 = vmatprep.mubr.f32.mxu0 0.0
    %183 = vmatmul.mubr.f32.gmra.mrb[0].mxu0 %v105
    %v184 = vpop.f32.mrb[0].mxu0
    %v185 = vadd.f32 0.0, %v184
    %v186 = vpop.f32.mrb[0].mxu0
    %187 = vmatprep.mubr.f32.mxu0 0.0
    %188 = vmatmul.mubr.f32.gmra.mrb[0].mxu0 %v108
    %v189 = vpop.f32.mrb[0].mxu0
    %v190 = vadd.f32 0.0, %v189
    %v191 = vpop.f32.mrb[0].mxu0
    %192 = vmatprep.mubr.f32.mxu0 0.0
    %193 = vmatmul.mubr.f32.gmra.mrb[0].mxu0 %v111
    %v194 = vpop.f32.mrb[0].mxu0
    %v195 = vadd.f32 0.0, %v194
    %v196 = vpop.f32.mrb[0].mxu0
    %197 = vdwg.mxu0
    %v199 = vsel %vm100, %v180, 0
    %v202 = vsel %vm100, %v185, 0
    %v205 = vsel %vm100, %v190, 0
    %v208 = vsel %vm100, %v195, 0
    %210 = vmatprep.subr.mxu0 0.0
    %211 = vmatpush1.xpose.msra.mxu0 %v102
    %212 = vmatprep.subr.mxu0 0.0
    %213 = vmatpush1.xpose.msra.mxu0 %v105
    %214 = vmatprep.subr.mxu0 0.0
    %215 = vmatpush1.xpose.msra.mxu0 %v108
    %216 = vmatprep.subr.mxu0 0.0
    %217 = vmatpush1.xpose.msra.mxu0 %v111
    %218 = vmatprep.subr.mxu0 0.0
    %219 = vmatpush1.xpose.msra.mxu0 0.0
    %220 = vmatprep.subr.mxu0 0.0
    %221 = vmatpush1.xpose.msra.mxu0 0.0
    %222 = vmatprep.subr.mxu0 0.0
    %223 = vmatpush1.xpose.msra.mxu0 0.0
    %224 = vmatprep.subr.mxu0 0.0
    %225 = vmatpush1.xpose.msra.mxu0 0.0
    %226 = vmatprep.subr.mxu0 0.0
    %227 = vmatpush1.xpose.msra.mxu0 0.0
    %228 = vmatprep.subr.mxu0 0.0
    %229 = vmatpush1.xpose.msra.mxu0 0.0
    %230 = vmatprep.subr.mxu0 0.0
    %231 = vmatpush1.xpose.msra.mxu0 0.0
    %232 = vmatprep.subr.mxu0 0.0
    %233 = vmatpush1.xpose.msra.mxu0 0.0
    %234 = vmatprep.subr.mxu0 0.0
    %235 = vmatpush1.xpose.msra.mxu0 0.0
    %236 = vmatprep.subr.mxu0 0.0
    %237 = vmatpush1.xpose.msra.mxu0 0.0
    %238 = vmatprep.subr.mxu0 0.0
    %239 = vmatpush1.xpose.msra.mxu0 0.0
    %240 = vmatprep.subr.mxu0 0.0
    %241 = vmatpush1.xpose.msra.mxu0 0.0
    %242 = vmatprep.subr.mxu0 0.0
    %243 = vmatpush1.xpose.msra.mxu0 0.0
    %244 = vmatprep.subr.mxu0 0.0
    %245 = vmatpush1.xpose.msra.mxu0 0.0
    %246 = vmatprep.subr.mxu0 0.0
    %247 = vmatpush1.xpose.msra.mxu0 0.0
    %248 = vmatprep.subr.mxu0 0.0
    %249 = vmatpush1.xpose.msra.mxu0 0.0
    %250 = vmatprep.subr.mxu0 0.0
    %251 = vmatpush1.xpose.msra.mxu0 0.0
    %252 = vmatprep.subr.mxu0 0.0
    %253 = vmatpush1.xpose.msra.mxu0 0.0
    %254 = vmatprep.subr.mxu0 0.0
    %255 = vmatpush1.xpose.msra.mxu0 0.0
    %256 = vmatprep.subr.mxu0 0.0
    %257 = vmatpush1.xpose.msra.mxu0 0.0
    %258 = vmatprep.subr.mxu0 0.0
    %259 = vmatpush1.xpose.msra.mxu0 0.0
    %260 = vmatprep.subr.mxu0 0.0
    %261 = vmatpush1.xpose.msra.mxu0 0.0
    %262 = vmatprep.subr.mxu0 0.0
    %263 = vmatpush1.xpose.msra.mxu0 0.0
    %264 = vmatprep.subr.mxu0 0.0
    %265 = vmatpush1.xpose.msra.mxu0 0.0
    %266 = vmatprep.subr.mxu0 0.0
    %267 = vmatpush1.xpose.msra.mxu0 0.0
    %268 = vmatprep.subr.mxu0 0.0
    %269 = vmatpush1.xpose.msra.mxu0 0.0
    %270 = vmatprep.subr.mxu0 0.0
    %271 = vmatpush1.xpose.msra.mxu0 0.0
    %272 = vmatprep.subr.mxu0 0.0
    %273 = vmatpush1.xpose.msra.mxu0 0.0
    %274 = vmatprep.mubr.f32.mxu0 0.0
    %275 = vmatmul.mubr.f32.gmra.mrb[0].mxu0 %v199
    %v276 = vpop.f32.mrb[0].mxu0
    %v277 = vadd.f32 0.0, %v276
    %v278 = vpop.f32.mrb[0].mxu0
    %279 = vmatprep.mubr.f32.mxu0 0.0
    %280 = vmatmul.mubr.f32.gmra.mrb[0].mxu0 %v202
    %v281 = vpop.f32.mrb[0].mxu0
    %v282 = vadd.f32 0.0, %v281
    %v283 = vpop.f32.mrb[0].mxu0
    %284 = vmatprep.mubr.f32.mxu0 0.0
    %285 = vmatmul.mubr.f32.gmra.mrb[0].mxu0 %v205
    %v286 = vpop.f32.mrb[0].mxu0
    %v287 = vadd.f32 0.0, %v286
    %v288 = vpop.f32.mrb[0].mxu0
    %289 = vmatprep.mubr.f32.mxu0 0.0
    %290 = vmatmul.mubr.f32.gmra.mrb[0].mxu0 %v208
    %v291 = vpop.f32.mrb[0].mxu0
    %v292 = vadd.f32 0.0, %v291
    %v293 = vpop.f32.mrb[0].mxu0
    %294 = vdwg.mxu0
    %v295 = vld [vmem:[%s1] sm:$0xff]
    %v296 = vld [vmem:[%s1 + $0x8] sm:$0xff]
    %v297 = vld [vmem:[%s1 + $0x10] sm:$0xff]
    %v298 = vld [vmem:[%s1 + $0x18] sm:$0xff]
    %299 = vxpose.xlu0.b32.start [1/16] %v295, 128
    %300 = vxpose.xlu0.b32.cont [2/16] %v296, 128
    %301 = vxpose.xlu0.b32.cont [3/16] %v297, 128
    %302 = vxpose.xlu0.b32.cont [4/16] %v298, 128
    %303 = vxpose.xlu0.b32.cont [5/16] 0.0, 128
    %304 = vxpose.xlu0.b32.cont [6/16] 0.0, 128
    %305 = vxpose.xlu0.b32.cont [7/16] 0.0, 128
    %306 = vxpose.xlu0.b32.cont [8/16] 0.0, 128
    %307 = vxpose.xlu0.b32.cont [9/16] 0.0, 128
    %308 = vxpose.xlu0.b32.cont [10/16] 0.0, 128
    %309 = vxpose.xlu0.b32.cont [11/16] 0.0, 128
    %310 = vxpose.xlu0.b32.cont [12/16] 0.0, 128
    %311 = vxpose.xlu0.b32.cont [13/16] 0.0, 128
    %312 = vxpose.xlu0.b32.cont [14/16] 0.0, 128
    %313 = vxpose.xlu0.b32.cont [15/16] 0.0, 128
    %314 = vxpose.xlu0.b32.end [16/16] 0.0, 128
    %v315 = vpop.trf.xlu0
    %v316 = vpop.trf.xlu0
    %v317 = vpop.trf.xlu0
    %v318 = vpop.trf.xlu0
    %v319 = vpop.trf.xlu0
    %v320 = vpop.trf.xlu0
    %v321 = vpop.trf.xlu0
    %v322 = vpop.trf.xlu0
    %v323 = vpop.trf.xlu0
    %v324 = vpop.trf.xlu0
    %v325 = vpop.trf.xlu0
    %v326 = vpop.trf.xlu0
    %v327 = vpop.trf.xlu0
    %v328 = vpop.trf.xlu0
    %v329 = vpop.trf.xlu0
    %v330 = vpop.trf.xlu0
    %v331 = vadd.f32 %v295, %v315
    %v332 = vadd.f32 %v296, %v316
    %v333 = vadd.f32 %v297, %v317
    %v334 = vadd.f32 %v298, %v318
    %v335 = vsel %vm56, %v295, %v331
    %v336 = vsel %vm57, %v296, %v332
    %v337 = vsel %vm58, %v297, %v333
    %v338 = vsel %vm59, %v298, %v334
    %339 = vmatprep.subr.mxu0 0.0
    %340 = vmatpush1.msra.mxu0 %v335
    %341 = vmatprep.subr.mxu0 0.0
    %342 = vmatpush1.msra.mxu0 %v336
    %343 = vmatprep.subr.mxu0 0.0
    %344 = vmatpush1.msra.mxu0 %v337
    %345 = vmatprep.subr.mxu0 0.0
    %346 = vmatpush1.msra.mxu0 %v338
    %347 = vmatprep.subr.mxu0 0.0
    %348 = vmatpush1.msra.mxu0 0.0
    %349 = vmatprep.subr.mxu0 0.0
    %350 = vmatpush1.msra.mxu0 0.0
    %351 = vmatprep.subr.mxu0 0.0
    %352 = vmatpush1.msra.mxu0 0.0
    %353 = vmatprep.subr.mxu0 0.0
    %354 = vmatpush1.msra.mxu0 0.0
    %355 = vmatprep.subr.mxu0 0.0
    %356 = vmatpush1.msra.mxu0 0.0
    %357 = vmatprep.subr.mxu0 0.0
    %358 = vmatpush1.msra.mxu0 0.0
    %359 = vmatprep.subr.mxu0 0.0
    %360 = vmatpush1.msra.mxu0 0.0
    %361 = vmatprep.subr.mxu0 0.0
    %362 = vmatpush1.msra.mxu0 0.0
    %363 = vmatprep.subr.mxu0 0.0
    %364 = vmatpush1.msra.mxu0 0.0
    %365 = vmatprep.subr.mxu0 0.0
    %366 = vmatpush1.msra.mxu0 0.0
    %367 = vmatprep.subr.mxu0 0.0
    %368 = vmatpush1.msra.mxu0 0.0
    %369 = vmatprep.subr.mxu0 0.0
    %370 = vmatpush1.msra.mxu0 0.0
    %371 = vmatprep.subr.mxu0 0.0
    %372 = vmatpush1.msra.mxu0 0.0
    %373 = vmatprep.subr.mxu0 0.0
    %374 = vmatpush1.msra.mxu0 0.0
    %375 = vmatprep.subr.mxu0 0.0
    %376 = vmatpush1.msra.mxu0 0.0
    %377 = vmatprep.subr.mxu0 0.0
    %378 = vmatpush1.msra.mxu0 0.0
    %379 = vmatprep.subr.mxu0 0.0
    %380 = vmatpush1.msra.mxu0 0.0
    %381 = vmatprep.subr.mxu0 0.0
    %382 = vmatpush1.msra.mxu0 0.0
    %383 = vmatprep.subr.mxu0 0.0
    %384 = vmatpush1.msra.mxu0 0.0
    %385 = vmatprep.subr.mxu0 0.0
    %386 = vmatpush1.msra.mxu0 0.0
    %387 = vmatprep.subr.mxu0 0.0
    %388 = vmatpush1.msra.mxu0 0.0
    %389 = vmatprep.subr.mxu0 0.0
    %390 = vmatpush1.msra.mxu0 0.0
    %391 = vmatprep.subr.mxu0 0.0
    %392 = vmatpush1.msra.mxu0 0.0
    %393 = vmatprep.subr.mxu0 0.0
    %394 = vmatpush1.msra.mxu0 0.0
    %395 = vmatprep.subr.mxu0 0.0
    %396 = vmatpush1.msra.mxu0 0.0
    %397 = vmatprep.subr.mxu0 0.0
    %398 = vmatpush1.msra.mxu0 0.0
    %399 = vmatprep.subr.mxu0 0.0
    %400 = vmatpush1.msra.mxu0 0.0
    %401 = vmatprep.subr.mxu0 0.0
    %402 = vmatpush1.msra.mxu0 0.0
    %403 = vmatprep.mubr.f32.mxu0 0.0
    %404 = vmatmul.mubr.f32.gmra.mrb[0].mxu0 %v102
    %v405 = vpop.f32.mrb[0].mxu0
    %v406 = vadd.f32 0.0, %v405
    %v407 = vpop.f32.mrb[0].mxu0
    %408 = vmatprep.mubr.f32.mxu0 0.0
    %409 = vmatmul.mubr.f32.gmra.mrb[0].mxu0 %v105
    %v410 = vpop.f32.mrb[0].mxu0
    %v411 = vadd.f32 0.0, %v410
    %v412 = vpop.f32.mrb[0].mxu0
    %413 = vmatprep.mubr.f32.mxu0 0.0
    %414 = vmatmul.mubr.f32.gmra.mrb[0].mxu0 %v108
    %v415 = vpop.f32.mrb[0].mxu0
    %v416 = vadd.f32 0.0, %v415
    %v417 = vpop.f32.mrb[0].mxu0
    %418 = vmatprep.mubr.f32.mxu0 0.0
    %419 = vmatmul.mubr.f32.gmra.mrb[0].mxu0 %v111
    %v420 = vpop.f32.mrb[0].mxu0
    %v421 = vadd.f32 0.0, %v420
    %v422 = vpop.f32.mrb[0].mxu0
    %423 = vdwg.mxu0
    %v425 = vsel %vm100, %v406, 0
    %v428 = vsel %vm100, %v411, 0
    %v431 = vsel %vm100, %v416, 0
    %v434 = vsel %vm100, %v421, 0
    %436 = vmatprep.subr.mxu0 0.0
    %437 = vmatpush1.xpose.msra.mxu0 %v102
    %438 = vmatprep.subr.mxu0 0.0
    %439 = vmatpush1.xpose.msra.mxu0 %v105
    %440 = vmatprep.subr.mxu0 0.0
    %441 = vmatpush1.xpose.msra.mxu0 %v108
    %442 = vmatprep.subr.mxu0 0.0
    %443 = vmatpush1.xpose.msra.mxu0 %v111
    %444 = vmatprep.subr.mxu0 0.0
    %445 = vmatpush1.xpose.msra.mxu0 0.0
    %446 = vmatprep.subr.mxu0 0.0
    %447 = vmatpush1.xpose.msra.mxu0 0.0
    %448 = vmatprep.subr.mxu0 0.0
    %449 = vmatpush1.xpose.msra.mxu0 0.0
    %450 = vmatprep.subr.mxu0 0.0
    %451 = vmatpush1.xpose.msra.mxu0 0.0
    %452 = vmatprep.subr.mxu0 0.0
    %453 = vmatpush1.xpose.msra.mxu0 0.0
    %454 = vmatprep.subr.mxu0 0.0
    %455 = vmatpush1.xpose.msra.mxu0 0.0
    %456 = vmatprep.subr.mxu0 0.0
    %457 = vmatpush1.xpose.msra.mxu0 0.0
    %458 = vmatprep.subr.mxu0 0.0
    %459 = vmatpush1.xpose.msra.mxu0 0.0
    %460 = vmatprep.subr.mxu0 0.0
    %461 = vmatpush1.xpose.msra.mxu0 0.0
    %462 = vmatprep.subr.mxu0 0.0
    %463 = vmatpush1.xpose.msra.mxu0 0.0
    %464 = vmatprep.subr.mxu0 0.0
    %465 = vmatpush1.xpose.msra.mxu0 0.0
    %466 = vmatprep.subr.mxu0 0.0
    %467 = vmatpush1.xpose.msra.mxu0 0.0
    %468 = vmatprep.subr.mxu0 0.0
    %469 = vmatpush1.xpose.msra.mxu0 0.0
    %470 = vmatprep.subr.mxu0 0.0
    %471 = vmatpush1.xpose.msra.mxu0 0.0
    %472 = vmatprep.subr.mxu0 0.0
    %473 = vmatpush1.xpose.msra.mxu0 0.0
    %474 = vmatprep.subr.mxu0 0.0
    %475 = vmatpush1.xpose.msra.mxu0 0.0
    %476 = vmatprep.subr.mxu0 0.0
    %477 = vmatpush1.xpose.msra.mxu0 0.0
    %478 = vmatprep.subr.mxu0 0.0
    %479 = vmatpush1.xpose.msra.mxu0 0.0
    %480 = vmatprep.subr.mxu0 0.0
    %481 = vmatpush1.xpose.msra.mxu0 0.0
    %482 = vmatprep.subr.mxu0 0.0
    %483 = vmatpush1.xpose.msra.mxu0 0.0
    %484 = vmatprep.subr.mxu0 0.0
    %485 = vmatpush1.xpose.msra.mxu0 0.0
    %486 = vmatprep.subr.mxu0 0.0
    %487 = vmatpush1.xpose.msra.mxu0 0.0
    %488 = vmatprep.subr.mxu0 0.0
    %489 = vmatpush1.xpose.msra.mxu0 0.0
    %490 = vmatprep.subr.mxu0 0.0
    %491 = vmatpush1.xpose.msra.mxu0 0.0
    %492 = vmatprep.subr.mxu0 0.0
    %493 = vmatpush1.xpose.msra.mxu0 0.0
    %494 = vmatprep.subr.mxu0 0.0
    %495 = vmatpush1.xpose.msra.mxu0 0.0
    %496 = vmatprep.subr.mxu0 0.0
    %497 = vmatpush1.xpose.msra.mxu0 0.0
    %498 = vmatprep.subr.mxu0 0.0
    %499 = vmatpush1.xpose.msra.mxu0 0.0
    %500 = vmatprep.mubr.f32.mxu0 0.0
    %501 = vmatmul.mubr.f32.gmra.mrb[0].mxu0 %v425
    %v502 = vpop.f32.mrb[0].mxu0
    %v503 = vadd.f32 0.0, %v502
    %v504 = vpop.f32.mrb[0].mxu0
    %505 = vmatprep.mubr.f32.mxu0 0.0
    %506 = vmatmul.mubr.f32.gmra.mrb[0].mxu0 %v428
    %v507 = vpop.f32.mrb[0].mxu0
    %v508 = vadd.f32 0.0, %v507
    %v509 = vpop.f32.mrb[0].mxu0
    %510 = vmatprep.mubr.f32.mxu0 0.0
    %511 = vmatmul.mubr.f32.gmra.mrb[0].mxu0 %v431
    %v512 = vpop.f32.mrb[0].mxu0
    %v513 = vadd.f32 0.0, %v512
    %v514 = vpop.f32.mrb[0].mxu0
    %515 = vmatprep.mubr.f32.mxu0 0.0
    %516 = vmatmul.mubr.f32.gmra.mrb[0].mxu0 %v434
    %v517 = vpop.f32.mrb[0].mxu0
    %v518 = vadd.f32 0.0, %v517
    %v519 = vpop.f32.mrb[0].mxu0
    %520 = vdwg.mxu0
    %v521 = vsub.f32 %v277, %v503
    %v522 = vsub.f32 %v282, %v508
    %v523 = vsub.f32 %v287, %v513
    %v524 = vsub.f32 %v292, %v518
    %v525 = vmul.f32 %v521, %v521
    %v526 = vmul.f32 %v522, %v522
    %v527 = vmul.f32 %v523, %v523
    %v528 = vmul.f32 %v524, %v524
    %v529 = vrot.slane %v525, 5
    %v530 = vrot.slane %v526, 5
    %v531 = vrot.slane %v527, 5
    %v532 = vrot.slane %v528, 5
    %vm533 = vcmp.lt.s32.totalorder %v46, 3
    %v534 = vsel %vm533, %v531, %v532
    %v535 = vsel %vm533, %v530, %v531
    %v536 = vsel %vm533, %v529, %v530
    %v537 = vsel %vm533, %v532, %v529
    %v538 = vadd.s32 %v46, 4294967293
    %v539 = vadd.s32 %v47, 4294967293
    %v540 = vadd.s32 %v48, 4294967293
    %v541 = vadd.s32 %v49, 4294967293
    %vm542 = vcmp.ge.s32.totalorder %v538, 0
    %vm543 = vcmp.ge.s32.totalorder %v539, 0
    %vm544 = vcmp.ge.s32.totalorder %v540, 0
    %vm545 = vcmp.ge.s32.totalorder %v541, 0
    %vm546 = vcmp.lt.s32.totalorder %v538, 32
    %vm547 = vcmp.lt.s32.totalorder %v539, 32
    %vm548 = vcmp.lt.s32.totalorder %v540, 32
    %vm549 = vcmp.lt.s32.totalorder %v541, 32
    %vm550 = vmand %vm542, %vm546
    %vm551 = vmand %vm543, %vm547
    %vm552 = vmand %vm544, %vm548
    %vm553 = vmand %vm545, %vm549
    %v554 = vsel %vm550, 1, 0
    %v555 = vsel %vm551, 1, 0
    %v556 = vsel %vm552, 1, 0
    %v557 = vsel %vm553, 1, 0
    %vm558 = vcmp.eq.s32.totalorder %v554, 1
    %vm559 = vcmp.eq.s32.totalorder %v555, 1
    %vm560 = vcmp.eq.s32.totalorder %v556, 1
    %vm561 = vcmp.eq.s32.totalorder %v557, 1
    %v562 = vsel %vm558, %v537, 0.0
    %v563 = vsel %vm559, %v536, 0.0
    %v564 = vsel %vm560, %v535, 0.0
    %v565 = vsel %vm561, %v534, 0.0
    %v566 = vld [vmem:[%s3] sm:$0xff]
    %v567 = vld [vmem:[%s3 + $0x8] sm:$0xff]
    %v568 = vld [vmem:[%s3 + $0x10] sm:$0xff]
    %v569 = vld [vmem:[%s3 + $0x18] sm:$0xff]
    %v570 = vld [vmem:[%s3 + $0x20] sm:$0xff]
    %v571 = vld [vmem:[%s3 + $0x28] sm:$0xff]
    %v572 = vld [vmem:[%s3 + $0x30] sm:$0xff]
    %v573 = vld [vmem:[%s3 + $0x38] sm:$0xff]
    %v574 = vld [vmem:[%s3 + $0x40] sm:$0xff]
    %v575 = vld [vmem:[%s3 + $0x48] sm:$0xff]
    %v576 = vld [vmem:[%s3 + $0x50] sm:$0xff]
    %v577 = vld [vmem:[%s3 + $0x58] sm:$0xff]
    %v578 = vld [vmem:[%s3 + $0x60] sm:$0xff]
    %v579 = vld [vmem:[%s3 + $0x68] sm:$0xff]
    %v580 = vld [vmem:[%s3 + $0x70] sm:$0xff]
    %v581 = vld [vmem:[%s3 + $0x78] sm:$0xff]
    %v582 = vld [vmem:[%s3 + $0x80] sm:$0xff]
    %v583 = vld [vmem:[%s3 + $0x88] sm:$0xff]
    %v584 = vld [vmem:[%s3 + $0x90] sm:$0xff]
    %v585 = vld [vmem:[%s3 + $0x98] sm:$0xff]
    %v586 = vld [vmem:[%s3 + $0xa0] sm:$0xff]
    %v587 = vld [vmem:[%s3 + $0xa8] sm:$0xff]
    %v588 = vld [vmem:[%s3 + $0xb0] sm:$0xff]
    %v589 = vld [vmem:[%s3 + $0xb8] sm:$0xff]
    %v590 = vld [vmem:[%s3 + $0xc0] sm:$0xff]
    %v591 = vld [vmem:[%s3 + $0xc8] sm:$0xff]
    %v592 = vld [vmem:[%s3 + $0xd0] sm:$0xff]
    %v593 = vld [vmem:[%s3 + $0xd8] sm:$0xff]
    %v594 = vld [vmem:[%s3 + $0xe0] sm:$0xff]
    %v595 = vld [vmem:[%s3 + $0xe8] sm:$0xff]
    %v596 = vld [vmem:[%s3 + $0xf0] sm:$0xff]
    %v597 = vld [vmem:[%s3 + $0xf8] sm:$0xff]
    %v598 = vrot.slane %v525, 6
    %v599 = vrot.slane %v526, 6
    %v600 = vrot.slane %v527, 6
    %v601 = vrot.slane %v528, 6
    %vm602 = vcmp.lt.s32.totalorder %v46, 2
    %v603 = vsel %vm602, %v600, %v601
    %v604 = vsel %vm602, %v599, %v600
    %v605 = vsel %vm602, %v598, %v599
    %v606 = vsel %vm602, %v601, %v598
    %v607 = vadd.s32 %v46, 4294967294
    %v608 = vadd.s32 %v47, 4294967294
    %v609 = vadd.s32 %v48, 4294967294
    %v610 = vadd.s32 %v49, 4294967294
    %vm611 = vcmp.ge.s32.totalorder %v607, 0
    %vm612 = vcmp.ge.s32.totalorder %v608, 0
    %vm613 = vcmp.ge.s32.totalorder %v609, 0
    %vm614 = vcmp.ge.s32.totalorder %v610, 0
    %vm615 = vcmp.lt.s32.totalorder %v607, 32
    %vm616 = vcmp.lt.s32.totalorder %v608, 32
    %vm617 = vcmp.lt.s32.totalorder %v609, 32
    %vm618 = vcmp.lt.s32.totalorder %v610, 32
    %vm619 = vmand %vm611, %vm615
    %vm620 = vmand %vm612, %vm616
    %vm621 = vmand %vm613, %vm617
    %vm622 = vmand %vm614, %vm618
    %v623 = vsel %vm619, 1, 0
    %v624 = vsel %vm620, 1, 0
    %v625 = vsel %vm621, 1, 0
    %v626 = vsel %vm622, 1, 0
    %vm627 = vcmp.eq.s32.totalorder %v623, 1
    %vm628 = vcmp.eq.s32.totalorder %v624, 1
    %vm629 = vcmp.eq.s32.totalorder %v625, 1
    %vm630 = vcmp.eq.s32.totalorder %v626, 1
    %v631 = vsel %vm627, %v606, 0.0
    %v632 = vsel %vm628, %v605, 0.0
    %v633 = vsel %vm629, %v604, 0.0
    %v634 = vsel %vm630, %v603, 0.0
    %s635 = scalar_lea.vmem %s3, 256
    %v636 = vld [vmem:[%s635] sm:$0xff]
    %v637 = vld [vmem:[%s635 + $0x8] sm:$0xff]
    %v638 = vld [vmem:[%s635 + $0x10] sm:$0xff]
    %v639 = vld [vmem:[%s635 + $0x18] sm:$0xff]
    %v640 = vld [vmem:[%s635 + $0x20] sm:$0xff]
    %v641 = vld [vmem:[%s635 + $0x28] sm:$0xff]
    %v642 = vld [vmem:[%s635 + $0x30] sm:$0xff]
    %v643 = vld [vmem:[%s635 + $0x38] sm:$0xff]
    %v644 = vld [vmem:[%s635 + $0x40] sm:$0xff]
    %v645 = vld [vmem:[%s635 + $0x48] sm:$0xff]
    %v646 = vld [vmem:[%s635 + $0x50] sm:$0xff]
    %v647 = vld [vmem:[%s635 + $0x58] sm:$0xff]
    %v648 = vld [vmem:[%s635 + $0x60] sm:$0xff]
    %v649 = vld [vmem:[%s635 + $0x68] sm:$0xff]
    %v650 = vld [vmem:[%s635 + $0x70] sm:$0xff]
    %v651 = vld [vmem:[%s635 + $0x78] sm:$0xff]
    %v652 = vld [vmem:[%s635 + $0x80] sm:$0xff]
    %v653 = vld [vmem:[%s635 + $0x88] sm:$0xff]
    %v654 = vld [vmem:[%s635 + $0x90] sm:$0xff]
    %v655 = vld [vmem:[%s635 + $0x98] sm:$0xff]
    %v656 = vld [vmem:[%s635 + $0xa0] sm:$0xff]
    %v657 = vld [vmem:[%s635 + $0xa8] sm:$0xff]
    %v658 = vld [vmem:[%s635 + $0xb0] sm:$0xff]
    %v659 = vld [vmem:[%s635 + $0xb8] sm:$0xff]
    %v660 = vld [vmem:[%s635 + $0xc0] sm:$0xff]
    %v661 = vld [vmem:[%s635 + $0xc8] sm:$0xff]
    %v662 = vld [vmem:[%s635 + $0xd0] sm:$0xff]
    %v663 = vld [vmem:[%s635 + $0xd8] sm:$0xff]
    %v664 = vld [vmem:[%s635 + $0xe0] sm:$0xff]
    %v665 = vld [vmem:[%s635 + $0xe8] sm:$0xff]
    %v666 = vld [vmem:[%s635 + $0xf0] sm:$0xff]
    %v667 = vld [vmem:[%s635 + $0xf8] sm:$0xff]
    %v669 = vsel %vm100, %v631, 0
    %v672 = vsel %vm100, %v632, 0
    %v675 = vsel %vm100, %v633, 0
    %v678 = vsel %vm100, %v634, 0
    %680 = vmatprep.subr.mxu0 %v637
    %681 = vmatpush1.msra.mxu0 %v636
    %682 = vmatprep.subr.mxu0 %v645
    %683 = vmatpush1.msra.mxu0 %v644
    %684 = vmatprep.subr.mxu0 %v653
    %685 = vmatpush1.msra.mxu0 %v652
    %686 = vmatprep.subr.mxu0 %v661
    %687 = vmatpush1.msra.mxu0 %v660
    %688 = vmatprep.subr.mxu0 0.0
    %689 = vmatpush1.msra.mxu0 0.0
    %690 = vmatprep.subr.mxu0 0.0
    %691 = vmatpush1.msra.mxu0 0.0
    %692 = vmatprep.subr.mxu0 0.0
    %693 = vmatpush1.msra.mxu0 0.0
    %694 = vmatprep.subr.mxu0 0.0
    %695 = vmatpush1.msra.mxu0 0.0
    %696 = vmatprep.subr.mxu0 0.0
    %697 = vmatpush1.msra.mxu0 0.0
    %698 = vmatprep.subr.mxu0 0.0
    %699 = vmatpush1.msra.mxu0 0.0
    %700 = vmatprep.subr.mxu0 0.0
    %701 = vmatpush1.msra.mxu0 0.0
    %702 = vmatprep.subr.mxu0 0.0
    %703 = vmatpush1.msra.mxu0 0.0
    %704 = vmatprep.subr.mxu0 0.0
    %705 = vmatpush1.msra.mxu0 0.0
    %706 = vmatprep.subr.mxu0 0.0
    %707 = vmatpush1.msra.mxu0 0.0
    %708 = vmatprep.subr.mxu0 0.0
    %709 = vmatpush1.msra.mxu0 0.0
    %710 = vmatprep.subr.mxu0 0.0
    %711 = vmatpush1.msra.mxu0 0.0
    %712 = vmatprep.subr.mxu0 0.0
    %713 = vmatpush1.msra.mxu0 0.0
    %714 = vmatprep.subr.mxu0 0.0
    %715 = vmatpush1.msra.mxu0 0.0
    %716 = vmatprep.subr.mxu0 0.0
    %717 = vmatpush1.msra.mxu0 0.0
    %718 = vmatprep.subr.mxu0 0.0
    %719 = vmatpush1.msra.mxu0 0.0
    %720 = vmatprep.subr.mxu0 0.0
    %721 = vmatpush1.msra.mxu0 0.0
    %722 = vmatprep.subr.mxu0 0.0
    %723 = vmatpush1.msra.mxu0 0.0
    %724 = vmatprep.subr.mxu0 0.0
    %725 = vmatpush1.msra.mxu0 0.0
    %726 = vmatprep.subr.mxu0 0.0
    %727 = vmatpush1.msra.mxu0 0.0
    %728 = vmatprep.subr.mxu0 0.0
    %729 = vmatpush1.msra.mxu0 0.0
    %730 = vmatprep.subr.mxu0 0.0
    %731 = vmatpush1.msra.mxu0 0.0
    %732 = vmatprep.subr.mxu0 0.0
    %733 = vmatpush1.msra.mxu0 0.0
    %734 = vmatprep.subr.mxu0 0.0
    %735 = vmatpush1.msra.mxu0 0.0
    %736 = vmatprep.subr.mxu0 0.0
    %737 = vmatpush1.msra.mxu0 0.0
    %738 = vmatprep.subr.mxu0 0.0
    %739 = vmatpush1.msra.mxu0 0.0
    %740 = vmatprep.subr.mxu0 0.0
    %741 = vmatpush1.msra.mxu0 0.0
    %742 = vmatprep.subr.mxu0 0.0
    %743 = vmatpush1.msra.mxu0 0.0
    %744 = vmatprep.mubr.f32.mxu0 0.0
    %745 = vmatmul.mubr.f32.gmra.mrb[0].mxu0 %v669
    %v746 = vpop.f32.mrb[0].mxu0
    %v747 = vadd.f32 0.0, %v746
    %v748 = vpop.f32.mrb[0].mxu0
    %v749 = vadd.f32 0.0, %v748
    %750 = vmatprep.mubr.f32.mxu0 0.0
    %751 = vmatmul.mubr.f32.gmra.mrb[0].mxu0 %v672
    %v752 = vpop.f32.mrb[0].mxu0
    %v753 = vadd.f32 0.0, %v752
    %v754 = vpop.f32.mrb[0].mxu0
    %v755 = vadd.f32 0.0, %v754
    %756 = vmatprep.mubr.f32.mxu0 0.0
    %757 = vmatmul.mubr.f32.gmra.mrb[0].mxu0 %v675
    %v758 = vpop.f32.mrb[0].mxu0
    %v759 = vadd.f32 0.0, %v758
    %v760 = vpop.f32.mrb[0].mxu0
    %v761 = vadd.f32 0.0, %v760
    %762 = vmatprep.mubr.f32.mxu0 0.0
    %763 = vmatmul.mubr.f32.gmra.mrb[0].mxu0 %v678
    %v764 = vpop.f32.mrb[0].mxu0
    %v765 = vadd.f32 0.0, %v764
    %v766 = vpop.f32.mrb[0].mxu0
    %v767 = vadd.f32 0.0, %v766
    %768 = vdwg.mxu0
    %769 = vmatprep.subr.mxu0 %v639
    %770 = vmatpush1.msra.mxu0 %v638
    %771 = vmatprep.subr.mxu0 %v647
    %772 = vmatpush1.msra.mxu0 %v646
    %773 = vmatprep.subr.mxu0 %v655
    %774 = vmatpush1.msra.mxu0 %v654
    %775 = vmatprep.subr.mxu0 %v663
    %776 = vmatpush1.msra.mxu0 %v662
    %777 = vmatprep.subr.mxu0 0.0
    %778 = vmatpush1.msra.mxu0 0.0
    %779 = vmatprep.subr.mxu0 0.0
    %780 = vmatpush1.msra.mxu0 0.0
    %781 = vmatprep.subr.mxu0 0.0
    %782 = vmatpush1.msra.mxu0 0.0
    %783 = vmatprep.subr.mxu0 0.0
    %784 = vmatpush1.msra.mxu0 0.0
    %785 = vmatprep.subr.mxu0 0.0
    %786 = vmatpush1.msra.mxu0 0.0
    %787 = vmatprep.subr.mxu0 0.0
    %788 = vmatpush1.msra.mxu0 0.0
    %789 = vmatprep.subr.mxu0 0.0
    %790 = vmatpush1.msra.mxu0 0.0
    %791 = vmatprep.subr.mxu0 0.0
    %792 = vmatpush1.msra.mxu0 0.0
    %793 = vmatprep.subr.mxu0 0.0
    %794 = vmatpush1.msra.mxu0 0.0
    %795 = vmatprep.subr.mxu0 0.0
    %796 = vmatpush1.msra.mxu0 0.0
    %797 = vmatprep.subr.mxu0 0.0
    %798 = vmatpush1.msra.mxu0 0.0
    %799 = vmatprep.subr.mxu0 0.0
    %800 = vmatpush1.msra.mxu0 0.0
    %801 = vmatprep.subr.mxu0 0.0
    %802 = vmatpush1.msra.mxu0 0.0
    %803 = vmatprep.subr.mxu0 0.0
    %804 = vmatpush1.msra.mxu0 0.0
    %805 = vmatprep.subr.mxu0 0.0
    %806 = vmatpush1.msra.mxu0 0.0
    %807 = vmatprep.subr.mxu0 0.0
    %808 = vmatpush1.msra.mxu0 0.0
    %809 = vmatprep.subr.mxu0 0.0
    %810 = vmatpush1.msra.mxu0 0.0
    %811 = vmatprep.subr.mxu0 0.0
    %812 = vmatpush1.msra.mxu0 0.0
    %813 = vmatprep.subr.mxu0 0.0
    %814 = vmatpush1.msra.mxu0 0.0
    %815 = vmatprep.subr.mxu0 0.0
    %816 = vmatpush1.msra.mxu0 0.0
    %817 = vmatprep.subr.mxu0 0.0
    %818 = vmatpush1.msra.mxu0 0.0
    %819 = vmatprep.subr.mxu0 0.0
    %820 = vmatpush1.msra.mxu0 0.0
    %821 = vmatprep.subr.mxu0 0.0
    %822 = vmatpush1.msra.mxu0 0.0
    %823 = vmatprep.subr.mxu0 0.0
    %824 = vmatpush1.msra.mxu0 0.0
    %825 = vmatprep.subr.mxu0 0.0
    %826 = vmatpush1.msra.mxu0 0.0
    %827 = vmatprep.subr.mxu0 0.0
    %828 = vmatpush1.msra.mxu0 0.0
    %829 = vmatprep.subr.mxu0 0.0
    %830 = vmatpush1.msra.mxu0 0.0
    %831 = vmatprep.subr.mxu0 0.0
    %832 = vmatpush1.msra.mxu0 0.0
    %833 = vmatprep.mubr.f32.mxu0 0.0
    %834 = vmatmul.mubr.f32.gmra.mrb[0].mxu0 %v669
    %v835 = vpop.f32.mrb[0].mxu0
    %v836 = vadd.f32 0.0, %v835
    %v837 = vpop.f32.mrb[0].mxu0
    %v838 = vadd.f32 0.0, %v837
    %839 = vmatprep.mubr.f32.mxu0 0.0
    %840 = vmatmul.mubr.f32.gmra.mrb[0].mxu0 %v672
    %v841 = vpop.f32.mrb[0].mxu0
    %v842 = vadd.f32 0.0, %v841
    %v843 = vpop.f32.mrb[0].mxu0
    %v844 = vadd.f32 0.0, %v843
    %845 = vmatprep.mubr.f32.mxu0 0.0
    %846 = vmatmul.mubr.f32.gmra.mrb[0].mxu0 %v675
    %v847 = vpop.f32.mrb[0].mxu0
    %v848 = vadd.f32 0.0, %v847
    %v849 = vpop.f32.mrb[0].mxu0
    %v850 = vadd.f32 0.0, %v849
    %851 = vmatprep.mubr.f32.mxu0 0.0
    %852 = vmatmul.mubr.f32.gmra.mrb[0].mxu0 %v678
    %v853 = vpop.f32.mrb[0].mxu0
    %v854 = vadd.f32 0.0, %v853
    %v855 = vpop.f32.mrb[0].mxu0
    %v856 = vadd.f32 0.0, %v855
    %857 = vdwg.mxu0
    %858 = vmatprep.subr.mxu0 %v641
    %859 = vmatpush1.msra.mxu0 %v640
    %860 = vmatprep.subr.mxu0 %v649
    %861 = vmatpush1.msra.mxu0 %v648
    %862 = vmatprep.subr.mxu0 %v657
    %863 = vmatpush1.msra.mxu0 %v656
    %864 = vmatprep.subr.mxu0 %v665
    %865 = vmatpush1.msra.mxu0 %v664
    %866 = vmatprep.subr.mxu0 0.0
    %867 = vmatpush1.msra.mxu0 0.0
    %868 = vmatprep.subr.mxu0 0.0
    %869 = vmatpush1.msra.mxu0 0.0
    %870 = vmatprep.subr.mxu0 0.0
    %871 = vmatpush1.msra.mxu0 0.0
    %872 = vmatprep.subr.mxu0 0.0
    %873 = vmatpush1.msra.mxu0 0.0
    %874 = vmatprep.subr.mxu0 0.0
    %875 = vmatpush1.msra.mxu0 0.0
    %876 = vmatprep.subr.mxu0 0.0
    %877 = vmatpush1.msra.mxu0 0.0
    %878 = vmatprep.subr.mxu0 0.0
    %879 = vmatpush1.msra.mxu0 0.0
    %880 = vmatprep.subr.mxu0 0.0
    %881 = vmatpush1.msra.mxu0 0.0
    %882 = vmatprep.subr.mxu0 0.0
    %883 = vmatpush1.msra.mxu0 0.0
    %884 = vmatprep.subr.mxu0 0.0
    %885 = vmatpush1.msra.mxu0 0.0
    %886 = vmatprep.subr.mxu0 0.0
    %887 = vmatpush1.msra.mxu0 0.0
    %888 = vmatprep.subr.mxu0 0.0
    %889 = vmatpush1.msra.mxu0 0.0
    %890 = vmatprep.subr.mxu0 0.0
    %891 = vmatpush1.msra.mxu0 0.0
    %892 = vmatprep.subr.mxu0 0.0
    %893 = vmatpush1.msra.mxu0 0.0
    %894 = vmatprep.subr.mxu0 0.0
    %895 = vmatpush1.msra.mxu0 0.0
    %896 = vmatprep.subr.mxu0 0.0
    %897 = vmatpush1.msra.mxu0 0.0
    %898 = vmatprep.subr.mxu0 0.0
    %899 = vmatpush1.msra.mxu0 0.0
    %900 = vmatprep.subr.mxu0 0.0
    %901 = vmatpush1.msra.mxu0 0.0
    %902 = vmatprep.subr.mxu0 0.0
    %903 = vmatpush1.msra.mxu0 0.0
    %904 = vmatprep.subr.mxu0 0.0
    %905 = vmatpush1.msra.mxu0 0.0
    %906 = vmatprep.subr.mxu0 0.0
    %907 = vmatpush1.msra.mxu0 0.0
    %908 = vmatprep.subr.mxu0 0.0
    %909 = vmatpush1.msra.mxu0 0.0
    %910 = vmatprep.subr.mxu0 0.0
    %911 = vmatpush1.msra.mxu0 0.0
    %912 = vmatprep.subr.mxu0 0.0
    %913 = vmatpush1.msra.mxu0 0.0
    %914 = vmatprep.subr.mxu0 0.0
    %915 = vmatpush1.msra.mxu0 0.0
    %916 = vmatprep.subr.mxu0 0.0
    %917 = vmatpush1.msra.mxu0 0.0
    %918 = vmatprep.subr.mxu0 0.0
    %919 = vmatpush1.msra.mxu0 0.0
    %920 = vmatprep.subr.mxu0 0.0
    %921 = vmatpush1.msra.mxu0 0.0
    %922 = vmatprep.mubr.f32.mxu0 0.0
    %923 = vmatmul.mubr.f32.gmra.mrb[0].mxu0 %v669
    %v924 = vpop.f32.mrb[0].mxu0
    %v925 = vadd.f32 0.0, %v924
    %v926 = vpop.f32.mrb[0].mxu0
    %v927 = vadd.f32 0.0, %v926
    %928 = vmatprep.mubr.f32.mxu0 0.0
    %929 = vmatmul.mubr.f32.gmra.mrb[0].mxu0 %v672
    %v930 = vpop.f32.mrb[0].mxu0
    %v931 = vadd.f32 0.0, %v930
    %v932 = vpop.f32.mrb[0].mxu0
    %v933 = vadd.f32 0.0, %v932
    %934 = vmatprep.mubr.f32.mxu0 0.0
    %935 = vmatmul.mubr.f32.gmra.mrb[0].mxu0 %v675
    %v936 = vpop.f32.mrb[0].mxu0
    %v937 = vadd.f32 0.0, %v936
    %v938 = vpop.f32.mrb[0].mxu0
    %v939 = vadd.f32 0.0, %v938
    %940 = vmatprep.mubr.f32.mxu0 0.0
    %941 = vmatmul.mubr.f32.gmra.mrb[0].mxu0 %v678
    %v942 = vpop.f32.mrb[0].mxu0
    %v943 = vadd.f32 0.0, %v942
    %v944 = vpop.f32.mrb[0].mxu0
    %v945 = vadd.f32 0.0, %v944
    %946 = vdwg.mxu0
    %947 = vmatprep.subr.mxu0 %v643
    %948 = vmatpush1.msra.mxu0 %v642
    %949 = vmatprep.subr.mxu0 %v651
    %950 = vmatpush1.msra.mxu0 %v650
    %951 = vmatprep.subr.mxu0 %v659
    %952 = vmatpush1.msra.mxu0 %v658
    %953 = vmatprep.subr.mxu0 %v667
    %954 = vmatpush1.msra.mxu0 %v666
    %955 = vmatprep.subr.mxu0 0.0
    %956 = vmatpush1.msra.mxu0 0.0
    %957 = vmatprep.subr.mxu0 0.0
    %958 = vmatpush1.msra.mxu0 0.0
    %959 = vmatprep.subr.mxu0 0.0
    %960 = vmatpush1.msra.mxu0 0.0
    %961 = vmatprep.subr.mxu0 0.0
    %962 = vmatpush1.msra.mxu0 0.0
    %963 = vmatprep.subr.mxu0 0.0
    %964 = vmatpush1.msra.mxu0 0.0
    %965 = vmatprep.subr.mxu0 0.0
    %966 = vmatpush1.msra.mxu0 0.0
    %967 = vmatprep.subr.mxu0 0.0
    %968 = vmatpush1.msra.mxu0 0.0
    %969 = vmatprep.subr.mxu0 0.0
    %970 = vmatpush1.msra.mxu0 0.0
    %971 = vmatprep.subr.mxu0 0.0
    %972 = vmatpush1.msra.mxu0 0.0
    %973 = vmatprep.subr.mxu0 0.0
    %974 = vmatpush1.msra.mxu0 0.0
    %975 = vmatprep.subr.mxu0 0.0
    %976 = vmatpush1.msra.mxu0 0.0
    %977 = vmatprep.subr.mxu0 0.0
    %978 = vmatpush1.msra.mxu0 0.0
    %979 = vmatprep.subr.mxu0 0.0
    %980 = vmatpush1.msra.mxu0 0.0
    %981 = vmatprep.subr.mxu0 0.0
    %982 = vmatpush1.msra.mxu0 0.0
    %983 = vmatprep.subr.mxu0 0.0
    %984 = vmatpush1.msra.mxu0 0.0
    %985 = vmatprep.subr.mxu0 0.0
    %986 = vmatpush1.msra.mxu0 0.0
    %987 = vmatprep.subr.mxu0 0.0
    %988 = vmatpush1.msra.mxu0 0.0
    %989 = vmatprep.subr.mxu0 0.0
    %990 = vmatpush1.msra.mxu0 0.0
    %991 = vmatprep.subr.mxu0 0.0
    %992 = vmatpush1.msra.mxu0 0.0
    %993 = vmatprep.subr.mxu0 0.0
    %994 = vmatpush1.msra.mxu0 0.0
    %995 = vmatprep.subr.mxu0 0.0
    %996 = vmatpush1.msra.mxu0 0.0
    %997 = vmatprep.subr.mxu0 0.0
    %998 = vmatpush1.msra.mxu0 0.0
    %999 = vmatprep.subr.mxu0 0.0
    %1000 = vmatpush1.msra.mxu0 0.0
    %1001 = vmatprep.subr.mxu0 0.0
    %1002 = vmatpush1.msra.mxu0 0.0
    %1003 = vmatprep.subr.mxu0 0.0
    %1004 = vmatpush1.msra.mxu0 0.0
    %1005 = vmatprep.subr.mxu0 0.0
    %1006 = vmatpush1.msra.mxu0 0.0
    %1007 = vmatprep.subr.mxu0 0.0
    %1008 = vmatpush1.msra.mxu0 0.0
    %1009 = vmatprep.subr.mxu0 0.0
    %1010 = vmatpush1.msra.mxu0 0.0
    %1011 = vmatprep.mubr.f32.mxu0 0.0
    %1012 = vmatmul.mubr.f32.gmra.mrb[0].mxu0 %v669
    %v1013 = vpop.f32.mrb[0].mxu0
    %v1014 = vadd.f32 0.0, %v1013
    %v1015 = vpop.f32.mrb[0].mxu0
    %v1016 = vadd.f32 0.0, %v1015
    %1017 = vmatprep.mubr.f32.mxu0 0.0
    %1018 = vmatmul.mubr.f32.gmra.mrb[0].mxu0 %v672
    %v1019 = vpop.f32.mrb[0].mxu0
    %v1020 = vadd.f32 0.0, %v1019
    %v1021 = vpop.f32.mrb[0].mxu0
    %v1022 = vadd.f32 0.0, %v1021
    %1023 = vmatprep.mubr.f32.mxu0 0.0
    %1024 = vmatmul.mubr.f32.gmra.mrb[0].mxu0 %v675
    %v1025 = vpop.f32.mrb[0].mxu0
    %v1026 = vadd.f32 0.0, %v1025
    %v1027 = vpop.f32.mrb[0].mxu0
    %v1028 = vadd.f32 0.0, %v1027
    %1029 = vmatprep.mubr.f32.mxu0 0.0
    %1030 = vmatmul.mubr.f32.gmra.mrb[0].mxu0 %v678
    %v1031 = vpop.f32.mrb[0].mxu0
    %v1032 = vadd.f32 0.0, %v1031
    %v1033 = vpop.f32.mrb[0].mxu0
    %v1034 = vadd.f32 0.0, %v1033
    %1035 = vdwg.mxu0
    %v1037 = vsel %vm100, %v562, 0
    %v1040 = vsel %vm100, %v563, 0
    %v1043 = vsel %vm100, %v564, 0
    %v1046 = vsel %vm100, %v565, 0
    %1048 = vmatprep.subr.mxu0 %v567
    %1049 = vmatpush1.msra.mxu0 %v566
    %1050 = vmatprep.subr.mxu0 %v575
    %1051 = vmatpush1.msra.mxu0 %v574
    %1052 = vmatprep.subr.mxu0 %v583
    %1053 = vmatpush1.msra.mxu0 %v582
    %1054 = vmatprep.subr.mxu0 %v591
    %1055 = vmatpush1.msra.mxu0 %v590
    %1056 = vmatprep.subr.mxu0 0.0
    %1057 = vmatpush1.msra.mxu0 0.0
    %1058 = vmatprep.subr.mxu0 0.0
    %1059 = vmatpush1.msra.mxu0 0.0
    %1060 = vmatprep.subr.mxu0 0.0
    %1061 = vmatpush1.msra.mxu0 0.0
    %1062 = vmatprep.subr.mxu0 0.0
    %1063 = vmatpush1.msra.mxu0 0.0
    %1064 = vmatprep.subr.mxu0 0.0
    %1065 = vmatpush1.msra.mxu0 0.0
    %1066 = vmatprep.subr.mxu0 0.0
    %1067 = vmatpush1.msra.mxu0 0.0
    %1068 = vmatprep.subr.mxu0 0.0
    %1069 = vmatpush1.msra.mxu0 0.0
    %1070 = vmatprep.subr.mxu0 0.0
    %1071 = vmatpush1.msra.mxu0 0.0
    %1072 = vmatprep.subr.mxu0 0.0
    %1073 = vmatpush1.msra.mxu0 0.0
    %1074 = vmatprep.subr.mxu0 0.0
    %1075 = vmatpush1.msra.mxu0 0.0
    %1076 = vmatprep.subr.mxu0 0.0
    %1077 = vmatpush1.msra.mxu0 0.0
    %1078 = vmatprep.subr.mxu0 0.0
    %1079 = vmatpush1.msra.mxu0 0.0
    %1080 = vmatprep.subr.mxu0 0.0
    %1081 = vmatpush1.msra.mxu0 0.0
    %1082 = vmatprep.subr.mxu0 0.0
    %1083 = vmatpush1.msra.mxu0 0.0
    %1084 = vmatprep.subr.mxu0 0.0
    %1085 = vmatpush1.msra.mxu0 0.0
    %1086 = vmatprep.subr.mxu0 0.0
    %1087 = vmatpush1.msra.mxu0 0.0
    %1088 = vmatprep.subr.mxu0 0.0
    %1089 = vmatpush1.msra.mxu0 0.0
    %1090 = vmatprep.subr.mxu0 0.0
    %1091 = vmatpush1.msra.mxu0 0.0
    %1092 = vmatprep.subr.mxu0 0.0
    %1093 = vmatpush1.msra.mxu0 0.0
    %1094 = vmatprep.subr.mxu0 0.0
    %1095 = vmatpush1.msra.mxu0 0.0
    %1096 = vmatprep.subr.mxu0 0.0
    %1097 = vmatpush1.msra.mxu0 0.0
    %1098 = vmatprep.subr.mxu0 0.0
    %1099 = vmatpush1.msra.mxu0 0.0
    %1100 = vmatprep.subr.mxu0 0.0
    %1101 = vmatpush1.msra.mxu0 0.0
    %1102 = vmatprep.subr.mxu0 0.0
    %1103 = vmatpush1.msra.mxu0 0.0
    %1104 = vmatprep.subr.mxu0 0.0
    %1105 = vmatpush1.msra.mxu0 0.0
    %1106 = vmatprep.subr.mxu0 0.0
    %1107 = vmatpush1.msra.mxu0 0.0
    %1108 = vmatprep.subr.mxu0 0.0
    %1109 = vmatpush1.msra.mxu0 0.0
    %1110 = vmatprep.subr.mxu0 0.0
    %1111 = vmatpush1.msra.mxu0 0.0
    %1112 = vmatprep.mubr.f32.mxu0 0.0
    %1113 = vmatmul.mubr.f32.gmra.mrb[0].mxu0 %v1037
    %v1114 = vpop.f32.mrb[0].mxu0
    %v1115 = vadd.f32 %v747, %v1114
    %v1116 = vpop.f32.mrb[0].mxu0
    %v1117 = vadd.f32 %v749, %v1116
    %1118 = vmatprep.mubr.f32.mxu0 0.0
    %1119 = vmatmul.mubr.f32.gmra.mrb[0].mxu0 %v1040
    %v1120 = vpop.f32.mrb[0].mxu0
    %v1121 = vadd.f32 %v753, %v1120
    %v1122 = vpop.f32.mrb[0].mxu0
    %v1123 = vadd.f32 %v755, %v1122
    %1124 = vmatprep.mubr.f32.mxu0 0.0
    %1125 = vmatmul.mubr.f32.gmra.mrb[0].mxu0 %v1043
    %v1126 = vpop.f32.mrb[0].mxu0
    %v1127 = vadd.f32 %v759, %v1126
    %v1128 = vpop.f32.mrb[0].mxu0
    %v1129 = vadd.f32 %v761, %v1128
    %1130 = vmatprep.mubr.f32.mxu0 0.0
    %1131 = vmatmul.mubr.f32.gmra.mrb[0].mxu0 %v1046
    %v1132 = vpop.f32.mrb[0].mxu0
    %v1133 = vadd.f32 %v765, %v1132
    %v1134 = vpop.f32.mrb[0].mxu0
    %v1135 = vadd.f32 %v767, %v1134
    %1136 = vdwg.mxu0
    %1137 = vmatprep.subr.mxu0 %v569
    %1138 = vmatpush1.msra.mxu0 %v568
    %1139 = vmatprep.subr.mxu0 %v577
    %1140 = vmatpush1.msra.mxu0 %v576
    %1141 = vmatprep.subr.mxu0 %v585
    %1142 = vmatpush1.msra.mxu0 %v584
    %1143 = vmatprep.subr.mxu0 %v593
    %1144 = vmatpush1.msra.mxu0 %v592
    %1145 = vmatprep.subr.mxu0 0.0
    %1146 = vmatpush1.msra.mxu0 0.0
    %1147 = vmatprep.subr.mxu0 0.0
    %1148 = vmatpush1.msra.mxu0 0.0
    %1149 = vmatprep.subr.mxu0 0.0
    %1150 = vmatpush1.msra.mxu0 0.0
    %1151 = vmatprep.subr.mxu0 0.0
    %1152 = vmatpush1.msra.mxu0 0.0
    %1153 = vmatprep.subr.mxu0 0.0
    %1154 = vmatpush1.msra.mxu0 0.0
    %1155 = vmatprep.subr.mxu0 0.0
    %1156 = vmatpush1.msra.mxu0 0.0
    %1157 = vmatprep.subr.mxu0 0.0
    %1158 = vmatpush1.msra.mxu0 0.0
    %1159 = vmatprep.subr.mxu0 0.0
    %1160 = vmatpush1.msra.mxu0 0.0
    %1161 = vmatprep.subr.mxu0 0.0
    %1162 = vmatpush1.msra.mxu0 0.0
    %1163 = vmatprep.subr.mxu0 0.0
    %1164 = vmatpush1.msra.mxu0 0.0
    %1165 = vmatprep.subr.mxu0 0.0
    %1166 = vmatpush1.msra.mxu0 0.0
    %1167 = vmatprep.subr.mxu0 0.0
    %1168 = vmatpush1.msra.mxu0 0.0
    %1169 = vmatprep.subr.mxu0 0.0
    %1170 = vmatpush1.msra.mxu0 0.0
    %1171 = vmatprep.subr.mxu0 0.0
    %1172 = vmatpush1.msra.mxu0 0.0
    %1173 = vmatprep.subr.mxu0 0.0
    %1174 = vmatpush1.msra.mxu0 0.0
    %1175 = vmatprep.subr.mxu0 0.0
    %1176 = vmatpush1.msra.mxu0 0.0
    %1177 = vmatprep.subr.mxu0 0.0
    %1178 = vmatpush1.msra.mxu0 0.0
    %1179 = vmatprep.subr.mxu0 0.0
    %1180 = vmatpush1.msra.mxu0 0.0
    %1181 = vmatprep.subr.mxu0 0.0
    %1182 = vmatpush1.msra.mxu0 0.0
    %1183 = vmatprep.subr.mxu0 0.0
    %1184 = vmatpush1.msra.mxu0 0.0
    %1185 = vmatprep.subr.mxu0 0.0
    %1186 = vmatpush1.msra.mxu0 0.0
    %1187 = vmatprep.subr.mxu0 0.0
    %1188 = vmatpush1.msra.mxu0 0.0
    %1189 = vmatprep.subr.mxu0 0.0
    %1190 = vmatpush1.msra.mxu0 0.0
    %1191 = vmatprep.subr.mxu0 0.0
    %1192 = vmatpush1.msra.mxu0 0.0
    %1193 = vmatprep.subr.mxu0 0.0
    %1194 = vmatpush1.msra.mxu0 0.0
    %1195 = vmatprep.subr.mxu0 0.0
    %1196 = vmatpush1.msra.mxu0 0.0
    %1197 = vmatprep.subr.mxu0 0.0
    %1198 = vmatpush1.msra.mxu0 0.0
    %1199 = vmatprep.subr.mxu0 0.0
    %1200 = vmatpush1.msra.mxu0 0.0
    %1201 = vmatprep.mubr.f32.mxu0 0.0
    %1202 = vmatmul.mubr.f32.gmra.mrb[0].mxu0 %v1037
    %v1203 = vpop.f32.mrb[0].mxu0
    %v1204 = vadd.f32 %v836, %v1203
    %v1205 = vpop.f32.mrb[0].mxu0
    %v1206 = vadd.f32 %v838, %v1205
    %1207 = vmatprep.mubr.f32.mxu0 0.0
    %1208 = vmatmul.mubr.f32.gmra.mrb[0].mxu0 %v1040
    %v1209 = vpop.f32.mrb[0].mxu0
    %v1210 = vadd.f32 %v842, %v1209
    %v1211 = vpop.f32.mrb[0].mxu0
    %v1212 = vadd.f32 %v844, %v1211
    %1213 = vmatprep.mubr.f32.mxu0 0.0
    %1214 = vmatmul.mubr.f32.gmra.mrb[0].mxu0 %v1043
    %v1215 = vpop.f32.mrb[0].mxu0
    %v1216 = vadd.f32 %v848, %v1215
    %v1217 = vpop.f32.mrb[0].mxu0
    %v1218 = vadd.f32 %v850, %v1217
    %1219 = vmatprep.mubr.f32.mxu0 0.0
    %1220 = vmatmul.mubr.f32.gmra.mrb[0].mxu0 %v1046
    %v1221 = vpop.f32.mrb[0].mxu0
    %v1222 = vadd.f32 %v854, %v1221
    %v1223 = vpop.f32.mrb[0].mxu0
    %v1224 = vadd.f32 %v856, %v1223
    %1225 = vdwg.mxu0
    %1226 = vmatprep.subr.mxu0 %v571
    %1227 = vmatpush1.msra.mxu0 %v570
    %1228 = vmatprep.subr.mxu0 %v579
    %1229 = vmatpush1.msra.mxu0 %v578
    %1230 = vmatprep.subr.mxu0 %v587
    %1231 = vmatpush1.msra.mxu0 %v586
    %1232 = vmatprep.subr.mxu0 %v595
    %1233 = vmatpush1.msra.mxu0 %v594
    %1234 = vmatprep.subr.mxu0 0.0
    %1235 = vmatpush1.msra.mxu0 0.0
    %1236 = vmatprep.subr.mxu0 0.0
    %1237 = vmatpush1.msra.mxu0 0.0
    %1238 = vmatprep.subr.mxu0 0.0
    %1239 = vmatpush1.msra.mxu0 0.0
    %1240 = vmatprep.subr.mxu0 0.0
    %1241 = vmatpush1.msra.mxu0 0.0
    %1242 = vmatprep.subr.mxu0 0.0
    %1243 = vmatpush1.msra.mxu0 0.0
    %1244 = vmatprep.subr.mxu0 0.0
    %1245 = vmatpush1.msra.mxu0 0.0
    %1246 = vmatprep.subr.mxu0 0.0
    %1247 = vmatpush1.msra.mxu0 0.0
    %1248 = vmatprep.subr.mxu0 0.0
    %1249 = vmatpush1.msra.mxu0 0.0
    %1250 = vmatprep.subr.mxu0 0.0
    %1251 = vmatpush1.msra.mxu0 0.0
    %1252 = vmatprep.subr.mxu0 0.0
    %1253 = vmatpush1.msra.mxu0 0.0
    %1254 = vmatprep.subr.mxu0 0.0
    %1255 = vmatpush1.msra.mxu0 0.0
    %1256 = vmatprep.subr.mxu0 0.0
    %1257 = vmatpush1.msra.mxu0 0.0
    %1258 = vmatprep.subr.mxu0 0.0
    %1259 = vmatpush1.msra.mxu0 0.0
    %1260 = vmatprep.subr.mxu0 0.0
    %1261 = vmatpush1.msra.mxu0 0.0
    %1262 = vmatprep.subr.mxu0 0.0
    %1263 = vmatpush1.msra.mxu0 0.0
    %1264 = vmatprep.subr.mxu0 0.0
    %1265 = vmatpush1.msra.mxu0 0.0
    %1266 = vmatprep.subr.mxu0 0.0
    %1267 = vmatpush1.msra.mxu0 0.0
    %1268 = vmatprep.subr.mxu0 0.0
    %1269 = vmatpush1.msra.mxu0 0.0
    %1270 = vmatprep.subr.mxu0 0.0
    %1271 = vmatpush1.msra.mxu0 0.0
    %1272 = vmatprep.subr.mxu0 0.0
    %1273 = vmatpush1.msra.mxu0 0.0
    %1274 = vmatprep.subr.mxu0 0.0
    %1275 = vmatpush1.msra.mxu0 0.0
    %1276 = vmatprep.subr.mxu0 0.0
    %1277 = vmatpush1.msra.mxu0 0.0
    %1278 = vmatprep.subr.mxu0 0.0
    %1279 = vmatpush1.msra.mxu0 0.0
    %1280 = vmatprep.subr.mxu0 0.0
    %1281 = vmatpush1.msra.mxu0 0.0
    %1282 = vmatprep.subr.mxu0 0.0
    %1283 = vmatpush1.msra.mxu0 0.0
    %1284 = vmatprep.subr.mxu0 0.0
    %1285 = vmatpush1.msra.mxu0 0.0
    %1286 = vmatprep.subr.mxu0 0.0
    %1287 = vmatpush1.msra.mxu0 0.0
    %1288 = vmatprep.subr.mxu0 0.0
    %1289 = vmatpush1.msra.mxu0 0.0
    %1290 = vmatprep.mubr.f32.mxu0 0.0
    %1291 = vmatmul.mubr.f32.gmra.mrb[0].mxu0 %v1037
    %v1292 = vpop.f32.mrb[0].mxu0
    %v1293 = vadd.f32 %v925, %v1292
    %v1294 = vpop.f32.mrb[0].mxu0
    %v1295 = vadd.f32 %v927, %v1294
    %1296 = vmatprep.mubr.f32.mxu0 0.0
    %1297 = vmatmul.mubr.f32.gmra.mrb[0].mxu0 %v1040
    %v1298 = vpop.f32.mrb[0].mxu0
    %v1299 = vadd.f32 %v931, %v1298
    %v1300 = vpop.f32.mrb[0].mxu0
    %v1301 = vadd.f32 %v933, %v1300
    %1302 = vmatprep.mubr.f32.mxu0 0.0
    %1303 = vmatmul.mubr.f32.gmra.mrb[0].mxu0 %v1043
    %v1304 = vpop.f32.mrb[0].mxu0
    %v1305 = vadd.f32 %v937, %v1304
    %v1306 = vpop.f32.mrb[0].mxu0
    %v1307 = vadd.f32 %v939, %v1306
    %1308 = vmatprep.mubr.f32.mxu0 0.0
    %1309 = vmatmul.mubr.f32.gmra.mrb[0].mxu0 %v1046
    %v1310 = vpop.f32.mrb[0].mxu0
    %v1311 = vadd.f32 %v943, %v1310
    %v1312 = vpop.f32.mrb[0].mxu0
    %v1313 = vadd.f32 %v945, %v1312
    %1314 = vdwg.mxu0
    %1315 = vmatprep.subr.mxu0 %v573
    %1316 = vmatpush1.msra.mxu0 %v572
    %1317 = vmatprep.subr.mxu0 %v581
    %1318 = vmatpush1.msra.mxu0 %v580
    %1319 = vmatprep.subr.mxu0 %v589
    %1320 = vmatpush1.msra.mxu0 %v588
    %1321 = vmatprep.subr.mxu0 %v597
    %1322 = vmatpush1.msra.mxu0 %v596
    %1323 = vmatprep.subr.mxu0 0.0
    %1324 = vmatpush1.msra.mxu0 0.0
    %1325 = vmatprep.subr.mxu0 0.0
    %1326 = vmatpush1.msra.mxu0 0.0
    %1327 = vmatprep.subr.mxu0 0.0
    %1328 = vmatpush1.msra.mxu0 0.0
    %1329 = vmatprep.subr.mxu0 0.0
    %1330 = vmatpush1.msra.mxu0 0.0
    %1331 = vmatprep.subr.mxu0 0.0
    %1332 = vmatpush1.msra.mxu0 0.0
    %1333 = vmatprep.subr.mxu0 0.0
    %1334 = vmatpush1.msra.mxu0 0.0
    %1335 = vmatprep.subr.mxu0 0.0
    %1336 = vmatpush1.msra.mxu0 0.0
    %1337 = vmatprep.subr.mxu0 0.0
    %1338 = vmatpush1.msra.mxu0 0.0
    %1339 = vmatprep.subr.mxu0 0.0
    %1340 = vmatpush1.msra.mxu0 0.0
    %1341 = vmatprep.subr.mxu0 0.0
    %1342 = vmatpush1.msra.mxu0 0.0
    %1343 = vmatprep.subr.mxu0 0.0
    %1344 = vmatpush1.msra.mxu0 0.0
    %1345 = vmatprep.subr.mxu0 0.0
    %1346 = vmatpush1.msra.mxu0 0.0
    %1347 = vmatprep.subr.mxu0 0.0
    %1348 = vmatpush1.msra.mxu0 0.0
    %1349 = vmatprep.subr.mxu0 0.0
    %1350 = vmatpush1.msra.mxu0 0.0
    %1351 = vmatprep.subr.mxu0 0.0
    %1352 = vmatpush1.msra.mxu0 0.0
    %1353 = vmatprep.subr.mxu0 0.0
    %1354 = vmatpush1.msra.mxu0 0.0
    %1355 = vmatprep.subr.mxu0 0.0
    %1356 = vmatpush1.msra.mxu0 0.0
    %1357 = vmatprep.subr.mxu0 0.0
    %1358 = vmatpush1.msra.mxu0 0.0
    %1359 = vmatprep.subr.mxu0 0.0
    %1360 = vmatpush1.msra.mxu0 0.0
    %1361 = vmatprep.subr.mxu0 0.0
    %1362 = vmatpush1.msra.mxu0 0.0
    %1363 = vmatprep.subr.mxu0 0.0
    %1364 = vmatpush1.msra.mxu0 0.0
    %1365 = vmatprep.subr.mxu0 0.0
    %1366 = vmatpush1.msra.mxu0 0.0
    %1367 = vmatprep.subr.mxu0 0.0
    %1368 = vmatpush1.msra.mxu0 0.0
    %1369 = vmatprep.subr.mxu0 0.0
    %1370 = vmatpush1.msra.mxu0 0.0
    %1371 = vmatprep.subr.mxu0 0.0
    %1372 = vmatpush1.msra.mxu0 0.0
    %1373 = vmatprep.subr.mxu0 0.0
    %1374 = vmatpush1.msra.mxu0 0.0
    %1375 = vmatprep.subr.mxu0 0.0
    %1376 = vmatpush1.msra.mxu0 0.0
    %1377 = vmatprep.subr.mxu0 0.0
    %1378 = vmatpush1.msra.mxu0 0.0
    %1379 = vmatprep.mubr.f32.mxu0 0.0
    %1380 = vmatmul.mubr.f32.gmra.mrb[0].mxu0 %v1037
    %v1381 = vpop.f32.mrb[0].mxu0
    %v1382 = vadd.f32 %v1014, %v1381
    %v1383 = vpop.f32.mrb[0].mxu0
    %v1384 = vadd.f32 %v1016, %v1383
    %1385 = vmatprep.mubr.f32.mxu0 0.0
    %1386 = vmatmul.mubr.f32.gmra.mrb[0].mxu0 %v1040
    %v1387 = vpop.f32.mrb[0].mxu0
    %v1388 = vadd.f32 %v1020, %v1387
    %v1389 = vpop.f32.mrb[0].mxu0
    %v1390 = vadd.f32 %v1022, %v1389
    %1391 = vmatprep.mubr.f32.mxu0 0.0
    %1392 = vmatmul.mubr.f32.gmra.mrb[0].mxu0 %v1043
    %v1393 = vpop.f32.mrb[0].mxu0
    %v1394 = vadd.f32 %v1026, %v1393
    %v1395 = vpop.f32.mrb[0].mxu0
    %v1396 = vadd.f32 %v1028, %v1395
    %1397 = vmatprep.mubr.f32.mxu0 0.0
    %1398 = vmatmul.mubr.f32.gmra.mrb[0].mxu0 %v1046
    %v1399 = vpop.f32.mrb[0].mxu0
    %v1400 = vadd.f32 %v1032, %v1399
    %v1401 = vpop.f32.mrb[0].mxu0
    %v1402 = vadd.f32 %v1034, %v1401
    %1403 = vdwg.mxu0
    %v1404 = vrot.slane %v525, 7
    %v1405 = vrot.slane %v526, 7
    %v1406 = vrot.slane %v527, 7
    %v1407 = vrot.slane %v528, 7
    %vm1408 = vcmp.lt.s32.totalorder %v46, 1
    %v1409 = vsel %vm1408, %v1406, %v1407
    %v1410 = vsel %vm1408, %v1405, %v1406
    %v1411 = vsel %vm1408, %v1404, %v1405
    %v1412 = vsel %vm1408, %v1407, %v1404
    %v1413 = vadd.s32 %v46, 4294967295
    %v1414 = vadd.s32 %v47, 4294967295
    %v1415 = vadd.s32 %v48, 4294967295
    %v1416 = vadd.s32 %v49, 4294967295
    %vm1417 = vcmp.ge.s32.totalorder %v1413, 0
    %vm1418 = vcmp.ge.s32.totalorder %v1414, 0
    %vm1419 = vcmp.ge.s32.totalorder %v1415, 0
    %vm1420 = vcmp.ge.s32.totalorder %v1416, 0
    %vm1421 = vcmp.lt.s32.totalorder %v1413, 32
    %vm1422 = vcmp.lt.s32.totalorder %v1414, 32
    %vm1423 = vcmp.lt.s32.totalorder %v1415, 32
    %vm1424 = vcmp.lt.s32.totalorder %v1416, 32
    %vm1425 = vmand %vm1417, %vm1421
    %vm1426 = vmand %vm1418, %vm1422
    %vm1427 = vmand %vm1419, %vm1423
    %vm1428 = vmand %vm1420, %vm1424
    %v1429 = vsel %vm1425, 1, 0
    %v1430 = vsel %vm1426, 1, 0
    %v1431 = vsel %vm1427, 1, 0
    %v1432 = vsel %vm1428, 1, 0
    %vm1433 = vcmp.eq.s32.totalorder %v1429, 1
    %vm1434 = vcmp.eq.s32.totalorder %v1430, 1
    %vm1435 = vcmp.eq.s32.totalorder %v1431, 1
    %vm1436 = vcmp.eq.s32.totalorder %v1432, 1
    %v1437 = vsel %vm1433, %v1412, 0.0
    %v1438 = vsel %vm1434, %v1411, 0.0
    %v1439 = vsel %vm1435, %v1410, 0.0
    %v1440 = vsel %vm1436, %v1409, 0.0
    %s1441 = scalar_lea.vmem %s3, 512
    %v1442 = vld [vmem:[%s1441] sm:$0xff]
    %v1443 = vld [vmem:[%s1441 + $0x8] sm:$0xff]
    %v1444 = vld [vmem:[%s1441 + $0x10] sm:$0xff]
    %v1445 = vld [vmem:[%s1441 + $0x18] sm:$0xff]
    %v1446 = vld [vmem:[%s1441 + $0x20] sm:$0xff]
    %v1447 = vld [vmem:[%s1441 + $0x28] sm:$0xff]
    %v1448 = vld [vmem:[%s1441 + $0x30] sm:$0xff]
    %v1449 = vld [vmem:[%s1441 + $0x38] sm:$0xff]
    %v1450 = vld [vmem:[%s1441 + $0x40] sm:$0xff]
    %v1451 = vld [vmem:[%s1441 + $0x48] sm:$0xff]
    %v1452 = vld [vmem:[%s1441 + $0x50] sm:$0xff]
    %v1453 = vld [vmem:[%s1441 + $0x58] sm:$0xff]
    %v1454 = vld [vmem:[%s1441 + $0x60] sm:$0xff]
    %v1455 = vld [vmem:[%s1441 + $0x68] sm:$0xff]
    %v1456 = vld [vmem:[%s1441 + $0x70] sm:$0xff]
    %v1457 = vld [vmem:[%s1441 + $0x78] sm:$0xff]
    %v1458 = vld [vmem:[%s1441 + $0x80] sm:$0xff]
    %v1459 = vld [vmem:[%s1441 + $0x88] sm:$0xff]
    %v1460 = vld [vmem:[%s1441 + $0x90] sm:$0xff]
    %v1461 = vld [vmem:[%s1441 + $0x98] sm:$0xff]
    %v1462 = vld [vmem:[%s1441 + $0xa0] sm:$0xff]
    %v1463 = vld [vmem:[%s1441 + $0xa8] sm:$0xff]
    %v1464 = vld [vmem:[%s1441 + $0xb0] sm:$0xff]
    %v1465 = vld [vmem:[%s1441 + $0xb8] sm:$0xff]
    %v1466 = vld [vmem:[%s1441 + $0xc0] sm:$0xff]
    %v1467 = vld [vmem:[%s1441 + $0xc8] sm:$0xff]
    %v1468 = vld [vmem:[%s1441 + $0xd0] sm:$0xff]
    %v1469 = vld [vmem:[%s1441 + $0xd8] sm:$0xff]
    %v1470 = vld [vmem:[%s1441 + $0xe0] sm:$0xff]
    %v1471 = vld [vmem:[%s1441 + $0xe8] sm:$0xff]
    %v1472 = vld [vmem:[%s1441 + $0xf0] sm:$0xff]
    %v1473 = vld [vmem:[%s1441 + $0xf8] sm:$0xff]
    %v1475 = vsel %vm100, %v1437, 0
    %v1478 = vsel %vm100, %v1438, 0
    %v1481 = vsel %vm100, %v1439, 0
    %v1484 = vsel %vm100, %v1440, 0
    %1486 = vmatprep.subr.mxu0 %v1443
    %1487 = vmatpush1.msra.mxu0 %v1442
    %1488 = vmatprep.subr.mxu0 %v1451
    %1489 = vmatpush1.msra.mxu0 %v1450
    %1490 = vmatprep.subr.mxu0 %v1459
    %1491 = vmatpush1.msra.mxu0 %v1458
    %1492 = vmatprep.subr.mxu0 %v1467
    %1493 = vmatpush1.msra.mxu0 %v1466
    %1494 = vmatprep.subr.mxu0 0.0
    %1495 = vmatpush1.msra.mxu0 0.0
    %1496 = vmatprep.subr.mxu0 0.0
    %1497 = vmatpush1.msra.mxu0 0.0
    %1498 = vmatprep.subr.mxu0 0.0
    %1499 = vmatpush1.msra.mxu0 0.0
    %1500 = vmatprep.subr.mxu0 0.0
    %1501 = vmatpush1.msra.mxu0 0.0
    %1502 = vmatprep.subr.mxu0 0.0
    %1503 = vmatpush1.msra.mxu0 0.0
    %1504 = vmatprep.subr.mxu0 0.0
    %1505 = vmatpush1.msra.mxu0 0.0
    %1506 = vmatprep.subr.mxu0 0.0
    %1507 = vmatpush1.msra.mxu0 0.0
    %1508 = vmatprep.subr.mxu0 0.0
    %1509 = vmatpush1.msra.mxu0 0.0
    %1510 = vmatprep.subr.mxu0 0.0
    %1511 = vmatpush1.msra.mxu0 0.0
    %1512 = vmatprep.subr.mxu0 0.0
    %1513 = vmatpush1.msra.mxu0 0.0
    %1514 = vmatprep.subr.mxu0 0.0
    %1515 = vmatpush1.msra.mxu0 0.0
    %1516 = vmatprep.subr.mxu0 0.0
    %1517 = vmatpush1.msra.mxu0 0.0
    %1518 = vmatprep.subr.mxu0 0.0
    %1519 = vmatpush1.msra.mxu0 0.0
    %1520 = vmatprep.subr.mxu0 0.0
    %1521 = vmatpush1.msra.mxu0 0.0
    %1522 = vmatprep.subr.mxu0 0.0
    %1523 = vmatpush1.msra.mxu0 0.0
    %1524 = vmatprep.subr.mxu0 0.0
    %1525 = vmatpush1.msra.mxu0 0.0
    %1526 = vmatprep.subr.mxu0 0.0
    %1527 = vmatpush1.msra.mxu0 0.0
    %1528 = vmatprep.subr.mxu0 0.0
    %1529 = vmatpush1.msra.mxu0 0.0
    %1530 = vmatprep.subr.mxu0 0.0
    %1531 = vmatpush1.msra.mxu0 0.0
    %1532 = vmatprep.subr.mxu0 0.0
    %1533 = vmatpush1.msra.mxu0 0.0
    %1534 = vmatprep.subr.mxu0 0.0
    %1535 = vmatpush1.msra.mxu0 0.0
    %1536 = vmatprep.subr.mxu0 0.0
    %1537 = vmatpush1.msra.mxu0 0.0
    %1538 = vmatprep.subr.mxu0 0.0
    %1539 = vmatpush1.msra.mxu0 0.0
    %1540 = vmatprep.subr.mxu0 0.0
    %1541 = vmatpush1.msra.mxu0 0.0
    %1542 = vmatprep.subr.mxu0 0.0
    %1543 = vmatpush1.msra.mxu0 0.0
    %1544 = vmatprep.subr.mxu0 0.0
    %1545 = vmatpush1.msra.mxu0 0.0
    %1546 = vmatprep.subr.mxu0 0.0
    %1547 = vmatpush1.msra.mxu0 0.0
    %1548 = vmatprep.subr.mxu0 0.0
    %1549 = vmatpush1.msra.mxu0 0.0
    %1550 = vmatprep.mubr.f32.mxu0 0.0
    %1551 = vmatmul.mubr.f32.gmra.mrb[0].mxu0 %v1475
    %v1552 = vpop.f32.mrb[0].mxu0
    %v1553 = vadd.f32 0.0, %v1552
    %v1554 = vpop.f32.mrb[0].mxu0
    %v1555 = vadd.f32 0.0, %v1554
    %1556 = vmatprep.mubr.f32.mxu0 0.0
    %1557 = vmatmul.mubr.f32.gmra.mrb[0].mxu0 %v1478
    %v1558 = vpop.f32.mrb[0].mxu0
    %v1559 = vadd.f32 0.0, %v1558
    %v1560 = vpop.f32.mrb[0].mxu0
    %v1561 = vadd.f32 0.0, %v1560
    %1562 = vmatprep.mubr.f32.mxu0 0.0
    %1563 = vmatmul.mubr.f32.gmra.mrb[0].mxu0 %v1481
    %v1564 = vpop.f32.mrb[0].mxu0
    %v1565 = vadd.f32 0.0, %v1564
    %v1566 = vpop.f32.mrb[0].mxu0
    %v1567 = vadd.f32 0.0, %v1566
    %1568 = vmatprep.mubr.f32.mxu0 0.0
    %1569 = vmatmul.mubr.f32.gmra.mrb[0].mxu0 %v1484
    %v1570 = vpop.f32.mrb[0].mxu0
    %v1571 = vadd.f32 0.0, %v1570
    %v1572 = vpop.f32.mrb[0].mxu0
    %v1573 = vadd.f32 0.0, %v1572
    %1574 = vdwg.mxu0
    %1575 = vmatprep.subr.mxu0 %v1445
    %1576 = vmatpush1.msra.mxu0 %v1444
    %1577 = vmatprep.subr.mxu0 %v1453
    %1578 = vmatpush1.msra.mxu0 %v1452
    %1579 = vmatprep.subr.mxu0 %v1461
    %1580 = vmatpush1.msra.mxu0 %v1460
    %1581 = vmatprep.subr.mxu0 %v1469
    %1582 = vmatpush1.msra.mxu0 %v1468
    %1583 = vmatprep.subr.mxu0 0.0
    %1584 = vmatpush1.msra.mxu0 0.0
    %1585 = vmatprep.subr.mxu0 0.0
    %1586 = vmatpush1.msra.mxu0 0.0
    %1587 = vmatprep.subr.mxu0 0.0
    %1588 = vmatpush1.msra.mxu0 0.0
    %1589 = vmatprep.subr.mxu0 0.0
    %1590 = vmatpush1.msra.mxu0 0.0
    %1591 = vmatprep.subr.mxu0 0.0
    %1592 = vmatpush1.msra.mxu0 0.0
    %1593 = vmatprep.subr.mxu0 0.0
    %1594 = vmatpush1.msra.mxu0 0.0
    %1595 = vmatprep.subr.mxu0 0.0
    %1596 = vmatpush1.msra.mxu0 0.0
    %1597 = vmatprep.subr.mxu0 0.0
    %1598 = vmatpush1.msra.mxu0 0.0
    %1599 = vmatprep.subr.mxu0 0.0
    %1600 = vmatpush1.msra.mxu0 0.0
    %1601 = vmatprep.subr.mxu0 0.0
    %1602 = vmatpush1.msra.mxu0 0.0
    %1603 = vmatprep.subr.mxu0 0.0
    %1604 = vmatpush1.msra.mxu0 0.0
    %1605 = vmatprep.subr.mxu0 0.0
    %1606 = vmatpush1.msra.mxu0 0.0
    %1607 = vmatprep.subr.mxu0 0.0
    %1608 = vmatpush1.msra.mxu0 0.0
    %1609 = vmatprep.subr.mxu0 0.0
    %1610 = vmatpush1.msra.mxu0 0.0
    %1611 = vmatprep.subr.mxu0 0.0
    %1612 = vmatpush1.msra.mxu0 0.0
    %1613 = vmatprep.subr.mxu0 0.0
    %1614 = vmatpush1.msra.mxu0 0.0
    %1615 = vmatprep.subr.mxu0 0.0
    %1616 = vmatpush1.msra.mxu0 0.0
    %1617 = vmatprep.subr.mxu0 0.0
    %1618 = vmatpush1.msra.mxu0 0.0
    %1619 = vmatprep.subr.mxu0 0.0
    %1620 = vmatpush1.msra.mxu0 0.0
    %1621 = vmatprep.subr.mxu0 0.0
    %1622 = vmatpush1.msra.mxu0 0.0
    %1623 = vmatprep.subr.mxu0 0.0
    %1624 = vmatpush1.msra.mxu0 0.0
    %1625 = vmatprep.subr.mxu0 0.0
    %1626 = vmatpush1.msra.mxu0 0.0
    %1627 = vmatprep.subr.mxu0 0.0
    %1628 = vmatpush1.msra.mxu0 0.0
    %1629 = vmatprep.subr.mxu0 0.0
    %1630 = vmatpush1.msra.mxu0 0.0
    %1631 = vmatprep.subr.mxu0 0.0
    %1632 = vmatpush1.msra.mxu0 0.0
    %1633 = vmatprep.subr.mxu0 0.0
    %1634 = vmatpush1.msra.mxu0 0.0
    %1635 = vmatprep.subr.mxu0 0.0
    %1636 = vmatpush1.msra.mxu0 0.0
    %1637 = vmatprep.subr.mxu0 0.0
    %1638 = vmatpush1.msra.mxu0 0.0
    %1639 = vmatprep.mubr.f32.mxu0 0.0
    %1640 = vmatmul.mubr.f32.gmra.mrb[0].mxu0 %v1475
    %v1641 = vpop.f32.mrb[0].mxu0
    %v1642 = vadd.f32 0.0, %v1641
    %v1643 = vpop.f32.mrb[0].mxu0
    %v1644 = vadd.f32 0.0, %v1643
    %1645 = vmatprep.mubr.f32.mxu0 0.0
    %1646 = vmatmul.mubr.f32.gmra.mrb[0].mxu0 %v1478
    %v1647 = vpop.f32.mrb[0].mxu0
    %v1648 = vadd.f32 0.0, %v1647
    %v1649 = vpop.f32.mrb[0].mxu0
    %v1650 = vadd.f32 0.0, %v1649
    %1651 = vmatprep.mubr.f32.mxu0 0.0
    %1652 = vmatmul.mubr.f32.gmra.mrb[0].mxu0 %v1481
    %v1653 = vpop.f32.mrb[0].mxu0
    %v1654 = vadd.f32 0.0, %v1653
    %v1655 = vpop.f32.mrb[0].mxu0
    %v1656 = vadd.f32 0.0, %v1655
    %1657 = vmatprep.mubr.f32.mxu0 0.0
    %1658 = vmatmul.mubr.f32.gmra.mrb[0].mxu0 %v1484
    %v1659 = vpop.f32.mrb[0].mxu0
    %v1660 = vadd.f32 0.0, %v1659
    %v1661 = vpop.f32.mrb[0].mxu0
    %v1662 = vadd.f32 0.0, %v1661
    %1663 = vdwg.mxu0
    %1664 = vmatprep.subr.mxu0 %v1447
    %1665 = vmatpush1.msra.mxu0 %v1446
    %1666 = vmatprep.subr.mxu0 %v1455
    %1667 = vmatpush1.msra.mxu0 %v1454
    %1668 = vmatprep.subr.mxu0 %v1463
    %1669 = vmatpush1.msra.mxu0 %v1462
    %1670 = vmatprep.subr.mxu0 %v1471
    %1671 = vmatpush1.msra.mxu0 %v1470
    %1672 = vmatprep.subr.mxu0 0.0
    %1673 = vmatpush1.msra.mxu0 0.0
    %1674 = vmatprep.subr.mxu0 0.0
    %1675 = vmatpush1.msra.mxu0 0.0
    %1676 = vmatprep.subr.mxu0 0.0
    %1677 = vmatpush1.msra.mxu0 0.0
    %1678 = vmatprep.subr.mxu0 0.0
    %1679 = vmatpush1.msra.mxu0 0.0
    %1680 = vmatprep.subr.mxu0 0.0
    %1681 = vmatpush1.msra.mxu0 0.0
    %1682 = vmatprep.subr.mxu0 0.0
    %1683 = vmatpush1.msra.mxu0 0.0
    %1684 = vmatprep.subr.mxu0 0.0
    %1685 = vmatpush1.msra.mxu0 0.0
    %1686 = vmatprep.subr.mxu0 0.0
    %1687 = vmatpush1.msra.mxu0 0.0
    %1688 = vmatprep.subr.mxu0 0.0
    %1689 = vmatpush1.msra.mxu0 0.0
    %1690 = vmatprep.subr.mxu0 0.0
    %1691 = vmatpush1.msra.mxu0 0.0
    %1692 = vmatprep.subr.mxu0 0.0
    %1693 = vmatpush1.msra.mxu0 0.0
    %1694 = vmatprep.subr.mxu0 0.0
    %1695 = vmatpush1.msra.mxu0 0.0
    %1696 = vmatprep.subr.mxu0 0.0
    %1697 = vmatpush1.msra.mxu0 0.0
    %1698 = vmatprep.subr.mxu0 0.0
    %1699 = vmatpush1.msra.mxu0 0.0
    %1700 = vmatprep.subr.mxu0 0.0
    %1701 = vmatpush1.msra.mxu0 0.0
    %1702 = vmatprep.subr.mxu0 0.0
    %1703 = vmatpush1.msra.mxu0 0.0
    %1704 = vmatprep.subr.mxu0 0.0
    %1705 = vmatpush1.msra.mxu0 0.0
    %1706 = vmatprep.subr.mxu0 0.0
    %1707 = vmatpush1.msra.mxu0 0.0
    %1708 = vmatprep.subr.mxu0 0.0
    %1709 = vmatpush1.msra.mxu0 0.0
    %1710 = vmatprep.subr.mxu0 0.0
    %1711 = vmatpush1.msra.mxu0 0.0
    %1712 = vmatprep.subr.mxu0 0.0
    %1713 = vmatpush1.msra.mxu0 0.0
    %1714 = vmatprep.subr.mxu0 0.0
    %1715 = vmatpush1.msra.mxu0 0.0
    %1716 = vmatprep.subr.mxu0 0.0
    %1717 = vmatpush1.msra.mxu0 0.0
    %1718 = vmatprep.subr.mxu0 0.0
    %1719 = vmatpush1.msra.mxu0 0.0
    %1720 = vmatprep.subr.mxu0 0.0
    %1721 = vmatpush1.msra.mxu0 0.0
    %1722 = vmatprep.subr.mxu0 0.0
    %1723 = vmatpush1.msra.mxu0 0.0
    %1724 = vmatprep.subr.mxu0 0.0
    %1725 = vmatpush1.msra.mxu0 0.0
    %1726 = vmatprep.subr.mxu0 0.0
    %1727 = vmatpush1.msra.mxu0 0.0
    %1728 = vmatprep.mubr.f32.mxu0 0.0
    %1729 = vmatmul.mubr.f32.gmra.mrb[0].mxu0 %v1475
    %v1730 = vpop.f32.mrb[0].mxu0
    %v1731 = vadd.f32 0.0, %v1730
    %v1732 = vpop.f32.mrb[0].mxu0
    %v1733 = vadd.f32 0.0, %v1732
    %1734 = vmatprep.mubr.f32.mxu0 0.0
    %1735 = vmatmul.mubr.f32.gmra.mrb[0].mxu0 %v1478
    %v1736 = vpop.f32.mrb[0].mxu0
    %v1737 = vadd.f32 0.0, %v1736
    %v1738 = vpop.f32.mrb[0].mxu0
    %v1739 = vadd.f32 0.0, %v1738
    %1740 = vmatprep.mubr.f32.mxu0 0.0
    %1741 = vmatmul.mubr.f32.gmra.mrb[0].mxu0 %v1481
    %v1742 = vpop.f32.mrb[0].mxu0
    %v1743 = vadd.f32 0.0, %v1742
    %v1744 = vpop.f32.mrb[0].mxu0
    %v1745 = vadd.f32 0.0, %v1744
    %1746 = vmatprep.mubr.f32.mxu0 0.0
    %1747 = vmatmul.mubr.f32.gmra.mrb[0].mxu0 %v1484
    %v1748 = vpop.f32.mrb[0].mxu0
    %v1749 = vadd.f32 0.0, %v1748
    %v1750 = vpop.f32.mrb[0].mxu0
    %v1751 = vadd.f32 0.0, %v1750
    %1752 = vdwg.mxu0
    %1753 = vmatprep.subr.mxu0 %v1449
    %1754 = vmatpush1.msra.mxu0 %v1448
    %1755 = vmatprep.subr.mxu0 %v1457
    %1756 = vmatpush1.msra.mxu0 %v1456
    %1757 = vmatprep.subr.mxu0 %v1465
    %1758 = vmatpush1.msra.mxu0 %v1464
    %1759 = vmatprep.subr.mxu0 %v1473
    %1760 = vmatpush1.msra.mxu0 %v1472
    %1761 = vmatprep.subr.mxu0 0.0
    %1762 = vmatpush1.msra.mxu0 0.0
    %1763 = vmatprep.subr.mxu0 0.0
    %1764 = vmatpush1.msra.mxu0 0.0
    %1765 = vmatprep.subr.mxu0 0.0
    %1766 = vmatpush1.msra.mxu0 0.0
    %1767 = vmatprep.subr.mxu0 0.0
    %1768 = vmatpush1.msra.mxu0 0.0
    %1769 = vmatprep.subr.mxu0 0.0
    %1770 = vmatpush1.msra.mxu0 0.0
    %1771 = vmatprep.subr.mxu0 0.0
    %1772 = vmatpush1.msra.mxu0 0.0
    %1773 = vmatprep.subr.mxu0 0.0
    %1774 = vmatpush1.msra.mxu0 0.0
    %1775 = vmatprep.subr.mxu0 0.0
    %1776 = vmatpush1.msra.mxu0 0.0
    %1777 = vmatprep.subr.mxu0 0.0
    %1778 = vmatpush1.msra.mxu0 0.0
    %1779 = vmatprep.subr.mxu0 0.0
    %1780 = vmatpush1.msra.mxu0 0.0
    %1781 = vmatprep.subr.mxu0 0.0
    %1782 = vmatpush1.msra.mxu0 0.0
    %1783 = vmatprep.subr.mxu0 0.0
    %1784 = vmatpush1.msra.mxu0 0.0
    %1785 = vmatprep.subr.mxu0 0.0
    %1786 = vmatpush1.msra.mxu0 0.0
    %1787 = vmatprep.subr.mxu0 0.0
    %1788 = vmatpush1.msra.mxu0 0.0
    %1789 = vmatprep.subr.mxu0 0.0
    %1790 = vmatpush1.msra.mxu0 0.0
    %1791 = vmatprep.subr.mxu0 0.0
    %1792 = vmatpush1.msra.mxu0 0.0
    %1793 = vmatprep.subr.mxu0 0.0
    %1794 = vmatpush1.msra.mxu0 0.0
    %1795 = vmatprep.subr.mxu0 0.0
    %1796 = vmatpush1.msra.mxu0 0.0
    %1797 = vmatprep.subr.mxu0 0.0
    %1798 = vmatpush1.msra.mxu0 0.0
    %1799 = vmatprep.subr.mxu0 0.0
    %1800 = vmatpush1.msra.mxu0 0.0
    %1801 = vmatprep.subr.mxu0 0.0
    %1802 = vmatpush1.msra.mxu0 0.0
    %1803 = vmatprep.subr.mxu0 0.0
    %1804 = vmatpush1.msra.mxu0 0.0
    %1805 = vmatprep.subr.mxu0 0.0
    %1806 = vmatpush1.msra.mxu0 0.0
    %1807 = vmatprep.subr.mxu0 0.0
    %1808 = vmatpush1.msra.mxu0 0.0
    %1809 = vmatprep.subr.mxu0 0.0
    %1810 = vmatpush1.msra.mxu0 0.0
    %1811 = vmatprep.subr.mxu0 0.0
    %1812 = vmatpush1.msra.mxu0 0.0
    %1813 = vmatprep.subr.mxu0 0.0
    %1814 = vmatpush1.msra.mxu0 0.0
    %1815 = vmatprep.subr.mxu0 0.0
    %1816 = vmatpush1.msra.mxu0 0.0
    %1817 = vmatprep.mubr.f32.mxu0 0.0
    %1818 = vmatmul.mubr.f32.gmra.mrb[0].mxu0 %v1475
    %v1819 = vpop.f32.mrb[0].mxu0
    %v1820 = vadd.f32 0.0, %v1819
    %v1821 = vpop.f32.mrb[0].mxu0
    %v1822 = vadd.f32 0.0, %v1821
    %1823 = vmatprep.mubr.f32.mxu0 0.0
    %1824 = vmatmul.mubr.f32.gmra.mrb[0].mxu0 %v1478
    %v1825 = vpop.f32.mrb[0].mxu0
    %v1826 = vadd.f32 0.0, %v1825
    %v1827 = vpop.f32.mrb[0].mxu0
    %v1828 = vadd.f32 0.0, %v1827
    %1829 = vmatprep.mubr.f32.mxu0 0.0
    %1830 = vmatmul.mubr.f32.gmra.mrb[0].mxu0 %v1481
    %v1831 = vpop.f32.mrb[0].mxu0
    %v1832 = vadd.f32 0.0, %v1831
    %v1833 = vpop.f32.mrb[0].mxu0
    %v1834 = vadd.f32 0.0, %v1833
    %1835 = vmatprep.mubr.f32.mxu0 0.0
    %1836 = vmatmul.mubr.f32.gmra.mrb[0].mxu0 %v1484
    %v1837 = vpop.f32.mrb[0].mxu0
    %v1838 = vadd.f32 0.0, %v1837
    %v1839 = vpop.f32.mrb[0].mxu0
    %v1840 = vadd.f32 0.0, %v1839
    %1841 = vdwg.mxu0
    %v1842 = vadd.f32 %v1115, %v1553
    %v1843 = vadd.f32 %v1117, %v1555
    %v1844 = vadd.f32 %v1204, %v1642
    %v1845 = vadd.f32 %v1206, %v1644
    %v1846 = vadd.f32 %v1293, %v1731
    %v1847 = vadd.f32 %v1295, %v1733
    %v1848 = vadd.f32 %v1382, %v1820
    %v1849 = vadd.f32 %v1384, %v1822
    %v1850 = vadd.f32 %v1121, %v1559
    %v1851 = vadd.f32 %v1123, %v1561
    %v1852 = vadd.f32 %v1210, %v1648
    %v1853 = vadd.f32 %v1212, %v1650
    %v1854 = vadd.f32 %v1299, %v1737
    %v1855 = vadd.f32 %v1301, %v1739
    %v1856 = vadd.f32 %v1388, %v1826
    %v1857 = vadd.f32 %v1390, %v1828
    %v1858 = vadd.f32 %v1127, %v1565
    %v1859 = vadd.f32 %v1129, %v1567
    %v1860 = vadd.f32 %v1216, %v1654
    %v1861 = vadd.f32 %v1218, %v1656
    %v1862 = vadd.f32 %v1305, %v1743
    %v1863 = vadd.f32 %v1307, %v1745
    %v1864 = vadd.f32 %v1394, %v1832
    %v1865 = vadd.f32 %v1396, %v1834
    %v1866 = vadd.f32 %v1133, %v1571
    %v1867 = vadd.f32 %v1135, %v1573
    %v1868 = vadd.f32 %v1222, %v1660
    %v1869 = vadd.f32 %v1224, %v1662
    %v1870 = vadd.f32 %v1311, %v1749
    %v1871 = vadd.f32 %v1313, %v1751
    %v1872 = vadd.f32 %v1400, %v1838
    %v1873 = vadd.f32 %v1402, %v1840
    %s1874 = scalar_lea.vmem %s3, 768
    %v1875 = vld [vmem:[%s1874] sm:$0xff]
    %v1876 = vld [vmem:[%s1874 + $0x8] sm:$0xff]
    %v1877 = vld [vmem:[%s1874 + $0x10] sm:$0xff]
    %v1878 = vld [vmem:[%s1874 + $0x18] sm:$0xff]
    %v1879 = vld [vmem:[%s1874 + $0x20] sm:$0xff]
    %v1880 = vld [vmem:[%s1874 + $0x28] sm:$0xff]
    %v1881 = vld [vmem:[%s1874 + $0x30] sm:$0xff]
    %v1882 = vld [vmem:[%s1874 + $0x38] sm:$0xff]
    %v1883 = vld [vmem:[%s1874 + $0x40] sm:$0xff]
    %v1884 = vld [vmem:[%s1874 + $0x48] sm:$0xff]
    %v1885 = vld [vmem:[%s1874 + $0x50] sm:$0xff]
    %v1886 = vld [vmem:[%s1874 + $0x58] sm:$0xff]
    %v1887 = vld [vmem:[%s1874 + $0x60] sm:$0xff]
    %v1888 = vld [vmem:[%s1874 + $0x68] sm:$0xff]
    %v1889 = vld [vmem:[%s1874 + $0x70] sm:$0xff]
    %v1890 = vld [vmem:[%s1874 + $0x78] sm:$0xff]
    %v1891 = vld [vmem:[%s1874 + $0x80] sm:$0xff]
    %v1892 = vld [vmem:[%s1874 + $0x88] sm:$0xff]
    %v1893 = vld [vmem:[%s1874 + $0x90] sm:$0xff]
    %v1894 = vld [vmem:[%s1874 + $0x98] sm:$0xff]
    %v1895 = vld [vmem:[%s1874 + $0xa0] sm:$0xff]
    %v1896 = vld [vmem:[%s1874 + $0xa8] sm:$0xff]
    %v1897 = vld [vmem:[%s1874 + $0xb0] sm:$0xff]
    %v1898 = vld [vmem:[%s1874 + $0xb8] sm:$0xff]
    %v1899 = vld [vmem:[%s1874 + $0xc0] sm:$0xff]
    %v1900 = vld [vmem:[%s1874 + $0xc8] sm:$0xff]
    %v1901 = vld [vmem:[%s1874 + $0xd0] sm:$0xff]
    %v1902 = vld [vmem:[%s1874 + $0xd8] sm:$0xff]
    %v1903 = vld [vmem:[%s1874 + $0xe0] sm:$0xff]
    %v1904 = vld [vmem:[%s1874 + $0xe8] sm:$0xff]
    %v1905 = vld [vmem:[%s1874 + $0xf0] sm:$0xff]
    %v1906 = vld [vmem:[%s1874 + $0xf8] sm:$0xff]
    %v1908 = vsel %vm100, %v525, 0
    %v1911 = vsel %vm100, %v526, 0
    %v1914 = vsel %vm100, %v527, 0
    %v1917 = vsel %vm100, %v528, 0
    %1919 = vmatprep.subr.mxu0 %v1876
    %1920 = vmatpush1.msra.mxu0 %v1875
    %1921 = vmatprep.subr.mxu0 %v1884
    %1922 = vmatpush1.msra.mxu0 %v1883
    %1923 = vmatprep.subr.mxu0 %v1892
    %1924 = vmatpush1.msra.mxu0 %v1891
    %1925 = vmatprep.subr.mxu0 %v1900
    %1926 = vmatpush1.msra.mxu0 %v1899
    %1927 = vmatprep.subr.mxu0 0.0
    %1928 = vmatpush1.msra.mxu0 0.0
    %1929 = vmatprep.subr.mxu0 0.0
    %1930 = vmatpush1.msra.mxu0 0.0
    %1931 = vmatprep.subr.mxu0 0.0
    %1932 = vmatpush1.msra.mxu0 0.0
    %1933 = vmatprep.subr.mxu0 0.0
    %1934 = vmatpush1.msra.mxu0 0.0
    %1935 = vmatprep.subr.mxu0 0.0
    %1936 = vmatpush1.msra.mxu0 0.0
    %1937 = vmatprep.subr.mxu0 0.0
    %1938 = vmatpush1.msra.mxu0 0.0
    %1939 = vmatprep.subr.mxu0 0.0
    %1940 = vmatpush1.msra.mxu0 0.0
    %1941 = vmatprep.subr.mxu0 0.0
    %1942 = vmatpush1.msra.mxu0 0.0
    %1943 = vmatprep.subr.mxu0 0.0
    %1944 = vmatpush1.msra.mxu0 0.0
    %1945 = vmatprep.subr.mxu0 0.0
    %1946 = vmatpush1.msra.mxu0 0.0
    %1947 = vmatprep.subr.mxu0 0.0
    %1948 = vmatpush1.msra.mxu0 0.0
    %1949 = vmatprep.subr.mxu0 0.0
    %1950 = vmatpush1.msra.mxu0 0.0
    %1951 = vmatprep.subr.mxu0 0.0
    %1952 = vmatpush1.msra.mxu0 0.0
    %1953 = vmatprep.subr.mxu0 0.0
    %1954 = vmatpush1.msra.mxu0 0.0
    %1955 = vmatprep.subr.mxu0 0.0
    %1956 = vmatpush1.msra.mxu0 0.0
    %1957 = vmatprep.subr.mxu0 0.0
    %1958 = vmatpush1.msra.mxu0 0.0
    %1959 = vmatprep.subr.mxu0 0.0
    %1960 = vmatpush1.msra.mxu0 0.0
    %1961 = vmatprep.subr.mxu0 0.0
    %1962 = vmatpush1.msra.mxu0 0.0
    %1963 = vmatprep.subr.mxu0 0.0
    %1964 = vmatpush1.msra.mxu0 0.0
    %1965 = vmatprep.subr.mxu0 0.0
    %1966 = vmatpush1.msra.mxu0 0.0
    %1967 = vmatprep.subr.mxu0 0.0
    %1968 = vmatpush1.msra.mxu0 0.0
    %1969 = vmatprep.subr.mxu0 0.0
    %1970 = vmatpush1.msra.mxu0 0.0
    %1971 = vmatprep.subr.mxu0 0.0
    %1972 = vmatpush1.msra.mxu0 0.0
    %1973 = vmatprep.subr.mxu0 0.0
    %1974 = vmatpush1.msra.mxu0 0.0
    %1975 = vmatprep.subr.mxu0 0.0
    %1976 = vmatpush1.msra.mxu0 0.0
    %1977 = vmatprep.subr.mxu0 0.0
    %1978 = vmatpush1.msra.mxu0 0.0
    %1979 = vmatprep.subr.mxu0 0.0
    %1980 = vmatpush1.msra.mxu0 0.0
    %1981 = vmatprep.subr.mxu0 0.0
    %1982 = vmatpush1.msra.mxu0 0.0
    %1983 = vmatprep.mubr.f32.mxu0 0.0
    %1984 = vmatmul.mubr.f32.gmra.mrb[0].mxu0 %v1908
    %v1985 = vpop.f32.mrb[0].mxu0
    %v1986 = vadd.f32 0.0, %v1985
    %v1987 = vpop.f32.mrb[0].mxu0
    %v1988 = vadd.f32 0.0, %v1987
    %1989 = vmatprep.mubr.f32.mxu0 0.0
    %1990 = vmatmul.mubr.f32.gmra.mrb[0].mxu0 %v1911
    %v1991 = vpop.f32.mrb[0].mxu0
    %v1992 = vadd.f32 0.0, %v1991
    %v1993 = vpop.f32.mrb[0].mxu0
    %v1994 = vadd.f32 0.0, %v1993
    %1995 = vmatprep.mubr.f32.mxu0 0.0
    %1996 = vmatmul.mubr.f32.gmra.mrb[0].mxu0 %v1914
    %v1997 = vpop.f32.mrb[0].mxu0
    %v1998 = vadd.f32 0.0, %v1997
    %v1999 = vpop.f32.mrb[0].mxu0
    %v2000 = vadd.f32 0.0, %v1999
    %2001 = vmatprep.mubr.f32.mxu0 0.0
    %2002 = vmatmul.mubr.f32.gmra.mrb[0].mxu0 %v1917
    %v2003 = vpop.f32.mrb[0].mxu0
    %v2004 = vadd.f32 0.0, %v2003
    %v2005 = vpop.f32.mrb[0].mxu0
    %v2006 = vadd.f32 0.0, %v2005
    %2007 = vdwg.mxu0
    %2008 = vmatprep.subr.mxu0 %v1878
    %2009 = vmatpush1.msra.mxu0 %v1877
    %2010 = vmatprep.subr.mxu0 %v1886
    %2011 = vmatpush1.msra.mxu0 %v1885
    %2012 = vmatprep.subr.mxu0 %v1894
    %2013 = vmatpush1.msra.mxu0 %v1893
    %2014 = vmatprep.subr.mxu0 %v1902
    %2015 = vmatpush1.msra.mxu0 %v1901
    %2016 = vmatprep.subr.mxu0 0.0
    %2017 = vmatpush1.msra.mxu0 0.0
    %2018 = vmatprep.subr.mxu0 0.0
    %2019 = vmatpush1.msra.mxu0 0.0
    %2020 = vmatprep.subr.mxu0 0.0
    %2021 = vmatpush1.msra.mxu0 0.0
    %2022 = vmatprep.subr.mxu0 0.0
    %2023 = vmatpush1.msra.mxu0 0.0
    %2024 = vmatprep.subr.mxu0 0.0
    %2025 = vmatpush1.msra.mxu0 0.0
    %2026 = vmatprep.subr.mxu0 0.0
    %2027 = vmatpush1.msra.mxu0 0.0
    %2028 = vmatprep.subr.mxu0 0.0
    %2029 = vmatpush1.msra.mxu0 0.0
    %2030 = vmatprep.subr.mxu0 0.0
    %2031 = vmatpush1.msra.mxu0 0.0
    %2032 = vmatprep.subr.mxu0 0.0
    %2033 = vmatpush1.msra.mxu0 0.0
    %2034 = vmatprep.subr.mxu0 0.0
    %2035 = vmatpush1.msra.mxu0 0.0
    %2036 = vmatprep.subr.mxu0 0.0
    %2037 = vmatpush1.msra.mxu0 0.0
    %2038 = vmatprep.subr.mxu0 0.0
    %2039 = vmatpush1.msra.mxu0 0.0
    %2040 = vmatprep.subr.mxu0 0.0
    %2041 = vmatpush1.msra.mxu0 0.0
    %2042 = vmatprep.subr.mxu0 0.0
    %2043 = vmatpush1.msra.mxu0 0.0
    %2044 = vmatprep.subr.mxu0 0.0
    %2045 = vmatpush1.msra.mxu0 0.0
    %2046 = vmatprep.subr.mxu0 0.0
    %2047 = vmatpush1.msra.mxu0 0.0
    %2048 = vmatprep.subr.mxu0 0.0
    %2049 = vmatpush1.msra.mxu0 0.0
    %2050 = vmatprep.subr.mxu0 0.0
    %2051 = vmatpush1.msra.mxu0 0.0
    %2052 = vmatprep.subr.mxu0 0.0
    %2053 = vmatpush1.msra.mxu0 0.0
    %2054 = vmatprep.subr.mxu0 0.0
    %2055 = vmatpush1.msra.mxu0 0.0
    %2056 = vmatprep.subr.mxu0 0.0
    %2057 = vmatpush1.msra.mxu0 0.0
    %2058 = vmatprep.subr.mxu0 0.0
    %2059 = vmatpush1.msra.mxu0 0.0
    %2060 = vmatprep.subr.mxu0 0.0
    %2061 = vmatpush1.msra.mxu0 0.0
    %2062 = vmatprep.subr.mxu0 0.0
    %2063 = vmatpush1.msra.mxu0 0.0
    %2064 = vmatprep.subr.mxu0 0.0
    %2065 = vmatpush1.msra.mxu0 0.0
    %2066 = vmatprep.subr.mxu0 0.0
    %2067 = vmatpush1.msra.mxu0 0.0
    %2068 = vmatprep.subr.mxu0 0.0
    %2069 = vmatpush1.msra.mxu0 0.0
    %2070 = vmatprep.subr.mxu0 0.0
    %2071 = vmatpush1.msra.mxu0 0.0
    %2072 = vmatprep.mubr.f32.mxu0 0.0
    %2073 = vmatmul.mubr.f32.gmra.mrb[0].mxu0 %v1908
    %v2074 = vpop.f32.mrb[0].mxu0
    %v2075 = vadd.f32 0.0, %v2074
    %v2076 = vpop.f32.mrb[0].mxu0
    %v2077 = vadd.f32 0.0, %v2076
    %2078 = vmatprep.mubr.f32.mxu0 0.0
    %2079 = vmatmul.mubr.f32.gmra.mrb[0].mxu0 %v1911
    %v2080 = vpop.f32.mrb[0].mxu0
    %v2081 = vadd.f32 0.0, %v2080
    %v2082 = vpop.f32.mrb[0].mxu0
    %v2083 = vadd.f32 0.0, %v2082
    %2084 = vmatprep.mubr.f32.mxu0 0.0
    %2085 = vmatmul.mubr.f32.gmra.mrb[0].mxu0 %v1914
    %v2086 = vpop.f32.mrb[0].mxu0
    %v2087 = vadd.f32 0.0, %v2086
    %v2088 = vpop.f32.mrb[0].mxu0
    %v2089 = vadd.f32 0.0, %v2088
    %2090 = vmatprep.mubr.f32.mxu0 0.0
    %2091 = vmatmul.mubr.f32.gmra.mrb[0].mxu0 %v1917
    %v2092 = vpop.f32.mrb[0].mxu0
    %v2093 = vadd.f32 0.0, %v2092
    %v2094 = vpop.f32.mrb[0].mxu0
    %v2095 = vadd.f32 0.0, %v2094
    %2096 = vdwg.mxu0
    %2097 = vmatprep.subr.mxu0 %v1880
    %2098 = vmatpush1.msra.mxu0 %v1879
    %2099 = vmatprep.subr.mxu0 %v1888
    %2100 = vmatpush1.msra.mxu0 %v1887
    %2101 = vmatprep.subr.mxu0 %v1896
    %2102 = vmatpush1.msra.mxu0 %v1895
    %2103 = vmatprep.subr.mxu0 %v1904
    %2104 = vmatpush1.msra.mxu0 %v1903
    %2105 = vmatprep.subr.mxu0 0.0
    %2106 = vmatpush1.msra.mxu0 0.0
    %2107 = vmatprep.subr.mxu0 0.0
    %2108 = vmatpush1.msra.mxu0 0.0
    %2109 = vmatprep.subr.mxu0 0.0
    %2110 = vmatpush1.msra.mxu0 0.0
    %2111 = vmatprep.subr.mxu0 0.0
    %2112 = vmatpush1.msra.mxu0 0.0
    %2113 = vmatprep.subr.mxu0 0.0
    %2114 = vmatpush1.msra.mxu0 0.0
    %2115 = vmatprep.subr.mxu0 0.0
    %2116 = vmatpush1.msra.mxu0 0.0
    %2117 = vmatprep.subr.mxu0 0.0
    %2118 = vmatpush1.msra.mxu0 0.0
    %2119 = vmatprep.subr.mxu0 0.0
    %2120 = vmatpush1.msra.mxu0 0.0
    %2121 = vmatprep.subr.mxu0 0.0
    %2122 = vmatpush1.msra.mxu0 0.0
    %2123 = vmatprep.subr.mxu0 0.0
    %2124 = vmatpush1.msra.mxu0 0.0
    %2125 = vmatprep.subr.mxu0 0.0
    %2126 = vmatpush1.msra.mxu0 0.0
    %2127 = vmatprep.subr.mxu0 0.0
    %2128 = vmatpush1.msra.mxu0 0.0
    %2129 = vmatprep.subr.mxu0 0.0
    %2130 = vmatpush1.msra.mxu0 0.0
    %2131 = vmatprep.subr.mxu0 0.0
    %2132 = vmatpush1.msra.mxu0 0.0
    %2133 = vmatprep.subr.mxu0 0.0
    %2134 = vmatpush1.msra.mxu0 0.0
    %2135 = vmatprep.subr.mxu0 0.0
    %2136 = vmatpush1.msra.mxu0 0.0
    %2137 = vmatprep.subr.mxu0 0.0
    %2138 = vmatpush1.msra.mxu0 0.0
    %2139 = vmatprep.subr.mxu0 0.0
    %2140 = vmatpush1.msra.mxu0 0.0
    %2141 = vmatprep.subr.mxu0 0.0
    %2142 = vmatpush1.msra.mxu0 0.0
    %2143 = vmatprep.subr.mxu0 0.0
    %2144 = vmatpush1.msra.mxu0 0.0
    %2145 = vmatprep.subr.mxu0 0.0
    %2146 = vmatpush1.msra.mxu0 0.0
    %2147 = vmatprep.subr.mxu0 0.0
    %2148 = vmatpush1.msra.mxu0 0.0
    %2149 = vmatprep.subr.mxu0 0.0
    %2150 = vmatpush1.msra.mxu0 0.0
    %2151 = vmatprep.subr.mxu0 0.0
    %2152 = vmatpush1.msra.mxu0 0.0
    %2153 = vmatprep.subr.mxu0 0.0
    %2154 = vmatpush1.msra.mxu0 0.0
    %2155 = vmatprep.subr.mxu0 0.0
    %2156 = vmatpush1.msra.mxu0 0.0
    %2157 = vmatprep.subr.mxu0 0.0
    %2158 = vmatpush1.msra.mxu0 0.0
    %2159 = vmatprep.subr.mxu0 0.0
    %2160 = vmatpush1.msra.mxu0 0.0
    %2161 = vmatprep.mubr.f32.mxu0 0.0
    %2162 = vmatmul.mubr.f32.gmra.mrb[0].mxu0 %v1908
    %v2163 = vpop.f32.mrb[0].mxu0
    %v2164 = vadd.f32 0.0, %v2163
    %v2165 = vpop.f32.mrb[0].mxu0
    %v2166 = vadd.f32 0.0, %v2165
    %2167 = vmatprep.mubr.f32.mxu0 0.0
    %2168 = vmatmul.mubr.f32.gmra.mrb[0].mxu0 %v1911
    %v2169 = vpop.f32.mrb[0].mxu0
    %v2170 = vadd.f32 0.0, %v2169
    %v2171 = vpop.f32.mrb[0].mxu0
    %v2172 = vadd.f32 0.0, %v2171
    %2173 = vmatprep.mubr.f32.mxu0 0.0
    %2174 = vmatmul.mubr.f32.gmra.mrb[0].mxu0 %v1914
    %v2175 = vpop.f32.mrb[0].mxu0
    %v2176 = vadd.f32 0.0, %v2175
    %v2177 = vpop.f32.mrb[0].mxu0
    %v2178 = vadd.f32 0.0, %v2177
    %2179 = vmatprep.mubr.f32.mxu0 0.0
    %2180 = vmatmul.mubr.f32.gmra.mrb[0].mxu0 %v1917
    %v2181 = vpop.f32.mrb[0].mxu0
    %v2182 = vadd.f32 0.0, %v2181
    %v2183 = vpop.f32.mrb[0].mxu0
    %v2184 = vadd.f32 0.0, %v2183
    %2185 = vdwg.mxu0
    %2186 = vmatprep.subr.mxu0 %v1882
    %2187 = vmatpush1.msra.mxu0 %v1881
    %2188 = vmatprep.subr.mxu0 %v1890
    %2189 = vmatpush1.msra.mxu0 %v1889
    %2190 = vmatprep.subr.mxu0 %v1898
    %2191 = vmatpush1.msra.mxu0 %v1897
    %2192 = vmatprep.subr.mxu0 %v1906
    %2193 = vmatpush1.msra.mxu0 %v1905
    %2194 = vmatprep.subr.mxu0 0.0
    %2195 = vmatpush1.msra.mxu0 0.0
    %2196 = vmatprep.subr.mxu0 0.0
    %2197 = vmatpush1.msra.mxu0 0.0
    %2198 = vmatprep.subr.mxu0 0.0
    %2199 = vmatpush1.msra.mxu0 0.0
    %2200 = vmatprep.subr.mxu0 0.0
    %2201 = vmatpush1.msra.mxu0 0.0
    %2202 = vmatprep.subr.mxu0 0.0
    %2203 = vmatpush1.msra.mxu0 0.0
    %2204 = vmatprep.subr.mxu0 0.0
    %2205 = vmatpush1.msra.mxu0 0.0
    %2206 = vmatprep.subr.mxu0 0.0
    %2207 = vmatpush1.msra.mxu0 0.0
    %2208 = vmatprep.subr.mxu0 0.0
    %2209 = vmatpush1.msra.mxu0 0.0
    %2210 = vmatprep.subr.mxu0 0.0
    %2211 = vmatpush1.msra.mxu0 0.0
    %2212 = vmatprep.subr.mxu0 0.0
    %2213 = vmatpush1.msra.mxu0 0.0
    %2214 = vmatprep.subr.mxu0 0.0
    %2215 = vmatpush1.msra.mxu0 0.0
    %2216 = vmatprep.subr.mxu0 0.0
    %2217 = vmatpush1.msra.mxu0 0.0
    %2218 = vmatprep.subr.mxu0 0.0
    %2219 = vmatpush1.msra.mxu0 0.0
    %2220 = vmatprep.subr.mxu0 0.0
    %2221 = vmatpush1.msra.mxu0 0.0
    %2222 = vmatprep.subr.mxu0 0.0
    %2223 = vmatpush1.msra.mxu0 0.0
    %2224 = vmatprep.subr.mxu0 0.0
    %2225 = vmatpush1.msra.mxu0 0.0
    %2226 = vmatprep.subr.mxu0 0.0
    %2227 = vmatpush1.msra.mxu0 0.0
    %2228 = vmatprep.subr.mxu0 0.0
    %2229 = vmatpush1.msra.mxu0 0.0
    %2230 = vmatprep.subr.mxu0 0.0
    %2231 = vmatpush1.msra.mxu0 0.0
    %2232 = vmatprep.subr.mxu0 0.0
    %2233 = vmatpush1.msra.mxu0 0.0
    %2234 = vmatprep.subr.mxu0 0.0
    %2235 = vmatpush1.msra.mxu0 0.0
    %2236 = vmatprep.subr.mxu0 0.0
    %2237 = vmatpush1.msra.mxu0 0.0
    %2238 = vmatprep.subr.mxu0 0.0
    %2239 = vmatpush1.msra.mxu0 0.0
    %2240 = vmatprep.subr.mxu0 0.0
    %2241 = vmatpush1.msra.mxu0 0.0
    %2242 = vmatprep.subr.mxu0 0.0
    %2243 = vmatpush1.msra.mxu0 0.0
    %2244 = vmatprep.subr.mxu0 0.0
    %2245 = vmatpush1.msra.mxu0 0.0
    %2246 = vmatprep.subr.mxu0 0.0
    %2247 = vmatpush1.msra.mxu0 0.0
    %2248 = vmatprep.subr.mxu0 0.0
    %2249 = vmatpush1.msra.mxu0 0.0
    %2250 = vmatprep.mubr.f32.mxu0 0.0
    %2251 = vmatmul.mubr.f32.gmra.mrb[0].mxu0 %v1908
    %v2252 = vpop.f32.mrb[0].mxu0
    %v2253 = vadd.f32 0.0, %v2252
    %v2254 = vpop.f32.mrb[0].mxu0
    %v2255 = vadd.f32 0.0, %v2254
    %2256 = vmatprep.mubr.f32.mxu0 0.0
    %2257 = vmatmul.mubr.f32.gmra.mrb[0].mxu0 %v1911
    %v2258 = vpop.f32.mrb[0].mxu0
    %v2259 = vadd.f32 0.0, %v2258
    %v2260 = vpop.f32.mrb[0].mxu0
    %v2261 = vadd.f32 0.0, %v2260
    %2262 = vmatprep.mubr.f32.mxu0 0.0
    %2263 = vmatmul.mubr.f32.gmra.mrb[0].mxu0 %v1914
    %v2264 = vpop.f32.mrb[0].mxu0
    %v2265 = vadd.f32 0.0, %v2264
    %v2266 = vpop.f32.mrb[0].mxu0
    %v2267 = vadd.f32 0.0, %v2266
    %2268 = vmatprep.mubr.f32.mxu0 0.0
    %2269 = vmatmul.mubr.f32.gmra.mrb[0].mxu0 %v1917
    %v2270 = vpop.f32.mrb[0].mxu0
    %v2271 = vadd.f32 0.0, %v2270
    %v2272 = vpop.f32.mrb[0].mxu0
    %v2273 = vadd.f32 0.0, %v2272
    %2274 = vdwg.mxu0
    %v2275 = vadd.f32 %v1842, %v1986
    %v2276 = vadd.f32 %v1843, %v1988
    %v2277 = vadd.f32 %v1844, %v2075
    %v2278 = vadd.f32 %v1845, %v2077
    %v2279 = vadd.f32 %v1846, %v2164
    %v2280 = vadd.f32 %v1847, %v2166
    %v2281 = vadd.f32 %v1848, %v2253
    %v2282 = vadd.f32 %v1849, %v2255
    %v2283 = vadd.f32 %v1850, %v1992
    %v2284 = vadd.f32 %v1851, %v1994
    %v2285 = vadd.f32 %v1852, %v2081
    %v2286 = vadd.f32 %v1853, %v2083
    %v2287 = vadd.f32 %v1854, %v2170
    %v2288 = vadd.f32 %v1855, %v2172
    %v2289 = vadd.f32 %v1856, %v2259
    %v2290 = vadd.f32 %v1857, %v2261
    %v2291 = vadd.f32 %v1858, %v1998
    %v2292 = vadd.f32 %v1859, %v2000
    %v2293 = vadd.f32 %v1860, %v2087
    %v2294 = vadd.f32 %v1861, %v2089
    %v2295 = vadd.f32 %v1862, %v2176
    %v2296 = vadd.f32 %v1863, %v2178
    %v2297 = vadd.f32 %v1864, %v2265
    %v2298 = vadd.f32 %v1865, %v2267
    %v2299 = vadd.f32 %v1866, %v2004
    %v2300 = vadd.f32 %v1867, %v2006
    %v2301 = vadd.f32 %v1868, %v2093
    %v2302 = vadd.f32 %v1869, %v2095
    %v2303 = vadd.f32 %v1870, %v2182
    %v2304 = vadd.f32 %v1871, %v2184
    %v2305 = vadd.f32 %v1872, %v2271
    %v2306 = vadd.f32 %v1873, %v2273
    %v2307 = vrot.slane %v525, 1
    %v2308 = vrot.slane %v526, 1
    %v2309 = vrot.slane %v527, 1
    %v2310 = vrot.slane %v528, 1
    %vm2311 = vcmp.lt.s32.totalorder %v46, 7
    %v2312 = vsel %vm2311, %v2309, %v2310
    %v2313 = vsel %vm2311, %v2308, %v2309
    %v2314 = vsel %vm2311, %v2307, %v2308
    %v2315 = vsel %vm2311, %v2310, %v2307
    %v2316 = vadd.s32 %v46, 1
    %v2317 = vadd.s32 %v47, 1
    %v2318 = vadd.s32 %v48, 1
    %v2319 = vadd.s32 %v49, 1
    %vm2320 = vcmp.ge.s32.totalorder %v2316, 0
    %vm2321 = vcmp.ge.s32.totalorder %v2317, 0
    %vm2322 = vcmp.ge.s32.totalorder %v2318, 0
    %vm2323 = vcmp.ge.s32.totalorder %v2319, 0
    %vm2324 = vcmp.lt.s32.totalorder %v2316, 32
    %vm2325 = vcmp.lt.s32.totalorder %v2317, 32
    %vm2326 = vcmp.lt.s32.totalorder %v2318, 32
    %vm2327 = vcmp.lt.s32.totalorder %v2319, 32
    %vm2328 = vmand %vm2320, %vm2324
    %vm2329 = vmand %vm2321, %vm2325
    %vm2330 = vmand %vm2322, %vm2326
    %vm2331 = vmand %vm2323, %vm2327
    %v2332 = vsel %vm2328, 1, 0
    %v2333 = vsel %vm2329, 1, 0
    %v2334 = vsel %vm2330, 1, 0
    %v2335 = vsel %vm2331, 1, 0
    %vm2336 = vcmp.eq.s32.totalorder %v2332, 1
    %vm2337 = vcmp.eq.s32.totalorder %v2333, 1
    %vm2338 = vcmp.eq.s32.totalorder %v2334, 1
    %vm2339 = vcmp.eq.s32.totalorder %v2335, 1
    %v2340 = vsel %vm2336, %v2314, 0.0
    %v2341 = vsel %vm2337, %v2313, 0.0
    %v2342 = vsel %vm2338, %v2312, 0.0
    %v2343 = vsel %vm2339, %v2315, 0.0
    %s2344 = scalar_lea.vmem %s3, 1024
    %v2345 = vld [vmem:[%s2344] sm:$0xff]
    %v2346 = vld [vmem:[%s2344 + $0x8] sm:$0xff]
    %v2347 = vld [vmem:[%s2344 + $0x10] sm:$0xff]
    %v2348 = vld [vmem:[%s2344 + $0x18] sm:$0xff]
    %v2349 = vld [vmem:[%s2344 + $0x20] sm:$0xff]
    %v2350 = vld [vmem:[%s2344 + $0x28] sm:$0xff]
    %v2351 = vld [vmem:[%s2344 + $0x30] sm:$0xff]
    %v2352 = vld [vmem:[%s2344 + $0x38] sm:$0xff]
    %v2353 = vld [vmem:[%s2344 + $0x40] sm:$0xff]
    %v2354 = vld [vmem:[%s2344 + $0x48] sm:$0xff]
    %v2355 = vld [vmem:[%s2344 + $0x50] sm:$0xff]
    %v2356 = vld [vmem:[%s2344 + $0x58] sm:$0xff]
    %v2357 = vld [vmem:[%s2344 + $0x60] sm:$0xff]
    %v2358 = vld [vmem:[%s2344 + $0x68] sm:$0xff]
    %v2359 = vld [vmem:[%s2344 + $0x70] sm:$0xff]
    %v2360 = vld [vmem:[%s2344 + $0x78] sm:$0xff]
    %v2361 = vld [vmem:[%s2344 + $0x80] sm:$0xff]
    %v2362 = vld [vmem:[%s2344 + $0x88] sm:$0xff]
    %v2363 = vld [vmem:[%s2344 + $0x90] sm:$0xff]
    %v2364 = vld [vmem:[%s2344 + $0x98] sm:$0xff]
    %v2365 = vld [vmem:[%s2344 + $0xa0] sm:$0xff]
    %v2366 = vld [vmem:[%s2344 + $0xa8] sm:$0xff]
    %v2367 = vld [vmem:[%s2344 + $0xb0] sm:$0xff]
    %v2368 = vld [vmem:[%s2344 + $0xb8] sm:$0xff]
    %v2369 = vld [vmem:[%s2344 + $0xc0] sm:$0xff]
    %v2370 = vld [vmem:[%s2344 + $0xc8] sm:$0xff]
    %v2371 = vld [vmem:[%s2344 + $0xd0] sm:$0xff]
    %v2372 = vld [vmem:[%s2344 + $0xd8] sm:$0xff]
    %v2373 = vld [vmem:[%s2344 + $0xe0] sm:$0xff]
    %v2374 = vld [vmem:[%s2344 + $0xe8] sm:$0xff]
    %v2375 = vld [vmem:[%s2344 + $0xf0] sm:$0xff]
    %v2376 = vld [vmem:[%s2344 + $0xf8] sm:$0xff]
    %v2378 = vsel %vm100, %v2340, 0
    %v2381 = vsel %vm100, %v2341, 0
    %v2384 = vsel %vm100, %v2342, 0
    %v2387 = vsel %vm100, %v2343, 0
    %2389 = vmatprep.subr.mxu0 %v2346
    %2390 = vmatpush1.msra.mxu0 %v2345
    %2391 = vmatprep.subr.mxu0 %v2354
    %2392 = vmatpush1.msra.mxu0 %v2353
    %2393 = vmatprep.subr.mxu0 %v2362
    %2394 = vmatpush1.msra.mxu0 %v2361
    %2395 = vmatprep.subr.mxu0 %v2370
    %2396 = vmatpush1.msra.mxu0 %v2369
    %2397 = vmatprep.subr.mxu0 0.0
    %2398 = vmatpush1.msra.mxu0 0.0
    %2399 = vmatprep.subr.mxu0 0.0
    %2400 = vmatpush1.msra.mxu0 0.0
    %2401 = vmatprep.subr.mxu0 0.0
    %2402 = vmatpush1.msra.mxu0 0.0
    %2403 = vmatprep.subr.mxu0 0.0
    %2404 = vmatpush1.msra.mxu0 0.0
    %2405 = vmatprep.subr.mxu0 0.0
    %2406 = vmatpush1.msra.mxu0 0.0
    %2407 = vmatprep.subr.mxu0 0.0
    %2408 = vmatpush1.msra.mxu0 0.0
    %2409 = vmatprep.subr.mxu0 0.0
    %2410 = vmatpush1.msra.mxu0 0.0
    %2411 = vmatprep.subr.mxu0 0.0
    %2412 = vmatpush1.msra.mxu0 0.0
    %2413 = vmatprep.subr.mxu0 0.0
    %2414 = vmatpush1.msra.mxu0 0.0
    %2415 = vmatprep.subr.mxu0 0.0
    %2416 = vmatpush1.msra.mxu0 0.0
    %2417 = vmatprep.subr.mxu0 0.0
    %2418 = vmatpush1.msra.mxu0 0.0
    %2419 = vmatprep.subr.mxu0 0.0
    %2420 = vmatpush1.msra.mxu0 0.0
    %2421 = vmatprep.subr.mxu0 0.0
    %2422 = vmatpush1.msra.mxu0 0.0
    %2423 = vmatprep.subr.mxu0 0.0
    %2424 = vmatpush1.msra.mxu0 0.0
    %2425 = vmatprep.subr.mxu0 0.0
    %2426 = vmatpush1.msra.mxu0 0.0
    %2427 = vmatprep.subr.mxu0 0.0
    %2428 = vmatpush1.msra.mxu0 0.0
    %2429 = vmatprep.subr.mxu0 0.0
    %2430 = vmatpush1.msra.mxu0 0.0
    %2431 = vmatprep.subr.mxu0 0.0
    %2432 = vmatpush1.msra.mxu0 0.0
    %2433 = vmatprep.subr.mxu0 0.0
    %2434 = vmatpush1.msra.mxu0 0.0
    %2435 = vmatprep.subr.mxu0 0.0
    %2436 = vmatpush1.msra.mxu0 0.0
    %2437 = vmatprep.subr.mxu0 0.0
    %2438 = vmatpush1.msra.mxu0 0.0
    %2439 = vmatprep.subr.mxu0 0.0
    %2440 = vmatpush1.msra.mxu0 0.0
    %2441 = vmatprep.subr.mxu0 0.0
    %2442 = vmatpush1.msra.mxu0 0.0
    %2443 = vmatprep.subr.mxu0 0.0
    %2444 = vmatpush1.msra.mxu0 0.0
    %2445 = vmatprep.subr.mxu0 0.0
    %2446 = vmatpush1.msra.mxu0 0.0
    %2447 = vmatprep.subr.mxu0 0.0
    %2448 = vmatpush1.msra.mxu0 0.0
    %2449 = vmatprep.subr.mxu0 0.0
    %2450 = vmatpush1.msra.mxu0 0.0
    %2451 = vmatprep.subr.mxu0 0.0
    %2452 = vmatpush1.msra.mxu0 0.0
    %2453 = vmatprep.mubr.f32.mxu0 0.0
    %2454 = vmatmul.mubr.f32.gmra.mrb[0].mxu0 %v2378
    %v2455 = vpop.f32.mrb[0].mxu0
    %v2456 = vadd.f32 0.0, %v2455
    %v2457 = vpop.f32.mrb[0].mxu0
    %v2458 = vadd.f32 0.0, %v2457
    %2459 = vmatprep.mubr.f32.mxu0 0.0
    %2460 = vmatmul.mubr.f32.gmra.mrb[0].mxu0 %v2381
    %v2461 = vpop.f32.mrb[0].mxu0
    %v2462 = vadd.f32 0.0, %v2461
    %v2463 = vpop.f32.mrb[0].mxu0
    %v2464 = vadd.f32 0.0, %v2463
    %2465 = vmatprep.mubr.f32.mxu0 0.0
    %2466 = vmatmul.mubr.f32.gmra.mrb[0].mxu0 %v2384
    %v2467 = vpop.f32.mrb[0].mxu0
    %v2468 = vadd.f32 0.0, %v2467
    %v2469 = vpop.f32.mrb[0].mxu0
    %v2470 = vadd.f32 0.0, %v2469
    %2471 = vmatprep.mubr.f32.mxu0 0.0
    %2472 = vmatmul.mubr.f32.gmra.mrb[0].mxu0 %v2387
    %v2473 = vpop.f32.mrb[0].mxu0
    %v2474 = vadd.f32 0.0, %v2473
    %v2475 = vpop.f32.mrb[0].mxu0
    %v2476 = vadd.f32 0.0, %v2475
    %2477 = vdwg.mxu0
    %2478 = vmatprep.subr.mxu0 %v2348
    %2479 = vmatpush1.msra.mxu0 %v2347
    %2480 = vmatprep.subr.mxu0 %v2356
    %2481 = vmatpush1.msra.mxu0 %v2355
    %2482 = vmatprep.subr.mxu0 %v2364
    %2483 = vmatpush1.msra.mxu0 %v2363
    %2484 = vmatprep.subr.mxu0 %v2372
    %2485 = vmatpush1.msra.mxu0 %v2371
    %2486 = vmatprep.subr.mxu0 0.0
    %2487 = vmatpush1.msra.mxu0 0.0
    %2488 = vmatprep.subr.mxu0 0.0
    %2489 = vmatpush1.msra.mxu0 0.0
    %2490 = vmatprep.subr.mxu0 0.0
    %2491 = vmatpush1.msra.mxu0 0.0
    %2492 = vmatprep.subr.mxu0 0.0
    %2493 = vmatpush1.msra.mxu0 0.0
    %2494 = vmatprep.subr.mxu0 0.0
    %2495 = vmatpush1.msra.mxu0 0.0
    %2496 = vmatprep.subr.mxu0 0.0
    %2497 = vmatpush1.msra.mxu0 0.0
    %2498 = vmatprep.subr.mxu0 0.0
    %2499 = vmatpush1.msra.mxu0 0.0
    %2500 = vmatprep.subr.mxu0 0.0
    %2501 = vmatpush1.msra.mxu0 0.0
    %2502 = vmatprep.subr.mxu0 0.0
    %2503 = vmatpush1.msra.mxu0 0.0
    %2504 = vmatprep.subr.mxu0 0.0
    %2505 = vmatpush1.msra.mxu0 0.0
    %2506 = vmatprep.subr.mxu0 0.0
    %2507 = vmatpush1.msra.mxu0 0.0
    %2508 = vmatprep.subr.mxu0 0.0
    %2509 = vmatpush1.msra.mxu0 0.0
    %2510 = vmatprep.subr.mxu0 0.0
    %2511 = vmatpush1.msra.mxu0 0.0
    %2512 = vmatprep.subr.mxu0 0.0
    %2513 = vmatpush1.msra.mxu0 0.0
    %2514 = vmatprep.subr.mxu0 0.0
    %2515 = vmatpush1.msra.mxu0 0.0
    %2516 = vmatprep.subr.mxu0 0.0
    %2517 = vmatpush1.msra.mxu0 0.0
    %2518 = vmatprep.subr.mxu0 0.0
    %2519 = vmatpush1.msra.mxu0 0.0
    %2520 = vmatprep.subr.mxu0 0.0
    %2521 = vmatpush1.msra.mxu0 0.0
    %2522 = vmatprep.subr.mxu0 0.0
    %2523 = vmatpush1.msra.mxu0 0.0
    %2524 = vmatprep.subr.mxu0 0.0
    %2525 = vmatpush1.msra.mxu0 0.0
    %2526 = vmatprep.subr.mxu0 0.0
    %2527 = vmatpush1.msra.mxu0 0.0
    %2528 = vmatprep.subr.mxu0 0.0
    %2529 = vmatpush1.msra.mxu0 0.0
    %2530 = vmatprep.subr.mxu0 0.0
    %2531 = vmatpush1.msra.mxu0 0.0
    %2532 = vmatprep.subr.mxu0 0.0
    %2533 = vmatpush1.msra.mxu0 0.0
    %2534 = vmatprep.subr.mxu0 0.0
    %2535 = vmatpush1.msra.mxu0 0.0
    %2536 = vmatprep.subr.mxu0 0.0
    %2537 = vmatpush1.msra.mxu0 0.0
    %2538 = vmatprep.subr.mxu0 0.0
    %2539 = vmatpush1.msra.mxu0 0.0
    %2540 = vmatprep.subr.mxu0 0.0
    %2541 = vmatpush1.msra.mxu0 0.0
    %2542 = vmatprep.mubr.f32.mxu0 0.0
    %2543 = vmatmul.mubr.f32.gmra.mrb[0].mxu0 %v2378
    %v2544 = vpop.f32.mrb[0].mxu0
    %v2545 = vadd.f32 0.0, %v2544
    %v2546 = vpop.f32.mrb[0].mxu0
    %v2547 = vadd.f32 0.0, %v2546
    %2548 = vmatprep.mubr.f32.mxu0 0.0
    %2549 = vmatmul.mubr.f32.gmra.mrb[0].mxu0 %v2381
    %v2550 = vpop.f32.mrb[0].mxu0
    %v2551 = vadd.f32 0.0, %v2550
    %v2552 = vpop.f32.mrb[0].mxu0
    %v2553 = vadd.f32 0.0, %v2552
    %2554 = vmatprep.mubr.f32.mxu0 0.0
    %2555 = vmatmul.mubr.f32.gmra.mrb[0].mxu0 %v2384
    %v2556 = vpop.f32.mrb[0].mxu0
    %v2557 = vadd.f32 0.0, %v2556
    %v2558 = vpop.f32.mrb[0].mxu0
    %v2559 = vadd.f32 0.0, %v2558
    %2560 = vmatprep.mubr.f32.mxu0 0.0
    %2561 = vmatmul.mubr.f32.gmra.mrb[0].mxu0 %v2387
    %v2562 = vpop.f32.mrb[0].mxu0
    %v2563 = vadd.f32 0.0, %v2562
    %v2564 = vpop.f32.mrb[0].mxu0
    %v2565 = vadd.f32 0.0, %v2564
    %2566 = vdwg.mxu0
    %2567 = vmatprep.subr.mxu0 %v2350
    %2568 = vmatpush1.msra.mxu0 %v2349
    %2569 = vmatprep.subr.mxu0 %v2358
    %2570 = vmatpush1.msra.mxu0 %v2357
    %2571 = vmatprep.subr.mxu0 %v2366
    %2572 = vmatpush1.msra.mxu0 %v2365
    %2573 = vmatprep.subr.mxu0 %v2374
    %2574 = vmatpush1.msra.mxu0 %v2373
    %2575 = vmatprep.subr.mxu0 0.0
    %2576 = vmatpush1.msra.mxu0 0.0
    %2577 = vmatprep.subr.mxu0 0.0
    %2578 = vmatpush1.msra.mxu0 0.0
    %2579 = vmatprep.subr.mxu0 0.0
    %2580 = vmatpush1.msra.mxu0 0.0
    %2581 = vmatprep.subr.mxu0 0.0
    %2582 = vmatpush1.msra.mxu0 0.0
    %2583 = vmatprep.subr.mxu0 0.0
    %2584 = vmatpush1.msra.mxu0 0.0
    %2585 = vmatprep.subr.mxu0 0.0
    %2586 = vmatpush1.msra.mxu0 0.0
    %2587 = vmatprep.subr.mxu0 0.0
    %2588 = vmatpush1.msra.mxu0 0.0
    %2589 = vmatprep.subr.mxu0 0.0
    %2590 = vmatpush1.msra.mxu0 0.0
    %2591 = vmatprep.subr.mxu0 0.0
    %2592 = vmatpush1.msra.mxu0 0.0
    %2593 = vmatprep.subr.mxu0 0.0
    %2594 = vmatpush1.msra.mxu0 0.0
    %2595 = vmatprep.subr.mxu0 0.0
    %2596 = vmatpush1.msra.mxu0 0.0
    %2597 = vmatprep.subr.mxu0 0.0
    %2598 = vmatpush1.msra.mxu0 0.0
    %2599 = vmatprep.subr.mxu0 0.0
    %2600 = vmatpush1.msra.mxu0 0.0
    %2601 = vmatprep.subr.mxu0 0.0
    %2602 = vmatpush1.msra.mxu0 0.0
    %2603 = vmatprep.subr.mxu0 0.0
    %2604 = vmatpush1.msra.mxu0 0.0
    %2605 = vmatprep.subr.mxu0 0.0
    %2606 = vmatpush1.msra.mxu0 0.0
    %2607 = vmatprep.subr.mxu0 0.0
    %2608 = vmatpush1.msra.mxu0 0.0
    %2609 = vmatprep.subr.mxu0 0.0
    %2610 = vmatpush1.msra.mxu0 0.0
    %2611 = vmatprep.subr.mxu0 0.0
    %2612 = vmatpush1.msra.mxu0 0.0
    %2613 = vmatprep.subr.mxu0 0.0
    %2614 = vmatpush1.msra.mxu0 0.0
    %2615 = vmatprep.subr.mxu0 0.0
    %2616 = vmatpush1.msra.mxu0 0.0
    %2617 = vmatprep.subr.mxu0 0.0
    %2618 = vmatpush1.msra.mxu0 0.0
    %2619 = vmatprep.subr.mxu0 0.0
    %2620 = vmatpush1.msra.mxu0 0.0
    %2621 = vmatprep.subr.mxu0 0.0
    %2622 = vmatpush1.msra.mxu0 0.0
    %2623 = vmatprep.subr.mxu0 0.0
    %2624 = vmatpush1.msra.mxu0 0.0
    %2625 = vmatprep.subr.mxu0 0.0
    %2626 = vmatpush1.msra.mxu0 0.0
    %2627 = vmatprep.subr.mxu0 0.0
    %2628 = vmatpush1.msra.mxu0 0.0
    %2629 = vmatprep.subr.mxu0 0.0
    %2630 = vmatpush1.msra.mxu0 0.0
    %2631 = vmatprep.mubr.f32.mxu0 0.0
    %2632 = vmatmul.mubr.f32.gmra.mrb[0].mxu0 %v2378
    %v2633 = vpop.f32.mrb[0].mxu0
    %v2634 = vadd.f32 0.0, %v2633
    %v2635 = vpop.f32.mrb[0].mxu0
    %v2636 = vadd.f32 0.0, %v2635
    %2637 = vmatprep.mubr.f32.mxu0 0.0
    %2638 = vmatmul.mubr.f32.gmra.mrb[0].mxu0 %v2381
    %v2639 = vpop.f32.mrb[0].mxu0
    %v2640 = vadd.f32 0.0, %v2639
    %v2641 = vpop.f32.mrb[0].mxu0
    %v2642 = vadd.f32 0.0, %v2641
    %2643 = vmatprep.mubr.f32.mxu0 0.0
    %2644 = vmatmul.mubr.f32.gmra.mrb[0].mxu0 %v2384
    %v2645 = vpop.f32.mrb[0].mxu0
    %v2646 = vadd.f32 0.0, %v2645
    %v2647 = vpop.f32.mrb[0].mxu0
    %v2648 = vadd.f32 0.0, %v2647
    %2649 = vmatprep.mubr.f32.mxu0 0.0
    %2650 = vmatmul.mubr.f32.gmra.mrb[0].mxu0 %v2387
    %v2651 = vpop.f32.mrb[0].mxu0
    %v2652 = vadd.f32 0.0, %v2651
    %v2653 = vpop.f32.mrb[0].mxu0
    %v2654 = vadd.f32 0.0, %v2653
    %2655 = vdwg.mxu0
    %2656 = vmatprep.subr.mxu0 %v2352
    %2657 = vmatpush1.msra.mxu0 %v2351
    %2658 = vmatprep.subr.mxu0 %v2360
    %2659 = vmatpush1.msra.mxu0 %v2359
    %2660 = vmatprep.subr.mxu0 %v2368
    %2661 = vmatpush1.msra.mxu0 %v2367
    %2662 = vmatprep.subr.mxu0 %v2376
    %2663 = vmatpush1.msra.mxu0 %v2375
    %2664 = vmatprep.subr.mxu0 0.0
    %2665 = vmatpush1.msra.mxu0 0.0
    %2666 = vmatprep.subr.mxu0 0.0
    %2667 = vmatpush1.msra.mxu0 0.0
    %2668 = vmatprep.subr.mxu0 0.0
    %2669 = vmatpush1.msra.mxu0 0.0
    %2670 = vmatprep.subr.mxu0 0.0
    %2671 = vmatpush1.msra.mxu0 0.0
    %2672 = vmatprep.subr.mxu0 0.0
    %2673 = vmatpush1.msra.mxu0 0.0
    %2674 = vmatprep.subr.mxu0 0.0
    %2675 = vmatpush1.msra.mxu0 0.0
    %2676 = vmatprep.subr.mxu0 0.0
    %2677 = vmatpush1.msra.mxu0 0.0
    %2678 = vmatprep.subr.mxu0 0.0
    %2679 = vmatpush1.msra.mxu0 0.0
    %2680 = vmatprep.subr.mxu0 0.0
    %2681 = vmatpush1.msra.mxu0 0.0
    %2682 = vmatprep.subr.mxu0 0.0
    %2683 = vmatpush1.msra.mxu0 0.0
    %2684 = vmatprep.subr.mxu0 0.0
    %2685 = vmatpush1.msra.mxu0 0.0
    %2686 = vmatprep.subr.mxu0 0.0
    %2687 = vmatpush1.msra.mxu0 0.0
    %2688 = vmatprep.subr.mxu0 0.0
    %2689 = vmatpush1.msra.mxu0 0.0
    %2690 = vmatprep.subr.mxu0 0.0
    %2691 = vmatpush1.msra.mxu0 0.0
    %2692 = vmatprep.subr.mxu0 0.0
    %2693 = vmatpush1.msra.mxu0 0.0
    %2694 = vmatprep.subr.mxu0 0.0
    %2695 = vmatpush1.msra.mxu0 0.0
    %2696 = vmatprep.subr.mxu0 0.0
    %2697 = vmatpush1.msra.mxu0 0.0
    %2698 = vmatprep.subr.mxu0 0.0
    %2699 = vmatpush1.msra.mxu0 0.0
    %2700 = vmatprep.subr.mxu0 0.0
    %2701 = vmatpush1.msra.mxu0 0.0
    %2702 = vmatprep.subr.mxu0 0.0
    %2703 = vmatpush1.msra.mxu0 0.0
    %2704 = vmatprep.subr.mxu0 0.0
    %2705 = vmatpush1.msra.mxu0 0.0
    %2706 = vmatprep.subr.mxu0 0.0
    %2707 = vmatpush1.msra.mxu0 0.0
    %2708 = vmatprep.subr.mxu0 0.0
    %2709 = vmatpush1.msra.mxu0 0.0
    %2710 = vmatprep.subr.mxu0 0.0
    %2711 = vmatpush1.msra.mxu0 0.0
    %2712 = vmatprep.subr.mxu0 0.0
    %2713 = vmatpush1.msra.mxu0 0.0
    %2714 = vmatprep.subr.mxu0 0.0
    %2715 = vmatpush1.msra.mxu0 0.0
    %2716 = vmatprep.subr.mxu0 0.0
    %2717 = vmatpush1.msra.mxu0 0.0
    %2718 = vmatprep.subr.mxu0 0.0
    %2719 = vmatpush1.msra.mxu0 0.0
    %2720 = vmatprep.mubr.f32.mxu0 0.0
    %2721 = vmatmul.mubr.f32.gmra.mrb[0].mxu0 %v2378
    %v2722 = vpop.f32.mrb[0].mxu0
    %v2723 = vadd.f32 0.0, %v2722
    %v2724 = vpop.f32.mrb[0].mxu0
    %v2725 = vadd.f32 0.0, %v2724
    %2726 = vmatprep.mubr.f32.mxu0 0.0
    %2727 = vmatmul.mubr.f32.gmra.mrb[0].mxu0 %v2381
    %v2728 = vpop.f32.mrb[0].mxu0
    %v2729 = vadd.f32 0.0, %v2728
    %v2730 = vpop.f32.mrb[0].mxu0
    %v2731 = vadd.f32 0.0, %v2730
    %2732 = vmatprep.mubr.f32.mxu0 0.0
    %2733 = vmatmul.mubr.f32.gmra.mrb[0].mxu0 %v2384
    %v2734 = vpop.f32.mrb[0].mxu0
    %v2735 = vadd.f32 0.0, %v2734
    %v2736 = vpop.f32.mrb[0].mxu0
    %v2737 = vadd.f32 0.0, %v2736
    %2738 = vmatprep.mubr.f32.mxu0 0.0
    %2739 = vmatmul.mubr.f32.gmra.mrb[0].mxu0 %v2387
    %v2740 = vpop.f32.mrb[0].mxu0
    %v2741 = vadd.f32 0.0, %v2740
    %v2742 = vpop.f32.mrb[0].mxu0
    %v2743 = vadd.f32 0.0, %v2742
    %2744 = vdwg.mxu0
    %v2745 = vadd.f32 %v2275, %v2456
    %v2746 = vadd.f32 %v2276, %v2458
    %v2747 = vadd.f32 %v2277, %v2545
    %v2748 = vadd.f32 %v2278, %v2547
    %v2749 = vadd.f32 %v2279, %v2634
    %v2750 = vadd.f32 %v2280, %v2636
    %v2751 = vadd.f32 %v2281, %v2723
    %v2752 = vadd.f32 %v2282, %v2725
    %v2753 = vadd.f32 %v2283, %v2462
    %v2754 = vadd.f32 %v2284, %v2464
    %v2755 = vadd.f32 %v2285, %v2551
    %v2756 = vadd.f32 %v2286, %v2553
    %v2757 = vadd.f32 %v2287, %v2640
    %v2758 = vadd.f32 %v2288, %v2642
    %v2759 = vadd.f32 %v2289, %v2729
    %v2760 = vadd.f32 %v2290, %v2731
    %v2761 = vadd.f32 %v2291, %v2468
    %v2762 = vadd.f32 %v2292, %v2470
    %v2763 = vadd.f32 %v2293, %v2557
    %v2764 = vadd.f32 %v2294, %v2559
    %v2765 = vadd.f32 %v2295, %v2646
    %v2766 = vadd.f32 %v2296, %v2648
    %v2767 = vadd.f32 %v2297, %v2735
    %v2768 = vadd.f32 %v2298, %v2737
    %v2769 = vadd.f32 %v2299, %v2474
    %v2770 = vadd.f32 %v2300, %v2476
    %v2771 = vadd.f32 %v2301, %v2563
    %v2772 = vadd.f32 %v2302, %v2565
    %v2773 = vadd.f32 %v2303, %v2652
    %v2774 = vadd.f32 %v2304, %v2654
    %v2775 = vadd.f32 %v2305, %v2741
    %v2776 = vadd.f32 %v2306, %v2743
    %v2777 = vrot.slane %v525, 2
    %v2778 = vrot.slane %v526, 2
    %v2779 = vrot.slane %v527, 2
    %v2780 = vrot.slane %v528, 2
    %vm2781 = vcmp.lt.s32.totalorder %v46, 6
    %v2782 = vsel %vm2781, %v2779, %v2780
    %v2783 = vsel %vm2781, %v2778, %v2779
    %v2784 = vsel %vm2781, %v2777, %v2778
    %v2785 = vsel %vm2781, %v2780, %v2777
    %v2786 = vadd.s32 %v46, 2
    %v2787 = vadd.s32 %v47, 2
    %v2788 = vadd.s32 %v48, 2
    %v2789 = vadd.s32 %v49, 2
    %vm2790 = vcmp.ge.s32.totalorder %v2786, 0
    %vm2791 = vcmp.ge.s32.totalorder %v2787, 0
    %vm2792 = vcmp.ge.s32.totalorder %v2788, 0
    %vm2793 = vcmp.ge.s32.totalorder %v2789, 0
    %vm2794 = vcmp.lt.s32.totalorder %v2786, 32
    %vm2795 = vcmp.lt.s32.totalorder %v2787, 32
    %vm2796 = vcmp.lt.s32.totalorder %v2788, 32
    %vm2797 = vcmp.lt.s32.totalorder %v2789, 32
    %vm2798 = vmand %vm2790, %vm2794
    %vm2799 = vmand %vm2791, %vm2795
    %vm2800 = vmand %vm2792, %vm2796
    %vm2801 = vmand %vm2793, %vm2797
    %v2802 = vsel %vm2798, 1, 0
    %v2803 = vsel %vm2799, 1, 0
    %v2804 = vsel %vm2800, 1, 0
    %v2805 = vsel %vm2801, 1, 0
    %vm2806 = vcmp.eq.s32.totalorder %v2802, 1
    %vm2807 = vcmp.eq.s32.totalorder %v2803, 1
    %vm2808 = vcmp.eq.s32.totalorder %v2804, 1
    %vm2809 = vcmp.eq.s32.totalorder %v2805, 1
    %v2810 = vsel %vm2806, %v2784, 0.0
    %v2811 = vsel %vm2807, %v2783, 0.0
    %v2812 = vsel %vm2808, %v2782, 0.0
    %v2813 = vsel %vm2809, %v2785, 0.0
    %s2814 = scalar_lea.vmem %s3, 1280
    %v2815 = vld [vmem:[%s2814] sm:$0xff]
    %v2816 = vld [vmem:[%s2814 + $0x8] sm:$0xff]
    %v2817 = vld [vmem:[%s2814 + $0x10] sm:$0xff]
    %v2818 = vld [vmem:[%s2814 + $0x18] sm:$0xff]
    %v2819 = vld [vmem:[%s2814 + $0x20] sm:$0xff]
    %v2820 = vld [vmem:[%s2814 + $0x28] sm:$0xff]
    %v2821 = vld [vmem:[%s2814 + $0x30] sm:$0xff]
    %v2822 = vld [vmem:[%s2814 + $0x38] sm:$0xff]
    %v2823 = vld [vmem:[%s2814 + $0x40] sm:$0xff]
    %v2824 = vld [vmem:[%s2814 + $0x48] sm:$0xff]
    %v2825 = vld [vmem:[%s2814 + $0x50] sm:$0xff]
    %v2826 = vld [vmem:[%s2814 + $0x58] sm:$0xff]
    %v2827 = vld [vmem:[%s2814 + $0x60] sm:$0xff]
    %v2828 = vld [vmem:[%s2814 + $0x68] sm:$0xff]
    %v2829 = vld [vmem:[%s2814 + $0x70] sm:$0xff]
    %v2830 = vld [vmem:[%s2814 + $0x78] sm:$0xff]
    %v2831 = vld [vmem:[%s2814 + $0x80] sm:$0xff]
    %v2832 = vld [vmem:[%s2814 + $0x88] sm:$0xff]
    %v2833 = vld [vmem:[%s2814 + $0x90] sm:$0xff]
    %v2834 = vld [vmem:[%s2814 + $0x98] sm:$0xff]
    %v2835 = vld [vmem:[%s2814 + $0xa0] sm:$0xff]
    %v2836 = vld [vmem:[%s2814 + $0xa8] sm:$0xff]
    %v2837 = vld [vmem:[%s2814 + $0xb0] sm:$0xff]
    %v2838 = vld [vmem:[%s2814 + $0xb8] sm:$0xff]
    %v2839 = vld [vmem:[%s2814 + $0xc0] sm:$0xff]
    %v2840 = vld [vmem:[%s2814 + $0xc8] sm:$0xff]
    %v2841 = vld [vmem:[%s2814 + $0xd0] sm:$0xff]
    %v2842 = vld [vmem:[%s2814 + $0xd8] sm:$0xff]
    %v2843 = vld [vmem:[%s2814 + $0xe0] sm:$0xff]
    %v2844 = vld [vmem:[%s2814 + $0xe8] sm:$0xff]
    %v2845 = vld [vmem:[%s2814 + $0xf0] sm:$0xff]
    %v2846 = vld [vmem:[%s2814 + $0xf8] sm:$0xff]
    %v2848 = vsel %vm100, %v2810, 0
    %v2851 = vsel %vm100, %v2811, 0
    %v2854 = vsel %vm100, %v2812, 0
    %v2857 = vsel %vm100, %v2813, 0
    %2859 = vmatprep.subr.mxu0 %v2816
    %2860 = vmatpush1.msra.mxu0 %v2815
    %2861 = vmatprep.subr.mxu0 %v2824
    %2862 = vmatpush1.msra.mxu0 %v2823
    %2863 = vmatprep.subr.mxu0 %v2832
    %2864 = vmatpush1.msra.mxu0 %v2831
    %2865 = vmatprep.subr.mxu0 %v2840
    %2866 = vmatpush1.msra.mxu0 %v2839
    %2867 = vmatprep.subr.mxu0 0.0
    %2868 = vmatpush1.msra.mxu0 0.0
    %2869 = vmatprep.subr.mxu0 0.0
    %2870 = vmatpush1.msra.mxu0 0.0
    %2871 = vmatprep.subr.mxu0 0.0
    %2872 = vmatpush1.msra.mxu0 0.0
    %2873 = vmatprep.subr.mxu0 0.0
    %2874 = vmatpush1.msra.mxu0 0.0
    %2875 = vmatprep.subr.mxu0 0.0
    %2876 = vmatpush1.msra.mxu0 0.0
    %2877 = vmatprep.subr.mxu0 0.0
    %2878 = vmatpush1.msra.mxu0 0.0
    %2879 = vmatprep.subr.mxu0 0.0
    %2880 = vmatpush1.msra.mxu0 0.0
    %2881 = vmatprep.subr.mxu0 0.0
    %2882 = vmatpush1.msra.mxu0 0.0
    %2883 = vmatprep.subr.mxu0 0.0
    %2884 = vmatpush1.msra.mxu0 0.0
    %2885 = vmatprep.subr.mxu0 0.0
    %2886 = vmatpush1.msra.mxu0 0.0
    %2887 = vmatprep.subr.mxu0 0.0
    %2888 = vmatpush1.msra.mxu0 0.0
    %2889 = vmatprep.subr.mxu0 0.0
    %2890 = vmatpush1.msra.mxu0 0.0
    %2891 = vmatprep.subr.mxu0 0.0
    %2892 = vmatpush1.msra.mxu0 0.0
    %2893 = vmatprep.subr.mxu0 0.0
    %2894 = vmatpush1.msra.mxu0 0.0
    %2895 = vmatprep.subr.mxu0 0.0
    %2896 = vmatpush1.msra.mxu0 0.0
    %2897 = vmatprep.subr.mxu0 0.0
    %2898 = vmatpush1.msra.mxu0 0.0
    %2899 = vmatprep.subr.mxu0 0.0
    %2900 = vmatpush1.msra.mxu0 0.0
    %2901 = vmatprep.subr.mxu0 0.0
    %2902 = vmatpush1.msra.mxu0 0.0
    %2903 = vmatprep.subr.mxu0 0.0
    %2904 = vmatpush1.msra.mxu0 0.0
    %2905 = vmatprep.subr.mxu0 0.0
    %2906 = vmatpush1.msra.mxu0 0.0
    %2907 = vmatprep.subr.mxu0 0.0
    %2908 = vmatpush1.msra.mxu0 0.0
    %2909 = vmatprep.subr.mxu0 0.0
    %2910 = vmatpush1.msra.mxu0 0.0
    %2911 = vmatprep.subr.mxu0 0.0
    %2912 = vmatpush1.msra.mxu0 0.0
    %2913 = vmatprep.subr.mxu0 0.0
    %2914 = vmatpush1.msra.mxu0 0.0
    %2915 = vmatprep.subr.mxu0 0.0
    %2916 = vmatpush1.msra.mxu0 0.0
    %2917 = vmatprep.subr.mxu0 0.0
    %2918 = vmatpush1.msra.mxu0 0.0
    %2919 = vmatprep.subr.mxu0 0.0
    %2920 = vmatpush1.msra.mxu0 0.0
    %2921 = vmatprep.subr.mxu0 0.0
    %2922 = vmatpush1.msra.mxu0 0.0
    %2923 = vmatprep.mubr.f32.mxu0 0.0
    %2924 = vmatmul.mubr.f32.gmra.mrb[0].mxu0 %v2848
    %v2925 = vpop.f32.mrb[0].mxu0
    %v2926 = vadd.f32 0.0, %v2925
    %v2927 = vpop.f32.mrb[0].mxu0
    %v2928 = vadd.f32 0.0, %v2927
    %2929 = vmatprep.mubr.f32.mxu0 0.0
    %2930 = vmatmul.mubr.f32.gmra.mrb[0].mxu0 %v2851
    %v2931 = vpop.f32.mrb[0].mxu0
    %v2932 = vadd.f32 0.0, %v2931
    %v2933 = vpop.f32.mrb[0].mxu0
    %v2934 = vadd.f32 0.0, %v2933
    %2935 = vmatprep.mubr.f32.mxu0 0.0
    %2936 = vmatmul.mubr.f32.gmra.mrb[0].mxu0 %v2854
    %v2937 = vpop.f32.mrb[0].mxu0
    %v2938 = vadd.f32 0.0, %v2937
    %v2939 = vpop.f32.mrb[0].mxu0
    %v2940 = vadd.f32 0.0, %v2939
    %2941 = vmatprep.mubr.f32.mxu0 0.0
    %2942 = vmatmul.mubr.f32.gmra.mrb[0].mxu0 %v2857
    %v2943 = vpop.f32.mrb[0].mxu0
    %v2944 = vadd.f32 0.0, %v2943
    %v2945 = vpop.f32.mrb[0].mxu0
    %v2946 = vadd.f32 0.0, %v2945
    %2947 = vdwg.mxu0
    %2948 = vmatprep.subr.mxu0 %v2818
    %2949 = vmatpush1.msra.mxu0 %v2817
    %2950 = vmatprep.subr.mxu0 %v2826
    %2951 = vmatpush1.msra.mxu0 %v2825
    %2952 = vmatprep.subr.mxu0 %v2834
    %2953 = vmatpush1.msra.mxu0 %v2833
    %2954 = vmatprep.subr.mxu0 %v2842
    %2955 = vmatpush1.msra.mxu0 %v2841
    %2956 = vmatprep.subr.mxu0 0.0
    %2957 = vmatpush1.msra.mxu0 0.0
    %2958 = vmatprep.subr.mxu0 0.0
    %2959 = vmatpush1.msra.mxu0 0.0
    %2960 = vmatprep.subr.mxu0 0.0
    %2961 = vmatpush1.msra.mxu0 0.0
    %2962 = vmatprep.subr.mxu0 0.0
    %2963 = vmatpush1.msra.mxu0 0.0
    %2964 = vmatprep.subr.mxu0 0.0
    %2965 = vmatpush1.msra.mxu0 0.0
    %2966 = vmatprep.subr.mxu0 0.0
    %2967 = vmatpush1.msra.mxu0 0.0
    %2968 = vmatprep.subr.mxu0 0.0
    %2969 = vmatpush1.msra.mxu0 0.0
    %2970 = vmatprep.subr.mxu0 0.0
    %2971 = vmatpush1.msra.mxu0 0.0
    %2972 = vmatprep.subr.mxu0 0.0
    %2973 = vmatpush1.msra.mxu0 0.0
    %2974 = vmatprep.subr.mxu0 0.0
    %2975 = vmatpush1.msra.mxu0 0.0
    %2976 = vmatprep.subr.mxu0 0.0
    %2977 = vmatpush1.msra.mxu0 0.0
    %2978 = vmatprep.subr.mxu0 0.0
    %2979 = vmatpush1.msra.mxu0 0.0
    %2980 = vmatprep.subr.mxu0 0.0
    %2981 = vmatpush1.msra.mxu0 0.0
    %2982 = vmatprep.subr.mxu0 0.0
    %2983 = vmatpush1.msra.mxu0 0.0
    %2984 = vmatprep.subr.mxu0 0.0
    %2985 = vmatpush1.msra.mxu0 0.0
    %2986 = vmatprep.subr.mxu0 0.0
    %2987 = vmatpush1.msra.mxu0 0.0
    %2988 = vmatprep.subr.mxu0 0.0
    %2989 = vmatpush1.msra.mxu0 0.0
    %2990 = vmatprep.subr.mxu0 0.0
    %2991 = vmatpush1.msra.mxu0 0.0
    %2992 = vmatprep.subr.mxu0 0.0
    %2993 = vmatpush1.msra.mxu0 0.0
    %2994 = vmatprep.subr.mxu0 0.0
    %2995 = vmatpush1.msra.mxu0 0.0
    %2996 = vmatprep.subr.mxu0 0.0
    %2997 = vmatpush1.msra.mxu0 0.0
    %2998 = vmatprep.subr.mxu0 0.0
    %2999 = vmatpush1.msra.mxu0 0.0
    %3000 = vmatprep.subr.mxu0 0.0
    %3001 = vmatpush1.msra.mxu0 0.0
    %3002 = vmatprep.subr.mxu0 0.0
    %3003 = vmatpush1.msra.mxu0 0.0
    %3004 = vmatprep.subr.mxu0 0.0
    %3005 = vmatpush1.msra.mxu0 0.0
    %3006 = vmatprep.subr.mxu0 0.0
    %3007 = vmatpush1.msra.mxu0 0.0
    %3008 = vmatprep.subr.mxu0 0.0
    %3009 = vmatpush1.msra.mxu0 0.0
    %3010 = vmatprep.subr.mxu0 0.0
    %3011 = vmatpush1.msra.mxu0 0.0
    %3012 = vmatprep.mubr.f32.mxu0 0.0
    %3013 = vmatmul.mubr.f32.gmra.mrb[0].mxu0 %v2848
    %v3014 = vpop.f32.mrb[0].mxu0
    %v3015 = vadd.f32 0.0, %v3014
    %v3016 = vpop.f32.mrb[0].mxu0
    %v3017 = vadd.f32 0.0, %v3016
    %3018 = vmatprep.mubr.f32.mxu0 0.0
    %3019 = vmatmul.mubr.f32.gmra.mrb[0].mxu0 %v2851
    %v3020 = vpop.f32.mrb[0].mxu0
    %v3021 = vadd.f32 0.0, %v3020
    %v3022 = vpop.f32.mrb[0].mxu0
    %v3023 = vadd.f32 0.0, %v3022
    %3024 = vmatprep.mubr.f32.mxu0 0.0
    %3025 = vmatmul.mubr.f32.gmra.mrb[0].mxu0 %v2854
    %v3026 = vpop.f32.mrb[0].mxu0
    %v3027 = vadd.f32 0.0, %v3026
    %v3028 = vpop.f32.mrb[0].mxu0
    %v3029 = vadd.f32 0.0, %v3028
    %3030 = vmatprep.mubr.f32.mxu0 0.0
    %3031 = vmatmul.mubr.f32.gmra.mrb[0].mxu0 %v2857
    %v3032 = vpop.f32.mrb[0].mxu0
    %v3033 = vadd.f32 0.0, %v3032
    %v3034 = vpop.f32.mrb[0].mxu0
    %v3035 = vadd.f32 0.0, %v3034
    %3036 = vdwg.mxu0
    %3037 = vmatprep.subr.mxu0 %v2820
    %3038 = vmatpush1.msra.mxu0 %v2819
    %3039 = vmatprep.subr.mxu0 %v2828
    %3040 = vmatpush1.msra.mxu0 %v2827
    %3041 = vmatprep.subr.mxu0 %v2836
    %3042 = vmatpush1.msra.mxu0 %v2835
    %3043 = vmatprep.subr.mxu0 %v2844
    %3044 = vmatpush1.msra.mxu0 %v2843
    %3045 = vmatprep.subr.mxu0 0.0
    %3046 = vmatpush1.msra.mxu0 0.0
    %3047 = vmatprep.subr.mxu0 0.0
    %3048 = vmatpush1.msra.mxu0 0.0
    %3049 = vmatprep.subr.mxu0 0.0
    %3050 = vmatpush1.msra.mxu0 0.0
    %3051 = vmatprep.subr.mxu0 0.0
    %3052 = vmatpush1.msra.mxu0 0.0
    %3053 = vmatprep.subr.mxu0 0.0
    %3054 = vmatpush1.msra.mxu0 0.0
    %3055 = vmatprep.subr.mxu0 0.0
    %3056 = vmatpush1.msra.mxu0 0.0
    %3057 = vmatprep.subr.mxu0 0.0
    %3058 = vmatpush1.msra.mxu0 0.0
    %3059 = vmatprep.subr.mxu0 0.0
    %3060 = vmatpush1.msra.mxu0 0.0
    %3061 = vmatprep.subr.mxu0 0.0
    %3062 = vmatpush1.msra.mxu0 0.0
    %3063 = vmatprep.subr.mxu0 0.0
    %3064 = vmatpush1.msra.mxu0 0.0
    %3065 = vmatprep.subr.mxu0 0.0
    %3066 = vmatpush1.msra.mxu0 0.0
    %3067 = vmatprep.subr.mxu0 0.0
    %3068 = vmatpush1.msra.mxu0 0.0
    %3069 = vmatprep.subr.mxu0 0.0
    %3070 = vmatpush1.msra.mxu0 0.0
    %3071 = vmatprep.subr.mxu0 0.0
    %3072 = vmatpush1.msra.mxu0 0.0
    %3073 = vmatprep.subr.mxu0 0.0
    %3074 = vmatpush1.msra.mxu0 0.0
    %3075 = vmatprep.subr.mxu0 0.0
    %3076 = vmatpush1.msra.mxu0 0.0
    %3077 = vmatprep.subr.mxu0 0.0
    %3078 = vmatpush1.msra.mxu0 0.0
    %3079 = vmatprep.subr.mxu0 0.0
    %3080 = vmatpush1.msra.mxu0 0.0
    %3081 = vmatprep.subr.mxu0 0.0
    %3082 = vmatpush1.msra.mxu0 0.0
    %3083 = vmatprep.subr.mxu0 0.0
    %3084 = vmatpush1.msra.mxu0 0.0
    %3085 = vmatprep.subr.mxu0 0.0
    %3086 = vmatpush1.msra.mxu0 0.0
    %3087 = vmatprep.subr.mxu0 0.0
    %3088 = vmatpush1.msra.mxu0 0.0
    %3089 = vmatprep.subr.mxu0 0.0
    %3090 = vmatpush1.msra.mxu0 0.0
    %3091 = vmatprep.subr.mxu0 0.0
    %3092 = vmatpush1.msra.mxu0 0.0
    %3093 = vmatprep.subr.mxu0 0.0
    %3094 = vmatpush1.msra.mxu0 0.0
    %3095 = vmatprep.subr.mxu0 0.0
    %3096 = vmatpush1.msra.mxu0 0.0
    %3097 = vmatprep.subr.mxu0 0.0
    %3098 = vmatpush1.msra.mxu0 0.0
    %3099 = vmatprep.subr.mxu0 0.0
    %3100 = vmatpush1.msra.mxu0 0.0
    %3101 = vmatprep.mubr.f32.mxu0 0.0
    %3102 = vmatmul.mubr.f32.gmra.mrb[0].mxu0 %v2848
    %v3103 = vpop.f32.mrb[0].mxu0
    %v3104 = vadd.f32 0.0, %v3103
    %v3105 = vpop.f32.mrb[0].mxu0
    %v3106 = vadd.f32 0.0, %v3105
    %3107 = vmatprep.mubr.f32.mxu0 0.0
    %3108 = vmatmul.mubr.f32.gmra.mrb[0].mxu0 %v2851
    %v3109 = vpop.f32.mrb[0].mxu0
    %v3110 = vadd.f32 0.0, %v3109
    %v3111 = vpop.f32.mrb[0].mxu0
    %v3112 = vadd.f32 0.0, %v3111
    %3113 = vmatprep.mubr.f32.mxu0 0.0
    %3114 = vmatmul.mubr.f32.gmra.mrb[0].mxu0 %v2854
    %v3115 = vpop.f32.mrb[0].mxu0
    %v3116 = vadd.f32 0.0, %v3115
    %v3117 = vpop.f32.mrb[0].mxu0
    %v3118 = vadd.f32 0.0, %v3117
    %3119 = vmatprep.mubr.f32.mxu0 0.0
    %3120 = vmatmul.mubr.f32.gmra.mrb[0].mxu0 %v2857
    %v3121 = vpop.f32.mrb[0].mxu0
    %v3122 = vadd.f32 0.0, %v3121
    %v3123 = vpop.f32.mrb[0].mxu0
    %v3124 = vadd.f32 0.0, %v3123
    %3125 = vdwg.mxu0
    %3126 = vmatprep.subr.mxu0 %v2822
    %3127 = vmatpush1.msra.mxu0 %v2821
    %3128 = vmatprep.subr.mxu0 %v2830
    %3129 = vmatpush1.msra.mxu0 %v2829
    %3130 = vmatprep.subr.mxu0 %v2838
    %3131 = vmatpush1.msra.mxu0 %v2837
    %3132 = vmatprep.subr.mxu0 %v2846
    %3133 = vmatpush1.msra.mxu0 %v2845
    %3134 = vmatprep.subr.mxu0 0.0
    %3135 = vmatpush1.msra.mxu0 0.0
    %3136 = vmatprep.subr.mxu0 0.0
    %3137 = vmatpush1.msra.mxu0 0.0
    %3138 = vmatprep.subr.mxu0 0.0
    %3139 = vmatpush1.msra.mxu0 0.0
    %3140 = vmatprep.subr.mxu0 0.0
    %3141 = vmatpush1.msra.mxu0 0.0
    %3142 = vmatprep.subr.mxu0 0.0
    %3143 = vmatpush1.msra.mxu0 0.0
    %3144 = vmatprep.subr.mxu0 0.0
    %3145 = vmatpush1.msra.mxu0 0.0
    %3146 = vmatprep.subr.mxu0 0.0
    %3147 = vmatpush1.msra.mxu0 0.0
    %3148 = vmatprep.subr.mxu0 0.0
    %3149 = vmatpush1.msra.mxu0 0.0
    %3150 = vmatprep.subr.mxu0 0.0
    %3151 = vmatpush1.msra.mxu0 0.0
    %3152 = vmatprep.subr.mxu0 0.0
    %3153 = vmatpush1.msra.mxu0 0.0
    %3154 = vmatprep.subr.mxu0 0.0
    %3155 = vmatpush1.msra.mxu0 0.0
    %3156 = vmatprep.subr.mxu0 0.0
    %3157 = vmatpush1.msra.mxu0 0.0
    %3158 = vmatprep.subr.mxu0 0.0
    %3159 = vmatpush1.msra.mxu0 0.0
    %3160 = vmatprep.subr.mxu0 0.0
    %3161 = vmatpush1.msra.mxu0 0.0
    %3162 = vmatprep.subr.mxu0 0.0
    %3163 = vmatpush1.msra.mxu0 0.0
    %3164 = vmatprep.subr.mxu0 0.0
    %3165 = vmatpush1.msra.mxu0 0.0
    %3166 = vmatprep.subr.mxu0 0.0
    %3167 = vmatpush1.msra.mxu0 0.0
    %3168 = vmatprep.subr.mxu0 0.0
    %3169 = vmatpush1.msra.mxu0 0.0
    %3170 = vmatprep.subr.mxu0 0.0
    %3171 = vmatpush1.msra.mxu0 0.0
    %3172 = vmatprep.subr.mxu0 0.0
    %3173 = vmatpush1.msra.mxu0 0.0
    %3174 = vmatprep.subr.mxu0 0.0
    %3175 = vmatpush1.msra.mxu0 0.0
    %3176 = vmatprep.subr.mxu0 0.0
    %3177 = vmatpush1.msra.mxu0 0.0
    %3178 = vmatprep.subr.mxu0 0.0
    %3179 = vmatpush1.msra.mxu0 0.0
    %3180 = vmatprep.subr.mxu0 0.0
    %3181 = vmatpush1.msra.mxu0 0.0
    %3182 = vmatprep.subr.mxu0 0.0
    %3183 = vmatpush1.msra.mxu0 0.0
    %3184 = vmatprep.subr.mxu0 0.0
    %3185 = vmatpush1.msra.mxu0 0.0
    %3186 = vmatprep.subr.mxu0 0.0
    %3187 = vmatpush1.msra.mxu0 0.0
    %3188 = vmatprep.subr.mxu0 0.0
    %3189 = vmatpush1.msra.mxu0 0.0
    %3190 = vmatprep.mubr.f32.mxu0 0.0
    %3191 = vmatmul.mubr.f32.gmra.mrb[0].mxu0 %v2848
    %v3192 = vpop.f32.mrb[0].mxu0
    %v3193 = vadd.f32 0.0, %v3192
    %v3194 = vpop.f32.mrb[0].mxu0
    %v3195 = vadd.f32 0.0, %v3194
    %3196 = vmatprep.mubr.f32.mxu0 0.0
    %3197 = vmatmul.mubr.f32.gmra.mrb[0].mxu0 %v2851
    %v3198 = vpop.f32.mrb[0].mxu0
    %v3199 = vadd.f32 0.0, %v3198
    %v3200 = vpop.f32.mrb[0].mxu0
    %v3201 = vadd.f32 0.0, %v3200
    %3202 = vmatprep.mubr.f32.mxu0 0.0
    %3203 = vmatmul.mubr.f32.gmra.mrb[0].mxu0 %v2854
    %v3204 = vpop.f32.mrb[0].mxu0
    %v3205 = vadd.f32 0.0, %v3204
    %v3206 = vpop.f32.mrb[0].mxu0
    %v3207 = vadd.f32 0.0, %v3206
    %3208 = vmatprep.mubr.f32.mxu0 0.0
    %3209 = vmatmul.mubr.f32.gmra.mrb[0].mxu0 %v2857
    %v3210 = vpop.f32.mrb[0].mxu0
    %v3211 = vadd.f32 0.0, %v3210
    %v3212 = vpop.f32.mrb[0].mxu0
    %v3213 = vadd.f32 0.0, %v3212
    %3214 = vdwg.mxu0
    %v3215 = vadd.f32 %v2745, %v2926
    %v3216 = vadd.f32 %v2746, %v2928
    %v3217 = vadd.f32 %v2747, %v3015
    %v3218 = vadd.f32 %v2748, %v3017
    %v3219 = vadd.f32 %v2749, %v3104
    %v3220 = vadd.f32 %v2750, %v3106
    %v3221 = vadd.f32 %v2751, %v3193
    %v3222 = vadd.f32 %v2752, %v3195
    %v3223 = vadd.f32 %v2753, %v2932
    %v3224 = vadd.f32 %v2754, %v2934
    %v3225 = vadd.f32 %v2755, %v3021
    %v3226 = vadd.f32 %v2756, %v3023
    %v3227 = vadd.f32 %v2757, %v3110
    %v3228 = vadd.f32 %v2758, %v3112
    %v3229 = vadd.f32 %v2759, %v3199
    %v3230 = vadd.f32 %v2760, %v3201
    %v3231 = vadd.f32 %v2761, %v2938
    %v3232 = vadd.f32 %v2762, %v2940
    %v3233 = vadd.f32 %v2763, %v3027
    %v3234 = vadd.f32 %v2764, %v3029
    %v3235 = vadd.f32 %v2765, %v3116
    %v3236 = vadd.f32 %v2766, %v3118
    %v3237 = vadd.f32 %v2767, %v3205
    %v3238 = vadd.f32 %v2768, %v3207
    %v3239 = vadd.f32 %v2769, %v2944
    %v3240 = vadd.f32 %v2770, %v2946
    %v3241 = vadd.f32 %v2771, %v3033
    %v3242 = vadd.f32 %v2772, %v3035
    %v3243 = vadd.f32 %v2773, %v3122
    %v3244 = vadd.f32 %v2774, %v3124
    %v3245 = vadd.f32 %v2775, %v3211
    %v3246 = vadd.f32 %v2776, %v3213
    %v3247 = vrot.slane %v525, 3
    %v3248 = vrot.slane %v526, 3
    %v3249 = vrot.slane %v527, 3
    %v3250 = vrot.slane %v528, 3
    %vm3251 = vcmp.lt.s32.totalorder %v46, 5
    %v3252 = vsel %vm3251, %v3249, %v3250
    %v3253 = vsel %vm3251, %v3248, %v3249
    %v3254 = vsel %vm3251, %v3247, %v3248
    %v3255 = vsel %vm3251, %v3250, %v3247
    %v3256 = vadd.s32 %v46, 3
    %v3257 = vadd.s32 %v47, 3
    %v3258 = vadd.s32 %v48, 3
    %v3259 = vadd.s32 %v49, 3
    %vm3260 = vcmp.ge.s32.totalorder %v3256, 0
    %vm3261 = vcmp.ge.s32.totalorder %v3257, 0
    %vm3262 = vcmp.ge.s32.totalorder %v3258, 0
    %vm3263 = vcmp.ge.s32.totalorder %v3259, 0
    %vm3264 = vcmp.lt.s32.totalorder %v3256, 32
    %vm3265 = vcmp.lt.s32.totalorder %v3257, 32
    %vm3266 = vcmp.lt.s32.totalorder %v3258, 32
    %vm3267 = vcmp.lt.s32.totalorder %v3259, 32
    %vm3268 = vmand %vm3260, %vm3264
    %vm3269 = vmand %vm3261, %vm3265
    %vm3270 = vmand %vm3262, %vm3266
    %vm3271 = vmand %vm3263, %vm3267
    %v3272 = vsel %vm3268, 1, 0
    %v3273 = vsel %vm3269, 1, 0
    %v3274 = vsel %vm3270, 1, 0
    %v3275 = vsel %vm3271, 1, 0
    %vm3276 = vcmp.eq.s32.totalorder %v3272, 1
    %vm3277 = vcmp.eq.s32.totalorder %v3273, 1
    %vm3278 = vcmp.eq.s32.totalorder %v3274, 1
    %vm3279 = vcmp.eq.s32.totalorder %v3275, 1
    %v3280 = vsel %vm3276, %v3254, 0.0
    %v3281 = vsel %vm3277, %v3253, 0.0
    %v3282 = vsel %vm3278, %v3252, 0.0
    %v3283 = vsel %vm3279, %v3255, 0.0
    %s3284 = scalar_lea.vmem %s3, 1536
    %v3285 = vld [vmem:[%s3284] sm:$0xff]
    %v3286 = vld [vmem:[%s3284 + $0x8] sm:$0xff]
    %v3287 = vld [vmem:[%s3284 + $0x10] sm:$0xff]
    %v3288 = vld [vmem:[%s3284 + $0x18] sm:$0xff]
    %v3289 = vld [vmem:[%s3284 + $0x20] sm:$0xff]
    %v3290 = vld [vmem:[%s3284 + $0x28] sm:$0xff]
    %v3291 = vld [vmem:[%s3284 + $0x30] sm:$0xff]
    %v3292 = vld [vmem:[%s3284 + $0x38] sm:$0xff]
    %v3293 = vld [vmem:[%s3284 + $0x40] sm:$0xff]
    %v3294 = vld [vmem:[%s3284 + $0x48] sm:$0xff]
    %v3295 = vld [vmem:[%s3284 + $0x50] sm:$0xff]
    %v3296 = vld [vmem:[%s3284 + $0x58] sm:$0xff]
    %v3297 = vld [vmem:[%s3284 + $0x60] sm:$0xff]
    %v3298 = vld [vmem:[%s3284 + $0x68] sm:$0xff]
    %v3299 = vld [vmem:[%s3284 + $0x70] sm:$0xff]
    %v3300 = vld [vmem:[%s3284 + $0x78] sm:$0xff]
    %v3301 = vld [vmem:[%s3284 + $0x80] sm:$0xff]
    %v3302 = vld [vmem:[%s3284 + $0x88] sm:$0xff]
    %v3303 = vld [vmem:[%s3284 + $0x90] sm:$0xff]
    %v3304 = vld [vmem:[%s3284 + $0x98] sm:$0xff]
    %v3305 = vld [vmem:[%s3284 + $0xa0] sm:$0xff]
    %v3306 = vld [vmem:[%s3284 + $0xa8] sm:$0xff]
    %v3307 = vld [vmem:[%s3284 + $0xb0] sm:$0xff]
    %v3308 = vld [vmem:[%s3284 + $0xb8] sm:$0xff]
    %v3309 = vld [vmem:[%s3284 + $0xc0] sm:$0xff]
    %v3310 = vld [vmem:[%s3284 + $0xc8] sm:$0xff]
    %v3311 = vld [vmem:[%s3284 + $0xd0] sm:$0xff]
    %v3312 = vld [vmem:[%s3284 + $0xd8] sm:$0xff]
    %v3313 = vld [vmem:[%s3284 + $0xe0] sm:$0xff]
    %v3314 = vld [vmem:[%s3284 + $0xe8] sm:$0xff]
    %v3315 = vld [vmem:[%s3284 + $0xf0] sm:$0xff]
    %v3316 = vld [vmem:[%s3284 + $0xf8] sm:$0xff]
    %v3318 = vsel %vm100, %v3280, 0
    %v3321 = vsel %vm100, %v3281, 0
    %v3324 = vsel %vm100, %v3282, 0
    %v3327 = vsel %vm100, %v3283, 0
    %3329 = vmatprep.subr.mxu0 %v3286
    %3330 = vmatpush1.msra.mxu0 %v3285
    %3331 = vmatprep.subr.mxu0 %v3294
    %3332 = vmatpush1.msra.mxu0 %v3293
    %3333 = vmatprep.subr.mxu0 %v3302
    %3334 = vmatpush1.msra.mxu0 %v3301
    %3335 = vmatprep.subr.mxu0 %v3310
    %3336 = vmatpush1.msra.mxu0 %v3309
    %3337 = vmatprep.subr.mxu0 0.0
    %3338 = vmatpush1.msra.mxu0 0.0
    %3339 = vmatprep.subr.mxu0 0.0
    %3340 = vmatpush1.msra.mxu0 0.0
    %3341 = vmatprep.subr.mxu0 0.0
    %3342 = vmatpush1.msra.mxu0 0.0
    %3343 = vmatprep.subr.mxu0 0.0
    %3344 = vmatpush1.msra.mxu0 0.0
    %3345 = vmatprep.subr.mxu0 0.0
    %3346 = vmatpush1.msra.mxu0 0.0
    %3347 = vmatprep.subr.mxu0 0.0
    %3348 = vmatpush1.msra.mxu0 0.0
    %3349 = vmatprep.subr.mxu0 0.0
    %3350 = vmatpush1.msra.mxu0 0.0
    %3351 = vmatprep.subr.mxu0 0.0
    %3352 = vmatpush1.msra.mxu0 0.0
    %3353 = vmatprep.subr.mxu0 0.0
    %3354 = vmatpush1.msra.mxu0 0.0
    %3355 = vmatprep.subr.mxu0 0.0
    %3356 = vmatpush1.msra.mxu0 0.0
    %3357 = vmatprep.subr.mxu0 0.0
    %3358 = vmatpush1.msra.mxu0 0.0
    %3359 = vmatprep.subr.mxu0 0.0
    %3360 = vmatpush1.msra.mxu0 0.0
    %3361 = vmatprep.subr.mxu0 0.0
    %3362 = vmatpush1.msra.mxu0 0.0
    %3363 = vmatprep.subr.mxu0 0.0
    %3364 = vmatpush1.msra.mxu0 0.0
    %3365 = vmatprep.subr.mxu0 0.0
    %3366 = vmatpush1.msra.mxu0 0.0
    %3367 = vmatprep.subr.mxu0 0.0
    %3368 = vmatpush1.msra.mxu0 0.0
    %3369 = vmatprep.subr.mxu0 0.0
    %3370 = vmatpush1.msra.mxu0 0.0
    %3371 = vmatprep.subr.mxu0 0.0
    %3372 = vmatpush1.msra.mxu0 0.0
    %3373 = vmatprep.subr.mxu0 0.0
    %3374 = vmatpush1.msra.mxu0 0.0
    %3375 = vmatprep.subr.mxu0 0.0
    %3376 = vmatpush1.msra.mxu0 0.0
    %3377 = vmatprep.subr.mxu0 0.0
    %3378 = vmatpush1.msra.mxu0 0.0
    %3379 = vmatprep.subr.mxu0 0.0
    %3380 = vmatpush1.msra.mxu0 0.0
    %3381 = vmatprep.subr.mxu0 0.0
    %3382 = vmatpush1.msra.mxu0 0.0
    %3383 = vmatprep.subr.mxu0 0.0
    %3384 = vmatpush1.msra.mxu0 0.0
    %3385 = vmatprep.subr.mxu0 0.0
    %3386 = vmatpush1.msra.mxu0 0.0
    %3387 = vmatprep.subr.mxu0 0.0
    %3388 = vmatpush1.msra.mxu0 0.0
    %3389 = vmatprep.subr.mxu0 0.0
    %3390 = vmatpush1.msra.mxu0 0.0
    %3391 = vmatprep.subr.mxu0 0.0
    %3392 = vmatpush1.msra.mxu0 0.0
    %3393 = vmatprep.mubr.f32.mxu0 0.0
    %3394 = vmatmul.mubr.f32.gmra.mrb[0].mxu0 %v3318
    %v3395 = vpop.f32.mrb[0].mxu0
    %v3396 = vadd.f32 0.0, %v3395
    %v3397 = vpop.f32.mrb[0].mxu0
    %v3398 = vadd.f32 0.0, %v3397
    %3399 = vmatprep.mubr.f32.mxu0 0.0
    %3400 = vmatmul.mubr.f32.gmra.mrb[0].mxu0 %v3321
    %v3401 = vpop.f32.mrb[0].mxu0
    %v3402 = vadd.f32 0.0, %v3401
    %v3403 = vpop.f32.mrb[0].mxu0
    %v3404 = vadd.f32 0.0, %v3403
    %3405 = vmatprep.mubr.f32.mxu0 0.0
    %3406 = vmatmul.mubr.f32.gmra.mrb[0].mxu0 %v3324
    %v3407 = vpop.f32.mrb[0].mxu0
    %v3408 = vadd.f32 0.0, %v3407
    %v3409 = vpop.f32.mrb[0].mxu0
    %v3410 = vadd.f32 0.0, %v3409
    %3411 = vmatprep.mubr.f32.mxu0 0.0
    %3412 = vmatmul.mubr.f32.gmra.mrb[0].mxu0 %v3327
    %v3413 = vpop.f32.mrb[0].mxu0
    %v3414 = vadd.f32 0.0, %v3413
    %v3415 = vpop.f32.mrb[0].mxu0
    %v3416 = vadd.f32 0.0, %v3415
    %3417 = vdwg.mxu0
    %3418 = vmatprep.subr.mxu0 %v3288
    %3419 = vmatpush1.msra.mxu0 %v3287
    %3420 = vmatprep.subr.mxu0 %v3296
    %3421 = vmatpush1.msra.mxu0 %v3295
    %3422 = vmatprep.subr.mxu0 %v3304
    %3423 = vmatpush1.msra.mxu0 %v3303
    %3424 = vmatprep.subr.mxu0 %v3312
    %3425 = vmatpush1.msra.mxu0 %v3311
    %3426 = vmatprep.subr.mxu0 0.0
    %3427 = vmatpush1.msra.mxu0 0.0
    %3428 = vmatprep.subr.mxu0 0.0
    %3429 = vmatpush1.msra.mxu0 0.0
    %3430 = vmatprep.subr.mxu0 0.0
    %3431 = vmatpush1.msra.mxu0 0.0
    %3432 = vmatprep.subr.mxu0 0.0
    %3433 = vmatpush1.msra.mxu0 0.0
    %3434 = vmatprep.subr.mxu0 0.0
    %3435 = vmatpush1.msra.mxu0 0.0
    %3436 = vmatprep.subr.mxu0 0.0
    %3437 = vmatpush1.msra.mxu0 0.0
    %3438 = vmatprep.subr.mxu0 0.0
    %3439 = vmatpush1.msra.mxu0 0.0
    %3440 = vmatprep.subr.mxu0 0.0
    %3441 = vmatpush1.msra.mxu0 0.0
    %3442 = vmatprep.subr.mxu0 0.0
    %3443 = vmatpush1.msra.mxu0 0.0
    %3444 = vmatprep.subr.mxu0 0.0
    %3445 = vmatpush1.msra.mxu0 0.0
    %3446 = vmatprep.subr.mxu0 0.0
    %3447 = vmatpush1.msra.mxu0 0.0
    %3448 = vmatprep.subr.mxu0 0.0
    %3449 = vmatpush1.msra.mxu0 0.0
    %3450 = vmatprep.subr.mxu0 0.0
    %3451 = vmatpush1.msra.mxu0 0.0
    %3452 = vmatprep.subr.mxu0 0.0
    %3453 = vmatpush1.msra.mxu0 0.0
    %3454 = vmatprep.subr.mxu0 0.0
    %3455 = vmatpush1.msra.mxu0 0.0
    %3456 = vmatprep.subr.mxu0 0.0
    %3457 = vmatpush1.msra.mxu0 0.0
    %3458 = vmatprep.subr.mxu0 0.0
    %3459 = vmatpush1.msra.mxu0 0.0
    %3460 = vmatprep.subr.mxu0 0.0
    %3461 = vmatpush1.msra.mxu0 0.0
    %3462 = vmatprep.subr.mxu0 0.0
    %3463 = vmatpush1.msra.mxu0 0.0
    %3464 = vmatprep.subr.mxu0 0.0
    %3465 = vmatpush1.msra.mxu0 0.0
    %3466 = vmatprep.subr.mxu0 0.0
    %3467 = vmatpush1.msra.mxu0 0.0
    %3468 = vmatprep.subr.mxu0 0.0
    %3469 = vmatpush1.msra.mxu0 0.0
    %3470 = vmatprep.subr.mxu0 0.0
    %3471 = vmatpush1.msra.mxu0 0.0
    %3472 = vmatprep.subr.mxu0 0.0
    %3473 = vmatpush1.msra.mxu0 0.0
    %3474 = vmatprep.subr.mxu0 0.0
    %3475 = vmatpush1.msra.mxu0 0.0
    %3476 = vmatprep.subr.mxu0 0.0
    %3477 = vmatpush1.msra.mxu0 0.0
    %3478 = vmatprep.subr.mxu0 0.0
    %3479 = vmatpush1.msra.mxu0 0.0
    %3480 = vmatprep.subr.mxu0 0.0
    %3481 = vmatpush1.msra.mxu0 0.0
    %3482 = vmatprep.mubr.f32.mxu0 0.0
    %3483 = vmatmul.mubr.f32.gmra.mrb[0].mxu0 %v3318
    %v3484 = vpop.f32.mrb[0].mxu0
    %v3485 = vadd.f32 0.0, %v3484
    %v3486 = vpop.f32.mrb[0].mxu0
    %v3487 = vadd.f32 0.0, %v3486
    %3488 = vmatprep.mubr.f32.mxu0 0.0
    %3489 = vmatmul.mubr.f32.gmra.mrb[0].mxu0 %v3321
    %v3490 = vpop.f32.mrb[0].mxu0
    %v3491 = vadd.f32 0.0, %v3490
    %v3492 = vpop.f32.mrb[0].mxu0
    %v3493 = vadd.f32 0.0, %v3492
    %3494 = vmatprep.mubr.f32.mxu0 0.0
    %3495 = vmatmul.mubr.f32.gmra.mrb[0].mxu0 %v3324
    %v3496 = vpop.f32.mrb[0].mxu0
    %v3497 = vadd.f32 0.0, %v3496
    %v3498 = vpop.f32.mrb[0].mxu0
    %v3499 = vadd.f32 0.0, %v3498
    %3500 = vmatprep.mubr.f32.mxu0 0.0
    %3501 = vmatmul.mubr.f32.gmra.mrb[0].mxu0 %v3327
    %v3502 = vpop.f32.mrb[0].mxu0
    %v3503 = vadd.f32 0.0, %v3502
    %v3504 = vpop.f32.mrb[0].mxu0
    %v3505 = vadd.f32 0.0, %v3504
    %3506 = vdwg.mxu0
    %3507 = vmatprep.subr.mxu0 %v3290
    %3508 = vmatpush1.msra.mxu0 %v3289
    %3509 = vmatprep.subr.mxu0 %v3298
    %3510 = vmatpush1.msra.mxu0 %v3297
    %3511 = vmatprep.subr.mxu0 %v3306
    %3512 = vmatpush1.msra.mxu0 %v3305
    %3513 = vmatprep.subr.mxu0 %v3314
    %3514 = vmatpush1.msra.mxu0 %v3313
    %3515 = vmatprep.subr.mxu0 0.0
    %3516 = vmatpush1.msra.mxu0 0.0
    %3517 = vmatprep.subr.mxu0 0.0
    %3518 = vmatpush1.msra.mxu0 0.0
    %3519 = vmatprep.subr.mxu0 0.0
    %3520 = vmatpush1.msra.mxu0 0.0
    %3521 = vmatprep.subr.mxu0 0.0
    %3522 = vmatpush1.msra.mxu0 0.0
    %3523 = vmatprep.subr.mxu0 0.0
    %3524 = vmatpush1.msra.mxu0 0.0
    %3525 = vmatprep.subr.mxu0 0.0
    %3526 = vmatpush1.msra.mxu0 0.0
    %3527 = vmatprep.subr.mxu0 0.0
    %3528 = vmatpush1.msra.mxu0 0.0
    %3529 = vmatprep.subr.mxu0 0.0
    %3530 = vmatpush1.msra.mxu0 0.0
    %3531 = vmatprep.subr.mxu0 0.0
    %3532 = vmatpush1.msra.mxu0 0.0
    %3533 = vmatprep.subr.mxu0 0.0
    %3534 = vmatpush1.msra.mxu0 0.0
    %3535 = vmatprep.subr.mxu0 0.0
    %3536 = vmatpush1.msra.mxu0 0.0
    %3537 = vmatprep.subr.mxu0 0.0
    %3538 = vmatpush1.msra.mxu0 0.0
    %3539 = vmatprep.subr.mxu0 0.0
    %3540 = vmatpush1.msra.mxu0 0.0
    %3541 = vmatprep.subr.mxu0 0.0
    %3542 = vmatpush1.msra.mxu0 0.0
    %3543 = vmatprep.subr.mxu0 0.0
    %3544 = vmatpush1.msra.mxu0 0.0
    %3545 = vmatprep.subr.mxu0 0.0
    %3546 = vmatpush1.msra.mxu0 0.0
    %3547 = vmatprep.subr.mxu0 0.0
    %3548 = vmatpush1.msra.mxu0 0.0
    %3549 = vmatprep.subr.mxu0 0.0
    %3550 = vmatpush1.msra.mxu0 0.0
    %3551 = vmatprep.subr.mxu0 0.0
    %3552 = vmatpush1.msra.mxu0 0.0
    %3553 = vmatprep.subr.mxu0 0.0
    %3554 = vmatpush1.msra.mxu0 0.0
    %3555 = vmatprep.subr.mxu0 0.0
    %3556 = vmatpush1.msra.mxu0 0.0
    %3557 = vmatprep.subr.mxu0 0.0
    %3558 = vmatpush1.msra.mxu0 0.0
    %3559 = vmatprep.subr.mxu0 0.0
    %3560 = vmatpush1.msra.mxu0 0.0
    %3561 = vmatprep.subr.mxu0 0.0
    %3562 = vmatpush1.msra.mxu0 0.0
    %3563 = vmatprep.subr.mxu0 0.0
    %3564 = vmatpush1.msra.mxu0 0.0
    %3565 = vmatprep.subr.mxu0 0.0
    %3566 = vmatpush1.msra.mxu0 0.0
    %3567 = vmatprep.subr.mxu0 0.0
    %3568 = vmatpush1.msra.mxu0 0.0
    %3569 = vmatprep.subr.mxu0 0.0
    %3570 = vmatpush1.msra.mxu0 0.0
    %3571 = vmatprep.mubr.f32.mxu0 0.0
    %3572 = vmatmul.mubr.f32.gmra.mrb[0].mxu0 %v3318
    %v3573 = vpop.f32.mrb[0].mxu0
    %v3574 = vadd.f32 0.0, %v3573
    %v3575 = vpop.f32.mrb[0].mxu0
    %v3576 = vadd.f32 0.0, %v3575
    %3577 = vmatprep.mubr.f32.mxu0 0.0
    %3578 = vmatmul.mubr.f32.gmra.mrb[0].mxu0 %v3321
    %v3579 = vpop.f32.mrb[0].mxu0
    %v3580 = vadd.f32 0.0, %v3579
    %v3581 = vpop.f32.mrb[0].mxu0
    %v3582 = vadd.f32 0.0, %v3581
    %3583 = vmatprep.mubr.f32.mxu0 0.0
    %3584 = vmatmul.mubr.f32.gmra.mrb[0].mxu0 %v3324
    %v3585 = vpop.f32.mrb[0].mxu0
    %v3586 = vadd.f32 0.0, %v3585
    %v3587 = vpop.f32.mrb[0].mxu0
    %v3588 = vadd.f32 0.0, %v3587
    %3589 = vmatprep.mubr.f32.mxu0 0.0
    %3590 = vmatmul.mubr.f32.gmra.mrb[0].mxu0 %v3327
    %v3591 = vpop.f32.mrb[0].mxu0
    %v3592 = vadd.f32 0.0, %v3591
    %v3593 = vpop.f32.mrb[0].mxu0
    %v3594 = vadd.f32 0.0, %v3593
    %3595 = vdwg.mxu0
    %3596 = vmatprep.subr.mxu0 %v3292
    %3597 = vmatpush1.msra.mxu0 %v3291
    %3598 = vmatprep.subr.mxu0 %v3300
    %3599 = vmatpush1.msra.mxu0 %v3299
    %3600 = vmatprep.subr.mxu0 %v3308
    %3601 = vmatpush1.msra.mxu0 %v3307
    %3602 = vmatprep.subr.mxu0 %v3316
    %3603 = vmatpush1.msra.mxu0 %v3315
    %3604 = vmatprep.subr.mxu0 0.0
    %3605 = vmatpush1.msra.mxu0 0.0
    %3606 = vmatprep.subr.mxu0 0.0
    %3607 = vmatpush1.msra.mxu0 0.0
    %3608 = vmatprep.subr.mxu0 0.0
    %3609 = vmatpush1.msra.mxu0 0.0
    %3610 = vmatprep.subr.mxu0 0.0
    %3611 = vmatpush1.msra.mxu0 0.0
    %3612 = vmatprep.subr.mxu0 0.0
    %3613 = vmatpush1.msra.mxu0 0.0
    %3614 = vmatprep.subr.mxu0 0.0
    %3615 = vmatpush1.msra.mxu0 0.0
    %3616 = vmatprep.subr.mxu0 0.0
    %3617 = vmatpush1.msra.mxu0 0.0
    %3618 = vmatprep.subr.mxu0 0.0
    %3619 = vmatpush1.msra.mxu0 0.0
    %3620 = vmatprep.subr.mxu0 0.0
    %3621 = vmatpush1.msra.mxu0 0.0
    %3622 = vmatprep.subr.mxu0 0.0
    %3623 = vmatpush1.msra.mxu0 0.0
    %3624 = vmatprep.subr.mxu0 0.0
    %3625 = vmatpush1.msra.mxu0 0.0
    %3626 = vmatprep.subr.mxu0 0.0
    %3627 = vmatpush1.msra.mxu0 0.0
    %3628 = vmatprep.subr.mxu0 0.0
    %3629 = vmatpush1.msra.mxu0 0.0
    %3630 = vmatprep.subr.mxu0 0.0
    %3631 = vmatpush1.msra.mxu0 0.0
    %3632 = vmatprep.subr.mxu0 0.0
    %3633 = vmatpush1.msra.mxu0 0.0
    %3634 = vmatprep.subr.mxu0 0.0
    %3635 = vmatpush1.msra.mxu0 0.0
    %3636 = vmatprep.subr.mxu0 0.0
    %3637 = vmatpush1.msra.mxu0 0.0
    %3638 = vmatprep.subr.mxu0 0.0
    %3639 = vmatpush1.msra.mxu0 0.0
    %3640 = vmatprep.subr.mxu0 0.0
    %3641 = vmatpush1.msra.mxu0 0.0
    %3642 = vmatprep.subr.mxu0 0.0
    %3643 = vmatpush1.msra.mxu0 0.0
    %3644 = vmatprep.subr.mxu0 0.0
    %3645 = vmatpush1.msra.mxu0 0.0
    %3646 = vmatprep.subr.mxu0 0.0
    %3647 = vmatpush1.msra.mxu0 0.0
    %3648 = vmatprep.subr.mxu0 0.0
    %3649 = vmatpush1.msra.mxu0 0.0
    %3650 = vmatprep.subr.mxu0 0.0
    %3651 = vmatpush1.msra.mxu0 0.0
    %3652 = vmatprep.subr.mxu0 0.0
    %3653 = vmatpush1.msra.mxu0 0.0
    %3654 = vmatprep.subr.mxu0 0.0
    %3655 = vmatpush1.msra.mxu0 0.0
    %3656 = vmatprep.subr.mxu0 0.0
    %3657 = vmatpush1.msra.mxu0 0.0
    %3658 = vmatprep.subr.mxu0 0.0
    %3659 = vmatpush1.msra.mxu0 0.0
    %3660 = vmatprep.mubr.f32.mxu0 0.0
    %3661 = vmatmul.mubr.f32.gmra.mrb[0].mxu0 %v3318
    %v3662 = vpop.f32.mrb[0].mxu0
    %v3663 = vadd.f32 0.0, %v3662
    %v3664 = vpop.f32.mrb[0].mxu0
    %v3665 = vadd.f32 0.0, %v3664
    %3666 = vmatprep.mubr.f32.mxu0 0.0
    %3667 = vmatmul.mubr.f32.gmra.mrb[0].mxu0 %v3321
    %v3668 = vpop.f32.mrb[0].mxu0
    %v3669 = vadd.f32 0.0, %v3668
    %v3670 = vpop.f32.mrb[0].mxu0
    %v3671 = vadd.f32 0.0, %v3670
    %3672 = vmatprep.mubr.f32.mxu0 0.0
    %3673 = vmatmul.mubr.f32.gmra.mrb[0].mxu0 %v3324
    %v3674 = vpop.f32.mrb[0].mxu0
    %v3675 = vadd.f32 0.0, %v3674
    %v3676 = vpop.f32.mrb[0].mxu0
    %v3677 = vadd.f32 0.0, %v3676
    %3678 = vmatprep.mubr.f32.mxu0 0.0
    %3679 = vmatmul.mubr.f32.gmra.mrb[0].mxu0 %v3327
    %v3680 = vpop.f32.mrb[0].mxu0
    %v3681 = vadd.f32 0.0, %v3680
    %v3682 = vpop.f32.mrb[0].mxu0
    %v3683 = vadd.f32 0.0, %v3682
    %3684 = vdwg.mxu0
    %v3685 = vadd.f32 %v3215, %v3396
    %v3686 = vadd.f32 %v3216, %v3398
    %v3687 = vadd.f32 %v3217, %v3485
    %v3688 = vadd.f32 %v3218, %v3487
    %v3689 = vadd.f32 %v3219, %v3574
    %v3690 = vadd.f32 %v3220, %v3576
    %v3691 = vadd.f32 %v3221, %v3663
    %v3692 = vadd.f32 %v3222, %v3665
    %v3693 = vadd.f32 %v3223, %v3402
    %v3694 = vadd.f32 %v3224, %v3404
    %v3695 = vadd.f32 %v3225, %v3491
    %v3696 = vadd.f32 %v3226, %v3493
    %v3697 = vadd.f32 %v3227, %v3580
    %v3698 = vadd.f32 %v3228, %v3582
    %v3699 = vadd.f32 %v3229, %v3669
    %v3700 = vadd.f32 %v3230, %v3671
    %v3701 = vadd.f32 %v3231, %v3408
    %v3702 = vadd.f32 %v3232, %v3410
    %v3703 = vadd.f32 %v3233, %v3497
    %v3704 = vadd.f32 %v3234, %v3499
    %v3705 = vadd.f32 %v3235, %v3586
    %v3706 = vadd.f32 %v3236, %v3588
    %v3707 = vadd.f32 %v3237, %v3675
    %v3708 = vadd.f32 %v3238, %v3677
    %v3709 = vadd.f32 %v3239, %v3414
    %v3710 = vadd.f32 %v3240, %v3416
    %v3711 = vadd.f32 %v3241, %v3503
    %v3712 = vadd.f32 %v3242, %v3505
    %v3713 = vadd.f32 %v3243, %v3592
    %v3714 = vadd.f32 %v3244, %v3594
    %v3715 = vadd.f32 %v3245, %v3681
    %v3716 = vadd.f32 %v3246, %v3683
    %v3717 = vld [vmem:[%s4] sm:$0xff]
    %v3719 = vlaneseq
    %v3720 = vshrl.u32 %v3719, 7
    %v3721 = vsub.s32 0, %v3720
    %v3722 = vrot.slane %v3717, %v3721
    %v3723 = vlaneseq
    %v3724 = vshrl.u32 %v3723, 7
    %v3725 = vsub.s32 1, %v3724
    %v3726 = vrot.slane %v3717, %v3725
    %v3727 = vlaneseq
    %v3728 = vshrl.u32 %v3727, 7
    %v3729 = vsub.s32 2, %v3728
    %v3730 = vrot.slane %v3717, %v3729
    %v3731 = vlaneseq
    %v3732 = vshrl.u32 %v3731, 7
    %v3733 = vsub.s32 3, %v3732
    %v3734 = vrot.slane %v3717, %v3733
    %v3735 = vlaneseq
    %v3736 = vshrl.u32 %v3735, 7
    %v3737 = vsub.s32 4, %v3736
    %v3738 = vrot.slane %v3717, %v3737
    %v3739 = vlaneseq
    %v3740 = vshrl.u32 %v3739, 7
    %v3741 = vsub.s32 5, %v3740
    %v3742 = vrot.slane %v3717, %v3741
    %v3743 = vlaneseq
    %v3744 = vshrl.u32 %v3743, 7
    %v3745 = vsub.s32 6, %v3744
    %v3746 = vrot.slane %v3717, %v3745
    %v3747 = vlaneseq
    %v3748 = vshrl.u32 %v3747, 7
    %v3749 = vsub.s32 7, %v3748
    %v3750 = vrot.slane %v3717, %v3749
    %v3759 = vadd.f32 %v3685, %v3722
    %v3760 = vadd.f32 %v3686, %v3726
    %v3761 = vadd.f32 %v3687, %v3730
    %v3762 = vadd.f32 %v3688, %v3734
    %v3763 = vadd.f32 %v3689, %v3738
    %v3764 = vadd.f32 %v3690, %v3742
    %v3765 = vadd.f32 %v3691, %v3746
    %v3766 = vadd.f32 %v3692, %v3750
    %v3767 = vadd.f32 %v3693, %v3722
    %v3768 = vadd.f32 %v3694, %v3726
    %v3769 = vadd.f32 %v3695, %v3730
    %v3770 = vadd.f32 %v3696, %v3734
    %v3771 = vadd.f32 %v3697, %v3738
    %v3772 = vadd.f32 %v3698, %v3742
    %v3773 = vadd.f32 %v3699, %v3746
    %v3774 = vadd.f32 %v3700, %v3750
    %v3775 = vadd.f32 %v3701, %v3722
    %v3776 = vadd.f32 %v3702, %v3726
    %v3777 = vadd.f32 %v3703, %v3730
    %v3778 = vadd.f32 %v3704, %v3734
    %v3779 = vadd.f32 %v3705, %v3738
    %v3780 = vadd.f32 %v3706, %v3742
    %v3781 = vadd.f32 %v3707, %v3746
    %v3782 = vadd.f32 %v3708, %v3750
    %v3783 = vadd.f32 %v3709, %v3722
    %v3784 = vadd.f32 %v3710, %v3726
    %v3785 = vadd.f32 %v3711, %v3730
    %v3786 = vadd.f32 %v3712, %v3734
    %v3787 = vadd.f32 %v3713, %v3738
    %v3788 = vadd.f32 %v3714, %v3742
    %v3789 = vadd.f32 %v3715, %v3746
    %v3790 = vadd.f32 %v3716, %v3750
    %v3791 = vmax.f32 %v3759, 0.0
    %v3792 = vmax.f32 %v3760, 0.0
    %v3793 = vmax.f32 %v3761, 0.0
    %v3794 = vmax.f32 %v3762, 0.0
    %v3795 = vmax.f32 %v3763, 0.0
    %v3796 = vmax.f32 %v3764, 0.0
    %v3797 = vmax.f32 %v3765, 0.0
    %v3798 = vmax.f32 %v3766, 0.0
    %v3799 = vmax.f32 %v3767, 0.0
    %v3800 = vmax.f32 %v3768, 0.0
    %v3801 = vmax.f32 %v3769, 0.0
    %v3802 = vmax.f32 %v3770, 0.0
    %v3803 = vmax.f32 %v3771, 0.0
    %v3804 = vmax.f32 %v3772, 0.0
    %v3805 = vmax.f32 %v3773, 0.0
    %v3806 = vmax.f32 %v3774, 0.0
    %v3807 = vmax.f32 %v3775, 0.0
    %v3808 = vmax.f32 %v3776, 0.0
    %v3809 = vmax.f32 %v3777, 0.0
    %v3810 = vmax.f32 %v3778, 0.0
    %v3811 = vmax.f32 %v3779, 0.0
    %v3812 = vmax.f32 %v3780, 0.0
    %v3813 = vmax.f32 %v3781, 0.0
    %v3814 = vmax.f32 %v3782, 0.0
    %v3815 = vmax.f32 %v3783, 0.0
    %v3816 = vmax.f32 %v3784, 0.0
    %v3817 = vmax.f32 %v3785, 0.0
    %v3818 = vmax.f32 %v3786, 0.0
    %v3819 = vmax.f32 %v3787, 0.0
    %v3820 = vmax.f32 %v3788, 0.0
    %v3821 = vmax.f32 %v3789, 0.0
    %v3822 = vmax.f32 %v3790, 0.0
    %v3823 = vmax.f32 %v3791, %v3793
    %v3824 = vmax.f32 %v3792, %v3794
    %v3825 = vmax.f32 %v3799, %v3801
    %v3826 = vmax.f32 %v3800, %v3802
    %v3827 = vmax.f32 %v3807, %v3809
    %v3828 = vmax.f32 %v3808, %v3810
    %v3829 = vmax.f32 %v3815, %v3817
    %v3830 = vmax.f32 %v3816, %v3818
    %v3831 = vmax.f32 %v3795, %v3797
    %v3832 = vmax.f32 %v3796, %v3798
    %v3833 = vmax.f32 %v3803, %v3805
    %v3834 = vmax.f32 %v3804, %v3806
    %v3835 = vmax.f32 %v3811, %v3813
    %v3836 = vmax.f32 %v3812, %v3814
    %v3837 = vmax.f32 %v3819, %v3821
    %v3838 = vmax.f32 %v3820, %v3822
    %v3839 = vmax.f32 %v3823, %v3831
    %v3840 = vmax.f32 %v3824, %v3832
    %v3841 = vmax.f32 %v3825, %v3833
    %v3842 = vmax.f32 %v3826, %v3834
    %v3843 = vmax.f32 %v3827, %v3835
    %v3844 = vmax.f32 %v3828, %v3836
    %v3845 = vmax.f32 %v3829, %v3837
    %v3846 = vmax.f32 %v3830, %v3838
    %v3847 = vrot.slane %v3839, 5
    %v3848 = vrot.slane %v3840, 5
    %v3849 = vrot.slane %v3841, 5
    %v3850 = vrot.slane %v3842, 5
    %v3851 = vrot.slane %v3843, 5
    %v3852 = vrot.slane %v3844, 5
    %v3853 = vrot.slane %v3845, 5
    %v3854 = vrot.slane %v3846, 5
    %v3855 = vsel %vm533, %v3851, %v3853
    %v3856 = vsel %vm533, %v3852, %v3854
    %v3857 = vsel %vm533, %v3849, %v3851
    %v3858 = vsel %vm533, %v3850, %v3852
    %v3859 = vsel %vm533, %v3847, %v3849
    %v3860 = vsel %vm533, %v3848, %v3850
    %v3861 = vsel %vm533, %v3853, %v3847
    %v3862 = vsel %vm533, %v3854, %v3848
    %v3863 = vsel %vm558, %v3861, 0.0
    %v3864 = vsel %vm558, %v3862, 0.0
    %v3865 = vsel %vm559, %v3859, 0.0
    %v3866 = vsel %vm559, %v3860, 0.0
    %v3867 = vsel %vm560, %v3857, 0.0
    %v3868 = vsel %vm560, %v3858, 0.0
    %v3869 = vsel %vm561, %v3855, 0.0
    %v3870 = vsel %vm561, %v3856, 0.0
    %v3871 = vld [vmem:[%s5] sm:$0xff]
    %v3872 = vld [vmem:[%s5 + $0x8] sm:$0xff]
    %v3873 = vld [vmem:[%s5 + $0x10] sm:$0xff]
    %v3874 = vld [vmem:[%s5 + $0x18] sm:$0xff]
    %v3875 = vld [vmem:[%s5 + $0x20] sm:$0xff]
    %v3876 = vld [vmem:[%s5 + $0x28] sm:$0xff]
    %v3877 = vld [vmem:[%s5 + $0x30] sm:$0xff]
    %v3878 = vld [vmem:[%s5 + $0x38] sm:$0xff]
    %v3879 = vld [vmem:[%s5 + $0x40] sm:$0xff]
    %v3880 = vld [vmem:[%s5 + $0x48] sm:$0xff]
    %v3881 = vld [vmem:[%s5 + $0x50] sm:$0xff]
    %v3882 = vld [vmem:[%s5 + $0x58] sm:$0xff]
    %v3883 = vld [vmem:[%s5 + $0x60] sm:$0xff]
    %v3884 = vld [vmem:[%s5 + $0x68] sm:$0xff]
    %v3885 = vld [vmem:[%s5 + $0x70] sm:$0xff]
    %v3886 = vld [vmem:[%s5 + $0x78] sm:$0xff]
    %v3887 = vld [vmem:[%s5 + $0x80] sm:$0xff]
    %v3888 = vld [vmem:[%s5 + $0x88] sm:$0xff]
    %v3889 = vld [vmem:[%s5 + $0x90] sm:$0xff]
    %v3890 = vld [vmem:[%s5 + $0x98] sm:$0xff]
    %v3891 = vld [vmem:[%s5 + $0xa0] sm:$0xff]
    %v3892 = vld [vmem:[%s5 + $0xa8] sm:$0xff]
    %v3893 = vld [vmem:[%s5 + $0xb0] sm:$0xff]
    %v3894 = vld [vmem:[%s5 + $0xb8] sm:$0xff]
    %v3895 = vld [vmem:[%s5 + $0xc0] sm:$0xff]
    %v3896 = vld [vmem:[%s5 + $0xc8] sm:$0xff]
    %v3897 = vld [vmem:[%s5 + $0xd0] sm:$0xff]
    %v3898 = vld [vmem:[%s5 + $0xd8] sm:$0xff]
    %v3899 = vld [vmem:[%s5 + $0xe0] sm:$0xff]
    %v3900 = vld [vmem:[%s5 + $0xe8] sm:$0xff]
    %v3901 = vld [vmem:[%s5 + $0xf0] sm:$0xff]
    %v3902 = vld [vmem:[%s5 + $0xf8] sm:$0xff]
    %v3903 = vld [vmem:[%s5 + $0x100] sm:$0xff]
    %v3904 = vld [vmem:[%s5 + $0x108] sm:$0xff]
    %v3905 = vld [vmem:[%s5 + $0x110] sm:$0xff]
    %v3906 = vld [vmem:[%s5 + $0x118] sm:$0xff]
    %v3907 = vld [vmem:[%s5 + $0x120] sm:$0xff]
    %v3908 = vld [vmem:[%s5 + $0x128] sm:$0xff]
    %v3909 = vld [vmem:[%s5 + $0x130] sm:$0xff]
    %v3910 = vld [vmem:[%s5 + $0x138] sm:$0xff]
    %v3911 = vld [vmem:[%s5 + $0x140] sm:$0xff]
    %v3912 = vld [vmem:[%s5 + $0x148] sm:$0xff]
    %v3913 = vld [vmem:[%s5 + $0x150] sm:$0xff]
    %v3914 = vld [vmem:[%s5 + $0x158] sm:$0xff]
    %v3915 = vld [vmem:[%s5 + $0x160] sm:$0xff]
    %v3916 = vld [vmem:[%s5 + $0x168] sm:$0xff]
    %v3917 = vld [vmem:[%s5 + $0x170] sm:$0xff]
    %v3918 = vld [vmem:[%s5 + $0x178] sm:$0xff]
    %v3919 = vld [vmem:[%s5 + $0x180] sm:$0xff]
    %v3920 = vld [vmem:[%s5 + $0x188] sm:$0xff]
    %v3921 = vld [vmem:[%s5 + $0x190] sm:$0xff]
    %v3922 = vld [vmem:[%s5 + $0x198] sm:$0xff]
    %v3923 = vld [vmem:[%s5 + $0x1a0] sm:$0xff]
    %v3924 = vld [vmem:[%s5 + $0x1a8] sm:$0xff]
    %v3925 = vld [vmem:[%s5 + $0x1b0] sm:$0xff]
    %v3926 = vld [vmem:[%s5 + $0x1b8] sm:$0xff]
    %v3927 = vld [vmem:[%s5 + $0x1c0] sm:$0xff]
    %v3928 = vld [vmem:[%s5 + $0x1c8] sm:$0xff]
    %v3929 = vld [vmem:[%s5 + $0x1d0] sm:$0xff]
    %v3930 = vld [vmem:[%s5 + $0x1d8] sm:$0xff]
    %v3931 = vld [vmem:[%s5 + $0x1e0] sm:$0xff]
    %v3932 = vld [vmem:[%s5 + $0x1e8] sm:$0xff]
    %v3933 = vld [vmem:[%s5 + $0x1f0] sm:$0xff]
    %v3934 = vld [vmem:[%s5 + $0x1f8] sm:$0xff]
    %v3935 = vld [vmem:[%s5 + $0x200] sm:$0xff]
    %v3936 = vld [vmem:[%s5 + $0x208] sm:$0xff]
    %v3937 = vld [vmem:[%s5 + $0x210] sm:$0xff]
    %v3938 = vld [vmem:[%s5 + $0x218] sm:$0xff]
    %v3939 = vld [vmem:[%s5 + $0x220] sm:$0xff]
    %v3940 = vld [vmem:[%s5 + $0x228] sm:$0xff]
    %v3941 = vld [vmem:[%s5 + $0x230] sm:$0xff]
    %v3942 = vld [vmem:[%s5 + $0x238] sm:$0xff]
    %v3943 = vld [vmem:[%s5 + $0x240] sm:$0xff]
    %v3944 = vld [vmem:[%s5 + $0x248] sm:$0xff]
    %v3945 = vld [vmem:[%s5 + $0x250] sm:$0xff]
    %v3946 = vld [vmem:[%s5 + $0x258] sm:$0xff]
    %v3947 = vld [vmem:[%s5 + $0x260] sm:$0xff]
    %v3948 = vld [vmem:[%s5 + $0x268] sm:$0xff]
    %v3949 = vld [vmem:[%s5 + $0x270] sm:$0xff]
    %v3950 = vld [vmem:[%s5 + $0x278] sm:$0xff]
    %v3951 = vld [vmem:[%s5 + $0x280] sm:$0xff]
    %v3952 = vld [vmem:[%s5 + $0x288] sm:$0xff]
    %v3953 = vld [vmem:[%s5 + $0x290] sm:$0xff]
    %v3954 = vld [vmem:[%s5 + $0x298] sm:$0xff]
    %v3955 = vld [vmem:[%s5 + $0x2a0] sm:$0xff]
    %v3956 = vld [vmem:[%s5 + $0x2a8] sm:$0xff]
    %v3957 = vld [vmem:[%s5 + $0x2b0] sm:$0xff]
    %v3958 = vld [vmem:[%s5 + $0x2b8] sm:$0xff]
    %v3959 = vld [vmem:[%s5 + $0x2c0] sm:$0xff]
    %v3960 = vld [vmem:[%s5 + $0x2c8] sm:$0xff]
    %v3961 = vld [vmem:[%s5 + $0x2d0] sm:$0xff]
    %v3962 = vld [vmem:[%s5 + $0x2d8] sm:$0xff]
    %v3963 = vld [vmem:[%s5 + $0x2e0] sm:$0xff]
    %v3964 = vld [vmem:[%s5 + $0x2e8] sm:$0xff]
    %v3965 = vld [vmem:[%s5 + $0x2f0] sm:$0xff]
    %v3966 = vld [vmem:[%s5 + $0x2f8] sm:$0xff]
    %v3967 = vld [vmem:[%s5 + $0x300] sm:$0xff]
    %v3968 = vld [vmem:[%s5 + $0x308] sm:$0xff]
    %v3969 = vld [vmem:[%s5 + $0x310] sm:$0xff]
    %v3970 = vld [vmem:[%s5 + $0x318] sm:$0xff]
    %v3971 = vld [vmem:[%s5 + $0x320] sm:$0xff]
    %v3972 = vld [vmem:[%s5 + $0x328] sm:$0xff]
    %v3973 = vld [vmem:[%s5 + $0x330] sm:$0xff]
    %v3974 = vld [vmem:[%s5 + $0x338] sm:$0xff]
    %v3975 = vld [vmem:[%s5 + $0x340] sm:$0xff]
    %v3976 = vld [vmem:[%s5 + $0x348] sm:$0xff]
    %v3977 = vld [vmem:[%s5 + $0x350] sm:$0xff]
    %v3978 = vld [vmem:[%s5 + $0x358] sm:$0xff]
    %v3979 = vld [vmem:[%s5 + $0x360] sm:$0xff]
    %v3980 = vld [vmem:[%s5 + $0x368] sm:$0xff]
    %v3981 = vld [vmem:[%s5 + $0x370] sm:$0xff]
    %v3982 = vld [vmem:[%s5 + $0x378] sm:$0xff]
    %v3983 = vld [vmem:[%s5 + $0x380] sm:$0xff]
    %v3984 = vld [vmem:[%s5 + $0x388] sm:$0xff]
    %v3985 = vld [vmem:[%s5 + $0x390] sm:$0xff]
    %v3986 = vld [vmem:[%s5 + $0x398] sm:$0xff]
    %v3987 = vld [vmem:[%s5 + $0x3a0] sm:$0xff]
    %v3988 = vld [vmem:[%s5 + $0x3a8] sm:$0xff]
    %v3989 = vld [vmem:[%s5 + $0x3b0] sm:$0xff]
    %v3990 = vld [vmem:[%s5 + $0x3b8] sm:$0xff]
    %v3991 = vld [vmem:[%s5 + $0x3c0] sm:$0xff]
    %v3992 = vld [vmem:[%s5 + $0x3c8] sm:$0xff]
    %v3993 = vld [vmem:[%s5 + $0x3d0] sm:$0xff]
    %v3994 = vld [vmem:[%s5 + $0x3d8] sm:$0xff]
    %v3995 = vld [vmem:[%s5 + $0x3e0] sm:$0xff]
    %v3996 = vld [vmem:[%s5 + $0x3e8] sm:$0xff]
    %v3997 = vld [vmem:[%s5 + $0x3f0] sm:$0xff]
    %v3998 = vld [vmem:[%s5 + $0x3f8] sm:$0xff]
    %v3999 = vrot.slane %v3839, 6
    %v4000 = vrot.slane %v3840, 6
    %v4001 = vrot.slane %v3841, 6
    %v4002 = vrot.slane %v3842, 6
    %v4003 = vrot.slane %v3843, 6
    %v4004 = vrot.slane %v3844, 6
    %v4005 = vrot.slane %v3845, 6
    %v4006 = vrot.slane %v3846, 6
    %v4007 = vsel %vm602, %v4003, %v4005
    %v4008 = vsel %vm602, %v4004, %v4006
    %v4009 = vsel %vm602, %v4001, %v4003
    %v4010 = vsel %vm602, %v4002, %v4004
    %v4011 = vsel %vm602, %v3999, %v4001
    %v4012 = vsel %vm602, %v4000, %v4002
    %v4013 = vsel %vm602, %v4005, %v3999
    %v4014 = vsel %vm602, %v4006, %v4000
    %v4015 = vsel %vm627, %v4013, 0.0
    %v4016 = vsel %vm627, %v4014, 0.0
    %v4017 = vsel %vm628, %v4011, 0.0
    %v4018 = vsel %vm628, %v4012, 0.0
    %v4019 = vsel %vm629, %v4009, 0.0
    %v4020 = vsel %vm629, %v4010, 0.0
    %v4021 = vsel %vm630, %v4007, 0.0
    %v4022 = vsel %vm630, %v4008, 0.0
    %s4023 = scalar_lea.vmem %s5, 1024
    %v4024 = vld [vmem:[%s4023] sm:$0xff]
    %v4025 = vld [vmem:[%s4023 + $0x8] sm:$0xff]
    %v4026 = vld [vmem:[%s4023 + $0x10] sm:$0xff]
    %v4027 = vld [vmem:[%s4023 + $0x18] sm:$0xff]
    %v4028 = vld [vmem:[%s4023 + $0x20] sm:$0xff]
    %v4029 = vld [vmem:[%s4023 + $0x28] sm:$0xff]
    %v4030 = vld [vmem:[%s4023 + $0x30] sm:$0xff]
    %v4031 = vld [vmem:[%s4023 + $0x38] sm:$0xff]
    %v4032 = vld [vmem:[%s4023 + $0x40] sm:$0xff]
    %v4033 = vld [vmem:[%s4023 + $0x48] sm:$0xff]
    %v4034 = vld [vmem:[%s4023 + $0x50] sm:$0xff]
    %v4035 = vld [vmem:[%s4023 + $0x58] sm:$0xff]
    %v4036 = vld [vmem:[%s4023 + $0x60] sm:$0xff]
    %v4037 = vld [vmem:[%s4023 + $0x68] sm:$0xff]
    %v4038 = vld [vmem:[%s4023 + $0x70] sm:$0xff]
    %v4039 = vld [vmem:[%s4023 + $0x78] sm:$0xff]
    %v4040 = vld [vmem:[%s4023 + $0x80] sm:$0xff]
    %v4041 = vld [vmem:[%s4023 + $0x88] sm:$0xff]
    %v4042 = vld [vmem:[%s4023 + $0x90] sm:$0xff]
    %v4043 = vld [vmem:[%s4023 + $0x98] sm:$0xff]
    %v4044 = vld [vmem:[%s4023 + $0xa0] sm:$0xff]
    %v4045 = vld [vmem:[%s4023 + $0xa8] sm:$0xff]
    %v4046 = vld [vmem:[%s4023 + $0xb0] sm:$0xff]
    %v4047 = vld [vmem:[%s4023 + $0xb8] sm:$0xff]
    %v4048 = vld [vmem:[%s4023 + $0xc0] sm:$0xff]
    %v4049 = vld [vmem:[%s4023 + $0xc8] sm:$0xff]
    %v4050 = vld [vmem:[%s4023 + $0xd0] sm:$0xff]
    %v4051 = vld [vmem:[%s4023 + $0xd8] sm:$0xff]
    %v4052 = vld [vmem:[%s4023 + $0xe0] sm:$0xff]
    %v4053 = vld [vmem:[%s4023 + $0xe8] sm:$0xff]
    %v4054 = vld [vmem:[%s4023 + $0xf0] sm:$0xff]
    %v4055 = vld [vmem:[%s4023 + $0xf8] sm:$0xff]
    %v4056 = vld [vmem:[%s4023 + $0x100] sm:$0xff]
    %v4057 = vld [vmem:[%s4023 + $0x108] sm:$0xff]
    %v4058 = vld [vmem:[%s4023 + $0x110] sm:$0xff]
    %v4059 = vld [vmem:[%s4023 + $0x118] sm:$0xff]
    %v4060 = vld [vmem:[%s4023 + $0x120] sm:$0xff]
    %v4061 = vld [vmem:[%s4023 + $0x128] sm:$0xff]
    %v4062 = vld [vmem:[%s4023 + $0x130] sm:$0xff]
    %v4063 = vld [vmem:[%s4023 + $0x138] sm:$0xff]
    %v4064 = vld [vmem:[%s4023 + $0x140] sm:$0xff]
    %v4065 = vld [vmem:[%s4023 + $0x148] sm:$0xff]
    %v4066 = vld [vmem:[%s4023 + $0x150] sm:$0xff]
    %v4067 = vld [vmem:[%s4023 + $0x158] sm:$0xff]
    %v4068 = vld [vmem:[%s4023 + $0x160] sm:$0xff]
    %v4069 = vld [vmem:[%s4023 + $0x168] sm:$0xff]
    %v4070 = vld [vmem:[%s4023 + $0x170] sm:$0xff]
    %v4071 = vld [vmem:[%s4023 + $0x178] sm:$0xff]
    %v4072 = vld [vmem:[%s4023 + $0x180] sm:$0xff]
    %v4073 = vld [vmem:[%s4023 + $0x188] sm:$0xff]
    %v4074 = vld [vmem:[%s4023 + $0x190] sm:$0xff]
    %v4075 = vld [vmem:[%s4023 + $0x198] sm:$0xff]
    %v4076 = vld [vmem:[%s4023 + $0x1a0] sm:$0xff]
    %v4077 = vld [vmem:[%s4023 + $0x1a8] sm:$0xff]
    %v4078 = vld [vmem:[%s4023 + $0x1b0] sm:$0xff]
    %v4079 = vld [vmem:[%s4023 + $0x1b8] sm:$0xff]
    %v4080 = vld [vmem:[%s4023 + $0x1c0] sm:$0xff]
    %v4081 = vld [vmem:[%s4023 + $0x1c8] sm:$0xff]
    %v4082 = vld [vmem:[%s4023 + $0x1d0] sm:$0xff]
    %v4083 = vld [vmem:[%s4023 + $0x1d8] sm:$0xff]
    %v4084 = vld [vmem:[%s4023 + $0x1e0] sm:$0xff]
    %v4085 = vld [vmem:[%s4023 + $0x1e8] sm:$0xff]
    %v4086 = vld [vmem:[%s4023 + $0x1f0] sm:$0xff]
    %v4087 = vld [vmem:[%s4023 + $0x1f8] sm:$0xff]
    %v4088 = vld [vmem:[%s4023 + $0x200] sm:$0xff]
    %v4089 = vld [vmem:[%s4023 + $0x208] sm:$0xff]
    %v4090 = vld [vmem:[%s4023 + $0x210] sm:$0xff]
    %v4091 = vld [vmem:[%s4023 + $0x218] sm:$0xff]
    %v4092 = vld [vmem:[%s4023 + $0x220] sm:$0xff]
    %v4093 = vld [vmem:[%s4023 + $0x228] sm:$0xff]
    %v4094 = vld [vmem:[%s4023 + $0x230] sm:$0xff]
    %v4095 = vld [vmem:[%s4023 + $0x238] sm:$0xff]
    %v4096 = vld [vmem:[%s4023 + $0x240] sm:$0xff]
    %v4097 = vld [vmem:[%s4023 + $0x248] sm:$0xff]
    %v4098 = vld [vmem:[%s4023 + $0x250] sm:$0xff]
    %v4099 = vld [vmem:[%s4023 + $0x258] sm:$0xff]
    %v4100 = vld [vmem:[%s4023 + $0x260] sm:$0xff]
    %v4101 = vld [vmem:[%s4023 + $0x268] sm:$0xff]
    %v4102 = vld [vmem:[%s4023 + $0x270] sm:$0xff]
    %v4103 = vld [vmem:[%s4023 + $0x278] sm:$0xff]
    %v4104 = vld [vmem:[%s4023 + $0x280] sm:$0xff]
    %v4105 = vld [vmem:[%s4023 + $0x288] sm:$0xff]
    %v4106 = vld [vmem:[%s4023 + $0x290] sm:$0xff]
    %v4107 = vld [vmem:[%s4023 + $0x298] sm:$0xff]
    %v4108 = vld [vmem:[%s4023 + $0x2a0] sm:$0xff]
    %v4109 = vld [vmem:[%s4023 + $0x2a8] sm:$0xff]
    %v4110 = vld [vmem:[%s4023 + $0x2b0] sm:$0xff]
    %v4111 = vld [vmem:[%s4023 + $0x2b8] sm:$0xff]
    %v4112 = vld [vmem:[%s4023 + $0x2c0] sm:$0xff]
    %v4113 = vld [vmem:[%s4023 + $0x2c8] sm:$0xff]
    %v4114 = vld [vmem:[%s4023 + $0x2d0] sm:$0xff]
    %v4115 = vld [vmem:[%s4023 + $0x2d8] sm:$0xff]
    %v4116 = vld [vmem:[%s4023 + $0x2e0] sm:$0xff]
    %v4117 = vld [vmem:[%s4023 + $0x2e8] sm:$0xff]
    %v4118 = vld [vmem:[%s4023 + $0x2f0] sm:$0xff]
    %v4119 = vld [vmem:[%s4023 + $0x2f8] sm:$0xff]
    %v4120 = vld [vmem:[%s4023 + $0x300] sm:$0xff]
    %v4121 = vld [vmem:[%s4023 + $0x308] sm:$0xff]
    %v4122 = vld [vmem:[%s4023 + $0x310] sm:$0xff]
    %v4123 = vld [vmem:[%s4023 + $0x318] sm:$0xff]
    %v4124 = vld [vmem:[%s4023 + $0x320] sm:$0xff]
    %v4125 = vld [vmem:[%s4023 + $0x328] sm:$0xff]
    %v4126 = vld [vmem:[%s4023 + $0x330] sm:$0xff]
    %v4127 = vld [vmem:[%s4023 + $0x338] sm:$0xff]
    %v4128 = vld [vmem:[%s4023 + $0x340] sm:$0xff]
    %v4129 = vld [vmem:[%s4023 + $0x348] sm:$0xff]
    %v4130 = vld [vmem:[%s4023 + $0x350] sm:$0xff]
    %v4131 = vld [vmem:[%s4023 + $0x358] sm:$0xff]
    %v4132 = vld [vmem:[%s4023 + $0x360] sm:$0xff]
    %v4133 = vld [vmem:[%s4023 + $0x368] sm:$0xff]
    %v4134 = vld [vmem:[%s4023 + $0x370] sm:$0xff]
    %v4135 = vld [vmem:[%s4023 + $0x378] sm:$0xff]
    %v4136 = vld [vmem:[%s4023 + $0x380] sm:$0xff]
    %v4137 = vld [vmem:[%s4023 + $0x388] sm:$0xff]
    %v4138 = vld [vmem:[%s4023 + $0x390] sm:$0xff]
    %v4139 = vld [vmem:[%s4023 + $0x398] sm:$0xff]
    %v4140 = vld [vmem:[%s4023 + $0x3a0] sm:$0xff]
    %v4141 = vld [vmem:[%s4023 + $0x3a8] sm:$0xff]
    %v4142 = vld [vmem:[%s4023 + $0x3b0] sm:$0xff]
    %v4143 = vld [vmem:[%s4023 + $0x3b8] sm:$0xff]
    %v4144 = vld [vmem:[%s4023 + $0x3c0] sm:$0xff]
    %v4145 = vld [vmem:[%s4023 + $0x3c8] sm:$0xff]
    %v4146 = vld [vmem:[%s4023 + $0x3d0] sm:$0xff]
    %v4147 = vld [vmem:[%s4023 + $0x3d8] sm:$0xff]
    %v4148 = vld [vmem:[%s4023 + $0x3e0] sm:$0xff]
    %v4149 = vld [vmem:[%s4023 + $0x3e8] sm:$0xff]
    %v4150 = vld [vmem:[%s4023 + $0x3f0] sm:$0xff]
    %v4151 = vld [vmem:[%s4023 + $0x3f8] sm:$0xff]
    %4152 = vmatprep.subr.mxu0 %v4025
    %4153 = vmatpush1.msra.mxu0 %v4024
    %4154 = vmatprep.subr.mxu0 %v4029
    %4155 = vmatpush1.msra.mxu0 %v4028
    %4156 = vmatprep.subr.mxu0 %v4033
    %4157 = vmatpush1.msra.mxu0 %v4032
    %4158 = vmatprep.subr.mxu0 %v4037
    %4159 = vmatpush1.msra.mxu0 %v4036
    %4160 = vmatprep.subr.mxu0 %v4041
    %4161 = vmatpush1.msra.mxu0 %v4040
    %4162 = vmatprep.subr.mxu0 %v4045
    %4163 = vmatpush1.msra.mxu0 %v4044
    %4164 = vmatprep.subr.mxu0 %v4049
    %4165 = vmatpush1.msra.mxu0 %v4048
    %4166 = vmatprep.subr.mxu0 %v4053
    %4167 = vmatpush1.msra.mxu0 %v4052
    %4168 = vmatprep.subr.mxu0 %v4057
    %4169 = vmatpush1.msra.mxu0 %v4056
    %4170 = vmatprep.subr.mxu0 %v4061
    %4171 = vmatpush1.msra.mxu0 %v4060
    %4172 = vmatprep.subr.mxu0 %v4065
    %4173 = vmatpush1.msra.mxu0 %v4064
    %4174 = vmatprep.subr.mxu0 %v4069
    %4175 = vmatpush1.msra.mxu0 %v4068
    %4176 = vmatprep.subr.mxu0 %v4073
    %4177 = vmatpush1.msra.mxu0 %v4072
    %4178 = vmatprep.subr.mxu0 %v4077
    %4179 = vmatpush1.msra.mxu0 %v4076
    %4180 = vmatprep.subr.mxu0 %v4081
    %4181 = vmatpush1.msra.mxu0 %v4080
    %4182 = vmatprep.subr.mxu0 %v4085
    %4183 = vmatpush1.msra.mxu0 %v4084
    %4184 = vmatprep.subr.mxu0 %v4089
    %4185 = vmatpush1.msra.mxu0 %v4088
    %4186 = vmatprep.subr.mxu0 %v4093
    %4187 = vmatpush1.msra.mxu0 %v4092
    %4188 = vmatprep.subr.mxu0 %v4097
    %4189 = vmatpush1.msra.mxu0 %v4096
    %4190 = vmatprep.subr.mxu0 %v4101
    %4191 = vmatpush1.msra.mxu0 %v4100
    %4192 = vmatprep.subr.mxu0 %v4105
    %4193 = vmatpush1.msra.mxu0 %v4104
    %4194 = vmatprep.subr.mxu0 %v4109
    %4195 = vmatpush1.msra.mxu0 %v4108
    %4196 = vmatprep.subr.mxu0 %v4113
    %4197 = vmatpush1.msra.mxu0 %v4112
    %4198 = vmatprep.subr.mxu0 %v4117
    %4199 = vmatpush1.msra.mxu0 %v4116
    %4200 = vmatprep.subr.mxu0 %v4121
    %4201 = vmatpush1.msra.mxu0 %v4120
    %4202 = vmatprep.subr.mxu0 %v4125
    %4203 = vmatpush1.msra.mxu0 %v4124
    %4204 = vmatprep.subr.mxu0 %v4129
    %4205 = vmatpush1.msra.mxu0 %v4128
    %4206 = vmatprep.subr.mxu0 %v4133
    %4207 = vmatpush1.msra.mxu0 %v4132
    %4208 = vmatprep.subr.mxu0 %v4137
    %4209 = vmatpush1.msra.mxu0 %v4136
    %4210 = vmatprep.subr.mxu0 %v4141
    %4211 = vmatpush1.msra.mxu0 %v4140
    %4212 = vmatprep.subr.mxu0 %v4145
    %4213 = vmatpush1.msra.mxu0 %v4144
    %4214 = vmatprep.subr.mxu0 %v4149
    %4215 = vmatpush1.msra.mxu0 %v4148
    %4216 = vmatprep.mubr.f32.mxu0 %v4016
    %4217 = vmatmul.mubr.f32.gmra.mrb[0].mxu0 %v4015
    %v4218 = vpop.f32.mrb[0].mxu0
    %v4219 = vadd.f32 0.0, %v4218
    %v4220 = vpop.f32.mrb[0].mxu0
    %v4221 = vadd.f32 0.0, %v4220
    %4222 = vmatprep.mubr.f32.mxu0 %v4018
    %4223 = vmatmul.mubr.f32.gmra.mrb[0].mxu0 %v4017
    %v4224 = vpop.f32.mrb[0].mxu0
    %v4225 = vadd.f32 0.0, %v4224
    %v4226 = vpop.f32.mrb[0].mxu0
    %v4227 = vadd.f32 0.0, %v4226
    %4228 = vmatprep.mubr.f32.mxu0 %v4020
    %4229 = vmatmul.mubr.f32.gmra.mrb[0].mxu0 %v4019
    %v4230 = vpop.f32.mrb[0].mxu0
    %v4231 = vadd.f32 0.0, %v4230
    %v4232 = vpop.f32.mrb[0].mxu0
    %v4233 = vadd.f32 0.0, %v4232
    %4234 = vmatprep.mubr.f32.mxu0 %v4022
    %4235 = vmatmul.mubr.f32.gmra.mrb[0].mxu0 %v4021
    %v4236 = vpop.f32.mrb[0].mxu0
    %v4237 = vadd.f32 0.0, %v4236
    %v4238 = vpop.f32.mrb[0].mxu0
    %v4239 = vadd.f32 0.0, %v4238
    %4240 = vdwg.mxu0
    %4241 = vmatprep.subr.mxu0 %v4027
    %4242 = vmatpush1.msra.mxu0 %v4026
    %4243 = vmatprep.subr.mxu0 %v4031
    %4244 = vmatpush1.msra.mxu0 %v4030
    %4245 = vmatprep.subr.mxu0 %v4035
    %4246 = vmatpush1.msra.mxu0 %v4034
    %4247 = vmatprep.subr.mxu0 %v4039
    %4248 = vmatpush1.msra.mxu0 %v4038
    %4249 = vmatprep.subr.mxu0 %v4043
    %4250 = vmatpush1.msra.mxu0 %v4042
    %4251 = vmatprep.subr.mxu0 %v4047
    %4252 = vmatpush1.msra.mxu0 %v4046
    %4253 = vmatprep.subr.mxu0 %v4051
    %4254 = vmatpush1.msra.mxu0 %v4050
    %4255 = vmatprep.subr.mxu0 %v4055
    %4256 = vmatpush1.msra.mxu0 %v4054
    %4257 = vmatprep.subr.mxu0 %v4059
    %4258 = vmatpush1.msra.mxu0 %v4058
    %4259 = vmatprep.subr.mxu0 %v4063
    %4260 = vmatpush1.msra.mxu0 %v4062
    %4261 = vmatprep.subr.mxu0 %v4067
    %4262 = vmatpush1.msra.mxu0 %v4066
    %4263 = vmatprep.subr.mxu0 %v4071
    %4264 = vmatpush1.msra.mxu0 %v4070
    %4265 = vmatprep.subr.mxu0 %v4075
    %4266 = vmatpush1.msra.mxu0 %v4074
    %4267 = vmatprep.subr.mxu0 %v4079
    %4268 = vmatpush1.msra.mxu0 %v4078
    %4269 = vmatprep.subr.mxu0 %v4083
    %4270 = vmatpush1.msra.mxu0 %v4082
    %4271 = vmatprep.subr.mxu0 %v4087
    %4272 = vmatpush1.msra.mxu0 %v4086
    %4273 = vmatprep.subr.mxu0 %v4091
    %4274 = vmatpush1.msra.mxu0 %v4090
    %4275 = vmatprep.subr.mxu0 %v4095
    %4276 = vmatpush1.msra.mxu0 %v4094
    %4277 = vmatprep.subr.mxu0 %v4099
    %4278 = vmatpush1.msra.mxu0 %v4098
    %4279 = vmatprep.subr.mxu0 %v4103
    %4280 = vmatpush1.msra.mxu0 %v4102
    %4281 = vmatprep.subr.mxu0 %v4107
    %4282 = vmatpush1.msra.mxu0 %v4106
    %4283 = vmatprep.subr.mxu0 %v4111
    %4284 = vmatpush1.msra.mxu0 %v4110
    %4285 = vmatprep.subr.mxu0 %v4115
    %4286 = vmatpush1.msra.mxu0 %v4114
    %4287 = vmatprep.subr.mxu0 %v4119
    %4288 = vmatpush1.msra.mxu0 %v4118
    %4289 = vmatprep.subr.mxu0 %v4123
    %4290 = vmatpush1.msra.mxu0 %v4122
    %4291 = vmatprep.subr.mxu0 %v4127
    %4292 = vmatpush1.msra.mxu0 %v4126
    %4293 = vmatprep.subr.mxu0 %v4131
    %4294 = vmatpush1.msra.mxu0 %v4130
    %4295 = vmatprep.subr.mxu0 %v4135
    %4296 = vmatpush1.msra.mxu0 %v4134
    %4297 = vmatprep.subr.mxu0 %v4139
    %4298 = vmatpush1.msra.mxu0 %v4138
    %4299 = vmatprep.subr.mxu0 %v4143
    %4300 = vmatpush1.msra.mxu0 %v4142
    %4301 = vmatprep.subr.mxu0 %v4147
    %4302 = vmatpush1.msra.mxu0 %v4146
    %4303 = vmatprep.subr.mxu0 %v4151
    %4304 = vmatpush1.msra.mxu0 %v4150
    %4305 = vmatprep.mubr.f32.mxu0 %v4016
    %4306 = vmatmul.mubr.f32.gmra.mrb[0].mxu0 %v4015
    %v4307 = vpop.f32.mrb[0].mxu0
    %v4308 = vadd.f32 0.0, %v4307
    %v4309 = vpop.f32.mrb[0].mxu0
    %v4310 = vadd.f32 0.0, %v4309
    %4311 = vmatprep.mubr.f32.mxu0 %v4018
    %4312 = vmatmul.mubr.f32.gmra.mrb[0].mxu0 %v4017
    %v4313 = vpop.f32.mrb[0].mxu0
    %v4314 = vadd.f32 0.0, %v4313
    %v4315 = vpop.f32.mrb[0].mxu0
    %v4316 = vadd.f32 0.0, %v4315
    %4317 = vmatprep.mubr.f32.mxu0 %v4020
    %4318 = vmatmul.mubr.f32.gmra.mrb[0].mxu0 %v4019
    %v4319 = vpop.f32.mrb[0].mxu0
    %v4320 = vadd.f32 0.0, %v4319
    %v4321 = vpop.f32.mrb[0].mxu0
    %v4322 = vadd.f32 0.0, %v4321
    %4323 = vmatprep.mubr.f32.mxu0 %v4022
    %4324 = vmatmul.mubr.f32.gmra.mrb[0].mxu0 %v4021
    %v4325 = vpop.f32.mrb[0].mxu0
    %v4326 = vadd.f32 0.0, %v4325
    %v4327 = vpop.f32.mrb[0].mxu0
    %v4328 = vadd.f32 0.0, %v4327
    %4329 = vdwg.mxu0
    %4330 = vmatprep.subr.mxu0 %v3872
    %4331 = vmatpush1.msra.mxu0 %v3871
    %4332 = vmatprep.subr.mxu0 %v3876
    %4333 = vmatpush1.msra.mxu0 %v3875
    %4334 = vmatprep.subr.mxu0 %v3880
    %4335 = vmatpush1.msra.mxu0 %v3879
    %4336 = vmatprep.subr.mxu0 %v3884
    %4337 = vmatpush1.msra.mxu0 %v3883
    %4338 = vmatprep.subr.mxu0 %v3888
    %4339 = vmatpush1.msra.mxu0 %v3887
    %4340 = vmatprep.subr.mxu0 %v3892
    %4341 = vmatpush1.msra.mxu0 %v3891
    %4342 = vmatprep.subr.mxu0 %v3896
    %4343 = vmatpush1.msra.mxu0 %v3895
    %4344 = vmatprep.subr.mxu0 %v3900
    %4345 = vmatpush1.msra.mxu0 %v3899
    %4346 = vmatprep.subr.mxu0 %v3904
    %4347 = vmatpush1.msra.mxu0 %v3903
    %4348 = vmatprep.subr.mxu0 %v3908
    %4349 = vmatpush1.msra.mxu0 %v3907
    %4350 = vmatprep.subr.mxu0 %v3912
    %4351 = vmatpush1.msra.mxu0 %v3911
    %4352 = vmatprep.subr.mxu0 %v3916
    %4353 = vmatpush1.msra.mxu0 %v3915
    %4354 = vmatprep.subr.mxu0 %v3920
    %4355 = vmatpush1.msra.mxu0 %v3919
    %4356 = vmatprep.subr.mxu0 %v3924
    %4357 = vmatpush1.msra.mxu0 %v3923
    %4358 = vmatprep.subr.mxu0 %v3928
    %4359 = vmatpush1.msra.mxu0 %v3927
    %4360 = vmatprep.subr.mxu0 %v3932
    %4361 = vmatpush1.msra.mxu0 %v3931
    %4362 = vmatprep.subr.mxu0 %v3936
    %4363 = vmatpush1.msra.mxu0 %v3935
    %4364 = vmatprep.subr.mxu0 %v3940
    %4365 = vmatpush1.msra.mxu0 %v3939
    %4366 = vmatprep.subr.mxu0 %v3944
    %4367 = vmatpush1.msra.mxu0 %v3943
    %4368 = vmatprep.subr.mxu0 %v3948
    %4369 = vmatpush1.msra.mxu0 %v3947
    %4370 = vmatprep.subr.mxu0 %v3952
    %4371 = vmatpush1.msra.mxu0 %v3951
    %4372 = vmatprep.subr.mxu0 %v3956
    %4373 = vmatpush1.msra.mxu0 %v3955
    %4374 = vmatprep.subr.mxu0 %v3960
    %4375 = vmatpush1.msra.mxu0 %v3959
    %4376 = vmatprep.subr.mxu0 %v3964
    %4377 = vmatpush1.msra.mxu0 %v3963
    %4378 = vmatprep.subr.mxu0 %v3968
    %4379 = vmatpush1.msra.mxu0 %v3967
    %4380 = vmatprep.subr.mxu0 %v3972
    %4381 = vmatpush1.msra.mxu0 %v3971
    %4382 = vmatprep.subr.mxu0 %v3976
    %4383 = vmatpush1.msra.mxu0 %v3975
    %4384 = vmatprep.subr.mxu0 %v3980
    %4385 = vmatpush1.msra.mxu0 %v3979
    %4386 = vmatprep.subr.mxu0 %v3984
    %4387 = vmatpush1.msra.mxu0 %v3983
    %4388 = vmatprep.subr.mxu0 %v3988
    %4389 = vmatpush1.msra.mxu0 %v3987
    %4390 = vmatprep.subr.mxu0 %v3992
    %4391 = vmatpush1.msra.mxu0 %v3991
    %4392 = vmatprep.subr.mxu0 %v3996
    %4393 = vmatpush1.msra.mxu0 %v3995
    %4394 = vmatprep.mubr.f32.mxu0 %v3864
    %4395 = vmatmul.mubr.f32.gmra.mrb[0].mxu0 %v3863
    %v4396 = vpop.f32.mrb[0].mxu0
    %v4397 = vadd.f32 %v4219, %v4396
    %v4398 = vpop.f32.mrb[0].mxu0
    %v4399 = vadd.f32 %v4221, %v4398
    %4400 = vmatprep.mubr.f32.mxu0 %v3866
    %4401 = vmatmul.mubr.f32.gmra.mrb[0].mxu0 %v3865
    %v4402 = vpop.f32.mrb[0].mxu0
    %v4403 = vadd.f32 %v4225, %v4402
    %v4404 = vpop.f32.mrb[0].mxu0
    %v4405 = vadd.f32 %v4227, %v4404
    %4406 = vmatprep.mubr.f32.mxu0 %v3868
    %4407 = vmatmul.mubr.f32.gmra.mrb[0].mxu0 %v3867
    %v4408 = vpop.f32.mrb[0].mxu0
    %v4409 = vadd.f32 %v4231, %v4408
    %v4410 = vpop.f32.mrb[0].mxu0
    %v4411 = vadd.f32 %v4233, %v4410
    %4412 = vmatprep.mubr.f32.mxu0 %v3870
    %4413 = vmatmul.mubr.f32.gmra.mrb[0].mxu0 %v3869
    %v4414 = vpop.f32.mrb[0].mxu0
    %v4415 = vadd.f32 %v4237, %v4414
    %v4416 = vpop.f32.mrb[0].mxu0
    %v4417 = vadd.f32 %v4239, %v4416
    %4418 = vdwg.mxu0
    %4419 = vmatprep.subr.mxu0 %v3874
    %4420 = vmatpush1.msra.mxu0 %v3873
    %4421 = vmatprep.subr.mxu0 %v3878
    %4422 = vmatpush1.msra.mxu0 %v3877
    %4423 = vmatprep.subr.mxu0 %v3882
    %4424 = vmatpush1.msra.mxu0 %v3881
    %4425 = vmatprep.subr.mxu0 %v3886
    %4426 = vmatpush1.msra.mxu0 %v3885
    %4427 = vmatprep.subr.mxu0 %v3890
    %4428 = vmatpush1.msra.mxu0 %v3889
    %4429 = vmatprep.subr.mxu0 %v3894
    %4430 = vmatpush1.msra.mxu0 %v3893
    %4431 = vmatprep.subr.mxu0 %v3898
    %4432 = vmatpush1.msra.mxu0 %v3897
    %4433 = vmatprep.subr.mxu0 %v3902
    %4434 = vmatpush1.msra.mxu0 %v3901
    %4435 = vmatprep.subr.mxu0 %v3906
    %4436 = vmatpush1.msra.mxu0 %v3905
    %4437 = vmatprep.subr.mxu0 %v3910
    %4438 = vmatpush1.msra.mxu0 %v3909
    %4439 = vmatprep.subr.mxu0 %v3914
    %4440 = vmatpush1.msra.mxu0 %v3913
    %4441 = vmatprep.subr.mxu0 %v3918
    %4442 = vmatpush1.msra.mxu0 %v3917
    %4443 = vmatprep.subr.mxu0 %v3922
    %4444 = vmatpush1.msra.mxu0 %v3921
    %4445 = vmatprep.subr.mxu0 %v3926
    %4446 = vmatpush1.msra.mxu0 %v3925
    %4447 = vmatprep.subr.mxu0 %v3930
    %4448 = vmatpush1.msra.mxu0 %v3929
    %4449 = vmatprep.subr.mxu0 %v3934
    %4450 = vmatpush1.msra.mxu0 %v3933
    %4451 = vmatprep.subr.mxu0 %v3938
    %4452 = vmatpush1.msra.mxu0 %v3937
    %4453 = vmatprep.subr.mxu0 %v3942
    %4454 = vmatpush1.msra.mxu0 %v3941
    %4455 = vmatprep.subr.mxu0 %v3946
    %4456 = vmatpush1.msra.mxu0 %v3945
    %4457 = vmatprep.subr.mxu0 %v3950
    %4458 = vmatpush1.msra.mxu0 %v3949
    %4459 = vmatprep.subr.mxu0 %v3954
    %4460 = vmatpush1.msra.mxu0 %v3953
    %4461 = vmatprep.subr.mxu0 %v3958
    %4462 = vmatpush1.msra.mxu0 %v3957
    %4463 = vmatprep.subr.mxu0 %v3962
    %4464 = vmatpush1.msra.mxu0 %v3961
    %4465 = vmatprep.subr.mxu0 %v3966
    %4466 = vmatpush1.msra.mxu0 %v3965
    %4467 = vmatprep.subr.mxu0 %v3970
    %4468 = vmatpush1.msra.mxu0 %v3969
    %4469 = vmatprep.subr.mxu0 %v3974
    %4470 = vmatpush1.msra.mxu0 %v3973
    %4471 = vmatprep.subr.mxu0 %v3978
    %4472 = vmatpush1.msra.mxu0 %v3977
    %4473 = vmatprep.subr.mxu0 %v3982
    %4474 = vmatpush1.msra.mxu0 %v3981
    %4475 = vmatprep.subr.mxu0 %v3986
    %4476 = vmatpush1.msra.mxu0 %v3985
    %4477 = vmatprep.subr.mxu0 %v3990
    %4478 = vmatpush1.msra.mxu0 %v3989
    %4479 = vmatprep.subr.mxu0 %v3994
    %4480 = vmatpush1.msra.mxu0 %v3993
    %4481 = vmatprep.subr.mxu0 %v3998
    %4482 = vmatpush1.msra.mxu0 %v3997
    %4483 = vmatprep.mubr.f32.mxu0 %v3864
    %4484 = vmatmul.mubr.f32.gmra.mrb[0].mxu0 %v3863
    %v4485 = vpop.f32.mrb[0].mxu0
    %v4486 = vadd.f32 %v4308, %v4485
    %v4487 = vpop.f32.mrb[0].mxu0
    %v4488 = vadd.f32 %v4310, %v4487
    %4489 = vmatprep.mubr.f32.mxu0 %v3866
    %4490 = vmatmul.mubr.f32.gmra.mrb[0].mxu0 %v3865
    %v4491 = vpop.f32.mrb[0].mxu0
    %v4492 = vadd.f32 %v4314, %v4491
    %v4493 = vpop.f32.mrb[0].mxu0
    %v4494 = vadd.f32 %v4316, %v4493
    %4495 = vmatprep.mubr.f32.mxu0 %v3868
    %4496 = vmatmul.mubr.f32.gmra.mrb[0].mxu0 %v3867
    %v4497 = vpop.f32.mrb[0].mxu0
    %v4498 = vadd.f32 %v4320, %v4497
    %v4499 = vpop.f32.mrb[0].mxu0
    %v4500 = vadd.f32 %v4322, %v4499
    %4501 = vmatprep.mubr.f32.mxu0 %v3870
    %4502 = vmatmul.mubr.f32.gmra.mrb[0].mxu0 %v3869
    %v4503 = vpop.f32.mrb[0].mxu0
    %v4504 = vadd.f32 %v4326, %v4503
    %v4505 = vpop.f32.mrb[0].mxu0
    %v4506 = vadd.f32 %v4328, %v4505
    %4507 = vdwg.mxu0
    %v4508 = vrot.slane %v3839, 7
    %v4509 = vrot.slane %v3840, 7
    %v4510 = vrot.slane %v3841, 7
    %v4511 = vrot.slane %v3842, 7
    %v4512 = vrot.slane %v3843, 7
    %v4513 = vrot.slane %v3844, 7
    %v4514 = vrot.slane %v3845, 7
    %v4515 = vrot.slane %v3846, 7
    %v4516 = vsel %vm1408, %v4512, %v4514
    %v4517 = vsel %vm1408, %v4513, %v4515
    %v4518 = vsel %vm1408, %v4510, %v4512
    %v4519 = vsel %vm1408, %v4511, %v4513
    %v4520 = vsel %vm1408, %v4508, %v4510
    %v4521 = vsel %vm1408, %v4509, %v4511
    %v4522 = vsel %vm1408, %v4514, %v4508
    %v4523 = vsel %vm1408, %v4515, %v4509
    %v4524 = vsel %vm1433, %v4522, 0.0
    %v4525 = vsel %vm1433, %v4523, 0.0
    %v4526 = vsel %vm1434, %v4520, 0.0
    %v4527 = vsel %vm1434, %v4521, 0.0
    %v4528 = vsel %vm1435, %v4518, 0.0
    %v4529 = vsel %vm1435, %v4519, 0.0
    %v4530 = vsel %vm1436, %v4516, 0.0
    %v4531 = vsel %vm1436, %v4517, 0.0
    %s4532 = scalar_lea.vmem %s5, 2048
    %v4533 = vld [vmem:[%s4532] sm:$0xff]
    %v4534 = vld [vmem:[%s4532 + $0x8] sm:$0xff]
    %v4535 = vld [vmem:[%s4532 + $0x10] sm:$0xff]
    %v4536 = vld [vmem:[%s4532 + $0x18] sm:$0xff]
    %v4537 = vld [vmem:[%s4532 + $0x20] sm:$0xff]
    %v4538 = vld [vmem:[%s4532 + $0x28] sm:$0xff]
    %v4539 = vld [vmem:[%s4532 + $0x30] sm:$0xff]
    %v4540 = vld [vmem:[%s4532 + $0x38] sm:$0xff]
    %v4541 = vld [vmem:[%s4532 + $0x40] sm:$0xff]
    %v4542 = vld [vmem:[%s4532 + $0x48] sm:$0xff]
    %v4543 = vld [vmem:[%s4532 + $0x50] sm:$0xff]
    %v4544 = vld [vmem:[%s4532 + $0x58] sm:$0xff]
    %v4545 = vld [vmem:[%s4532 + $0x60] sm:$0xff]
    %v4546 = vld [vmem:[%s4532 + $0x68] sm:$0xff]
    %v4547 = vld [vmem:[%s4532 + $0x70] sm:$0xff]
    %v4548 = vld [vmem:[%s4532 + $0x78] sm:$0xff]
    %v4549 = vld [vmem:[%s4532 + $0x80] sm:$0xff]
    %v4550 = vld [vmem:[%s4532 + $0x88] sm:$0xff]
    %v4551 = vld [vmem:[%s4532 + $0x90] sm:$0xff]
    %v4552 = vld [vmem:[%s4532 + $0x98] sm:$0xff]
    %v4553 = vld [vmem:[%s4532 + $0xa0] sm:$0xff]
    %v4554 = vld [vmem:[%s4532 + $0xa8] sm:$0xff]
    %v4555 = vld [vmem:[%s4532 + $0xb0] sm:$0xff]
    %v4556 = vld [vmem:[%s4532 + $0xb8] sm:$0xff]
    %v4557 = vld [vmem:[%s4532 + $0xc0] sm:$0xff]
    %v4558 = vld [vmem:[%s4532 + $0xc8] sm:$0xff]
    %v4559 = vld [vmem:[%s4532 + $0xd0] sm:$0xff]
    %v4560 = vld [vmem:[%s4532 + $0xd8] sm:$0xff]
    %v4561 = vld [vmem:[%s4532 + $0xe0] sm:$0xff]
    %v4562 = vld [vmem:[%s4532 + $0xe8] sm:$0xff]
    %v4563 = vld [vmem:[%s4532 + $0xf0] sm:$0xff]
    %v4564 = vld [vmem:[%s4532 + $0xf8] sm:$0xff]
    %v4565 = vld [vmem:[%s4532 + $0x100] sm:$0xff]
    %v4566 = vld [vmem:[%s4532 + $0x108] sm:$0xff]
    %v4567 = vld [vmem:[%s4532 + $0x110] sm:$0xff]
    %v4568 = vld [vmem:[%s4532 + $0x118] sm:$0xff]
    %v4569 = vld [vmem:[%s4532 + $0x120] sm:$0xff]
    %v4570 = vld [vmem:[%s4532 + $0x128] sm:$0xff]
    %v4571 = vld [vmem:[%s4532 + $0x130] sm:$0xff]
    %v4572 = vld [vmem:[%s4532 + $0x138] sm:$0xff]
    %v4573 = vld [vmem:[%s4532 + $0x140] sm:$0xff]
    %v4574 = vld [vmem:[%s4532 + $0x148] sm:$0xff]
    %v4575 = vld [vmem:[%s4532 + $0x150] sm:$0xff]
    %v4576 = vld [vmem:[%s4532 + $0x158] sm:$0xff]
    %v4577 = vld [vmem:[%s4532 + $0x160] sm:$0xff]
    %v4578 = vld [vmem:[%s4532 + $0x168] sm:$0xff]
    %v4579 = vld [vmem:[%s4532 + $0x170] sm:$0xff]
    %v4580 = vld [vmem:[%s4532 + $0x178] sm:$0xff]
    %v4581 = vld [vmem:[%s4532 + $0x180] sm:$0xff]
    %v4582 = vld [vmem:[%s4532 + $0x188] sm:$0xff]
    %v4583 = vld [vmem:[%s4532 + $0x190] sm:$0xff]
    %v4584 = vld [vmem:[%s4532 + $0x198] sm:$0xff]
    %v4585 = vld [vmem:[%s4532 + $0x1a0] sm:$0xff]
    %v4586 = vld [vmem:[%s4532 + $0x1a8] sm:$0xff]
    %v4587 = vld [vmem:[%s4532 + $0x1b0] sm:$0xff]
    %v4588 = vld [vmem:[%s4532 + $0x1b8] sm:$0xff]
    %v4589 = vld [vmem:[%s4532 + $0x1c0] sm:$0xff]
    %v4590 = vld [vmem:[%s4532 + $0x1c8] sm:$0xff]
    %v4591 = vld [vmem:[%s4532 + $0x1d0] sm:$0xff]
    %v4592 = vld [vmem:[%s4532 + $0x1d8] sm:$0xff]
    %v4593 = vld [vmem:[%s4532 + $0x1e0] sm:$0xff]
    %v4594 = vld [vmem:[%s4532 + $0x1e8] sm:$0xff]
    %v4595 = vld [vmem:[%s4532 + $0x1f0] sm:$0xff]
    %v4596 = vld [vmem:[%s4532 + $0x1f8] sm:$0xff]
    %v4597 = vld [vmem:[%s4532 + $0x200] sm:$0xff]
    %v4598 = vld [vmem:[%s4532 + $0x208] sm:$0xff]
    %v4599 = vld [vmem:[%s4532 + $0x210] sm:$0xff]
    %v4600 = vld [vmem:[%s4532 + $0x218] sm:$0xff]
    %v4601 = vld [vmem:[%s4532 + $0x220] sm:$0xff]
    %v4602 = vld [vmem:[%s4532 + $0x228] sm:$0xff]
    %v4603 = vld [vmem:[%s4532 + $0x230] sm:$0xff]
    %v4604 = vld [vmem:[%s4532 + $0x238] sm:$0xff]
    %v4605 = vld [vmem:[%s4532 + $0x240] sm:$0xff]
    %v4606 = vld [vmem:[%s4532 + $0x248] sm:$0xff]
    %v4607 = vld [vmem:[%s4532 + $0x250] sm:$0xff]
    %v4608 = vld [vmem:[%s4532 + $0x258] sm:$0xff]
    %v4609 = vld [vmem:[%s4532 + $0x260] sm:$0xff]
    %v4610 = vld [vmem:[%s4532 + $0x268] sm:$0xff]
    %v4611 = vld [vmem:[%s4532 + $0x270] sm:$0xff]
    %v4612 = vld [vmem:[%s4532 + $0x278] sm:$0xff]
    %v4613 = vld [vmem:[%s4532 + $0x280] sm:$0xff]
    %v4614 = vld [vmem:[%s4532 + $0x288] sm:$0xff]
    %v4615 = vld [vmem:[%s4532 + $0x290] sm:$0xff]
    %v4616 = vld [vmem:[%s4532 + $0x298] sm:$0xff]
    %v4617 = vld [vmem:[%s4532 + $0x2a0] sm:$0xff]
    %v4618 = vld [vmem:[%s4532 + $0x2a8] sm:$0xff]
    %v4619 = vld [vmem:[%s4532 + $0x2b0] sm:$0xff]
    %v4620 = vld [vmem:[%s4532 + $0x2b8] sm:$0xff]
    %v4621 = vld [vmem:[%s4532 + $0x2c0] sm:$0xff]
    %v4622 = vld [vmem:[%s4532 + $0x2c8] sm:$0xff]
    %v4623 = vld [vmem:[%s4532 + $0x2d0] sm:$0xff]
    %v4624 = vld [vmem:[%s4532 + $0x2d8] sm:$0xff]
    %v4625 = vld [vmem:[%s4532 + $0x2e0] sm:$0xff]
    %v4626 = vld [vmem:[%s4532 + $0x2e8] sm:$0xff]
    %v4627 = vld [vmem:[%s4532 + $0x2f0] sm:$0xff]
    %v4628 = vld [vmem:[%s4532 + $0x2f8] sm:$0xff]
    %v4629 = vld [vmem:[%s4532 + $0x300] sm:$0xff]
    %v4630 = vld [vmem:[%s4532 + $0x308] sm:$0xff]
    %v4631 = vld [vmem:[%s4532 + $0x310] sm:$0xff]
    %v4632 = vld [vmem:[%s4532 + $0x318] sm:$0xff]
    %v4633 = vld [vmem:[%s4532 + $0x320] sm:$0xff]
    %v4634 = vld [vmem:[%s4532 + $0x328] sm:$0xff]
    %v4635 = vld [vmem:[%s4532 + $0x330] sm:$0xff]
    %v4636 = vld [vmem:[%s4532 + $0x338] sm:$0xff]
    %v4637 = vld [vmem:[%s4532 + $0x340] sm:$0xff]
    %v4638 = vld [vmem:[%s4532 + $0x348] sm:$0xff]
    %v4639 = vld [vmem:[%s4532 + $0x350] sm:$0xff]
    %v4640 = vld [vmem:[%s4532 + $0x358] sm:$0xff]
    %v4641 = vld [vmem:[%s4532 + $0x360] sm:$0xff]
    %v4642 = vld [vmem:[%s4532 + $0x368] sm:$0xff]
    %v4643 = vld [vmem:[%s4532 + $0x370] sm:$0xff]
    %v4644 = vld [vmem:[%s4532 + $0x378] sm:$0xff]
    %v4645 = vld [vmem:[%s4532 + $0x380] sm:$0xff]
    %v4646 = vld [vmem:[%s4532 + $0x388] sm:$0xff]
    %v4647 = vld [vmem:[%s4532 + $0x390] sm:$0xff]
    %v4648 = vld [vmem:[%s4532 + $0x398] sm:$0xff]
    %v4649 = vld [vmem:[%s4532 + $0x3a0] sm:$0xff]
    %v4650 = vld [vmem:[%s4532 + $0x3a8] sm:$0xff]
    %v4651 = vld [vmem:[%s4532 + $0x3b0] sm:$0xff]
    %v4652 = vld [vmem:[%s4532 + $0x3b8] sm:$0xff]
    %v4653 = vld [vmem:[%s4532 + $0x3c0] sm:$0xff]
    %v4654 = vld [vmem:[%s4532 + $0x3c8] sm:$0xff]
    %v4655 = vld [vmem:[%s4532 + $0x3d0] sm:$0xff]
    %v4656 = vld [vmem:[%s4532 + $0x3d8] sm:$0xff]
    %v4657 = vld [vmem:[%s4532 + $0x3e0] sm:$0xff]
    %v4658 = vld [vmem:[%s4532 + $0x3e8] sm:$0xff]
    %v4659 = vld [vmem:[%s4532 + $0x3f0] sm:$0xff]
    %v4660 = vld [vmem:[%s4532 + $0x3f8] sm:$0xff]
    %4661 = vmatprep.subr.mxu0 %v4534
    %4662 = vmatpush1.msra.mxu0 %v4533
    %4663 = vmatprep.subr.mxu0 %v4538
    %4664 = vmatpush1.msra.mxu0 %v4537
    %4665 = vmatprep.subr.mxu0 %v4542
    %4666 = vmatpush1.msra.mxu0 %v4541
    %4667 = vmatprep.subr.mxu0 %v4546
    %4668 = vmatpush1.msra.mxu0 %v4545
    %4669 = vmatprep.subr.mxu0 %v4550
    %4670 = vmatpush1.msra.mxu0 %v4549
    %4671 = vmatprep.subr.mxu0 %v4554
    %4672 = vmatpush1.msra.mxu0 %v4553
    %4673 = vmatprep.subr.mxu0 %v4558
    %4674 = vmatpush1.msra.mxu0 %v4557
    %4675 = vmatprep.subr.mxu0 %v4562
    %4676 = vmatpush1.msra.mxu0 %v4561
    %4677 = vmatprep.subr.mxu0 %v4566
    %4678 = vmatpush1.msra.mxu0 %v4565
    %4679 = vmatprep.subr.mxu0 %v4570
    %4680 = vmatpush1.msra.mxu0 %v4569
    %4681 = vmatprep.subr.mxu0 %v4574
    %4682 = vmatpush1.msra.mxu0 %v4573
    %4683 = vmatprep.subr.mxu0 %v4578
    %4684 = vmatpush1.msra.mxu0 %v4577
    %4685 = vmatprep.subr.mxu0 %v4582
    %4686 = vmatpush1.msra.mxu0 %v4581
    %4687 = vmatprep.subr.mxu0 %v4586
    %4688 = vmatpush1.msra.mxu0 %v4585
    %4689 = vmatprep.subr.mxu0 %v4590
    %4690 = vmatpush1.msra.mxu0 %v4589
    %4691 = vmatprep.subr.mxu0 %v4594
    %4692 = vmatpush1.msra.mxu0 %v4593
    %4693 = vmatprep.subr.mxu0 %v4598
    %4694 = vmatpush1.msra.mxu0 %v4597
    %4695 = vmatprep.subr.mxu0 %v4602
    %4696 = vmatpush1.msra.mxu0 %v4601
    %4697 = vmatprep.subr.mxu0 %v4606
    %4698 = vmatpush1.msra.mxu0 %v4605
    %4699 = vmatprep.subr.mxu0 %v4610
    %4700 = vmatpush1.msra.mxu0 %v4609
    %4701 = vmatprep.subr.mxu0 %v4614
    %4702 = vmatpush1.msra.mxu0 %v4613
    %4703 = vmatprep.subr.mxu0 %v4618
    %4704 = vmatpush1.msra.mxu0 %v4617
    %4705 = vmatprep.subr.mxu0 %v4622
    %4706 = vmatpush1.msra.mxu0 %v4621
    %4707 = vmatprep.subr.mxu0 %v4626
    %4708 = vmatpush1.msra.mxu0 %v4625
    %4709 = vmatprep.subr.mxu0 %v4630
    %4710 = vmatpush1.msra.mxu0 %v4629
    %4711 = vmatprep.subr.mxu0 %v4634
    %4712 = vmatpush1.msra.mxu0 %v4633
    %4713 = vmatprep.subr.mxu0 %v4638
    %4714 = vmatpush1.msra.mxu0 %v4637
    %4715 = vmatprep.subr.mxu0 %v4642
    %4716 = vmatpush1.msra.mxu0 %v4641
    %4717 = vmatprep.subr.mxu0 %v4646
    %4718 = vmatpush1.msra.mxu0 %v4645
    %4719 = vmatprep.subr.mxu0 %v4650
    %4720 = vmatpush1.msra.mxu0 %v4649
    %4721 = vmatprep.subr.mxu0 %v4654
    %4722 = vmatpush1.msra.mxu0 %v4653
    %4723 = vmatprep.subr.mxu0 %v4658
    %4724 = vmatpush1.msra.mxu0 %v4657
    %4725 = vmatprep.mubr.f32.mxu0 %v4525
    %4726 = vmatmul.mubr.f32.gmra.mrb[0].mxu0 %v4524
    %v4727 = vpop.f32.mrb[0].mxu0
    %v4728 = vadd.f32 0.0, %v4727
    %v4729 = vpop.f32.mrb[0].mxu0
    %v4730 = vadd.f32 0.0, %v4729
    %4731 = vmatprep.mubr.f32.mxu0 %v4527
    %4732 = vmatmul.mubr.f32.gmra.mrb[0].mxu0 %v4526
    %v4733 = vpop.f32.mrb[0].mxu0
    %v4734 = vadd.f32 0.0, %v4733
    %v4735 = vpop.f32.mrb[0].mxu0
    %v4736 = vadd.f32 0.0, %v4735
    %4737 = vmatprep.mubr.f32.mxu0 %v4529
    %4738 = vmatmul.mubr.f32.gmra.mrb[0].mxu0 %v4528
    %v4739 = vpop.f32.mrb[0].mxu0
    %v4740 = vadd.f32 0.0, %v4739
    %v4741 = vpop.f32.mrb[0].mxu0
    %v4742 = vadd.f32 0.0, %v4741
    %4743 = vmatprep.mubr.f32.mxu0 %v4531
    %4744 = vmatmul.mubr.f32.gmra.mrb[0].mxu0 %v4530
    %v4745 = vpop.f32.mrb[0].mxu0
    %v4746 = vadd.f32 0.0, %v4745
    %v4747 = vpop.f32.mrb[0].mxu0
    %v4748 = vadd.f32 0.0, %v4747
    %4749 = vdwg.mxu0
    %4750 = vmatprep.subr.mxu0 %v4536
    %4751 = vmatpush1.msra.mxu0 %v4535
    %4752 = vmatprep.subr.mxu0 %v4540
    %4753 = vmatpush1.msra.mxu0 %v4539
    %4754 = vmatprep.subr.mxu0 %v4544
    %4755 = vmatpush1.msra.mxu0 %v4543
    %4756 = vmatprep.subr.mxu0 %v4548
    %4757 = vmatpush1.msra.mxu0 %v4547
    %4758 = vmatprep.subr.mxu0 %v4552
    %4759 = vmatpush1.msra.mxu0 %v4551
    %4760 = vmatprep.subr.mxu0 %v4556
    %4761 = vmatpush1.msra.mxu0 %v4555
    %4762 = vmatprep.subr.mxu0 %v4560
    %4763 = vmatpush1.msra.mxu0 %v4559
    %4764 = vmatprep.subr.mxu0 %v4564
    %4765 = vmatpush1.msra.mxu0 %v4563
    %4766 = vmatprep.subr.mxu0 %v4568
    %4767 = vmatpush1.msra.mxu0 %v4567
    %4768 = vmatprep.subr.mxu0 %v4572
    %4769 = vmatpush1.msra.mxu0 %v4571
    %4770 = vmatprep.subr.mxu0 %v4576
    %4771 = vmatpush1.msra.mxu0 %v4575
    %4772 = vmatprep.subr.mxu0 %v4580
    %4773 = vmatpush1.msra.mxu0 %v4579
    %4774 = vmatprep.subr.mxu0 %v4584
    %4775 = vmatpush1.msra.mxu0 %v4583
    %4776 = vmatprep.subr.mxu0 %v4588
    %4777 = vmatpush1.msra.mxu0 %v4587
    %4778 = vmatprep.subr.mxu0 %v4592
    %4779 = vmatpush1.msra.mxu0 %v4591
    %4780 = vmatprep.subr.mxu0 %v4596
    %4781 = vmatpush1.msra.mxu0 %v4595
    %4782 = vmatprep.subr.mxu0 %v4600
    %4783 = vmatpush1.msra.mxu0 %v4599
    %4784 = vmatprep.subr.mxu0 %v4604
    %4785 = vmatpush1.msra.mxu0 %v4603
    %4786 = vmatprep.subr.mxu0 %v4608
    %4787 = vmatpush1.msra.mxu0 %v4607
    %4788 = vmatprep.subr.mxu0 %v4612
    %4789 = vmatpush1.msra.mxu0 %v4611
    %4790 = vmatprep.subr.mxu0 %v4616
    %4791 = vmatpush1.msra.mxu0 %v4615
    %4792 = vmatprep.subr.mxu0 %v4620
    %4793 = vmatpush1.msra.mxu0 %v4619
    %4794 = vmatprep.subr.mxu0 %v4624
    %4795 = vmatpush1.msra.mxu0 %v4623
    %4796 = vmatprep.subr.mxu0 %v4628
    %4797 = vmatpush1.msra.mxu0 %v4627
    %4798 = vmatprep.subr.mxu0 %v4632
    %4799 = vmatpush1.msra.mxu0 %v4631
    %4800 = vmatprep.subr.mxu0 %v4636
    %4801 = vmatpush1.msra.mxu0 %v4635
    %4802 = vmatprep.subr.mxu0 %v4640
    %4803 = vmatpush1.msra.mxu0 %v4639
    %4804 = vmatprep.subr.mxu0 %v4644
    %4805 = vmatpush1.msra.mxu0 %v4643
    %4806 = vmatprep.subr.mxu0 %v4648
    %4807 = vmatpush1.msra.mxu0 %v4647
    %4808 = vmatprep.subr.mxu0 %v4652
    %4809 = vmatpush1.msra.mxu0 %v4651
    %4810 = vmatprep.subr.mxu0 %v4656
    %4811 = vmatpush1.msra.mxu0 %v4655
    %4812 = vmatprep.subr.mxu0 %v4660
    %4813 = vmatpush1.msra.mxu0 %v4659
    %4814 = vmatprep.mubr.f32.mxu0 %v4525
    %4815 = vmatmul.mubr.f32.gmra.mrb[0].mxu0 %v4524
    %v4816 = vpop.f32.mrb[0].mxu0
    %v4817 = vadd.f32 0.0, %v4816
    %v4818 = vpop.f32.mrb[0].mxu0
    %v4819 = vadd.f32 0.0, %v4818
    %4820 = vmatprep.mubr.f32.mxu0 %v4527
    %4821 = vmatmul.mubr.f32.gmra.mrb[0].mxu0 %v4526
    %v4822 = vpop.f32.mrb[0].mxu0
    %v4823 = vadd.f32 0.0, %v4822
    %v4824 = vpop.f32.mrb[0].mxu0
    %v4825 = vadd.f32 0.0, %v4824
    %4826 = vmatprep.mubr.f32.mxu0 %v4529
    %4827 = vmatmul.mubr.f32.gmra.mrb[0].mxu0 %v4528
    %v4828 = vpop.f32.mrb[0].mxu0
    %v4829 = vadd.f32 0.0, %v4828
    %v4830 = vpop.f32.mrb[0].mxu0
    %v4831 = vadd.f32 0.0, %v4830
    %4832 = vmatprep.mubr.f32.mxu0 %v4531
    %4833 = vmatmul.mubr.f32.gmra.mrb[0].mxu0 %v4530
    %v4834 = vpop.f32.mrb[0].mxu0
    %v4835 = vadd.f32 0.0, %v4834
    %v4836 = vpop.f32.mrb[0].mxu0
    %v4837 = vadd.f32 0.0, %v4836
    %4838 = vdwg.mxu0
    %v4839 = vadd.f32 %v4397, %v4728
    %v4840 = vadd.f32 %v4399, %v4730
    %v4841 = vadd.f32 %v4486, %v4817
    %v4842 = vadd.f32 %v4488, %v4819
    %v4843 = vadd.f32 %v4403, %v4734
    %v4844 = vadd.f32 %v4405, %v4736
    %v4845 = vadd.f32 %v4492, %v4823
    %v4846 = vadd.f32 %v4494, %v4825
    %v4847 = vadd.f32 %v4409, %v4740
    %v4848 = vadd.f32 %v4411, %v4742
    %v4849 = vadd.f32 %v4498, %v4829
    %v4850 = vadd.f32 %v4500, %v4831
    %v4851 = vadd.f32 %v4415, %v4746
    %v4852 = vadd.f32 %v4417, %v4748
    %v4853 = vadd.f32 %v4504, %v4835
    %v4854 = vadd.f32 %v4506, %v4837
    %s4855 = scalar_lea.vmem %s5, 3072
    %v4856 = vld [vmem:[%s4855] sm:$0xff]
    %v4857 = vld [vmem:[%s4855 + $0x8] sm:$0xff]
    %v4858 = vld [vmem:[%s4855 + $0x10] sm:$0xff]
    %v4859 = vld [vmem:[%s4855 + $0x18] sm:$0xff]
    %v4860 = vld [vmem:[%s4855 + $0x20] sm:$0xff]
    %v4861 = vld [vmem:[%s4855 + $0x28] sm:$0xff]
    %v4862 = vld [vmem:[%s4855 + $0x30] sm:$0xff]
    %v4863 = vld [vmem:[%s4855 + $0x38] sm:$0xff]
    %v4864 = vld [vmem:[%s4855 + $0x40] sm:$0xff]
    %v4865 = vld [vmem:[%s4855 + $0x48] sm:$0xff]
    %v4866 = vld [vmem:[%s4855 + $0x50] sm:$0xff]
    %v4867 = vld [vmem:[%s4855 + $0x58] sm:$0xff]
    %v4868 = vld [vmem:[%s4855 + $0x60] sm:$0xff]
    %v4869 = vld [vmem:[%s4855 + $0x68] sm:$0xff]
    %v4870 = vld [vmem:[%s4855 + $0x70] sm:$0xff]
    %v4871 = vld [vmem:[%s4855 + $0x78] sm:$0xff]
    %v4872 = vld [vmem:[%s4855 + $0x80] sm:$0xff]
    %v4873 = vld [vmem:[%s4855 + $0x88] sm:$0xff]
    %v4874 = vld [vmem:[%s4855 + $0x90] sm:$0xff]
    %v4875 = vld [vmem:[%s4855 + $0x98] sm:$0xff]
    %v4876 = vld [vmem:[%s4855 + $0xa0] sm:$0xff]
    %v4877 = vld [vmem:[%s4855 + $0xa8] sm:$0xff]
    %v4878 = vld [vmem:[%s4855 + $0xb0] sm:$0xff]
    %v4879 = vld [vmem:[%s4855 + $0xb8] sm:$0xff]
    %v4880 = vld [vmem:[%s4855 + $0xc0] sm:$0xff]
    %v4881 = vld [vmem:[%s4855 + $0xc8] sm:$0xff]
    %v4882 = vld [vmem:[%s4855 + $0xd0] sm:$0xff]
    %v4883 = vld [vmem:[%s4855 + $0xd8] sm:$0xff]
    %v4884 = vld [vmem:[%s4855 + $0xe0] sm:$0xff]
    %v4885 = vld [vmem:[%s4855 + $0xe8] sm:$0xff]
    %v4886 = vld [vmem:[%s4855 + $0xf0] sm:$0xff]
    %v4887 = vld [vmem:[%s4855 + $0xf8] sm:$0xff]
    %v4888 = vld [vmem:[%s4855 + $0x100] sm:$0xff]
    %v4889 = vld [vmem:[%s4855 + $0x108] sm:$0xff]
    %v4890 = vld [vmem:[%s4855 + $0x110] sm:$0xff]
    %v4891 = vld [vmem:[%s4855 + $0x118] sm:$0xff]
    %v4892 = vld [vmem:[%s4855 + $0x120] sm:$0xff]
    %v4893 = vld [vmem:[%s4855 + $0x128] sm:$0xff]
    %v4894 = vld [vmem:[%s4855 + $0x130] sm:$0xff]
    %v4895 = vld [vmem:[%s4855 + $0x138] sm:$0xff]
    %v4896 = vld [vmem:[%s4855 + $0x140] sm:$0xff]
    %v4897 = vld [vmem:[%s4855 + $0x148] sm:$0xff]
    %v4898 = vld [vmem:[%s4855 + $0x150] sm:$0xff]
    %v4899 = vld [vmem:[%s4855 + $0x158] sm:$0xff]
    %v4900 = vld [vmem:[%s4855 + $0x160] sm:$0xff]
    %v4901 = vld [vmem:[%s4855 + $0x168] sm:$0xff]
    %v4902 = vld [vmem:[%s4855 + $0x170] sm:$0xff]
    %v4903 = vld [vmem:[%s4855 + $0x178] sm:$0xff]
    %v4904 = vld [vmem:[%s4855 + $0x180] sm:$0xff]
    %v4905 = vld [vmem:[%s4855 + $0x188] sm:$0xff]
    %v4906 = vld [vmem:[%s4855 + $0x190] sm:$0xff]
    %v4907 = vld [vmem:[%s4855 + $0x198] sm:$0xff]
    %v4908 = vld [vmem:[%s4855 + $0x1a0] sm:$0xff]
    %v4909 = vld [vmem:[%s4855 + $0x1a8] sm:$0xff]
    %v4910 = vld [vmem:[%s4855 + $0x1b0] sm:$0xff]
    %v4911 = vld [vmem:[%s4855 + $0x1b8] sm:$0xff]
    %v4912 = vld [vmem:[%s4855 + $0x1c0] sm:$0xff]
    %v4913 = vld [vmem:[%s4855 + $0x1c8] sm:$0xff]
    %v4914 = vld [vmem:[%s4855 + $0x1d0] sm:$0xff]
    %v4915 = vld [vmem:[%s4855 + $0x1d8] sm:$0xff]
    %v4916 = vld [vmem:[%s4855 + $0x1e0] sm:$0xff]
    %v4917 = vld [vmem:[%s4855 + $0x1e8] sm:$0xff]
    %v4918 = vld [vmem:[%s4855 + $0x1f0] sm:$0xff]
    %v4919 = vld [vmem:[%s4855 + $0x1f8] sm:$0xff]
    %v4920 = vld [vmem:[%s4855 + $0x200] sm:$0xff]
    %v4921 = vld [vmem:[%s4855 + $0x208] sm:$0xff]
    %v4922 = vld [vmem:[%s4855 + $0x210] sm:$0xff]
    %v4923 = vld [vmem:[%s4855 + $0x218] sm:$0xff]
    %v4924 = vld [vmem:[%s4855 + $0x220] sm:$0xff]
    %v4925 = vld [vmem:[%s4855 + $0x228] sm:$0xff]
    %v4926 = vld [vmem:[%s4855 + $0x230] sm:$0xff]
    %v4927 = vld [vmem:[%s4855 + $0x238] sm:$0xff]
    %v4928 = vld [vmem:[%s4855 + $0x240] sm:$0xff]
    %v4929 = vld [vmem:[%s4855 + $0x248] sm:$0xff]
    %v4930 = vld [vmem:[%s4855 + $0x250] sm:$0xff]
    %v4931 = vld [vmem:[%s4855 + $0x258] sm:$0xff]
    %v4932 = vld [vmem:[%s4855 + $0x260] sm:$0xff]
    %v4933 = vld [vmem:[%s4855 + $0x268] sm:$0xff]
    %v4934 = vld [vmem:[%s4855 + $0x270] sm:$0xff]
    %v4935 = vld [vmem:[%s4855 + $0x278] sm:$0xff]
    %v4936 = vld [vmem:[%s4855 + $0x280] sm:$0xff]
    %v4937 = vld [vmem:[%s4855 + $0x288] sm:$0xff]
    %v4938 = vld [vmem:[%s4855 + $0x290] sm:$0xff]
    %v4939 = vld [vmem:[%s4855 + $0x298] sm:$0xff]
    %v4940 = vld [vmem:[%s4855 + $0x2a0] sm:$0xff]
    %v4941 = vld [vmem:[%s4855 + $0x2a8] sm:$0xff]
    %v4942 = vld [vmem:[%s4855 + $0x2b0] sm:$0xff]
    %v4943 = vld [vmem:[%s4855 + $0x2b8] sm:$0xff]
    %v4944 = vld [vmem:[%s4855 + $0x2c0] sm:$0xff]
    %v4945 = vld [vmem:[%s4855 + $0x2c8] sm:$0xff]
    %v4946 = vld [vmem:[%s4855 + $0x2d0] sm:$0xff]
    %v4947 = vld [vmem:[%s4855 + $0x2d8] sm:$0xff]
    %v4948 = vld [vmem:[%s4855 + $0x2e0] sm:$0xff]
    %v4949 = vld [vmem:[%s4855 + $0x2e8] sm:$0xff]
    %v4950 = vld [vmem:[%s4855 + $0x2f0] sm:$0xff]
    %v4951 = vld [vmem:[%s4855 + $0x2f8] sm:$0xff]
    %v4952 = vld [vmem:[%s4855 + $0x300] sm:$0xff]
    %v4953 = vld [vmem:[%s4855 + $0x308] sm:$0xff]
    %v4954 = vld [vmem:[%s4855 + $0x310] sm:$0xff]
    %v4955 = vld [vmem:[%s4855 + $0x318] sm:$0xff]
    %v4956 = vld [vmem:[%s4855 + $0x320] sm:$0xff]
    %v4957 = vld [vmem:[%s4855 + $0x328] sm:$0xff]
    %v4958 = vld [vmem:[%s4855 + $0x330] sm:$0xff]
    %v4959 = vld [vmem:[%s4855 + $0x338] sm:$0xff]
    %v4960 = vld [vmem:[%s4855 + $0x340] sm:$0xff]
    %v4961 = vld [vmem:[%s4855 + $0x348] sm:$0xff]
    %v4962 = vld [vmem:[%s4855 + $0x350] sm:$0xff]
    %v4963 = vld [vmem:[%s4855 + $0x358] sm:$0xff]
    %v4964 = vld [vmem:[%s4855 + $0x360] sm:$0xff]
    %v4965 = vld [vmem:[%s4855 + $0x368] sm:$0xff]
    %v4966 = vld [vmem:[%s4855 + $0x370] sm:$0xff]
    %v4967 = vld [vmem:[%s4855 + $0x378] sm:$0xff]
    %v4968 = vld [vmem:[%s4855 + $0x380] sm:$0xff]
    %v4969 = vld [vmem:[%s4855 + $0x388] sm:$0xff]
    %v4970 = vld [vmem:[%s4855 + $0x390] sm:$0xff]
    %v4971 = vld [vmem:[%s4855 + $0x398] sm:$0xff]
    %v4972 = vld [vmem:[%s4855 + $0x3a0] sm:$0xff]
    %v4973 = vld [vmem:[%s4855 + $0x3a8] sm:$0xff]
    %v4974 = vld [vmem:[%s4855 + $0x3b0] sm:$0xff]
    %v4975 = vld [vmem:[%s4855 + $0x3b8] sm:$0xff]
    %v4976 = vld [vmem:[%s4855 + $0x3c0] sm:$0xff]
    %v4977 = vld [vmem:[%s4855 + $0x3c8] sm:$0xff]
    %v4978 = vld [vmem:[%s4855 + $0x3d0] sm:$0xff]
    %v4979 = vld [vmem:[%s4855 + $0x3d8] sm:$0xff]
    %v4980 = vld [vmem:[%s4855 + $0x3e0] sm:$0xff]
    %v4981 = vld [vmem:[%s4855 + $0x3e8] sm:$0xff]
    %v4982 = vld [vmem:[%s4855 + $0x3f0] sm:$0xff]
    %v4983 = vld [vmem:[%s4855 + $0x3f8] sm:$0xff]
    %4984 = vmatprep.subr.mxu0 %v4857
    %4985 = vmatpush1.msra.mxu0 %v4856
    %4986 = vmatprep.subr.mxu0 %v4861
    %4987 = vmatpush1.msra.mxu0 %v4860
    %4988 = vmatprep.subr.mxu0 %v4865
    %4989 = vmatpush1.msra.mxu0 %v4864
    %4990 = vmatprep.subr.mxu0 %v4869
    %4991 = vmatpush1.msra.mxu0 %v4868
    %4992 = vmatprep.subr.mxu0 %v4873
    %4993 = vmatpush1.msra.mxu0 %v4872
    %4994 = vmatprep.subr.mxu0 %v4877
    %4995 = vmatpush1.msra.mxu0 %v4876
    %4996 = vmatprep.subr.mxu0 %v4881
    %4997 = vmatpush1.msra.mxu0 %v4880
    %4998 = vmatprep.subr.mxu0 %v4885
    %4999 = vmatpush1.msra.mxu0 %v4884
    %5000 = vmatprep.subr.mxu0 %v4889
    %5001 = vmatpush1.msra.mxu0 %v4888
    %5002 = vmatprep.subr.mxu0 %v4893
    %5003 = vmatpush1.msra.mxu0 %v4892
    %5004 = vmatprep.subr.mxu0 %v4897
    %5005 = vmatpush1.msra.mxu0 %v4896
    %5006 = vmatprep.subr.mxu0 %v4901
    %5007 = vmatpush1.msra.mxu0 %v4900
    %5008 = vmatprep.subr.mxu0 %v4905
    %5009 = vmatpush1.msra.mxu0 %v4904
    %5010 = vmatprep.subr.mxu0 %v4909
    %5011 = vmatpush1.msra.mxu0 %v4908
    %5012 = vmatprep.subr.mxu0 %v4913
    %5013 = vmatpush1.msra.mxu0 %v4912
    %5014 = vmatprep.subr.mxu0 %v4917
    %5015 = vmatpush1.msra.mxu0 %v4916
    %5016 = vmatprep.subr.mxu0 %v4921
    %5017 = vmatpush1.msra.mxu0 %v4920
    %5018 = vmatprep.subr.mxu0 %v4925
    %5019 = vmatpush1.msra.mxu0 %v4924
    %5020 = vmatprep.subr.mxu0 %v4929
    %5021 = vmatpush1.msra.mxu0 %v4928
    %5022 = vmatprep.subr.mxu0 %v4933
    %5023 = vmatpush1.msra.mxu0 %v4932
    %5024 = vmatprep.subr.mxu0 %v4937
    %5025 = vmatpush1.msra.mxu0 %v4936
    %5026 = vmatprep.subr.mxu0 %v4941
    %5027 = vmatpush1.msra.mxu0 %v4940
    %5028 = vmatprep.subr.mxu0 %v4945
    %5029 = vmatpush1.msra.mxu0 %v4944
    %5030 = vmatprep.subr.mxu0 %v4949
    %5031 = vmatpush1.msra.mxu0 %v4948
    %5032 = vmatprep.subr.mxu0 %v4953
    %5033 = vmatpush1.msra.mxu0 %v4952
    %5034 = vmatprep.subr.mxu0 %v4957
    %5035 = vmatpush1.msra.mxu0 %v4956
    %5036 = vmatprep.subr.mxu0 %v4961
    %5037 = vmatpush1.msra.mxu0 %v4960
    %5038 = vmatprep.subr.mxu0 %v4965
    %5039 = vmatpush1.msra.mxu0 %v4964
    %5040 = vmatprep.subr.mxu0 %v4969
    %5041 = vmatpush1.msra.mxu0 %v4968
    %5042 = vmatprep.subr.mxu0 %v4973
    %5043 = vmatpush1.msra.mxu0 %v4972
    %5044 = vmatprep.subr.mxu0 %v4977
    %5045 = vmatpush1.msra.mxu0 %v4976
    %5046 = vmatprep.subr.mxu0 %v4981
    %5047 = vmatpush1.msra.mxu0 %v4980
    %5048 = vmatprep.mubr.f32.mxu0 %v3840
    %5049 = vmatmul.mubr.f32.gmra.mrb[0].mxu0 %v3839
    %v5050 = vpop.f32.mrb[0].mxu0
    %v5051 = vadd.f32 0.0, %v5050
    %v5052 = vpop.f32.mrb[0].mxu0
    %v5053 = vadd.f32 0.0, %v5052
    %5054 = vmatprep.mubr.f32.mxu0 %v3842
    %5055 = vmatmul.mubr.f32.gmra.mrb[0].mxu0 %v3841
    %v5056 = vpop.f32.mrb[0].mxu0
    %v5057 = vadd.f32 0.0, %v5056
    %v5058 = vpop.f32.mrb[0].mxu0
    %v5059 = vadd.f32 0.0, %v5058
    %5060 = vmatprep.mubr.f32.mxu0 %v3844
    %5061 = vmatmul.mubr.f32.gmra.mrb[0].mxu0 %v3843
    %v5062 = vpop.f32.mrb[0].mxu0
    %v5063 = vadd.f32 0.0, %v5062
    %v5064 = vpop.f32.mrb[0].mxu0
    %v5065 = vadd.f32 0.0, %v5064
    %5066 = vmatprep.mubr.f32.mxu0 %v3846
    %5067 = vmatmul.mubr.f32.gmra.mrb[0].mxu0 %v3845
    %v5068 = vpop.f32.mrb[0].mxu0
    %v5069 = vadd.f32 0.0, %v5068
    %v5070 = vpop.f32.mrb[0].mxu0
    %v5071 = vadd.f32 0.0, %v5070
    %5072 = vdwg.mxu0
    %5073 = vmatprep.subr.mxu0 %v4859
    %5074 = vmatpush1.msra.mxu0 %v4858
    %5075 = vmatprep.subr.mxu0 %v4863
    %5076 = vmatpush1.msra.mxu0 %v4862
    %5077 = vmatprep.subr.mxu0 %v4867
    %5078 = vmatpush1.msra.mxu0 %v4866
    %5079 = vmatprep.subr.mxu0 %v4871
    %5080 = vmatpush1.msra.mxu0 %v4870
    %5081 = vmatprep.subr.mxu0 %v4875
    %5082 = vmatpush1.msra.mxu0 %v4874
    %5083 = vmatprep.subr.mxu0 %v4879
    %5084 = vmatpush1.msra.mxu0 %v4878
    %5085 = vmatprep.subr.mxu0 %v4883
    %5086 = vmatpush1.msra.mxu0 %v4882
    %5087 = vmatprep.subr.mxu0 %v4887
    %5088 = vmatpush1.msra.mxu0 %v4886
    %5089 = vmatprep.subr.mxu0 %v4891
    %5090 = vmatpush1.msra.mxu0 %v4890
    %5091 = vmatprep.subr.mxu0 %v4895
    %5092 = vmatpush1.msra.mxu0 %v4894
    %5093 = vmatprep.subr.mxu0 %v4899
    %5094 = vmatpush1.msra.mxu0 %v4898
    %5095 = vmatprep.subr.mxu0 %v4903
    %5096 = vmatpush1.msra.mxu0 %v4902
    %5097 = vmatprep.subr.mxu0 %v4907
    %5098 = vmatpush1.msra.mxu0 %v4906
    %5099 = vmatprep.subr.mxu0 %v4911
    %5100 = vmatpush1.msra.mxu0 %v4910
    %5101 = vmatprep.subr.mxu0 %v4915
    %5102 = vmatpush1.msra.mxu0 %v4914
    %5103 = vmatprep.subr.mxu0 %v4919
    %5104 = vmatpush1.msra.mxu0 %v4918
    %5105 = vmatprep.subr.mxu0 %v4923
    %5106 = vmatpush1.msra.mxu0 %v4922
    %5107 = vmatprep.subr.mxu0 %v4927
    %5108 = vmatpush1.msra.mxu0 %v4926
    %5109 = vmatprep.subr.mxu0 %v4931
    %5110 = vmatpush1.msra.mxu0 %v4930
    %5111 = vmatprep.subr.mxu0 %v4935
    %5112 = vmatpush1.msra.mxu0 %v4934
    %5113 = vmatprep.subr.mxu0 %v4939
    %5114 = vmatpush1.msra.mxu0 %v4938
    %5115 = vmatprep.subr.mxu0 %v4943
    %5116 = vmatpush1.msra.mxu0 %v4942
    %5117 = vmatprep.subr.mxu0 %v4947
    %5118 = vmatpush1.msra.mxu0 %v4946
    %5119 = vmatprep.subr.mxu0 %v4951
    %5120 = vmatpush1.msra.mxu0 %v4950
    %5121 = vmatprep.subr.mxu0 %v4955
    %5122 = vmatpush1.msra.mxu0 %v4954
    %5123 = vmatprep.subr.mxu0 %v4959
    %5124 = vmatpush1.msra.mxu0 %v4958
    %5125 = vmatprep.subr.mxu0 %v4963
    %5126 = vmatpush1.msra.mxu0 %v4962
    %5127 = vmatprep.subr.mxu0 %v4967
    %5128 = vmatpush1.msra.mxu0 %v4966
    %5129 = vmatprep.subr.mxu0 %v4971
    %5130 = vmatpush1.msra.mxu0 %v4970
    %5131 = vmatprep.subr.mxu0 %v4975
    %5132 = vmatpush1.msra.mxu0 %v4974
    %5133 = vmatprep.subr.mxu0 %v4979
    %5134 = vmatpush1.msra.mxu0 %v4978
    %5135 = vmatprep.subr.mxu0 %v4983
    %5136 = vmatpush1.msra.mxu0 %v4982
    %5137 = vmatprep.mubr.f32.mxu0 %v3840
    %5138 = vmatmul.mubr.f32.gmra.mrb[0].mxu0 %v3839
    %v5139 = vpop.f32.mrb[0].mxu0
    %v5140 = vadd.f32 0.0, %v5139
    %v5141 = vpop.f32.mrb[0].mxu0
    %v5142 = vadd.f32 0.0, %v5141
    %5143 = vmatprep.mubr.f32.mxu0 %v3842
    %5144 = vmatmul.mubr.f32.gmra.mrb[0].mxu0 %v3841
    %v5145 = vpop.f32.mrb[0].mxu0
    %v5146 = vadd.f32 0.0, %v5145
    %v5147 = vpop.f32.mrb[0].mxu0
    %v5148 = vadd.f32 0.0, %v5147
    %5149 = vmatprep.mubr.f32.mxu0 %v3844
    %5150 = vmatmul.mubr.f32.gmra.mrb[0].mxu0 %v3843
    %v5151 = vpop.f32.mrb[0].mxu0
    %v5152 = vadd.f32 0.0, %v5151
    %v5153 = vpop.f32.mrb[0].mxu0
    %v5154 = vadd.f32 0.0, %v5153
    %5155 = vmatprep.mubr.f32.mxu0 %v3846
    %5156 = vmatmul.mubr.f32.gmra.mrb[0].mxu0 %v3845
    %v5157 = vpop.f32.mrb[0].mxu0
    %v5158 = vadd.f32 0.0, %v5157
    %v5159 = vpop.f32.mrb[0].mxu0
    %v5160 = vadd.f32 0.0, %v5159
    %5161 = vdwg.mxu0
    %v5162 = vadd.f32 %v4839, %v5051
    %v5163 = vadd.f32 %v4840, %v5053
    %v5164 = vadd.f32 %v4841, %v5140
    %v5165 = vadd.f32 %v4842, %v5142
    %v5166 = vadd.f32 %v4843, %v5057
    %v5167 = vadd.f32 %v4844, %v5059
    %v5168 = vadd.f32 %v4845, %v5146
    %v5169 = vadd.f32 %v4846, %v5148
    %v5170 = vadd.f32 %v4847, %v5063
    %v5171 = vadd.f32 %v4848, %v5065
    %v5172 = vadd.f32 %v4849, %v5152
    %v5173 = vadd.f32 %v4850, %v5154
    %v5174 = vadd.f32 %v4851, %v5069
    %v5175 = vadd.f32 %v4852, %v5071
    %v5176 = vadd.f32 %v4853, %v5158
    %v5177 = vadd.f32 %v4854, %v5160
    %v5178 = vrot.slane %v3839, 1
    %v5179 = vrot.slane %v3840, 1
    %v5180 = vrot.slane %v3841, 1
    %v5181 = vrot.slane %v3842, 1
    %v5182 = vrot.slane %v3843, 1
    %v5183 = vrot.slane %v3844, 1
    %v5184 = vrot.slane %v3845, 1
    %v5185 = vrot.slane %v3846, 1
    %v5186 = vsel %vm2311, %v5182, %v5184
    %v5187 = vsel %vm2311, %v5183, %v5185
    %v5188 = vsel %vm2311, %v5180, %v5182
    %v5189 = vsel %vm2311, %v5181, %v5183
    %v5190 = vsel %vm2311, %v5178, %v5180
    %v5191 = vsel %vm2311, %v5179, %v5181
    %v5192 = vsel %vm2311, %v5184, %v5178
    %v5193 = vsel %vm2311, %v5185, %v5179
    %v5194 = vsel %vm2336, %v5190, 0.0
    %v5195 = vsel %vm2336, %v5191, 0.0
    %v5196 = vsel %vm2337, %v5188, 0.0
    %v5197 = vsel %vm2337, %v5189, 0.0
    %v5198 = vsel %vm2338, %v5186, 0.0
    %v5199 = vsel %vm2338, %v5187, 0.0
    %v5200 = vsel %vm2339, %v5192, 0.0
    %v5201 = vsel %vm2339, %v5193, 0.0
    %s5202 = scalar_lea.vmem %s5, 4096
    %v5203 = vld [vmem:[%s5202] sm:$0xff]
    %v5204 = vld [vmem:[%s5202 + $0x8] sm:$0xff]
    %v5205 = vld [vmem:[%s5202 + $0x10] sm:$0xff]
    %v5206 = vld [vmem:[%s5202 + $0x18] sm:$0xff]
    %v5207 = vld [vmem:[%s5202 + $0x20] sm:$0xff]
    %v5208 = vld [vmem:[%s5202 + $0x28] sm:$0xff]
    %v5209 = vld [vmem:[%s5202 + $0x30] sm:$0xff]
    %v5210 = vld [vmem:[%s5202 + $0x38] sm:$0xff]
    %v5211 = vld [vmem:[%s5202 + $0x40] sm:$0xff]
    %v5212 = vld [vmem:[%s5202 + $0x48] sm:$0xff]
    %v5213 = vld [vmem:[%s5202 + $0x50] sm:$0xff]
    %v5214 = vld [vmem:[%s5202 + $0x58] sm:$0xff]
    %v5215 = vld [vmem:[%s5202 + $0x60] sm:$0xff]
    %v5216 = vld [vmem:[%s5202 + $0x68] sm:$0xff]
    %v5217 = vld [vmem:[%s5202 + $0x70] sm:$0xff]
    %v5218 = vld [vmem:[%s5202 + $0x78] sm:$0xff]
    %v5219 = vld [vmem:[%s5202 + $0x80] sm:$0xff]
    %v5220 = vld [vmem:[%s5202 + $0x88] sm:$0xff]
    %v5221 = vld [vmem:[%s5202 + $0x90] sm:$0xff]
    %v5222 = vld [vmem:[%s5202 + $0x98] sm:$0xff]
    %v5223 = vld [vmem:[%s5202 + $0xa0] sm:$0xff]
    %v5224 = vld [vmem:[%s5202 + $0xa8] sm:$0xff]
    %v5225 = vld [vmem:[%s5202 + $0xb0] sm:$0xff]
    %v5226 = vld [vmem:[%s5202 + $0xb8] sm:$0xff]
    %v5227 = vld [vmem:[%s5202 + $0xc0] sm:$0xff]
    %v5228 = vld [vmem:[%s5202 + $0xc8] sm:$0xff]
    %v5229 = vld [vmem:[%s5202 + $0xd0] sm:$0xff]
    %v5230 = vld [vmem:[%s5202 + $0xd8] sm:$0xff]
    %v5231 = vld [vmem:[%s5202 + $0xe0] sm:$0xff]
    %v5232 = vld [vmem:[%s5202 + $0xe8] sm:$0xff]
    %v5233 = vld [vmem:[%s5202 + $0xf0] sm:$0xff]
    %v5234 = vld [vmem:[%s5202 + $0xf8] sm:$0xff]
    %v5235 = vld [vmem:[%s5202 + $0x100] sm:$0xff]
    %v5236 = vld [vmem:[%s5202 + $0x108] sm:$0xff]
    %v5237 = vld [vmem:[%s5202 + $0x110] sm:$0xff]
    %v5238 = vld [vmem:[%s5202 + $0x118] sm:$0xff]
    %v5239 = vld [vmem:[%s5202 + $0x120] sm:$0xff]
    %v5240 = vld [vmem:[%s5202 + $0x128] sm:$0xff]
    %v5241 = vld [vmem:[%s5202 + $0x130] sm:$0xff]
    %v5242 = vld [vmem:[%s5202 + $0x138] sm:$0xff]
    %v5243 = vld [vmem:[%s5202 + $0x140] sm:$0xff]
    %v5244 = vld [vmem:[%s5202 + $0x148] sm:$0xff]
    %v5245 = vld [vmem:[%s5202 + $0x150] sm:$0xff]
    %v5246 = vld [vmem:[%s5202 + $0x158] sm:$0xff]
    %v5247 = vld [vmem:[%s5202 + $0x160] sm:$0xff]
    %v5248 = vld [vmem:[%s5202 + $0x168] sm:$0xff]
    %v5249 = vld [vmem:[%s5202 + $0x170] sm:$0xff]
    %v5250 = vld [vmem:[%s5202 + $0x178] sm:$0xff]
    %v5251 = vld [vmem:[%s5202 + $0x180] sm:$0xff]
    %v5252 = vld [vmem:[%s5202 + $0x188] sm:$0xff]
    %v5253 = vld [vmem:[%s5202 + $0x190] sm:$0xff]
    %v5254 = vld [vmem:[%s5202 + $0x198] sm:$0xff]
    %v5255 = vld [vmem:[%s5202 + $0x1a0] sm:$0xff]
    %v5256 = vld [vmem:[%s5202 + $0x1a8] sm:$0xff]
    %v5257 = vld [vmem:[%s5202 + $0x1b0] sm:$0xff]
    %v5258 = vld [vmem:[%s5202 + $0x1b8] sm:$0xff]
    %v5259 = vld [vmem:[%s5202 + $0x1c0] sm:$0xff]
    %v5260 = vld [vmem:[%s5202 + $0x1c8] sm:$0xff]
    %v5261 = vld [vmem:[%s5202 + $0x1d0] sm:$0xff]
    %v5262 = vld [vmem:[%s5202 + $0x1d8] sm:$0xff]
    %v5263 = vld [vmem:[%s5202 + $0x1e0] sm:$0xff]
    %v5264 = vld [vmem:[%s5202 + $0x1e8] sm:$0xff]
    %v5265 = vld [vmem:[%s5202 + $0x1f0] sm:$0xff]
    %v5266 = vld [vmem:[%s5202 + $0x1f8] sm:$0xff]
    %v5267 = vld [vmem:[%s5202 + $0x200] sm:$0xff]
    %v5268 = vld [vmem:[%s5202 + $0x208] sm:$0xff]
    %v5269 = vld [vmem:[%s5202 + $0x210] sm:$0xff]
    %v5270 = vld [vmem:[%s5202 + $0x218] sm:$0xff]
    %v5271 = vld [vmem:[%s5202 + $0x220] sm:$0xff]
    %v5272 = vld [vmem:[%s5202 + $0x228] sm:$0xff]
    %v5273 = vld [vmem:[%s5202 + $0x230] sm:$0xff]
    %v5274 = vld [vmem:[%s5202 + $0x238] sm:$0xff]
    %v5275 = vld [vmem:[%s5202 + $0x240] sm:$0xff]
    %v5276 = vld [vmem:[%s5202 + $0x248] sm:$0xff]
    %v5277 = vld [vmem:[%s5202 + $0x250] sm:$0xff]
    %v5278 = vld [vmem:[%s5202 + $0x258] sm:$0xff]
    %v5279 = vld [vmem:[%s5202 + $0x260] sm:$0xff]
    %v5280 = vld [vmem:[%s5202 + $0x268] sm:$0xff]
    %v5281 = vld [vmem:[%s5202 + $0x270] sm:$0xff]
    %v5282 = vld [vmem:[%s5202 + $0x278] sm:$0xff]
    %v5283 = vld [vmem:[%s5202 + $0x280] sm:$0xff]
    %v5284 = vld [vmem:[%s5202 + $0x288] sm:$0xff]
    %v5285 = vld [vmem:[%s5202 + $0x290] sm:$0xff]
    %v5286 = vld [vmem:[%s5202 + $0x298] sm:$0xff]
    %v5287 = vld [vmem:[%s5202 + $0x2a0] sm:$0xff]
    %v5288 = vld [vmem:[%s5202 + $0x2a8] sm:$0xff]
    %v5289 = vld [vmem:[%s5202 + $0x2b0] sm:$0xff]
    %v5290 = vld [vmem:[%s5202 + $0x2b8] sm:$0xff]
    %v5291 = vld [vmem:[%s5202 + $0x2c0] sm:$0xff]
    %v5292 = vld [vmem:[%s5202 + $0x2c8] sm:$0xff]
    %v5293 = vld [vmem:[%s5202 + $0x2d0] sm:$0xff]
    %v5294 = vld [vmem:[%s5202 + $0x2d8] sm:$0xff]
    %v5295 = vld [vmem:[%s5202 + $0x2e0] sm:$0xff]
    %v5296 = vld [vmem:[%s5202 + $0x2e8] sm:$0xff]
    %v5297 = vld [vmem:[%s5202 + $0x2f0] sm:$0xff]
    %v5298 = vld [vmem:[%s5202 + $0x2f8] sm:$0xff]
    %v5299 = vld [vmem:[%s5202 + $0x300] sm:$0xff]
    %v5300 = vld [vmem:[%s5202 + $0x308] sm:$0xff]
    %v5301 = vld [vmem:[%s5202 + $0x310] sm:$0xff]
    %v5302 = vld [vmem:[%s5202 + $0x318] sm:$0xff]
    %v5303 = vld [vmem:[%s5202 + $0x320] sm:$0xff]
    %v5304 = vld [vmem:[%s5202 + $0x328] sm:$0xff]
    %v5305 = vld [vmem:[%s5202 + $0x330] sm:$0xff]
    %v5306 = vld [vmem:[%s5202 + $0x338] sm:$0xff]
    %v5307 = vld [vmem:[%s5202 + $0x340] sm:$0xff]
    %v5308 = vld [vmem:[%s5202 + $0x348] sm:$0xff]
    %v5309 = vld [vmem:[%s5202 + $0x350] sm:$0xff]
    %v5310 = vld [vmem:[%s5202 + $0x358] sm:$0xff]
    %v5311 = vld [vmem:[%s5202 + $0x360] sm:$0xff]
    %v5312 = vld [vmem:[%s5202 + $0x368] sm:$0xff]
    %v5313 = vld [vmem:[%s5202 + $0x370] sm:$0xff]
    %v5314 = vld [vmem:[%s5202 + $0x378] sm:$0xff]
    %v5315 = vld [vmem:[%s5202 + $0x380] sm:$0xff]
    %v5316 = vld [vmem:[%s5202 + $0x388] sm:$0xff]
    %v5317 = vld [vmem:[%s5202 + $0x390] sm:$0xff]
    %v5318 = vld [vmem:[%s5202 + $0x398] sm:$0xff]
    %v5319 = vld [vmem:[%s5202 + $0x3a0] sm:$0xff]
    %v5320 = vld [vmem:[%s5202 + $0x3a8] sm:$0xff]
    %v5321 = vld [vmem:[%s5202 + $0x3b0] sm:$0xff]
    %v5322 = vld [vmem:[%s5202 + $0x3b8] sm:$0xff]
    %v5323 = vld [vmem:[%s5202 + $0x3c0] sm:$0xff]
    %v5324 = vld [vmem:[%s5202 + $0x3c8] sm:$0xff]
    %v5325 = vld [vmem:[%s5202 + $0x3d0] sm:$0xff]
    %v5326 = vld [vmem:[%s5202 + $0x3d8] sm:$0xff]
    %v5327 = vld [vmem:[%s5202 + $0x3e0] sm:$0xff]
    %v5328 = vld [vmem:[%s5202 + $0x3e8] sm:$0xff]
    %v5329 = vld [vmem:[%s5202 + $0x3f0] sm:$0xff]
    %v5330 = vld [vmem:[%s5202 + $0x3f8] sm:$0xff]
    %5331 = vmatprep.subr.mxu0 %v5204
    %5332 = vmatpush1.msra.mxu0 %v5203
    %5333 = vmatprep.subr.mxu0 %v5208
    %5334 = vmatpush1.msra.mxu0 %v5207
    %5335 = vmatprep.subr.mxu0 %v5212
    %5336 = vmatpush1.msra.mxu0 %v5211
    %5337 = vmatprep.subr.mxu0 %v5216
    %5338 = vmatpush1.msra.mxu0 %v5215
    %5339 = vmatprep.subr.mxu0 %v5220
    %5340 = vmatpush1.msra.mxu0 %v5219
    %5341 = vmatprep.subr.mxu0 %v5224
    %5342 = vmatpush1.msra.mxu0 %v5223
    %5343 = vmatprep.subr.mxu0 %v5228
    %5344 = vmatpush1.msra.mxu0 %v5227
    %5345 = vmatprep.subr.mxu0 %v5232
    %5346 = vmatpush1.msra.mxu0 %v5231
    %5347 = vmatprep.subr.mxu0 %v5236
    %5348 = vmatpush1.msra.mxu0 %v5235
    %5349 = vmatprep.subr.mxu0 %v5240
    %5350 = vmatpush1.msra.mxu0 %v5239
    %5351 = vmatprep.subr.mxu0 %v5244
    %5352 = vmatpush1.msra.mxu0 %v5243
    %5353 = vmatprep.subr.mxu0 %v5248
    %5354 = vmatpush1.msra.mxu0 %v5247
    %5355 = vmatprep.subr.mxu0 %v5252
    %5356 = vmatpush1.msra.mxu0 %v5251
    %5357 = vmatprep.subr.mxu0 %v5256
    %5358 = vmatpush1.msra.mxu0 %v5255
    %5359 = vmatprep.subr.mxu0 %v5260
    %5360 = vmatpush1.msra.mxu0 %v5259
    %5361 = vmatprep.subr.mxu0 %v5264
    %5362 = vmatpush1.msra.mxu0 %v5263
    %5363 = vmatprep.subr.mxu0 %v5268
    %5364 = vmatpush1.msra.mxu0 %v5267
    %5365 = vmatprep.subr.mxu0 %v5272
    %5366 = vmatpush1.msra.mxu0 %v5271
    %5367 = vmatprep.subr.mxu0 %v5276
    %5368 = vmatpush1.msra.mxu0 %v5275
    %5369 = vmatprep.subr.mxu0 %v5280
    %5370 = vmatpush1.msra.mxu0 %v5279
    %5371 = vmatprep.subr.mxu0 %v5284
    %5372 = vmatpush1.msra.mxu0 %v5283
    %5373 = vmatprep.subr.mxu0 %v5288
    %5374 = vmatpush1.msra.mxu0 %v5287
    %5375 = vmatprep.subr.mxu0 %v5292
    %5376 = vmatpush1.msra.mxu0 %v5291
    %5377 = vmatprep.subr.mxu0 %v5296
    %5378 = vmatpush1.msra.mxu0 %v5295
    %5379 = vmatprep.subr.mxu0 %v5300
    %5380 = vmatpush1.msra.mxu0 %v5299
    %5381 = vmatprep.subr.mxu0 %v5304
    %5382 = vmatpush1.msra.mxu0 %v5303
    %5383 = vmatprep.subr.mxu0 %v5308
    %5384 = vmatpush1.msra.mxu0 %v5307
    %5385 = vmatprep.subr.mxu0 %v5312
    %5386 = vmatpush1.msra.mxu0 %v5311
    %5387 = vmatprep.subr.mxu0 %v5316
    %5388 = vmatpush1.msra.mxu0 %v5315
    %5389 = vmatprep.subr.mxu0 %v5320
    %5390 = vmatpush1.msra.mxu0 %v5319
    %5391 = vmatprep.subr.mxu0 %v5324
    %5392 = vmatpush1.msra.mxu0 %v5323
    %5393 = vmatprep.subr.mxu0 %v5328
    %5394 = vmatpush1.msra.mxu0 %v5327
    %5395 = vmatprep.mubr.f32.mxu0 %v5195
    %5396 = vmatmul.mubr.f32.gmra.mrb[0].mxu0 %v5194
    %v5397 = vpop.f32.mrb[0].mxu0
    %v5398 = vadd.f32 0.0, %v5397
    %v5399 = vpop.f32.mrb[0].mxu0
    %v5400 = vadd.f32 0.0, %v5399
    %5401 = vmatprep.mubr.f32.mxu0 %v5197
    %5402 = vmatmul.mubr.f32.gmra.mrb[0].mxu0 %v5196
    %v5403 = vpop.f32.mrb[0].mxu0
    %v5404 = vadd.f32 0.0, %v5403
    %v5405 = vpop.f32.mrb[0].mxu0
    %v5406 = vadd.f32 0.0, %v5405
    %5407 = vmatprep.mubr.f32.mxu0 %v5199
    %5408 = vmatmul.mubr.f32.gmra.mrb[0].mxu0 %v5198
    %v5409 = vpop.f32.mrb[0].mxu0
    %v5410 = vadd.f32 0.0, %v5409
    %v5411 = vpop.f32.mrb[0].mxu0
    %v5412 = vadd.f32 0.0, %v5411
    %5413 = vmatprep.mubr.f32.mxu0 %v5201
    %5414 = vmatmul.mubr.f32.gmra.mrb[0].mxu0 %v5200
    %v5415 = vpop.f32.mrb[0].mxu0
    %v5416 = vadd.f32 0.0, %v5415
    %v5417 = vpop.f32.mrb[0].mxu0
    %v5418 = vadd.f32 0.0, %v5417
    %5419 = vdwg.mxu0
    %5420 = vmatprep.subr.mxu0 %v5206
    %5421 = vmatpush1.msra.mxu0 %v5205
    %5422 = vmatprep.subr.mxu0 %v5210
    %5423 = vmatpush1.msra.mxu0 %v5209
    %5424 = vmatprep.subr.mxu0 %v5214
    %5425 = vmatpush1.msra.mxu0 %v5213
    %5426 = vmatprep.subr.mxu0 %v5218
    %5427 = vmatpush1.msra.mxu0 %v5217
    %5428 = vmatprep.subr.mxu0 %v5222
    %5429 = vmatpush1.msra.mxu0 %v5221
    %5430 = vmatprep.subr.mxu0 %v5226
    %5431 = vmatpush1.msra.mxu0 %v5225
    %5432 = vmatprep.subr.mxu0 %v5230
    %5433 = vmatpush1.msra.mxu0 %v5229
    %5434 = vmatprep.subr.mxu0 %v5234
    %5435 = vmatpush1.msra.mxu0 %v5233
    %5436 = vmatprep.subr.mxu0 %v5238
    %5437 = vmatpush1.msra.mxu0 %v5237
    %5438 = vmatprep.subr.mxu0 %v5242
    %5439 = vmatpush1.msra.mxu0 %v5241
    %5440 = vmatprep.subr.mxu0 %v5246
    %5441 = vmatpush1.msra.mxu0 %v5245
    %5442 = vmatprep.subr.mxu0 %v5250
    %5443 = vmatpush1.msra.mxu0 %v5249
    %5444 = vmatprep.subr.mxu0 %v5254
    %5445 = vmatpush1.msra.mxu0 %v5253
    %5446 = vmatprep.subr.mxu0 %v5258
    %5447 = vmatpush1.msra.mxu0 %v5257
    %5448 = vmatprep.subr.mxu0 %v5262
    %5449 = vmatpush1.msra.mxu0 %v5261
    %5450 = vmatprep.subr.mxu0 %v5266
    %5451 = vmatpush1.msra.mxu0 %v5265
    %5452 = vmatprep.subr.mxu0 %v5270
    %5453 = vmatpush1.msra.mxu0 %v5269
    %5454 = vmatprep.subr.mxu0 %v5274
    %5455 = vmatpush1.msra.mxu0 %v5273
    %5456 = vmatprep.subr.mxu0 %v5278
    %5457 = vmatpush1.msra.mxu0 %v5277
    %5458 = vmatprep.subr.mxu0 %v5282
    %5459 = vmatpush1.msra.mxu0 %v5281
    %5460 = vmatprep.subr.mxu0 %v5286
    %5461 = vmatpush1.msra.mxu0 %v5285
    %5462 = vmatprep.subr.mxu0 %v5290
    %5463 = vmatpush1.msra.mxu0 %v5289
    %5464 = vmatprep.subr.mxu0 %v5294
    %5465 = vmatpush1.msra.mxu0 %v5293
    %5466 = vmatprep.subr.mxu0 %v5298
    %5467 = vmatpush1.msra.mxu0 %v5297
    %5468 = vmatprep.subr.mxu0 %v5302
    %5469 = vmatpush1.msra.mxu0 %v5301
    %5470 = vmatprep.subr.mxu0 %v5306
    %5471 = vmatpush1.msra.mxu0 %v5305
    %5472 = vmatprep.subr.mxu0 %v5310
    %5473 = vmatpush1.msra.mxu0 %v5309
    %5474 = vmatprep.subr.mxu0 %v5314
    %5475 = vmatpush1.msra.mxu0 %v5313
    %5476 = vmatprep.subr.mxu0 %v5318
    %5477 = vmatpush1.msra.mxu0 %v5317
    %5478 = vmatprep.subr.mxu0 %v5322
    %5479 = vmatpush1.msra.mxu0 %v5321
    %5480 = vmatprep.subr.mxu0 %v5326
    %5481 = vmatpush1.msra.mxu0 %v5325
    %5482 = vmatprep.subr.mxu0 %v5330
    %5483 = vmatpush1.msra.mxu0 %v5329
    %5484 = vmatprep.mubr.f32.mxu0 %v5195
    %5485 = vmatmul.mubr.f32.gmra.mrb[0].mxu0 %v5194
    %v5486 = vpop.f32.mrb[0].mxu0
    %v5487 = vadd.f32 0.0, %v5486
    %v5488 = vpop.f32.mrb[0].mxu0
    %v5489 = vadd.f32 0.0, %v5488
    %5490 = vmatprep.mubr.f32.mxu0 %v5197
    %5491 = vmatmul.mubr.f32.gmra.mrb[0].mxu0 %v5196
    %v5492 = vpop.f32.mrb[0].mxu0
    %v5493 = vadd.f32 0.0, %v5492
    %v5494 = vpop.f32.mrb[0].mxu0
    %v5495 = vadd.f32 0.0, %v5494
    %5496 = vmatprep.mubr.f32.mxu0 %v5199
    %5497 = vmatmul.mubr.f32.gmra.mrb[0].mxu0 %v5198
    %v5498 = vpop.f32.mrb[0].mxu0
    %v5499 = vadd.f32 0.0, %v5498
    %v5500 = vpop.f32.mrb[0].mxu0
    %v5501 = vadd.f32 0.0, %v5500
    %5502 = vmatprep.mubr.f32.mxu0 %v5201
    %5503 = vmatmul.mubr.f32.gmra.mrb[0].mxu0 %v5200
    %v5504 = vpop.f32.mrb[0].mxu0
    %v5505 = vadd.f32 0.0, %v5504
    %v5506 = vpop.f32.mrb[0].mxu0
    %v5507 = vadd.f32 0.0, %v5506
    %5508 = vdwg.mxu0
    %v5509 = vadd.f32 %v5162, %v5398
    %v5510 = vadd.f32 %v5163, %v5400
    %v5511 = vadd.f32 %v5164, %v5487
    %v5512 = vadd.f32 %v5165, %v5489
    %v5513 = vadd.f32 %v5166, %v5404
    %v5514 = vadd.f32 %v5167, %v5406
    %v5515 = vadd.f32 %v5168, %v5493
    %v5516 = vadd.f32 %v5169, %v5495
    %v5517 = vadd.f32 %v5170, %v5410
    %v5518 = vadd.f32 %v5171, %v5412
    %v5519 = vadd.f32 %v5172, %v5499
    %v5520 = vadd.f32 %v5173, %v5501
    %v5521 = vadd.f32 %v5174, %v5416
    %v5522 = vadd.f32 %v5175, %v5418
    %v5523 = vadd.f32 %v5176, %v5505
    %v5524 = vadd.f32 %v5177, %v5507
    %v5525 = vrot.slane %v3839, 2
    %v5526 = vrot.slane %v3840, 2
    %v5527 = vrot.slane %v3841, 2
    %v5528 = vrot.slane %v3842, 2
    %v5529 = vrot.slane %v3843, 2
    %v5530 = vrot.slane %v3844, 2
    %v5531 = vrot.slane %v3845, 2
    %v5532 = vrot.slane %v3846, 2
    %v5533 = vsel %vm2781, %v5529, %v5531
    %v5534 = vsel %vm2781, %v5530, %v5532
    %v5535 = vsel %vm2781, %v5527, %v5529
    %v5536 = vsel %vm2781, %v5528, %v5530
    %v5537 = vsel %vm2781, %v5525, %v5527
    %v5538 = vsel %vm2781, %v5526, %v5528
    %v5539 = vsel %vm2781, %v5531, %v5525
    %v5540 = vsel %vm2781, %v5532, %v5526
    %v5541 = vsel %vm2806, %v5537, 0.0
    %v5542 = vsel %vm2806, %v5538, 0.0
    %v5543 = vsel %vm2807, %v5535, 0.0
    %v5544 = vsel %vm2807, %v5536, 0.0
    %v5545 = vsel %vm2808, %v5533, 0.0
    %v5546 = vsel %vm2808, %v5534, 0.0
    %v5547 = vsel %vm2809, %v5539, 0.0
    %v5548 = vsel %vm2809, %v5540, 0.0
    %s5549 = scalar_lea.vmem %s5, 5120
    %v5550 = vld [vmem:[%s5549] sm:$0xff]
    %v5551 = vld [vmem:[%s5549 + $0x8] sm:$0xff]
    %v5552 = vld [vmem:[%s5549 + $0x10] sm:$0xff]
    %v5553 = vld [vmem:[%s5549 + $0x18] sm:$0xff]
    %v5554 = vld [vmem:[%s5549 + $0x20] sm:$0xff]
    %v5555 = vld [vmem:[%s5549 + $0x28] sm:$0xff]
    %v5556 = vld [vmem:[%s5549 + $0x30] sm:$0xff]
    %v5557 = vld [vmem:[%s5549 + $0x38] sm:$0xff]
    %v5558 = vld [vmem:[%s5549 + $0x40] sm:$0xff]
    %v5559 = vld [vmem:[%s5549 + $0x48] sm:$0xff]
    %v5560 = vld [vmem:[%s5549 + $0x50] sm:$0xff]
    %v5561 = vld [vmem:[%s5549 + $0x58] sm:$0xff]
    %v5562 = vld [vmem:[%s5549 + $0x60] sm:$0xff]
    %v5563 = vld [vmem:[%s5549 + $0x68] sm:$0xff]
    %v5564 = vld [vmem:[%s5549 + $0x70] sm:$0xff]
    %v5565 = vld [vmem:[%s5549 + $0x78] sm:$0xff]
    %v5566 = vld [vmem:[%s5549 + $0x80] sm:$0xff]
    %v5567 = vld [vmem:[%s5549 + $0x88] sm:$0xff]
    %v5568 = vld [vmem:[%s5549 + $0x90] sm:$0xff]
    %v5569 = vld [vmem:[%s5549 + $0x98] sm:$0xff]
    %v5570 = vld [vmem:[%s5549 + $0xa0] sm:$0xff]
    %v5571 = vld [vmem:[%s5549 + $0xa8] sm:$0xff]
    %v5572 = vld [vmem:[%s5549 + $0xb0] sm:$0xff]
    %v5573 = vld [vmem:[%s5549 + $0xb8] sm:$0xff]
    %v5574 = vld [vmem:[%s5549 + $0xc0] sm:$0xff]
    %v5575 = vld [vmem:[%s5549 + $0xc8] sm:$0xff]
    %v5576 = vld [vmem:[%s5549 + $0xd0] sm:$0xff]
    %v5577 = vld [vmem:[%s5549 + $0xd8] sm:$0xff]
    %v5578 = vld [vmem:[%s5549 + $0xe0] sm:$0xff]
    %v5579 = vld [vmem:[%s5549 + $0xe8] sm:$0xff]
    %v5580 = vld [vmem:[%s5549 + $0xf0] sm:$0xff]
    %v5581 = vld [vmem:[%s5549 + $0xf8] sm:$0xff]
    %v5582 = vld [vmem:[%s5549 + $0x100] sm:$0xff]
    %v5583 = vld [vmem:[%s5549 + $0x108] sm:$0xff]
    %v5584 = vld [vmem:[%s5549 + $0x110] sm:$0xff]
    %v5585 = vld [vmem:[%s5549 + $0x118] sm:$0xff]
    %v5586 = vld [vmem:[%s5549 + $0x120] sm:$0xff]
    %v5587 = vld [vmem:[%s5549 + $0x128] sm:$0xff]
    %v5588 = vld [vmem:[%s5549 + $0x130] sm:$0xff]
    %v5589 = vld [vmem:[%s5549 + $0x138] sm:$0xff]
    %v5590 = vld [vmem:[%s5549 + $0x140] sm:$0xff]
    %v5591 = vld [vmem:[%s5549 + $0x148] sm:$0xff]
    %v5592 = vld [vmem:[%s5549 + $0x150] sm:$0xff]
    %v5593 = vld [vmem:[%s5549 + $0x158] sm:$0xff]
    %v5594 = vld [vmem:[%s5549 + $0x160] sm:$0xff]
    %v5595 = vld [vmem:[%s5549 + $0x168] sm:$0xff]
    %v5596 = vld [vmem:[%s5549 + $0x170] sm:$0xff]
    %v5597 = vld [vmem:[%s5549 + $0x178] sm:$0xff]
    %v5598 = vld [vmem:[%s5549 + $0x180] sm:$0xff]
    %v5599 = vld [vmem:[%s5549 + $0x188] sm:$0xff]
    %v5600 = vld [vmem:[%s5549 + $0x190] sm:$0xff]
    %v5601 = vld [vmem:[%s5549 + $0x198] sm:$0xff]
    %v5602 = vld [vmem:[%s5549 + $0x1a0] sm:$0xff]
    %v5603 = vld [vmem:[%s5549 + $0x1a8] sm:$0xff]
    %v5604 = vld [vmem:[%s5549 + $0x1b0] sm:$0xff]
    %v5605 = vld [vmem:[%s5549 + $0x1b8] sm:$0xff]
    %v5606 = vld [vmem:[%s5549 + $0x1c0] sm:$0xff]
    %v5607 = vld [vmem:[%s5549 + $0x1c8] sm:$0xff]
    %v5608 = vld [vmem:[%s5549 + $0x1d0] sm:$0xff]
    %v5609 = vld [vmem:[%s5549 + $0x1d8] sm:$0xff]
    %v5610 = vld [vmem:[%s5549 + $0x1e0] sm:$0xff]
    %v5611 = vld [vmem:[%s5549 + $0x1e8] sm:$0xff]
    %v5612 = vld [vmem:[%s5549 + $0x1f0] sm:$0xff]
    %v5613 = vld [vmem:[%s5549 + $0x1f8] sm:$0xff]
    %v5614 = vld [vmem:[%s5549 + $0x200] sm:$0xff]
    %v5615 = vld [vmem:[%s5549 + $0x208] sm:$0xff]
    %v5616 = vld [vmem:[%s5549 + $0x210] sm:$0xff]
    %v5617 = vld [vmem:[%s5549 + $0x218] sm:$0xff]
    %v5618 = vld [vmem:[%s5549 + $0x220] sm:$0xff]
    %v5619 = vld [vmem:[%s5549 + $0x228] sm:$0xff]
    %v5620 = vld [vmem:[%s5549 + $0x230] sm:$0xff]
    %v5621 = vld [vmem:[%s5549 + $0x238] sm:$0xff]
    %v5622 = vld [vmem:[%s5549 + $0x240] sm:$0xff]
    %v5623 = vld [vmem:[%s5549 + $0x248] sm:$0xff]
    %v5624 = vld [vmem:[%s5549 + $0x250] sm:$0xff]
    %v5625 = vld [vmem:[%s5549 + $0x258] sm:$0xff]
    %v5626 = vld [vmem:[%s5549 + $0x260] sm:$0xff]
    %v5627 = vld [vmem:[%s5549 + $0x268] sm:$0xff]
    %v5628 = vld [vmem:[%s5549 + $0x270] sm:$0xff]
    %v5629 = vld [vmem:[%s5549 + $0x278] sm:$0xff]
    %v5630 = vld [vmem:[%s5549 + $0x280] sm:$0xff]
    %v5631 = vld [vmem:[%s5549 + $0x288] sm:$0xff]
    %v5632 = vld [vmem:[%s5549 + $0x290] sm:$0xff]
    %v5633 = vld [vmem:[%s5549 + $0x298] sm:$0xff]
    %v5634 = vld [vmem:[%s5549 + $0x2a0] sm:$0xff]
    %v5635 = vld [vmem:[%s5549 + $0x2a8] sm:$0xff]
    %v5636 = vld [vmem:[%s5549 + $0x2b0] sm:$0xff]
    %v5637 = vld [vmem:[%s5549 + $0x2b8] sm:$0xff]
    %v5638 = vld [vmem:[%s5549 + $0x2c0] sm:$0xff]
    %v5639 = vld [vmem:[%s5549 + $0x2c8] sm:$0xff]
    %v5640 = vld [vmem:[%s5549 + $0x2d0] sm:$0xff]
    %v5641 = vld [vmem:[%s5549 + $0x2d8] sm:$0xff]
    %v5642 = vld [vmem:[%s5549 + $0x2e0] sm:$0xff]
    %v5643 = vld [vmem:[%s5549 + $0x2e8] sm:$0xff]
    %v5644 = vld [vmem:[%s5549 + $0x2f0] sm:$0xff]
    %v5645 = vld [vmem:[%s5549 + $0x2f8] sm:$0xff]
    %v5646 = vld [vmem:[%s5549 + $0x300] sm:$0xff]
    %v5647 = vld [vmem:[%s5549 + $0x308] sm:$0xff]
    %v5648 = vld [vmem:[%s5549 + $0x310] sm:$0xff]
    %v5649 = vld [vmem:[%s5549 + $0x318] sm:$0xff]
    %v5650 = vld [vmem:[%s5549 + $0x320] sm:$0xff]
    %v5651 = vld [vmem:[%s5549 + $0x328] sm:$0xff]
    %v5652 = vld [vmem:[%s5549 + $0x330] sm:$0xff]
    %v5653 = vld [vmem:[%s5549 + $0x338] sm:$0xff]
    %v5654 = vld [vmem:[%s5549 + $0x340] sm:$0xff]
    %v5655 = vld [vmem:[%s5549 + $0x348] sm:$0xff]
    %v5656 = vld [vmem:[%s5549 + $0x350] sm:$0xff]
    %v5657 = vld [vmem:[%s5549 + $0x358] sm:$0xff]
    %v5658 = vld [vmem:[%s5549 + $0x360] sm:$0xff]
    %v5659 = vld [vmem:[%s5549 + $0x368] sm:$0xff]
    %v5660 = vld [vmem:[%s5549 + $0x370] sm:$0xff]
    %v5661 = vld [vmem:[%s5549 + $0x378] sm:$0xff]
    %v5662 = vld [vmem:[%s5549 + $0x380] sm:$0xff]
    %v5663 = vld [vmem:[%s5549 + $0x388] sm:$0xff]
    %v5664 = vld [vmem:[%s5549 + $0x390] sm:$0xff]
    %v5665 = vld [vmem:[%s5549 + $0x398] sm:$0xff]
    %v5666 = vld [vmem:[%s5549 + $0x3a0] sm:$0xff]
    %v5667 = vld [vmem:[%s5549 + $0x3a8] sm:$0xff]
    %v5668 = vld [vmem:[%s5549 + $0x3b0] sm:$0xff]
    %v5669 = vld [vmem:[%s5549 + $0x3b8] sm:$0xff]
    %v5670 = vld [vmem:[%s5549 + $0x3c0] sm:$0xff]
    %v5671 = vld [vmem:[%s5549 + $0x3c8] sm:$0xff]
    %v5672 = vld [vmem:[%s5549 + $0x3d0] sm:$0xff]
    %v5673 = vld [vmem:[%s5549 + $0x3d8] sm:$0xff]
    %v5674 = vld [vmem:[%s5549 + $0x3e0] sm:$0xff]
    %v5675 = vld [vmem:[%s5549 + $0x3e8] sm:$0xff]
    %v5676 = vld [vmem:[%s5549 + $0x3f0] sm:$0xff]
    %v5677 = vld [vmem:[%s5549 + $0x3f8] sm:$0xff]
    %5678 = vmatprep.subr.mxu0 %v5551
    %5679 = vmatpush1.msra.mxu0 %v5550
    %5680 = vmatprep.subr.mxu0 %v5555
    %5681 = vmatpush1.msra.mxu0 %v5554
    %5682 = vmatprep.subr.mxu0 %v5559
    %5683 = vmatpush1.msra.mxu0 %v5558
    %5684 = vmatprep.subr.mxu0 %v5563
    %5685 = vmatpush1.msra.mxu0 %v5562
    %5686 = vmatprep.subr.mxu0 %v5567
    %5687 = vmatpush1.msra.mxu0 %v5566
    %5688 = vmatprep.subr.mxu0 %v5571
    %5689 = vmatpush1.msra.mxu0 %v5570
    %5690 = vmatprep.subr.mxu0 %v5575
    %5691 = vmatpush1.msra.mxu0 %v5574
    %5692 = vmatprep.subr.mxu0 %v5579
    %5693 = vmatpush1.msra.mxu0 %v5578
    %5694 = vmatprep.subr.mxu0 %v5583
    %5695 = vmatpush1.msra.mxu0 %v5582
    %5696 = vmatprep.subr.mxu0 %v5587
    %5697 = vmatpush1.msra.mxu0 %v5586
    %5698 = vmatprep.subr.mxu0 %v5591
    %5699 = vmatpush1.msra.mxu0 %v5590
    %5700 = vmatprep.subr.mxu0 %v5595
    %5701 = vmatpush1.msra.mxu0 %v5594
    %5702 = vmatprep.subr.mxu0 %v5599
    %5703 = vmatpush1.msra.mxu0 %v5598
    %5704 = vmatprep.subr.mxu0 %v5603
    %5705 = vmatpush1.msra.mxu0 %v5602
    %5706 = vmatprep.subr.mxu0 %v5607
    %5707 = vmatpush1.msra.mxu0 %v5606
    %5708 = vmatprep.subr.mxu0 %v5611
    %5709 = vmatpush1.msra.mxu0 %v5610
    %5710 = vmatprep.subr.mxu0 %v5615
    %5711 = vmatpush1.msra.mxu0 %v5614
    %5712 = vmatprep.subr.mxu0 %v5619
    %5713 = vmatpush1.msra.mxu0 %v5618
    %5714 = vmatprep.subr.mxu0 %v5623
    %5715 = vmatpush1.msra.mxu0 %v5622
    %5716 = vmatprep.subr.mxu0 %v5627
    %5717 = vmatpush1.msra.mxu0 %v5626
    %5718 = vmatprep.subr.mxu0 %v5631
    %5719 = vmatpush1.msra.mxu0 %v5630
    %5720 = vmatprep.subr.mxu0 %v5635
    %5721 = vmatpush1.msra.mxu0 %v5634
    %5722 = vmatprep.subr.mxu0 %v5639
    %5723 = vmatpush1.msra.mxu0 %v5638
    %5724 = vmatprep.subr.mxu0 %v5643
    %5725 = vmatpush1.msra.mxu0 %v5642
    %5726 = vmatprep.subr.mxu0 %v5647
    %5727 = vmatpush1.msra.mxu0 %v5646
    %5728 = vmatprep.subr.mxu0 %v5651
    %5729 = vmatpush1.msra.mxu0 %v5650
    %5730 = vmatprep.subr.mxu0 %v5655
    %5731 = vmatpush1.msra.mxu0 %v5654
    %5732 = vmatprep.subr.mxu0 %v5659
    %5733 = vmatpush1.msra.mxu0 %v5658
    %5734 = vmatprep.subr.mxu0 %v5663
    %5735 = vmatpush1.msra.mxu0 %v5662
    %5736 = vmatprep.subr.mxu0 %v5667
    %5737 = vmatpush1.msra.mxu0 %v5666
    %5738 = vmatprep.subr.mxu0 %v5671
    %5739 = vmatpush1.msra.mxu0 %v5670
    %5740 = vmatprep.subr.mxu0 %v5675
    %5741 = vmatpush1.msra.mxu0 %v5674
    %5742 = vmatprep.mubr.f32.mxu0 %v5542
    %5743 = vmatmul.mubr.f32.gmra.mrb[0].mxu0 %v5541
    %v5744 = vpop.f32.mrb[0].mxu0
    %v5745 = vadd.f32 0.0, %v5744
    %v5746 = vpop.f32.mrb[0].mxu0
    %v5747 = vadd.f32 0.0, %v5746
    %5748 = vmatprep.mubr.f32.mxu0 %v5544
    %5749 = vmatmul.mubr.f32.gmra.mrb[0].mxu0 %v5543
    %v5750 = vpop.f32.mrb[0].mxu0
    %v5751 = vadd.f32 0.0, %v5750
    %v5752 = vpop.f32.mrb[0].mxu0
    %v5753 = vadd.f32 0.0, %v5752
    %5754 = vmatprep.mubr.f32.mxu0 %v5546
    %5755 = vmatmul.mubr.f32.gmra.mrb[0].mxu0 %v5545
    %v5756 = vpop.f32.mrb[0].mxu0
    %v5757 = vadd.f32 0.0, %v5756
    %v5758 = vpop.f32.mrb[0].mxu0
    %v5759 = vadd.f32 0.0, %v5758
    %5760 = vmatprep.mubr.f32.mxu0 %v5548
    %5761 = vmatmul.mubr.f32.gmra.mrb[0].mxu0 %v5547
    %v5762 = vpop.f32.mrb[0].mxu0
    %v5763 = vadd.f32 0.0, %v5762
    %v5764 = vpop.f32.mrb[0].mxu0
    %v5765 = vadd.f32 0.0, %v5764
    %5766 = vdwg.mxu0
    %5767 = vmatprep.subr.mxu0 %v5553
    %5768 = vmatpush1.msra.mxu0 %v5552
    %5769 = vmatprep.subr.mxu0 %v5557
    %5770 = vmatpush1.msra.mxu0 %v5556
    %5771 = vmatprep.subr.mxu0 %v5561
    %5772 = vmatpush1.msra.mxu0 %v5560
    %5773 = vmatprep.subr.mxu0 %v5565
    %5774 = vmatpush1.msra.mxu0 %v5564
    %5775 = vmatprep.subr.mxu0 %v5569
    %5776 = vmatpush1.msra.mxu0 %v5568
    %5777 = vmatprep.subr.mxu0 %v5573
    %5778 = vmatpush1.msra.mxu0 %v5572
    %5779 = vmatprep.subr.mxu0 %v5577
    %5780 = vmatpush1.msra.mxu0 %v5576
    %5781 = vmatprep.subr.mxu0 %v5581
    %5782 = vmatpush1.msra.mxu0 %v5580
    %5783 = vmatprep.subr.mxu0 %v5585
    %5784 = vmatpush1.msra.mxu0 %v5584
    %5785 = vmatprep.subr.mxu0 %v5589
    %5786 = vmatpush1.msra.mxu0 %v5588
    %5787 = vmatprep.subr.mxu0 %v5593
    %5788 = vmatpush1.msra.mxu0 %v5592
    %5789 = vmatprep.subr.mxu0 %v5597
    %5790 = vmatpush1.msra.mxu0 %v5596
    %5791 = vmatprep.subr.mxu0 %v5601
    %5792 = vmatpush1.msra.mxu0 %v5600
    %5793 = vmatprep.subr.mxu0 %v5605
    %5794 = vmatpush1.msra.mxu0 %v5604
    %5795 = vmatprep.subr.mxu0 %v5609
    %5796 = vmatpush1.msra.mxu0 %v5608
    %5797 = vmatprep.subr.mxu0 %v5613
    %5798 = vmatpush1.msra.mxu0 %v5612
    %5799 = vmatprep.subr.mxu0 %v5617
    %5800 = vmatpush1.msra.mxu0 %v5616
    %5801 = vmatprep.subr.mxu0 %v5621
    %5802 = vmatpush1.msra.mxu0 %v5620
    %5803 = vmatprep.subr.mxu0 %v5625
    %5804 = vmatpush1.msra.mxu0 %v5624
    %5805 = vmatprep.subr.mxu0 %v5629
    %5806 = vmatpush1.msra.mxu0 %v5628
    %5807 = vmatprep.subr.mxu0 %v5633
    %5808 = vmatpush1.msra.mxu0 %v5632
    %5809 = vmatprep.subr.mxu0 %v5637
    %5810 = vmatpush1.msra.mxu0 %v5636
    %5811 = vmatprep.subr.mxu0 %v5641
    %5812 = vmatpush1.msra.mxu0 %v5640
    %5813 = vmatprep.subr.mxu0 %v5645
    %5814 = vmatpush1.msra.mxu0 %v5644
    %5815 = vmatprep.subr.mxu0 %v5649
    %5816 = vmatpush1.msra.mxu0 %v5648
    %5817 = vmatprep.subr.mxu0 %v5653
    %5818 = vmatpush1.msra.mxu0 %v5652
    %5819 = vmatprep.subr.mxu0 %v5657
    %5820 = vmatpush1.msra.mxu0 %v5656
    %5821 = vmatprep.subr.mxu0 %v5661
    %5822 = vmatpush1.msra.mxu0 %v5660
    %5823 = vmatprep.subr.mxu0 %v5665
    %5824 = vmatpush1.msra.mxu0 %v5664
    %5825 = vmatprep.subr.mxu0 %v5669
    %5826 = vmatpush1.msra.mxu0 %v5668
    %5827 = vmatprep.subr.mxu0 %v5673
    %5828 = vmatpush1.msra.mxu0 %v5672
    %5829 = vmatprep.subr.mxu0 %v5677
    %5830 = vmatpush1.msra.mxu0 %v5676
    %5831 = vmatprep.mubr.f32.mxu0 %v5542
    %5832 = vmatmul.mubr.f32.gmra.mrb[0].mxu0 %v5541
    %v5833 = vpop.f32.mrb[0].mxu0
    %v5834 = vadd.f32 0.0, %v5833
    %v5835 = vpop.f32.mrb[0].mxu0
    %v5836 = vadd.f32 0.0, %v5835
    %5837 = vmatprep.mubr.f32.mxu0 %v5544
    %5838 = vmatmul.mubr.f32.gmra.mrb[0].mxu0 %v5543
    %v5839 = vpop.f32.mrb[0].mxu0
    %v5840 = vadd.f32 0.0, %v5839
    %v5841 = vpop.f32.mrb[0].mxu0
    %v5842 = vadd.f32 0.0, %v5841
    %5843 = vmatprep.mubr.f32.mxu0 %v5546
    %5844 = vmatmul.mubr.f32.gmra.mrb[0].mxu0 %v5545
    %v5845 = vpop.f32.mrb[0].mxu0
    %v5846 = vadd.f32 0.0, %v5845
    %v5847 = vpop.f32.mrb[0].mxu0
    %v5848 = vadd.f32 0.0, %v5847
    %5849 = vmatprep.mubr.f32.mxu0 %v5548
    %5850 = vmatmul.mubr.f32.gmra.mrb[0].mxu0 %v5547
    %v5851 = vpop.f32.mrb[0].mxu0
    %v5852 = vadd.f32 0.0, %v5851
    %v5853 = vpop.f32.mrb[0].mxu0
    %v5854 = vadd.f32 0.0, %v5853
    %5855 = vdwg.mxu0
    %v5856 = vadd.f32 %v5509, %v5745
    %v5857 = vadd.f32 %v5510, %v5747
    %v5858 = vadd.f32 %v5511, %v5834
    %v5859 = vadd.f32 %v5512, %v5836
    %v5860 = vadd.f32 %v5513, %v5751
    %v5861 = vadd.f32 %v5514, %v5753
    %v5862 = vadd.f32 %v5515, %v5840
    %v5863 = vadd.f32 %v5516, %v5842
    %v5864 = vadd.f32 %v5517, %v5757
    %v5865 = vadd.f32 %v5518, %v5759
    %v5866 = vadd.f32 %v5519, %v5846
    %v5867 = vadd.f32 %v5520, %v5848
    %v5868 = vadd.f32 %v5521, %v5763
    %v5869 = vadd.f32 %v5522, %v5765
    %v5870 = vadd.f32 %v5523, %v5852
    %v5871 = vadd.f32 %v5524, %v5854
    %v5872 = vrot.slane %v3839, 3
    %v5873 = vrot.slane %v3840, 3
    %v5874 = vrot.slane %v3841, 3
    %v5875 = vrot.slane %v3842, 3
    %v5876 = vrot.slane %v3843, 3
    %v5877 = vrot.slane %v3844, 3
    %v5878 = vrot.slane %v3845, 3
    %v5879 = vrot.slane %v3846, 3
    %v5880 = vsel %vm3251, %v5876, %v5878
    %v5881 = vsel %vm3251, %v5877, %v5879
    %v5882 = vsel %vm3251, %v5874, %v5876
    %v5883 = vsel %vm3251, %v5875, %v5877
    %v5884 = vsel %vm3251, %v5872, %v5874
    %v5885 = vsel %vm3251, %v5873, %v5875
    %v5886 = vsel %vm3251, %v5878, %v5872
    %v5887 = vsel %vm3251, %v5879, %v5873
    %v5888 = vsel %vm3276, %v5884, 0.0
    %v5889 = vsel %vm3276, %v5885, 0.0
    %v5890 = vsel %vm3277, %v5882, 0.0
    %v5891 = vsel %vm3277, %v5883, 0.0
    %v5892 = vsel %vm3278, %v5880, 0.0
    %v5893 = vsel %vm3278, %v5881, 0.0
    %v5894 = vsel %vm3279, %v5886, 0.0
    %v5895 = vsel %vm3279, %v5887, 0.0
    %s5896 = scalar_lea.vmem %s5, 6144
    %v5897 = vld [vmem:[%s5896] sm:$0xff]
    %v5898 = vld [vmem:[%s5896 + $0x8] sm:$0xff]
    %v5899 = vld [vmem:[%s5896 + $0x10] sm:$0xff]
    %v5900 = vld [vmem:[%s5896 + $0x18] sm:$0xff]
    %v5901 = vld [vmem:[%s5896 + $0x20] sm:$0xff]
    %v5902 = vld [vmem:[%s5896 + $0x28] sm:$0xff]
    %v5903 = vld [vmem:[%s5896 + $0x30] sm:$0xff]
    %v5904 = vld [vmem:[%s5896 + $0x38] sm:$0xff]
    %v5905 = vld [vmem:[%s5896 + $0x40] sm:$0xff]
    %v5906 = vld [vmem:[%s5896 + $0x48] sm:$0xff]
    %v5907 = vld [vmem:[%s5896 + $0x50] sm:$0xff]
    %v5908 = vld [vmem:[%s5896 + $0x58] sm:$0xff]
    %v5909 = vld [vmem:[%s5896 + $0x60] sm:$0xff]
    %v5910 = vld [vmem:[%s5896 + $0x68] sm:$0xff]
    %v5911 = vld [vmem:[%s5896 + $0x70] sm:$0xff]
    %v5912 = vld [vmem:[%s5896 + $0x78] sm:$0xff]
    %v5913 = vld [vmem:[%s5896 + $0x80] sm:$0xff]
    %v5914 = vld [vmem:[%s5896 + $0x88] sm:$0xff]
    %v5915 = vld [vmem:[%s5896 + $0x90] sm:$0xff]
    %v5916 = vld [vmem:[%s5896 + $0x98] sm:$0xff]
    %v5917 = vld [vmem:[%s5896 + $0xa0] sm:$0xff]
    %v5918 = vld [vmem:[%s5896 + $0xa8] sm:$0xff]
    %v5919 = vld [vmem:[%s5896 + $0xb0] sm:$0xff]
    %v5920 = vld [vmem:[%s5896 + $0xb8] sm:$0xff]
    %v5921 = vld [vmem:[%s5896 + $0xc0] sm:$0xff]
    %v5922 = vld [vmem:[%s5896 + $0xc8] sm:$0xff]
    %v5923 = vld [vmem:[%s5896 + $0xd0] sm:$0xff]
    %v5924 = vld [vmem:[%s5896 + $0xd8] sm:$0xff]
    %v5925 = vld [vmem:[%s5896 + $0xe0] sm:$0xff]
    %v5926 = vld [vmem:[%s5896 + $0xe8] sm:$0xff]
    %v5927 = vld [vmem:[%s5896 + $0xf0] sm:$0xff]
    %v5928 = vld [vmem:[%s5896 + $0xf8] sm:$0xff]
    %v5929 = vld [vmem:[%s5896 + $0x100] sm:$0xff]
    %v5930 = vld [vmem:[%s5896 + $0x108] sm:$0xff]
    %v5931 = vld [vmem:[%s5896 + $0x110] sm:$0xff]
    %v5932 = vld [vmem:[%s5896 + $0x118] sm:$0xff]
    %v5933 = vld [vmem:[%s5896 + $0x120] sm:$0xff]
    %v5934 = vld [vmem:[%s5896 + $0x128] sm:$0xff]
    %v5935 = vld [vmem:[%s5896 + $0x130] sm:$0xff]
    %v5936 = vld [vmem:[%s5896 + $0x138] sm:$0xff]
    %v5937 = vld [vmem:[%s5896 + $0x140] sm:$0xff]
    %v5938 = vld [vmem:[%s5896 + $0x148] sm:$0xff]
    %v5939 = vld [vmem:[%s5896 + $0x150] sm:$0xff]
    %v5940 = vld [vmem:[%s5896 + $0x158] sm:$0xff]
    %v5941 = vld [vmem:[%s5896 + $0x160] sm:$0xff]
    %v5942 = vld [vmem:[%s5896 + $0x168] sm:$0xff]
    %v5943 = vld [vmem:[%s5896 + $0x170] sm:$0xff]
    %v5944 = vld [vmem:[%s5896 + $0x178] sm:$0xff]
    %v5945 = vld [vmem:[%s5896 + $0x180] sm:$0xff]
    %v5946 = vld [vmem:[%s5896 + $0x188] sm:$0xff]
    %v5947 = vld [vmem:[%s5896 + $0x190] sm:$0xff]
    %v5948 = vld [vmem:[%s5896 + $0x198] sm:$0xff]
    %v5949 = vld [vmem:[%s5896 + $0x1a0] sm:$0xff]
    %v5950 = vld [vmem:[%s5896 + $0x1a8] sm:$0xff]
    %v5951 = vld [vmem:[%s5896 + $0x1b0] sm:$0xff]
    %v5952 = vld [vmem:[%s5896 + $0x1b8] sm:$0xff]
    %v5953 = vld [vmem:[%s5896 + $0x1c0] sm:$0xff]
    %v5954 = vld [vmem:[%s5896 + $0x1c8] sm:$0xff]
    %v5955 = vld [vmem:[%s5896 + $0x1d0] sm:$0xff]
    %v5956 = vld [vmem:[%s5896 + $0x1d8] sm:$0xff]
    %v5957 = vld [vmem:[%s5896 + $0x1e0] sm:$0xff]
    %v5958 = vld [vmem:[%s5896 + $0x1e8] sm:$0xff]
    %v5959 = vld [vmem:[%s5896 + $0x1f0] sm:$0xff]
    %v5960 = vld [vmem:[%s5896 + $0x1f8] sm:$0xff]
    %v5961 = vld [vmem:[%s5896 + $0x200] sm:$0xff]
    %v5962 = vld [vmem:[%s5896 + $0x208] sm:$0xff]
    %v5963 = vld [vmem:[%s5896 + $0x210] sm:$0xff]
    %v5964 = vld [vmem:[%s5896 + $0x218] sm:$0xff]
    %v5965 = vld [vmem:[%s5896 + $0x220] sm:$0xff]
    %v5966 = vld [vmem:[%s5896 + $0x228] sm:$0xff]
    %v5967 = vld [vmem:[%s5896 + $0x230] sm:$0xff]
    %v5968 = vld [vmem:[%s5896 + $0x238] sm:$0xff]
    %v5969 = vld [vmem:[%s5896 + $0x240] sm:$0xff]
    %v5970 = vld [vmem:[%s5896 + $0x248] sm:$0xff]
    %v5971 = vld [vmem:[%s5896 + $0x250] sm:$0xff]
    %v5972 = vld [vmem:[%s5896 + $0x258] sm:$0xff]
    %v5973 = vld [vmem:[%s5896 + $0x260] sm:$0xff]
    %v5974 = vld [vmem:[%s5896 + $0x268] sm:$0xff]
    %v5975 = vld [vmem:[%s5896 + $0x270] sm:$0xff]
    %v5976 = vld [vmem:[%s5896 + $0x278] sm:$0xff]
    %v5977 = vld [vmem:[%s5896 + $0x280] sm:$0xff]
    %v5978 = vld [vmem:[%s5896 + $0x288] sm:$0xff]
    %v5979 = vld [vmem:[%s5896 + $0x290] sm:$0xff]
    %v5980 = vld [vmem:[%s5896 + $0x298] sm:$0xff]
    %v5981 = vld [vmem:[%s5896 + $0x2a0] sm:$0xff]
    %v5982 = vld [vmem:[%s5896 + $0x2a8] sm:$0xff]
    %v5983 = vld [vmem:[%s5896 + $0x2b0] sm:$0xff]
    %v5984 = vld [vmem:[%s5896 + $0x2b8] sm:$0xff]
    %v5985 = vld [vmem:[%s5896 + $0x2c0] sm:$0xff]
    %v5986 = vld [vmem:[%s5896 + $0x2c8] sm:$0xff]
    %v5987 = vld [vmem:[%s5896 + $0x2d0] sm:$0xff]
    %v5988 = vld [vmem:[%s5896 + $0x2d8] sm:$0xff]
    %v5989 = vld [vmem:[%s5896 + $0x2e0] sm:$0xff]
    %v5990 = vld [vmem:[%s5896 + $0x2e8] sm:$0xff]
    %v5991 = vld [vmem:[%s5896 + $0x2f0] sm:$0xff]
    %v5992 = vld [vmem:[%s5896 + $0x2f8] sm:$0xff]
    %v5993 = vld [vmem:[%s5896 + $0x300] sm:$0xff]
    %v5994 = vld [vmem:[%s5896 + $0x308] sm:$0xff]
    %v5995 = vld [vmem:[%s5896 + $0x310] sm:$0xff]
    %v5996 = vld [vmem:[%s5896 + $0x318] sm:$0xff]
    %v5997 = vld [vmem:[%s5896 + $0x320] sm:$0xff]
    %v5998 = vld [vmem:[%s5896 + $0x328] sm:$0xff]
    %v5999 = vld [vmem:[%s5896 + $0x330] sm:$0xff]
    %v6000 = vld [vmem:[%s5896 + $0x338] sm:$0xff]
    %v6001 = vld [vmem:[%s5896 + $0x340] sm:$0xff]
    %v6002 = vld [vmem:[%s5896 + $0x348] sm:$0xff]
    %v6003 = vld [vmem:[%s5896 + $0x350] sm:$0xff]
    %v6004 = vld [vmem:[%s5896 + $0x358] sm:$0xff]
    %v6005 = vld [vmem:[%s5896 + $0x360] sm:$0xff]
    %v6006 = vld [vmem:[%s5896 + $0x368] sm:$0xff]
    %v6007 = vld [vmem:[%s5896 + $0x370] sm:$0xff]
    %v6008 = vld [vmem:[%s5896 + $0x378] sm:$0xff]
    %v6009 = vld [vmem:[%s5896 + $0x380] sm:$0xff]
    %v6010 = vld [vmem:[%s5896 + $0x388] sm:$0xff]
    %v6011 = vld [vmem:[%s5896 + $0x390] sm:$0xff]
    %v6012 = vld [vmem:[%s5896 + $0x398] sm:$0xff]
    %v6013 = vld [vmem:[%s5896 + $0x3a0] sm:$0xff]
    %v6014 = vld [vmem:[%s5896 + $0x3a8] sm:$0xff]
    %v6015 = vld [vmem:[%s5896 + $0x3b0] sm:$0xff]
    %v6016 = vld [vmem:[%s5896 + $0x3b8] sm:$0xff]
    %v6017 = vld [vmem:[%s5896 + $0x3c0] sm:$0xff]
    %v6018 = vld [vmem:[%s5896 + $0x3c8] sm:$0xff]
    %v6019 = vld [vmem:[%s5896 + $0x3d0] sm:$0xff]
    %v6020 = vld [vmem:[%s5896 + $0x3d8] sm:$0xff]
    %v6021 = vld [vmem:[%s5896 + $0x3e0] sm:$0xff]
    %v6022 = vld [vmem:[%s5896 + $0x3e8] sm:$0xff]
    %v6023 = vld [vmem:[%s5896 + $0x3f0] sm:$0xff]
    %v6024 = vld [vmem:[%s5896 + $0x3f8] sm:$0xff]
    %6025 = vmatprep.subr.mxu0 %v5898
    %6026 = vmatpush1.msra.mxu0 %v5897
    %6027 = vmatprep.subr.mxu0 %v5902
    %6028 = vmatpush1.msra.mxu0 %v5901
    %6029 = vmatprep.subr.mxu0 %v5906
    %6030 = vmatpush1.msra.mxu0 %v5905
    %6031 = vmatprep.subr.mxu0 %v5910
    %6032 = vmatpush1.msra.mxu0 %v5909
    %6033 = vmatprep.subr.mxu0 %v5914
    %6034 = vmatpush1.msra.mxu0 %v5913
    %6035 = vmatprep.subr.mxu0 %v5918
    %6036 = vmatpush1.msra.mxu0 %v5917
    %6037 = vmatprep.subr.mxu0 %v5922
    %6038 = vmatpush1.msra.mxu0 %v5921
    %6039 = vmatprep.subr.mxu0 %v5926
    %6040 = vmatpush1.msra.mxu0 %v5925
    %6041 = vmatprep.subr.mxu0 %v5930
    %6042 = vmatpush1.msra.mxu0 %v5929
    %6043 = vmatprep.subr.mxu0 %v5934
    %6044 = vmatpush1.msra.mxu0 %v5933
    %6045 = vmatprep.subr.mxu0 %v5938
    %6046 = vmatpush1.msra.mxu0 %v5937
    %6047 = vmatprep.subr.mxu0 %v5942
    %6048 = vmatpush1.msra.mxu0 %v5941
    %6049 = vmatprep.subr.mxu0 %v5946
    %6050 = vmatpush1.msra.mxu0 %v5945
    %6051 = vmatprep.subr.mxu0 %v5950
    %6052 = vmatpush1.msra.mxu0 %v5949
    %6053 = vmatprep.subr.mxu0 %v5954
    %6054 = vmatpush1.msra.mxu0 %v5953
    %6055 = vmatprep.subr.mxu0 %v5958
    %6056 = vmatpush1.msra.mxu0 %v5957
    %6057 = vmatprep.subr.mxu0 %v5962
    %6058 = vmatpush1.msra.mxu0 %v5961
    %6059 = vmatprep.subr.mxu0 %v5966
    %6060 = vmatpush1.msra.mxu0 %v5965
    %6061 = vmatprep.subr.mxu0 %v5970
    %6062 = vmatpush1.msra.mxu0 %v5969
    %6063 = vmatprep.subr.mxu0 %v5974
    %6064 = vmatpush1.msra.mxu0 %v5973
    %6065 = vmatprep.subr.mxu0 %v5978
    %6066 = vmatpush1.msra.mxu0 %v5977
    %6067 = vmatprep.subr.mxu0 %v5982
    %6068 = vmatpush1.msra.mxu0 %v5981
    %6069 = vmatprep.subr.mxu0 %v5986
    %6070 = vmatpush1.msra.mxu0 %v5985
    %6071 = vmatprep.subr.mxu0 %v5990
    %6072 = vmatpush1.msra.mxu0 %v5989
    %6073 = vmatprep.subr.mxu0 %v5994
    %6074 = vmatpush1.msra.mxu0 %v5993
    %6075 = vmatprep.subr.mxu0 %v5998
    %6076 = vmatpush1.msra.mxu0 %v5997
    %6077 = vmatprep.subr.mxu0 %v6002
    %6078 = vmatpush1.msra.mxu0 %v6001
    %6079 = vmatprep.subr.mxu0 %v6006
    %6080 = vmatpush1.msra.mxu0 %v6005
    %6081 = vmatprep.subr.mxu0 %v6010
    %6082 = vmatpush1.msra.mxu0 %v6009
    %6083 = vmatprep.subr.mxu0 %v6014
    %6084 = vmatpush1.msra.mxu0 %v6013
    %6085 = vmatprep.subr.mxu0 %v6018
    %6086 = vmatpush1.msra.mxu0 %v6017
    %6087 = vmatprep.subr.mxu0 %v6022
    %6088 = vmatpush1.msra.mxu0 %v6021
    %6089 = vmatprep.mubr.f32.mxu0 %v5889
    %6090 = vmatmul.mubr.f32.gmra.mrb[0].mxu0 %v5888
    %v6091 = vpop.f32.mrb[0].mxu0
    %v6092 = vadd.f32 0.0, %v6091
    %v6093 = vpop.f32.mrb[0].mxu0
    %v6094 = vadd.f32 0.0, %v6093
    %6095 = vmatprep.mubr.f32.mxu0 %v5891
    %6096 = vmatmul.mubr.f32.gmra.mrb[0].mxu0 %v5890
    %v6097 = vpop.f32.mrb[0].mxu0
    %v6098 = vadd.f32 0.0, %v6097
    %v6099 = vpop.f32.mrb[0].mxu0
    %v6100 = vadd.f32 0.0, %v6099
    %6101 = vmatprep.mubr.f32.mxu0 %v5893
    %6102 = vmatmul.mubr.f32.gmra.mrb[0].mxu0 %v5892
    %v6103 = vpop.f32.mrb[0].mxu0
    %v6104 = vadd.f32 0.0, %v6103
    %v6105 = vpop.f32.mrb[0].mxu0
    %v6106 = vadd.f32 0.0, %v6105
    %6107 = vmatprep.mubr.f32.mxu0 %v5895
    %6108 = vmatmul.mubr.f32.gmra.mrb[0].mxu0 %v5894
    %v6109 = vpop.f32.mrb[0].mxu0
    %v6110 = vadd.f32 0.0, %v6109
    %v6111 = vpop.f32.mrb[0].mxu0
    %v6112 = vadd.f32 0.0, %v6111
    %6113 = vdwg.mxu0
    %6114 = vmatprep.subr.mxu0 %v5900
    %6115 = vmatpush1.msra.mxu0 %v5899
    %6116 = vmatprep.subr.mxu0 %v5904
    %6117 = vmatpush1.msra.mxu0 %v5903
    %6118 = vmatprep.subr.mxu0 %v5908
    %6119 = vmatpush1.msra.mxu0 %v5907
    %6120 = vmatprep.subr.mxu0 %v5912
    %6121 = vmatpush1.msra.mxu0 %v5911
    %6122 = vmatprep.subr.mxu0 %v5916
    %6123 = vmatpush1.msra.mxu0 %v5915
    %6124 = vmatprep.subr.mxu0 %v5920
    %6125 = vmatpush1.msra.mxu0 %v5919
    %6126 = vmatprep.subr.mxu0 %v5924
    %6127 = vmatpush1.msra.mxu0 %v5923
    %6128 = vmatprep.subr.mxu0 %v5928
    %6129 = vmatpush1.msra.mxu0 %v5927
    %6130 = vmatprep.subr.mxu0 %v5932
    %6131 = vmatpush1.msra.mxu0 %v5931
    %6132 = vmatprep.subr.mxu0 %v5936
    %6133 = vmatpush1.msra.mxu0 %v5935
    %6134 = vmatprep.subr.mxu0 %v5940
    %6135 = vmatpush1.msra.mxu0 %v5939
    %6136 = vmatprep.subr.mxu0 %v5944
    %6137 = vmatpush1.msra.mxu0 %v5943
    %6138 = vmatprep.subr.mxu0 %v5948
    %6139 = vmatpush1.msra.mxu0 %v5947
    %6140 = vmatprep.subr.mxu0 %v5952
    %6141 = vmatpush1.msra.mxu0 %v5951
    %6142 = vmatprep.subr.mxu0 %v5956
    %6143 = vmatpush1.msra.mxu0 %v5955
    %6144 = vmatprep.subr.mxu0 %v5960
    %6145 = vmatpush1.msra.mxu0 %v5959
    %6146 = vmatprep.subr.mxu0 %v5964
    %6147 = vmatpush1.msra.mxu0 %v5963
    %6148 = vmatprep.subr.mxu0 %v5968
    %6149 = vmatpush1.msra.mxu0 %v5967
    %6150 = vmatprep.subr.mxu0 %v5972
    %6151 = vmatpush1.msra.mxu0 %v5971
    %6152 = vmatprep.subr.mxu0 %v5976
    %6153 = vmatpush1.msra.mxu0 %v5975
    %6154 = vmatprep.subr.mxu0 %v5980
    %6155 = vmatpush1.msra.mxu0 %v5979
    %6156 = vmatprep.subr.mxu0 %v5984
    %6157 = vmatpush1.msra.mxu0 %v5983
    %6158 = vmatprep.subr.mxu0 %v5988
    %6159 = vmatpush1.msra.mxu0 %v5987
    %6160 = vmatprep.subr.mxu0 %v5992
    %6161 = vmatpush1.msra.mxu0 %v5991
    %6162 = vmatprep.subr.mxu0 %v5996
    %6163 = vmatpush1.msra.mxu0 %v5995
    %6164 = vmatprep.subr.mxu0 %v6000
    %6165 = vmatpush1.msra.mxu0 %v5999
    %6166 = vmatprep.subr.mxu0 %v6004
    %6167 = vmatpush1.msra.mxu0 %v6003
    %6168 = vmatprep.subr.mxu0 %v6008
    %6169 = vmatpush1.msra.mxu0 %v6007
    %6170 = vmatprep.subr.mxu0 %v6012
    %6171 = vmatpush1.msra.mxu0 %v6011
    %6172 = vmatprep.subr.mxu0 %v6016
    %6173 = vmatpush1.msra.mxu0 %v6015
    %6174 = vmatprep.subr.mxu0 %v6020
    %6175 = vmatpush1.msra.mxu0 %v6019
    %6176 = vmatprep.subr.mxu0 %v6024
    %6177 = vmatpush1.msra.mxu0 %v6023
    %6178 = vmatprep.mubr.f32.mxu0 %v5889
    %6179 = vmatmul.mubr.f32.gmra.mrb[0].mxu0 %v5888
    %v6180 = vpop.f32.mrb[0].mxu0
    %v6181 = vadd.f32 0.0, %v6180
    %v6182 = vpop.f32.mrb[0].mxu0
    %v6183 = vadd.f32 0.0, %v6182
    %6184 = vmatprep.mubr.f32.mxu0 %v5891
    %6185 = vmatmul.mubr.f32.gmra.mrb[0].mxu0 %v5890
    %v6186 = vpop.f32.mrb[0].mxu0
    %v6187 = vadd.f32 0.0, %v6186
    %v6188 = vpop.f32.mrb[0].mxu0
    %v6189 = vadd.f32 0.0, %v6188
    %6190 = vmatprep.mubr.f32.mxu0 %v5893
    %6191 = vmatmul.mubr.f32.gmra.mrb[0].mxu0 %v5892
    %v6192 = vpop.f32.mrb[0].mxu0
    %v6193 = vadd.f32 0.0, %v6192
    %v6194 = vpop.f32.mrb[0].mxu0
    %v6195 = vadd.f32 0.0, %v6194
    %6196 = vmatprep.mubr.f32.mxu0 %v5895
    %6197 = vmatmul.mubr.f32.gmra.mrb[0].mxu0 %v5894
    %v6198 = vpop.f32.mrb[0].mxu0
    %v6199 = vadd.f32 0.0, %v6198
    %v6200 = vpop.f32.mrb[0].mxu0
    %v6201 = vadd.f32 0.0, %v6200
    %6202 = vdwg.mxu0
    %v6203 = vadd.f32 %v5856, %v6092
    %v6204 = vadd.f32 %v5857, %v6094
    %v6205 = vadd.f32 %v5858, %v6181
    %v6206 = vadd.f32 %v5859, %v6183
    %v6207 = vadd.f32 %v5860, %v6098
    %v6208 = vadd.f32 %v5861, %v6100
    %v6209 = vadd.f32 %v5862, %v6187
    %v6210 = vadd.f32 %v5863, %v6189
    %v6211 = vadd.f32 %v5864, %v6104
    %v6212 = vadd.f32 %v5865, %v6106
    %v6213 = vadd.f32 %v5866, %v6193
    %v6214 = vadd.f32 %v5867, %v6195
    %v6215 = vadd.f32 %v5868, %v6110
    %v6216 = vadd.f32 %v5869, %v6112
    %v6217 = vadd.f32 %v5870, %v6199
    %v6218 = vadd.f32 %v5871, %v6201
    %v6219 = vld [vmem:[%s6] sm:$0xf]
    %v6221 = vlaneseq
    %v6222 = vshrl.u32 %v6221, 7
    %v6223 = vsub.s32 0, %v6222
    %v6224 = vrot.slane %v6219, %v6223
    %v6225 = vlaneseq
    %v6226 = vshrl.u32 %v6225, 7
    %v6227 = vsub.s32 1, %v6226
    %v6228 = vrot.slane %v6219, %v6227
    %v6229 = vlaneseq
    %v6230 = vshrl.u32 %v6229, 7
    %v6231 = vsub.s32 2, %v6230
    %v6232 = vrot.slane %v6219, %v6231
    %v6233 = vlaneseq
    %v6234 = vshrl.u32 %v6233, 7
    %v6235 = vsub.s32 3, %v6234
    %v6236 = vrot.slane %v6219, %v6235
    %v6241 = vadd.f32 %v6203, %v6224
    %v6242 = vadd.f32 %v6204, %v6228
    %v6243 = vadd.f32 %v6205, %v6232
    %v6244 = vadd.f32 %v6206, %v6236
    %v6245 = vadd.f32 %v6207, %v6224
    %v6246 = vadd.f32 %v6208, %v6228
    %v6247 = vadd.f32 %v6209, %v6232
    %v6248 = vadd.f32 %v6210, %v6236
    %v6249 = vadd.f32 %v6211, %v6224
    %v6250 = vadd.f32 %v6212, %v6228
    %v6251 = vadd.f32 %v6213, %v6232
    %v6252 = vadd.f32 %v6214, %v6236
    %v6253 = vadd.f32 %v6215, %v6224
    %v6254 = vadd.f32 %v6216, %v6228
    %v6255 = vadd.f32 %v6217, %v6232
    %v6256 = vadd.f32 %v6218, %v6236
    %v6257 = vmax.f32 %v6241, 0.0
    %v6258 = vmax.f32 %v6242, 0.0
    %v6259 = vmax.f32 %v6243, 0.0
    %v6260 = vmax.f32 %v6244, 0.0
    %v6261 = vmax.f32 %v6245, 0.0
    %v6262 = vmax.f32 %v6246, 0.0
    %v6263 = vmax.f32 %v6247, 0.0
    %v6264 = vmax.f32 %v6248, 0.0
    %v6265 = vmax.f32 %v6249, 0.0
    %v6266 = vmax.f32 %v6250, 0.0
    %v6267 = vmax.f32 %v6251, 0.0
    %v6268 = vmax.f32 %v6252, 0.0
    %v6269 = vmax.f32 %v6253, 0.0
    %v6270 = vmax.f32 %v6254, 0.0
    %v6271 = vmax.f32 %v6255, 0.0
    %v6272 = vmax.f32 %v6256, 0.0
    %v6273 = vmax.f32 %v6257, %v6258
    %v6274 = vmax.f32 %v6261, %v6262
    %v6275 = vmax.f32 %v6265, %v6266
    %v6276 = vmax.f32 %v6269, %v6270
    %v6277 = vmax.f32 %v6259, %v6260
    %v6278 = vmax.f32 %v6263, %v6264
    %v6279 = vmax.f32 %v6267, %v6268
    %v6280 = vmax.f32 %v6271, %v6272
    %v6281 = vmax.f32 %v6273, %v6277
    %v6282 = vmax.f32 %v6274, %v6278
    %v6283 = vmax.f32 %v6275, %v6279
    %v6284 = vmax.f32 %v6276, %v6280
    %v6285 = vadd.f32 %v6281, %v6282
    %v6286 = vadd.f32 %v6285, %v6283
    %v6287 = vadd.f32 %v6286, %v6284
    %v6288 = vrot.slane %v6287, 4
    %v6289 = vadd.f32 %v6287, %v6288
    %v6290 = vrot.slane %v6289, 2
    %v6291 = vadd.f32 %v6289, %v6290
    %v6292 = vrot.slane %v6291, 1
    %v6293 = vadd.f32 %v6291, %v6292
    %v6294 = vld [vmem:[%s7] sm:$0xff]
    %v6295 = vld [vmem:[%s7 + $0x8] sm:$0xff]
    %v6296 = vld [vmem:[%s7 + $0x10] sm:$0xff]
    %v6297 = vld [vmem:[%s7 + $0x18] sm:$0xff]
    %v6298 = vld [vmem:[%s7 + $0x20] sm:$0xff]
    %v6299 = vld [vmem:[%s7 + $0x28] sm:$0xff]
    %v6300 = vld [vmem:[%s7 + $0x30] sm:$0xff]
    %v6301 = vld [vmem:[%s7 + $0x38] sm:$0xff]
    %v6302 = vld [vmem:[%s7 + $0x40] sm:$0xff]
    %v6303 = vld [vmem:[%s7 + $0x48] sm:$0xff]
    %v6304 = vld [vmem:[%s7 + $0x50] sm:$0xff]
    %v6305 = vld [vmem:[%s7 + $0x58] sm:$0xff]
    %v6306 = vld [vmem:[%s7 + $0x60] sm:$0xff]
    %v6307 = vld [vmem:[%s7 + $0x68] sm:$0xff]
    %v6308 = vld [vmem:[%s7 + $0x70] sm:$0xff]
    %v6309 = vld [vmem:[%s7 + $0x78] sm:$0xff]
    %v6310 = vld [vmem:[%s8] sm:$0x1]
    %6311 = vmatprep.subr.mxu0 0.0
    %6312 = vmatpush1.msra.mxu0 %v6294
    %6313 = vmatprep.subr.mxu0 0.0
    %6314 = vmatpush1.msra.mxu0 %v6295
    %6315 = vmatprep.subr.mxu0 0.0
    %6316 = vmatpush1.msra.mxu0 %v6296
    %6317 = vmatprep.subr.mxu0 0.0
    %6318 = vmatpush1.msra.mxu0 %v6297
    %6319 = vmatprep.subr.mxu0 0.0
    %6320 = vmatpush1.msra.mxu0 %v6298
    %6321 = vmatprep.subr.mxu0 0.0
    %6322 = vmatpush1.msra.mxu0 %v6299
    %6323 = vmatprep.subr.mxu0 0.0
    %6324 = vmatpush1.msra.mxu0 %v6300
    %6325 = vmatprep.subr.mxu0 0.0
    %6326 = vmatpush1.msra.mxu0 %v6301
    %6327 = vmatprep.subr.mxu0 0.0
    %6328 = vmatpush1.msra.mxu0 %v6302
    %6329 = vmatprep.subr.mxu0 0.0
    %6330 = vmatpush1.msra.mxu0 %v6303
    %6331 = vmatprep.subr.mxu0 0.0
    %6332 = vmatpush1.msra.mxu0 %v6304
    %6333 = vmatprep.subr.mxu0 0.0
    %6334 = vmatpush1.msra.mxu0 %v6305
    %6335 = vmatprep.subr.mxu0 0.0
    %6336 = vmatpush1.msra.mxu0 %v6306
    %6337 = vmatprep.subr.mxu0 0.0
    %6338 = vmatpush1.msra.mxu0 %v6307
    %6339 = vmatprep.subr.mxu0 0.0
    %6340 = vmatpush1.msra.mxu0 %v6308
    %6341 = vmatprep.subr.mxu0 0.0
    %6342 = vmatpush1.msra.mxu0 %v6309
    %6343 = vmatprep.subr.mxu0 0.0
    %6344 = vmatpush1.msra.mxu0 0.0
    %6345 = vmatprep.subr.mxu0 0.0
    %6346 = vmatpush1.msra.mxu0 0.0
    %6347 = vmatprep.subr.mxu0 0.0
    %6348 = vmatpush1.msra.mxu0 0.0
    %6349 = vmatprep.subr.mxu0 0.0
    %6350 = vmatpush1.msra.mxu0 0.0
    %6351 = vmatprep.subr.mxu0 0.0
    %6352 = vmatpush1.msra.mxu0 0.0
    %6353 = vmatprep.subr.mxu0 0.0
    %6354 = vmatpush1.msra.mxu0 0.0
    %6355 = vmatprep.subr.mxu0 0.0
    %6356 = vmatpush1.msra.mxu0 0.0
    %6357 = vmatprep.subr.mxu0 0.0
    %6358 = vmatpush1.msra.mxu0 0.0
    %6359 = vmatprep.subr.mxu0 0.0
    %6360 = vmatpush1.msra.mxu0 0.0
    %6361 = vmatprep.subr.mxu0 0.0
    %6362 = vmatpush1.msra.mxu0 0.0
    %6363 = vmatprep.subr.mxu0 0.0
    %6364 = vmatpush1.msra.mxu0 0.0
    %6365 = vmatprep.subr.mxu0 0.0
    %6366 = vmatpush1.msra.mxu0 0.0
    %6367 = vmatprep.subr.mxu0 0.0
    %6368 = vmatpush1.msra.mxu0 0.0
    %6369 = vmatprep.subr.mxu0 0.0
    %6370 = vmatpush1.msra.mxu0 0.0
    %6371 = vmatprep.subr.mxu0 0.0
    %6372 = vmatpush1.msra.mxu0 0.0
    %6373 = vmatprep.subr.mxu0 0.0
    %6374 = vmatpush1.msra.mxu0 0.0
    %6375 = vmatprep.mubr.f32.mxu0 0.0
    %6376 = vmatmul.mubr.f32.gmra.mrb[0].mxu0 %v6293
    %v6377 = vpop.f32.mrb[0].mxu0
    %v6378 = vadd.f32 %v6310, %v6377
    %v6379 = vpop.f32.mrb[0].mxu0
    %6380 = vdwg.mxu0
    %v6381 = vld [vmem:[%s9] sm:$0xff]
    %v6382 = vld [vmem:[%s9 + $0x8] sm:$0xff]
    %v6383 = vld [vmem:[%s9 + $0x10] sm:$0xff]
    %v6384 = vld [vmem:[%s9 + $0x18] sm:$0xff]
    %v6385 = vld [vmem:[%s9 + $0x20] sm:$0xff]
    %v6386 = vld [vmem:[%s9 + $0x28] sm:$0xff]
    %v6387 = vld [vmem:[%s9 + $0x30] sm:$0xff]
    %v6388 = vld [vmem:[%s9 + $0x38] sm:$0xff]
    %v6389 = vld [vmem:[#allocation2] sm:$0x1]
    %vm6390 = vcmask 523264
    %v6392 = vsel %vm6390, %v6378, 0
    %6394 = vmatprep.subr.mxu0 0.0
    %6395 = vmatpush1.msra.mxu0 %v6381
    %6396 = vmatprep.subr.mxu0 0.0
    %6397 = vmatpush1.msra.mxu0 %v6382
    %6398 = vmatprep.subr.mxu0 0.0
    %6399 = vmatpush1.msra.mxu0 %v6383
    %6400 = vmatprep.subr.mxu0 0.0
    %6401 = vmatpush1.msra.mxu0 %v6384
    %6402 = vmatprep.subr.mxu0 0.0
    %6403 = vmatpush1.msra.mxu0 %v6385
    %6404 = vmatprep.subr.mxu0 0.0
    %6405 = vmatpush1.msra.mxu0 %v6386
    %6406 = vmatprep.subr.mxu0 0.0
    %6407 = vmatpush1.msra.mxu0 %v6387
    %6408 = vmatprep.subr.mxu0 0.0
    %6409 = vmatpush1.msra.mxu0 %v6388
    %6410 = vmatprep.subr.mxu0 0.0
    %6411 = vmatpush1.msra.mxu0 0.0
    %6412 = vmatprep.subr.mxu0 0.0
    %6413 = vmatpush1.msra.mxu0 0.0
    %6414 = vmatprep.subr.mxu0 0.0
    %6415 = vmatpush1.msra.mxu0 0.0
    %6416 = vmatprep.subr.mxu0 0.0
    %6417 = vmatpush1.msra.mxu0 0.0
    %6418 = vmatprep.subr.mxu0 0.0
    %6419 = vmatpush1.msra.mxu0 0.0
    %6420 = vmatprep.subr.mxu0 0.0
    %6421 = vmatpush1.msra.mxu0 0.0
    %6422 = vmatprep.subr.mxu0 0.0
    %6423 = vmatpush1.msra.mxu0 0.0
    %6424 = vmatprep.subr.mxu0 0.0
    %6425 = vmatpush1.msra.mxu0 0.0
    %6426 = vmatprep.subr.mxu0 0.0
    %6427 = vmatpush1.msra.mxu0 0.0
    %6428 = vmatprep.subr.mxu0 0.0
    %6429 = vmatpush1.msra.mxu0 0.0
    %6430 = vmatprep.subr.mxu0 0.0
    %6431 = vmatpush1.msra.mxu0 0.0
    %6432 = vmatprep.subr.mxu0 0.0
    %6433 = vmatpush1.msra.mxu0 0.0
    %6434 = vmatprep.subr.mxu0 0.0
    %6435 = vmatpush1.msra.mxu0 0.0
    %6436 = vmatprep.subr.mxu0 0.0
    %6437 = vmatpush1.msra.mxu0 0.0
    %6438 = vmatprep.subr.mxu0 0.0
    %6439 = vmatpush1.msra.mxu0 0.0
    %6440 = vmatprep.subr.mxu0 0.0
    %6441 = vmatpush1.msra.mxu0 0.0
    %6442 = vmatprep.subr.mxu0 0.0
    %6443 = vmatpush1.msra.mxu0 0.0
    %6444 = vmatprep.subr.mxu0 0.0
    %6445 = vmatpush1.msra.mxu0 0.0
    %6446 = vmatprep.subr.mxu0 0.0
    %6447 = vmatpush1.msra.mxu0 0.0
    %6448 = vmatprep.subr.mxu0 0.0
    %6449 = vmatpush1.msra.mxu0 0.0
    %6450 = vmatprep.subr.mxu0 0.0
    %6451 = vmatpush1.msra.mxu0 0.0
    %6452 = vmatprep.subr.mxu0 0.0
    %6453 = vmatpush1.msra.mxu0 0.0
    %6454 = vmatprep.subr.mxu0 0.0
    %6455 = vmatpush1.msra.mxu0 0.0
    %6456 = vmatprep.subr.mxu0 0.0
    %6457 = vmatpush1.msra.mxu0 0.0
    %6458 = vmatprep.mubr.f32.mxu0 0.0
    %6459 = vmatmul.mubr.f32.gmra.mrb[0].mxu0 %v6392
    %v6460 = vpop.f32.mrb[0].mxu0
    %v6461 = vadd.f32 %v6389, %v6460
    %v6462 = vpop.f32.mrb[0].mxu0
    %6463 = vdwg.mxu0
    %vm6464 = vcmask 0
    %6465 = vst.msk [vmem:[#allocation3] sm:$0x1] %vm6464, %v6461
    // Predicated region
    $region46: #{discriminator_forward.1} parent=1 // pred_check
      _
    $region47: #{discriminator_forward.1} parent=1 // pred_check_branch
      %6467 = sbr.rel (0) target = $region49
    $region48: #{discriminator_forward.1} parent=1 // pred_region
      %s6469 = ssub.s32 16, 16
      %6470 = vsyncadd [#allocation4], %s6469
      %s6472 = sshll.u32 [#allocation3], 4
      %s6473 = int_to_ptr.vmem [resolvable:$true] %s6472
      %6475 = dma.vmem_to_hbm [thread:$0]  %s6473, 16, %s11, [#allocation4]
    $region49: #{discriminator_forward.1} parent=1 // pred_fallthru
      _
    // Predicated region
    $region50: #{discriminator_forward.1} parent=1 // pred_check
      _
    $region51: #{discriminator_forward.1} parent=1 // pred_check_branch
      %6477 = sbr.rel (0) target = $region53
    $region52: #{discriminator_forward.1} parent=1 // pred_region
      %6478 = dma.done [#allocation4], 16
    $region53: #{discriminator_forward.1} parent=1 // pred_fallthru
      _
    %6479 = vsyncpa [#allocation4], 1

</llo_original>
